<compile_context>
chip_gen: v7x
topology: tpu7x:2x2x1
jax: 0.10.0
libtpu: 0.0.40
codegen_flags: <defaults>
</compile_context>

<pallas_src>
import functools

import numpy as np
import jax
import jax.numpy as jnp
from jax.experimental import pallas as pl
from jax.experimental.pallas import tpu as pltpu


K1_PAD = 128  # conv1 GEMM contraction dim, zero-padded from 3*3*6 = 54 to 128
BB = 8        # batch elements processed per grid step (multiple of 8)


# ----------------------------------------------------------------------------
# Fused Pallas kernel (one grid step == BB batch elements)
# ----------------------------------------------------------------------------
def _fused_forward_kernel(p1_ref, w1_ref, b1_ref, sel_ref, w2_ref, b2_ref,
                          fcw_ref, fcb_ref, out_ref, *, bb, n_taps, n_pos2):
    _, m1, k1 = p1_ref.shape

    # ---- conv1: one batched im2col GEMM (bb*64, 128) x (128, 256) ----------
    patches1 = p1_ref[...].reshape(bb * m1, k1)                     # bf16
    h1 = jnp.dot(patches1, w1_ref[...], preferred_element_type=jnp.float32)
    h1 = jnp.maximum(h1 + b1_ref[...], 0.0).astype(jnp.bfloat16)    # (bb*64, 256)

    # ---- conv2: in-kernel im2col via block-diagonal one-hot selection ------
    # sel rows are ordered (tap, batch, out_pos); columns (batch, in_pos);
    # all-zero rows realize the conv2 zero padding.
    patches2 = jnp.dot(sel_ref[...], h1,
                       preferred_element_type=jnp.float32).astype(jnp.bfloat16)
    c_out = w2_ref.shape[-1]
    rows = bb * n_pos2
    acc = jnp.zeros((rows, c_out), jnp.float32)
    for t in range(n_taps):                 # 9 taps, K = 256 (lane aligned)
        x_t = patches2[t * rows:(t + 1) * rows, :]                  # (bb*16, 256)
        acc = acc + jnp.dot(x_t, w2_ref[t], preferred_element_type=jnp.float32)
    h2 = jnp.maximum(acc + b2_ref[...], 0.0)                        # (bb*16, 256)

    # ---- global spatial max-pool + Linear(256 -> 1) on the VPU -------------
    pooled = jnp.max(h2.reshape(bb, n_pos2, c_out), axis=1)         # (bb, 256)
    val = jnp.sum(pooled * fcw_ref[...], axis=-1, keepdims=True) + fcb_ref[...]
    out_ref[0] = jnp.broadcast_to(val, out_ref.shape[1:]).astype(out_ref.dtype)


# ----------------------------------------------------------------------------
# One-time parameter preparation (weight relayout hoisted out of the forward)
# ----------------------------------------------------------------------------
def _make_conv2_selection(h_in, w_in, k, stride, pad, bb, dtype=jnp.bfloat16):
    """Block-diag one-hot matrix: conv1-out rows (batch,pos) -> (tap,batch,pos)."""
    h_out = (h_in + 2 * pad - k) // stride + 1
    w_out = (w_in + 2 * pad - k) // stride + 1
    n1, n2 = h_in * w_in, h_out * w_out
    sel = np.zeros((k * k, n2, n1), np.float32)
    for di in range(k):
        for dj in range(k):
            t = di * k + dj
            for a in range(h_out):
                for b in range(w_out):
                    r = stride * a + di - pad
                    c = stride * b + dj - pad
                    if 0 <= r < h_in and 0 <= c < w_in:
                        sel[t, a * w_out + b, r * w_in + c] = 1.0
    big = np.zeros((k * k, bb, n2, bb, n1), np.float32)
    for b in range(bb):
        big[:, b, :, b, :] = sel
    return jnp.asarray(big.reshape(k * k * bb * n2, bb * n1), dtype)


def prepare_params(params, image_hw=(16, 16), bb=BB):
    assert bb % 8 == 0, "batch block must be a multiple of 8 (sublane tile)"
    c1o, c1i, kh, kw = params["conv1_w"].shape                  # (256, 6, 3, 3)
    w1 = jnp.transpose(params["conv1_w"], (2, 3, 1, 0)).reshape(kh * kw * c1i, c1o)
    w1 = jnp.pad(w1, ((0, K1_PAD - kh * kw * c1i), (0, 0))).astype(jnp.bfloat16)

    c2o, c2i, _, _ = params["conv2_w"].shape                    # (256, 256, 3, 3)
    w2 = jnp.transpose(params["conv2_w"], (2, 3, 1, 0)).reshape(kh * kw, c2i, c2o)
    w2 = w2.astype(jnp.bfloat16)

    h1o = (image_hw[0] + 2 - 3) // 2 + 1                        # conv1 out H (=8)
    w1o = (image_hw[1] + 2 - 3) // 2 + 1                        # conv1 out W (=8)
    return {
        "w1": w1,                                               # (128, 256) bf16
        "b1": params["conv1_b"].reshape(1, -1).astype(jnp.float32),
        "w2": w2,                                               # (9, 256, 256) bf16
        "b2": params["conv2_b"].reshape(1, -1).astype(jnp.float32),
        "fcw": params["fc_w"].reshape(1, -1).astype(jnp.float32),   # (1, 256)
        "fcb": params["fc_b"].reshape(1, 1).astype(jnp.float32),    # (1, 1)
        "sel": _make_conv2_selection(h1o, w1o, 3, 2, 1, bb),    # (9*bb*16, bb*64)
    }


# ----------------------------------------------------------------------------
# Forward (wrapper does only layout work for the kernel input)
# ----------------------------------------------------------------------------
def _im2col_conv1(x_nhwc, k=3, stride=2, pad=1):
    x = jnp.pad(x_nhwc, ((0, 0), (pad, pad), (pad, pad), (0, 0)))
    n, hp, wp, c = x.shape
    ho = (hp - k) // stride + 1
    wo = (wp - k) // stride + 1
    cols = []
    for di in range(k):
        for dj in range(k):
            cols.append(x[:, di:di + stride * ho:stride,
                          dj:dj + stride * wo:stride, :])
    patches = jnp.stack(cols, axis=3)                  # (N, Ho, Wo, k*k, C)
    return patches.reshape(n, ho * wo, k * k * c)      # (N, 64, 54)


@jax.jit
def game_state_model(prepared, x1_nchw, x2_nchw):
    x = jnp.concatenate([x1_nchw, x2_nchw], axis=1)    # (N, 6, H, W)
    x = jnp.transpose(x, (0, 2, 3, 1))                 # NHWC
    patches = _im2col_conv1(x)
    n, m1, k1 = patches.shape
    patches = jnp.pad(patches, ((0, 0), (0, 0), (0, K1_PAD - k1)))
    patches = patches.astype(jnp.bfloat16)             # (N, 64, 128) bf16

    n_taps = prepared["w2"].shape[0]                   # 9
    bb = prepared["sel"].shape[1] // m1                # batch block (8)
    n_pos2 = prepared["sel"].shape[0] // (n_taps * bb) # 16

    n_pad = ((n + bb - 1) // bb) * bb
    if n_pad != n:
        patches = jnp.pad(patches, ((0, n_pad - n), (0, 0), (0, 0)))
    n_blocks = n_pad // bb

    kernel = functools.partial(_fused_forward_kernel,
                               bb=bb, n_taps=n_taps, n_pos2=n_pos2)
    slab = pl.pallas_call(
        kernel,
        out_shape=jax.ShapeDtypeStruct((n_blocks, bb, 128), jnp.float32),
        grid=(n_blocks,),
        in_specs=[
            pl.BlockSpec((bb, m1, K1_PAD), lambda i: (i, 0, 0)),
            pl.BlockSpec(prepared["w1"].shape, lambda i: (0, 0)),
            pl.BlockSpec(prepared["b1"].shape, lambda i: (0, 0)),
            pl.BlockSpec(prepared["sel"].shape, lambda i: (0, 0)),
            pl.BlockSpec(prepared["w2"].shape, lambda i: (0, 0, 0)),
            pl.BlockSpec(prepared["b2"].shape, lambda i: (0, 0)),
            pl.BlockSpec(prepared["fcw"].shape, lambda i: (0, 0)),
            pl.BlockSpec(prepared["fcb"].shape, lambda i: (0, 0)),
        ],
        out_specs=pl.BlockSpec((1, bb, 128), lambda i: (i, 0, 0)),
        compiler_params=pltpu.CompilerParams(
            dimension_semantics=("parallel",)),
    )(patches, prepared["w1"], prepared["b1"], prepared["sel"],
      prepared["w2"], prepared["b2"], prepared["fcw"], prepared["fcb"])
    return slab[:, :, 0].reshape(n_pad, 1)[:n]         # (N, 1)


# ----------------------------------------------------------------------------
# Params + pure-JAX reference (same assumed architecture)
# ----------------------------------------------------------------------------
def init_params(key):
    k1, k2, k3, k4, k5, k6 = jax.random.split(key, 6)
    return {
        "conv1_w": jax.random.normal(k1, (256, 6, 3, 3), jnp.float32) * 0.05,
        "conv1_b": jax.random.normal(k2, (256,), jnp.float32) * 0.05,
        "conv2_w": jax.random.normal(k3, (256, 256, 3, 3), jnp.float32) * 0.02,
        "conv2_b": jax.random.normal(k4, (256,), jnp.float32) * 0.02,
        "fc_w": jax.random.normal(k5, (1, 256), jnp.float32) * 0.05,
        "fc_b": jax.random.normal(k6, (1,), jnp.float32) * 0.05,
    }


def _reference_forward(params, x1, x2):
    x = jnp.concatenate([x1, x2], axis=1)

    def conv(x, w, b):
        y = jax.lax.conv_general_dilated(
            x, w, window_strides=(2, 2), padding=((1, 1), (1, 1)),
            dimension_numbers=("NCHW", "OIHW", "NCHW"))
        return jax.nn.relu(y + b[None, :, None, None])

    x = conv(x, params["conv1_w"], params["conv1_b"])
    x = conv(x, params["conv2_w"], params["conv2_b"])
    pooled = jnp.max(x, axis=(2, 3))                   # (N, 256)
    return pooled @ params["fc_w"].T + params["fc_b"][None, :]


if __name__ == "__main__":
    key = jax.random.PRNGKey(0)
    pkey, dkey1, dkey2 = jax.random.split(key, 3)
    params = init_params(pkey)
    prepared = prepare_params(params, image_hw=(16, 16))

    # Start image and current-state image, NCHW like PyTorch: (2, 3, 16, 16)
    x1 = jax.random.normal(dkey1, (2, 3, 16, 16), jnp.float32)
    x2 = jax.random.normal(dkey2, (2, 3, 16, 16), jnp.float32)

    out = game_state_model(prepared, x1, x2)
    jax.block_until_ready(out)
    assert out.shape == (2, 1), out.shape

    ref = _reference_forward(params, x1, x2)
    err = float(jnp.max(jnp.abs(out - ref)))
    assert err < 5e-2, f"max abs error {err} vs f32 reference"
    print("KERNEL_OK")
</pallas_src>

<mosaic_0001>
module attributes {stable_mosaic.version = 11 : i64} {
  func.func @_fused_forward_kernel(%arg0: i32, %arg1: memref<8x64x128xbf16, #tpu.memory_space<vmem>>, %arg2: memref<128x256xbf16, #tpu.memory_space<vmem>>, %arg3: memref<1x256xf32, #tpu.memory_space<vmem>>, %arg4: memref<1152x512xbf16, #tpu.memory_space<vmem>>, %arg5: memref<9x256x256xbf16, #tpu.memory_space<vmem>>, %arg6: memref<1x256xf32, #tpu.memory_space<vmem>>, %arg7: memref<1x256xf32, #tpu.memory_space<vmem>>, %arg8: memref<1x1xf32, #tpu.memory_space<vmem>>, %arg9: memref<1x8x128xf32, #tpu.memory_space<vmem>>) attributes {dimension_semantics = [#tpu.dimension_semantics<parallel>], iteration_bounds = array<i64: 1>, scalar_prefetch = 0 : i64, scratch_operands = 0 : i64, tpu.core_type = #tpu.core_type<tc>, window_params = [{transform_indices = @transform_0, window_bounds = array<i64: 8, 64, 128>}, {pipeline_mode = #tpu.pipeline_mode<synchronous>, transform_indices = @transform_1, window_bounds = array<i64: 128, 256>}, {pipeline_mode = #tpu.pipeline_mode<synchronous>, transform_indices = @transform_2, window_bounds = array<i64: 1, 256>}, {pipeline_mode = #tpu.pipeline_mode<synchronous>, transform_indices = @transform_3, window_bounds = array<i64: 1152, 512>}, {pipeline_mode = #tpu.pipeline_mode<synchronous>, transform_indices = @transform_4, window_bounds = array<i64: 9, 256, 256>}, {pipeline_mode = #tpu.pipeline_mode<synchronous>, transform_indices = @transform_5, window_bounds = array<i64: 1, 256>}, {pipeline_mode = #tpu.pipeline_mode<synchronous>, transform_indices = @transform_6, window_bounds = array<i64: 1, 256>}, {pipeline_mode = #tpu.pipeline_mode<synchronous>, transform_indices = @transform_7, window_bounds = array<i64: 1, 1>}, {transform_indices = @transform_8, window_bounds = array<i64: 1, 8, 128>}]} {
    %c0 = arith.constant 0 : index
    %c0_0 = arith.constant 0 : index
    %c0_1 = arith.constant 0 : index
    %0 = vector.load %arg1[%c0, %c0_0, %c0_1] : memref<8x64x128xbf16, #tpu.memory_space<vmem>>, vector<8x64x128xbf16>
    %1 = vector.shape_cast %0 : vector<8x64x128xbf16> to vector<512x128xbf16>
    %c0_2 = arith.constant 0 : index
    %c0_3 = arith.constant 0 : index
    %2 = vector.load %arg2[%c0_2, %c0_3] : memref<128x256xbf16, #tpu.memory_space<vmem>>, vector<128x256xbf16>
    %cst = arith.constant dense<0.000000e+00> : vector<512x256xf32>
    %3 = tpu.matmul %1, %2, %cst {dimension_numbers = #tpu.dot_dimension_numbers<[1], [0], [0], [1], [0, 0, 1, 1], [], []>} : vector<512x128xbf16>, vector<128x256xbf16>, vector<512x256xf32> -> vector<512x256xf32>
    %c0_4 = arith.constant 0 : index
    %c0_5 = arith.constant 0 : index
    %4 = vector.load %arg3[%c0_4, %c0_5] : memref<1x256xf32, #tpu.memory_space<vmem>>, vector<1x256xf32>
    %5 = vector.broadcast %4 : vector<1x256xf32> to vector<512x256xf32>
    %6 = arith.addf %3, %5 : vector<512x256xf32>
    %cst_6 = arith.constant 0.000000e+00 : f32
    %7 = vector.broadcast %cst_6 : f32 to vector<512x256xf32>
    %8 = arith.maximumf %6, %7 : vector<512x256xf32>
    %9 = arith.truncf %8 : vector<512x256xf32> to vector<512x256xbf16>
    %c0_7 = arith.constant 0 : index
    %c0_8 = arith.constant 0 : index
    %10 = vector.load %arg4[%c0_7, %c0_8] : memref<1152x512xbf16, #tpu.memory_space<vmem>>, vector<1152x512xbf16>
    %cst_9 = arith.constant dense<0.000000e+00> : vector<1152x256xf32>
    %11 = tpu.matmul %10, %9, %cst_9 {dimension_numbers = #tpu.dot_dimension_numbers<[1], [0], [0], [1], [0, 0, 1, 1], [], []>} : vector<1152x512xbf16>, vector<512x256xbf16>, vector<1152x256xf32> -> vector<1152x256xf32>
    %12 = arith.truncf %11 : vector<1152x256xf32> to vector<1152x256xbf16>
    %cst_10 = arith.constant 0.000000e+00 : f32
    %13 = vector.broadcast %cst_10 : f32 to vector<128x256xf32>
    %14 = vector.extract_strided_slice %12 {offsets = [0, 0], sizes = [128, 256], strides = [1, 1]} : vector<1152x256xbf16> to vector<128x256xbf16>
    %c0_11 = arith.constant 0 : index
    %c0_12 = arith.constant 0 : index
    %c0_13 = arith.constant 0 : index
    %15 = vector.load %arg5[%c0_11, %c0_12, %c0_13] : memref<9x256x256xbf16, #tpu.memory_space<vmem>>, vector<1x256x256xbf16>
    %16 = vector.shape_cast %15 : vector<1x256x256xbf16> to vector<256x256xbf16>
    %cst_14 = arith.constant dense<0.000000e+00> : vector<128x256xf32>
    %17 = tpu.matmul %14, %16, %cst_14 {dimension_numbers = #tpu.dot_dimension_numbers<[1], [0], [0], [1], [0, 0, 1, 1], [], []>} : vector<128x256xbf16>, vector<256x256xbf16>, vector<128x256xf32> -> vector<128x256xf32>
    %18 = arith.addf %13, %17 : vector<128x256xf32>
    %19 = vector.extract_strided_slice %12 {offsets = [128, 0], sizes = [128, 256], strides = [1, 1]} : vector<1152x256xbf16> to vector<128x256xbf16>
    %c1 = arith.constant 1 : index
    %c0_15 = arith.constant 0 : index
    %c0_16 = arith.constant 0 : index
    %20 = vector.load %arg5[%c1, %c0_15, %c0_16] : memref<9x256x256xbf16, #tpu.memory_space<vmem>>, vector<1x256x256xbf16>
    %21 = vector.shape_cast %20 : vector<1x256x256xbf16> to vector<256x256xbf16>
    %cst_17 = arith.constant dense<0.000000e+00> : vector<128x256xf32>
    %22 = tpu.matmul %19, %21, %cst_17 {dimension_numbers = #tpu.dot_dimension_numbers<[1], [0], [0], [1], [0, 0, 1, 1], [], []>} : vector<128x256xbf16>, vector<256x256xbf16>, vector<128x256xf32> -> vector<128x256xf32>
    %23 = arith.addf %18, %22 : vector<128x256xf32>
    %24 = vector.extract_strided_slice %12 {offsets = [256, 0], sizes = [128, 256], strides = [1, 1]} : vector<1152x256xbf16> to vector<128x256xbf16>
    %c2 = arith.constant 2 : index
    %c0_18 = arith.constant 0 : index
    %c0_19 = arith.constant 0 : index
    %25 = vector.load %arg5[%c2, %c0_18, %c0_19] : memref<9x256x256xbf16, #tpu.memory_space<vmem>>, vector<1x256x256xbf16>
    %26 = vector.shape_cast %25 : vector<1x256x256xbf16> to vector<256x256xbf16>
    %cst_20 = arith.constant dense<0.000000e+00> : vector<128x256xf32>
    %27 = tpu.matmul %24, %26, %cst_20 {dimension_numbers = #tpu.dot_dimension_numbers<[1], [0], [0], [1], [0, 0, 1, 1], [], []>} : vector<128x256xbf16>, vector<256x256xbf16>, vector<128x256xf32> -> vector<128x256xf32>
    %28 = arith.addf %23, %27 : vector<128x256xf32>
    %29 = vector.extract_strided_slice %12 {offsets = [384, 0], sizes = [128, 256], strides = [1, 1]} : vector<1152x256xbf16> to vector<128x256xbf16>
    %c3 = arith.constant 3 : index
    %c0_21 = arith.constant 0 : index
    %c0_22 = arith.constant 0 : index
    %30 = vector.load %arg5[%c3, %c0_21, %c0_22] : memref<9x256x256xbf16, #tpu.memory_space<vmem>>, vector<1x256x256xbf16>
    %31 = vector.shape_cast %30 : vector<1x256x256xbf16> to vector<256x256xbf16>
    %cst_23 = arith.constant dense<0.000000e+00> : vector<128x256xf32>
    %32 = tpu.matmul %29, %31, %cst_23 {dimension_numbers = #tpu.dot_dimension_numbers<[1], [0], [0], [1], [0, 0, 1, 1], [], []>} : vector<128x256xbf16>, vector<256x256xbf16>, vector<128x256xf32> -> vector<128x256xf32>
    %33 = arith.addf %28, %32 : vector<128x256xf32>
    %34 = vector.extract_strided_slice %12 {offsets = [512, 0], sizes = [128, 256], strides = [1, 1]} : vector<1152x256xbf16> to vector<128x256xbf16>
    %c4 = arith.constant 4 : index
    %c0_24 = arith.constant 0 : index
    %c0_25 = arith.constant 0 : index
    %35 = vector.load %arg5[%c4, %c0_24, %c0_25] : memref<9x256x256xbf16, #tpu.memory_space<vmem>>, vector<1x256x256xbf16>
    %36 = vector.shape_cast %35 : vector<1x256x256xbf16> to vector<256x256xbf16>
    %cst_26 = arith.constant dense<0.000000e+00> : vector<128x256xf32>
    %37 = tpu.matmul %34, %36, %cst_26 {dimension_numbers = #tpu.dot_dimension_numbers<[1], [0], [0], [1], [0, 0, 1, 1], [], []>} : vector<128x256xbf16>, vector<256x256xbf16>, vector<128x256xf32> -> vector<128x256xf32>
    %38 = arith.addf %33, %37 : vector<128x256xf32>
    %39 = vector.extract_strided_slice %12 {offsets = [640, 0], sizes = [128, 256], strides = [1, 1]} : vector<1152x256xbf16> to vector<128x256xbf16>
    %c5 = arith.constant 5 : index
    %c0_27 = arith.constant 0 : index
    %c0_28 = arith.constant 0 : index
    %40 = vector.load %arg5[%c5, %c0_27, %c0_28] : memref<9x256x256xbf16, #tpu.memory_space<vmem>>, vector<1x256x256xbf16>
    %41 = vector.shape_cast %40 : vector<1x256x256xbf16> to vector<256x256xbf16>
    %cst_29 = arith.constant dense<0.000000e+00> : vector<128x256xf32>
    %42 = tpu.matmul %39, %41, %cst_29 {dimension_numbers = #tpu.dot_dimension_numbers<[1], [0], [0], [1], [0, 0, 1, 1], [], []>} : vector<128x256xbf16>, vector<256x256xbf16>, vector<128x256xf32> -> vector<128x256xf32>
    %43 = arith.addf %38, %42 : vector<128x256xf32>
    %44 = vector.extract_strided_slice %12 {offsets = [768, 0], sizes = [128, 256], strides = [1, 1]} : vector<1152x256xbf16> to vector<128x256xbf16>
    %c6 = arith.constant 6 : index
    %c0_30 = arith.constant 0 : index
    %c0_31 = arith.constant 0 : index
    %45 = vector.load %arg5[%c6, %c0_30, %c0_31] : memref<9x256x256xbf16, #tpu.memory_space<vmem>>, vector<1x256x256xbf16>
    %46 = vector.shape_cast %45 : vector<1x256x256xbf16> to vector<256x256xbf16>
    %cst_32 = arith.constant dense<0.000000e+00> : vector<128x256xf32>
    %47 = tpu.matmul %44, %46, %cst_32 {dimension_numbers = #tpu.dot_dimension_numbers<[1], [0], [0], [1], [0, 0, 1, 1], [], []>} : vector<128x256xbf16>, vector<256x256xbf16>, vector<128x256xf32> -> vector<128x256xf32>
    %48 = arith.addf %43, %47 : vector<128x256xf32>
    %49 = vector.extract_strided_slice %12 {offsets = [896, 0], sizes = [128, 256], strides = [1, 1]} : vector<1152x256xbf16> to vector<128x256xbf16>
    %c7 = arith.constant 7 : index
    %c0_33 = arith.constant 0 : index
    %c0_34 = arith.constant 0 : index
    %50 = vector.load %arg5[%c7, %c0_33, %c0_34] : memref<9x256x256xbf16, #tpu.memory_space<vmem>>, vector<1x256x256xbf16>
    %51 = vector.shape_cast %50 : vector<1x256x256xbf16> to vector<256x256xbf16>
    %cst_35 = arith.constant dense<0.000000e+00> : vector<128x256xf32>
    %52 = tpu.matmul %49, %51, %cst_35 {dimension_numbers = #tpu.dot_dimension_numbers<[1], [0], [0], [1], [0, 0, 1, 1], [], []>} : vector<128x256xbf16>, vector<256x256xbf16>, vector<128x256xf32> -> vector<128x256xf32>
    %53 = arith.addf %48, %52 : vector<128x256xf32>
    %54 = vector.extract_strided_slice %12 {offsets = [1024, 0], sizes = [128, 256], strides = [1, 1]} : vector<1152x256xbf16> to vector<128x256xbf16>
    %c8 = arith.constant 8 : index
    %c0_36 = arith.constant 0 : index
    %c0_37 = arith.constant 0 : index
    %55 = vector.load %arg5[%c8, %c0_36, %c0_37] : memref<9x256x256xbf16, #tpu.memory_space<vmem>>, vector<1x256x256xbf16>
    %56 = vector.shape_cast %55 : vector<1x256x256xbf16> to vector<256x256xbf16>
    %cst_38 = arith.constant dense<0.000000e+00> : vector<128x256xf32>
    %57 = tpu.matmul %54, %56, %cst_38 {dimension_numbers = #tpu.dot_dimension_numbers<[1], [0], [0], [1], [0, 0, 1, 1], [], []>} : vector<128x256xbf16>, vector<256x256xbf16>, vector<128x256xf32> -> vector<128x256xf32>
    %58 = arith.addf %53, %57 : vector<128x256xf32>
    %c0_39 = arith.constant 0 : index
    %c0_40 = arith.constant 0 : index
    %59 = vector.load %arg6[%c0_39, %c0_40] : memref<1x256xf32, #tpu.memory_space<vmem>>, vector<1x256xf32>
    %60 = vector.broadcast %59 : vector<1x256xf32> to vector<128x256xf32>
    %61 = arith.addf %58, %60 : vector<128x256xf32>
    %cst_41 = arith.constant 0.000000e+00 : f32
    %62 = vector.broadcast %cst_41 : f32 to vector<128x256xf32>
    %63 = arith.maximumf %61, %62 : vector<128x256xf32>
    %64 = vector.shape_cast %63 : vector<128x256xf32> to vector<8x16x256xf32>
    %cst_42 = arith.constant dense<0xFF800000> : vector<8x256xf32>
    %65 = vector.multi_reduction <maximumf>, %64, %cst_42 [1] : vector<8x16x256xf32> to vector<8x256xf32>
    %c0_43 = arith.constant 0 : index
    %c0_44 = arith.constant 0 : index
    %66 = vector.load %arg7[%c0_43, %c0_44] : memref<1x256xf32, #tpu.memory_space<vmem>>, vector<1x256xf32>
    %67 = vector.broadcast %66 : vector<1x256xf32> to vector<8x256xf32>
    %68 = arith.mulf %65, %67 : vector<8x256xf32>
    %cst_45 = arith.constant dense<0.000000e+00> : vector<8xf32>
    %69 = vector.multi_reduction <add>, %68, %cst_45 [1] : vector<8x256xf32> to vector<8xf32>
    %70 = vector.shape_cast %69 : vector<8xf32> to vector<8x1xf32>
    %c0_46 = arith.constant 0 : index
    %c0_47 = arith.constant 0 : index
    %71 = vector.load %arg8[%c0_46, %c0_47] : memref<1x1xf32, #tpu.memory_space<vmem>>, vector<1x1xf32>
    %72 = vector.broadcast %71 : vector<1x1xf32> to vector<8x1xf32>
    %73 = arith.addf %70, %72 : vector<8x1xf32>
    %74 = vector.shape_cast %73 : vector<8x1xf32> to vector<8x1xf32>
    %75 = vector.broadcast %74 : vector<8x1xf32> to vector<8x128xf32>
    %c0_48 = arith.constant 0 : index
    %c0_49 = arith.constant 0 : index
    %c0_50 = arith.constant 0 : index
    %76 = vector.load %arg9[%c0_48, %c0_49, %c0_50] : memref<1x8x128xf32, #tpu.memory_space<vmem>>, vector<1x8x128xf32>
    %77 = vector.shape_cast %76 : vector<1x8x128xf32> to vector<8x128xf32>
    %78 = vector.shape_cast %75 : vector<8x128xf32> to vector<1x8x128xf32>
    tpu.vector_store %arg9[%c0_48, %c0_49, %c0_50], %78 {strides = array<i32>} : memref<1x8x128xf32, #tpu.memory_space<vmem>>, vector<1x8x128xf32>,
    return
  }
  func.func @transform_0(%arg0: i32) -> (i32, i32, i32) {
    %c0_i32 = arith.constant 0 : i32
    %c0_i32_0 = arith.constant 0 : i32
    %c0_i32_1 = arith.constant 0 : i32
    return %arg0, %c0_i32, %c0_i32_0 : i32, i32, i32
  }
  func.func @transform_1(%arg0: i32) -> (i32, i32) {
    %c0_i32 = arith.constant 0 : i32
    %c0_i32_0 = arith.constant 0 : i32
    %c0_i32_1 = arith.constant 0 : i32
    return %c0_i32, %c0_i32_0 : i32, i32
  }
  func.func @transform_2(%arg0: i32) -> (i32, i32) {
    %c0_i32 = arith.constant 0 : i32
    %c0_i32_0 = arith.constant 0 : i32
    %c0_i32_1 = arith.constant 0 : i32
    return %c0_i32, %c0_i32_0 : i32, i32
  }
  func.func @transform_3(%arg0: i32) -> (i32, i32) {
    %c0_i32 = arith.constant 0 : i32
    %c0_i32_0 = arith.constant 0 : i32
    %c0_i32_1 = arith.constant 0 : i32
    return %c0_i32, %c0_i32_0 : i32, i32
  }
  func.func @transform_4(%arg0: i32) -> (i32, i32, i32) {
    %c0_i32 = arith.constant 0 : i32
    %c0_i32_0 = arith.constant 0 : i32
    %c0_i32_1 = arith.constant 0 : i32
    %c0_i32_2 = arith.constant 0 : i32
    return %c0_i32, %c0_i32_0, %c0_i32_1 : i32, i32, i32
  }
  func.func @transform_5(%arg0: i32) -> (i32, i32) {
    %c0_i32 = arith.constant 0 : i32
    %c0_i32_0 = arith.constant 0 : i32
    %c0_i32_1 = arith.constant 0 : i32
    return %c0_i32, %c0_i32_0 : i32, i32
  }
  func.func @transform_6(%arg0: i32) -> (i32, i32) {
    %c0_i32 = arith.constant 0 : i32
    %c0_i32_0 = arith.constant 0 : i32
    %c0_i32_1 = arith.constant 0 : i32
    return %c0_i32, %c0_i32_0 : i32, i32
  }
  func.func @transform_7(%arg0: i32) -> (i32, i32) {
    %c0_i32 = arith.constant 0 : i32
    %c0_i32_0 = arith.constant 0 : i32
    %c0_i32_1 = arith.constant 0 : i32
    return %c0_i32, %c0_i32_0 : i32, i32
  }
  func.func @transform_8(%arg0: i32) -> (i32, i32, i32) {
    %c0_i32 = arith.constant 0 : i32
    %c0_i32_0 = arith.constant 0 : i32
    %c0_i32_1 = arith.constant 0 : i32
    return %arg0, %c0_i32, %c0_i32_0 : i32, i32, i32
  }
}

</mosaic_0001>

<llo_original>
// kernel: game_state_model.1
$region0: #{game_state_model.1}
  #allocation0 [shape = 'u32[]', space=smem, size = 0x4, offset = 0x4, fixed_abs, tag = 'smem constant byte address 0x4 - core index']
  #allocation1 [shape = 'u32[144,128]{1,0:T(1,128)}', space=vmem, size = 0x12000, scoped, tag = 'internal scratch']
  #allocation2 [shape = 'f32[1,1]{1,0:T(1,128)S(1)}', space=vmem, size = 0x200, scoped, tag = 'scoped memory for game_state_model.1']
  %s0 = inlined_call_operand.vmem [shape: bf16[8,64,128], index: 0, kind: input, shape index: {}]
  %s1 = inlined_call_operand.vmem [shape: bf16[128,256], index: 1, kind: input, shape index: {}]
  %s2 = inlined_call_operand.vmem [shape: f32[1,256], index: 2, kind: input, shape index: {}]
  %s3 = inlined_call_operand.vmem [shape: bf16[1152,512], index: 3, kind: input, shape index: {}]
  %s4 = inlined_call_operand.hbm [shape: bf16[9,256,256], index: 4, kind: input, shape index: {}]
  %s5 = inlined_call_operand.vmem [shape: f32[1,256], index: 5, kind: input, shape index: {}]
  %s6 = inlined_call_operand.vmem [shape: f32[1,256], index: 6, kind: input, shape index: {}]
  %s7 = inlined_call_operand.<no memory space> [shape: f32[1,1], index: 7, kind: input, shape index: {}]
  %s8 = inlined_call_operand.vmem [shape: f32[1,8,128], index: 8, kind: output, shape index: {}]
  %s9 = sld [smem:[#allocation0]]
  $region46: #{game_state_model.1} parent=0
    _
  %s11 = ssub.s32 1, %s9
  %s12 = scalar_select 0, %s11, %s9
  %v13 = vstv %s7
  %14 = vst [vmem:[#allocation2] sm:$0x1] %v13
  $region1: #{game_state_model.1} parent=0
    #allocation3 [shape = 'u8[1179648]{0}', space=vmem, size = 0x120000, scoped, tag = 'input window, operand 4, single buffered']
    #allocation4 [shape = 's32[1]{0}', space=sflag, size = 0x4, scoped, tag = 'scoped memory for game_state_model.1']
    %15 = vsyncpa [#allocation4], 0
    // Predicated region
    $region2: #{game_state_model.1} parent=1 // pred_check
      _
    $region3: #{game_state_model.1} parent=1 // pred_check_branch
      %17 = sbr.rel (0) target = $region5
    $region4: #{game_state_model.1} parent=1 // pred_region
      _
    $region5: #{game_state_model.1} parent=1 // pred_fallthru
      _
    // Predicated region
    $region6: #{game_state_model.1} parent=1 // pred_check
      _
    $region7: #{game_state_model.1} parent=1 // pred_check_branch
      %19 = sbr.rel (0) target = $region9
    $region8: #{game_state_model.1} parent=1 // pred_region
      _
    $region9: #{game_state_model.1} parent=1 // pred_fallthru
      _
    // Predicated region
    $region10: #{game_state_model.1} parent=1 // pred_check
      _
    $region11: #{game_state_model.1} parent=1 // pred_check_branch
      %21 = sbr.rel (0) target = $region13
    $region12: #{game_state_model.1} parent=1 // pred_region
      _
    $region13: #{game_state_model.1} parent=1 // pred_fallthru
      _
    // Predicated region
    $region14: #{game_state_model.1} parent=1 // pred_check
      _
    $region15: #{game_state_model.1} parent=1 // pred_check_branch
      %23 = sbr.rel (0) target = $region17
    $region16: #{game_state_model.1} parent=1 // pred_region
      _
    $region17: #{game_state_model.1} parent=1 // pred_fallthru
      _
    // Predicated region
    $region18: #{game_state_model.1} parent=1 // pred_check
      _
    $region19: #{game_state_model.1} parent=1 // pred_check_branch
      %25 = sbr.rel (0) target = $region21
    $region20: #{game_state_model.1} parent=1 // pred_region
      %s27 = ssub.s32 36864, 36864
      %28 = vsyncadd [#allocation4], %s27
      %s29 = sshll.u32 [#allocation3], 4
      %s30 = int_to_ptr.vmem [resolvable:$true] %s29
      %35 = dma.hbm_to_vmem [thread:$0]  %s4, 36864, %s30, [#allocation4], 128, 128, 8
    $region21: #{game_state_model.1} parent=1 // pred_fallthru
      _
    // Predicated region
    $region22: #{game_state_model.1} parent=1 // pred_check
      _
    $region23: #{game_state_model.1} parent=1 // pred_check_branch
      %37 = sbr.rel (0) target = $region25
    $region24: #{game_state_model.1} parent=1 // pred_region
      _
    $region25: #{game_state_model.1} parent=1 // pred_fallthru
      _
    // Predicated region
    $region26: #{game_state_model.1} parent=1 // pred_check
      _
    $region27: #{game_state_model.1} parent=1 // pred_check_branch
      %39 = sbr.rel (0) target = $region29
    $region28: #{game_state_model.1} parent=1 // pred_region
      _
    $region29: #{game_state_model.1} parent=1 // pred_fallthru
      _
    // Predicated region
    $region30: #{game_state_model.1} parent=1 // pred_check
      _
    $region31: #{game_state_model.1} parent=1 // pred_check_branch
      %41 = sbr.rel (0) target = $region33
    $region32: #{game_state_model.1} parent=1 // pred_region
      _
    $region33: #{game_state_model.1} parent=1 // pred_fallthru
      _
    // Predicated region
    $region34: #{game_state_model.1} parent=1 // pred_check
      _
    $region35: #{game_state_model.1} parent=1 // pred_check_branch
      %43 = sbr.rel (0) target = $region37
    $region36: #{game_state_model.1} parent=1 // pred_region
      %44 = dma.done [#allocation4], 36864
    $region37: #{game_state_model.1} parent=1 // pred_fallthru
      _
    %v46 = vld [vmem:[%s0] sm:$0xf]
    %v47 = vld [vmem:[%s0 + $0x4] sm:$0xf]
    %v48 = vld [vmem:[%s0 + $0x8] sm:$0xf]
    %v49 = vld [vmem:[%s0 + $0xc] sm:$0xf]
    %v50 = vld [vmem:[%s0 + $0x10] sm:$0xf]
    %v51 = vld [vmem:[%s0 + $0x14] sm:$0xf]
    %v52 = vld [vmem:[%s0 + $0x18] sm:$0xf]
    %v53 = vld [vmem:[%s0 + $0x1c] sm:$0xf]
    %v54 = vld [vmem:[%s0 + $0x20] sm:$0xf]
    %v55 = vld [vmem:[%s0 + $0x24] sm:$0xf]
    %v56 = vld [vmem:[%s0 + $0x28] sm:$0xf]
    %v57 = vld [vmem:[%s0 + $0x2c] sm:$0xf]
    %v58 = vld [vmem:[%s0 + $0x30] sm:$0xf]
    %v59 = vld [vmem:[%s0 + $0x34] sm:$0xf]
    %v60 = vld [vmem:[%s0 + $0x38] sm:$0xf]
    %v61 = vld [vmem:[%s0 + $0x3c] sm:$0xf]
    %v62 = vld [vmem:[%s0 + $0x40] sm:$0xf]
    %v63 = vld [vmem:[%s0 + $0x44] sm:$0xf]
    %v64 = vld [vmem:[%s0 + $0x48] sm:$0xf]
    %v65 = vld [vmem:[%s0 + $0x4c] sm:$0xf]
    %v66 = vld [vmem:[%s0 + $0x50] sm:$0xf]
    %v67 = vld [vmem:[%s0 + $0x54] sm:$0xf]
    %v68 = vld [vmem:[%s0 + $0x58] sm:$0xf]
    %v69 = vld [vmem:[%s0 + $0x5c] sm:$0xf]
    %v70 = vld [vmem:[%s0 + $0x60] sm:$0xf]
    %v71 = vld [vmem:[%s0 + $0x64] sm:$0xf]
    %v72 = vld [vmem:[%s0 + $0x68] sm:$0xf]
    %v73 = vld [vmem:[%s0 + $0x6c] sm:$0xf]
    %v74 = vld [vmem:[%s0 + $0x70] sm:$0xf]
    %v75 = vld [vmem:[%s0 + $0x74] sm:$0xf]
    %v76 = vld [vmem:[%s0 + $0x78] sm:$0xf]
    %v77 = vld [vmem:[%s0 + $0x7c] sm:$0xf]
    %v78 = vld [vmem:[%s0 + $0x80] sm:$0xf]
    %v79 = vld [vmem:[%s0 + $0x84] sm:$0xf]
    %v80 = vld [vmem:[%s0 + $0x88] sm:$0xf]
    %v81 = vld [vmem:[%s0 + $0x8c] sm:$0xf]
    %v82 = vld [vmem:[%s0 + $0x90] sm:$0xf]
    %v83 = vld [vmem:[%s0 + $0x94] sm:$0xf]
    %v84 = vld [vmem:[%s0 + $0x98] sm:$0xf]
    %v85 = vld [vmem:[%s0 + $0x9c] sm:$0xf]
    %v86 = vld [vmem:[%s0 + $0xa0] sm:$0xf]
    %v87 = vld [vmem:[%s0 + $0xa4] sm:$0xf]
    %v88 = vld [vmem:[%s0 + $0xa8] sm:$0xf]
    %v89 = vld [vmem:[%s0 + $0xac] sm:$0xf]
    %v90 = vld [vmem:[%s0 + $0xb0] sm:$0xf]
    %v91 = vld [vmem:[%s0 + $0xb4] sm:$0xf]
    %v92 = vld [vmem:[%s0 + $0xb8] sm:$0xf]
    %v93 = vld [vmem:[%s0 + $0xbc] sm:$0xf]
    %v94 = vld [vmem:[%s0 + $0xc0] sm:$0xf]
    %v95 = vld [vmem:[%s0 + $0xc4] sm:$0xf]
    %v96 = vld [vmem:[%s0 + $0xc8] sm:$0xf]
    %v97 = vld [vmem:[%s0 + $0xcc] sm:$0xf]
    %v98 = vld [vmem:[%s0 + $0xd0] sm:$0xf]
    %v99 = vld [vmem:[%s0 + $0xd4] sm:$0xf]
    %v100 = vld [vmem:[%s0 + $0xd8] sm:$0xf]
    %v101 = vld [vmem:[%s0 + $0xdc] sm:$0xf]
    %v102 = vld [vmem:[%s0 + $0xe0] sm:$0xf]
    %v103 = vld [vmem:[%s0 + $0xe4] sm:$0xf]
    %v104 = vld [vmem:[%s0 + $0xe8] sm:$0xf]
    %v105 = vld [vmem:[%s0 + $0xec] sm:$0xf]
    %v106 = vld [vmem:[%s0 + $0xf0] sm:$0xf]
    %v107 = vld [vmem:[%s0 + $0xf4] sm:$0xf]
    %v108 = vld [vmem:[%s0 + $0xf8] sm:$0xf]
    %v109 = vld [vmem:[%s0 + $0xfc] sm:$0xf]
    %v110 = vld [vmem:[%s1] sm:$0xff]
    %v111 = vld [vmem:[%s1 + $0x8] sm:$0xff]
    %v112 = vld [vmem:[%s1 + $0x10] sm:$0xff]
    %v113 = vld [vmem:[%s1 + $0x18] sm:$0xff]
    %v114 = vld [vmem:[%s1 + $0x20] sm:$0xff]
    %v115 = vld [vmem:[%s1 + $0x28] sm:$0xff]
    %v116 = vld [vmem:[%s1 + $0x30] sm:$0xff]
    %v117 = vld [vmem:[%s1 + $0x38] sm:$0xff]
    %v118 = vld [vmem:[%s1 + $0x40] sm:$0xff]
    %v119 = vld [vmem:[%s1 + $0x48] sm:$0xff]
    %v120 = vld [vmem:[%s1 + $0x50] sm:$0xff]
    %v121 = vld [vmem:[%s1 + $0x58] sm:$0xff]
    %v122 = vld [vmem:[%s1 + $0x60] sm:$0xff]
    %v123 = vld [vmem:[%s1 + $0x68] sm:$0xff]
    %v124 = vld [vmem:[%s1 + $0x70] sm:$0xff]
    %v125 = vld [vmem:[%s1 + $0x78] sm:$0xff]
    %v126 = vld [vmem:[%s2] sm:$0x3]
    %v128 = vlaneseq
    %v129 = vshrl.u32 %v128, 7
    %v130 = vsub.s32 0, %v129
    %v131 = vrot.slane %v126, %v130
    %v132 = vlaneseq
    %v133 = vshrl.u32 %v132, 7
    %v134 = vsub.s32 1, %v133
    %v135 = vrot.slane %v126, %v134
    %v202 = vunpack.c.l.b16 %v46
    %v203 = vunpack.c.l.b16 %v47
    %v204 = vunpack.c.l.b16 %v48
    %v205 = vunpack.c.l.b16 %v49
    %v206 = vunpack.c.l.b16 %v50
    %v207 = vunpack.c.l.b16 %v51
    %v208 = vunpack.c.l.b16 %v52
    %v209 = vunpack.c.l.b16 %v53
    %v210 = vunpack.c.l.b16 %v54
    %v211 = vunpack.c.l.b16 %v55
    %v212 = vunpack.c.l.b16 %v56
    %v213 = vunpack.c.l.b16 %v57
    %v214 = vunpack.c.l.b16 %v58
    %v215 = vunpack.c.l.b16 %v59
    %v216 = vunpack.c.l.b16 %v60
    %v217 = vunpack.c.l.b16 %v61
    %v218 = vunpack.c.l.b16 %v62
    %v219 = vunpack.c.l.b16 %v63
    %v220 = vunpack.c.l.b16 %v64
    %v221 = vunpack.c.l.b16 %v65
    %v222 = vunpack.c.l.b16 %v66
    %v223 = vunpack.c.l.b16 %v67
    %v224 = vunpack.c.l.b16 %v68
    %v225 = vunpack.c.l.b16 %v69
    %v226 = vunpack.c.l.b16 %v70
    %v227 = vunpack.c.l.b16 %v71
    %v228 = vunpack.c.l.b16 %v72
    %v229 = vunpack.c.l.b16 %v73
    %v230 = vunpack.c.l.b16 %v74
    %v231 = vunpack.c.l.b16 %v75
    %v232 = vunpack.c.l.b16 %v76
    %v233 = vunpack.c.l.b16 %v77
    %v234 = vunpack.c.l.b16 %v78
    %v235 = vunpack.c.l.b16 %v79
    %v236 = vunpack.c.l.b16 %v80
    %v237 = vunpack.c.l.b16 %v81
    %v238 = vunpack.c.l.b16 %v82
    %v239 = vunpack.c.l.b16 %v83
    %v240 = vunpack.c.l.b16 %v84
    %v241 = vunpack.c.l.b16 %v85
    %v242 = vunpack.c.l.b16 %v86
    %v243 = vunpack.c.l.b16 %v87
    %v244 = vunpack.c.l.b16 %v88
    %v245 = vunpack.c.l.b16 %v89
    %v246 = vunpack.c.l.b16 %v90
    %v247 = vunpack.c.l.b16 %v91
    %v248 = vunpack.c.l.b16 %v92
    %v249 = vunpack.c.l.b16 %v93
    %v250 = vunpack.c.l.b16 %v94
    %v251 = vunpack.c.l.b16 %v95
    %v252 = vunpack.c.l.b16 %v96
    %v253 = vunpack.c.l.b16 %v97
    %v254 = vunpack.c.l.b16 %v98
    %v255 = vunpack.c.l.b16 %v99
    %v256 = vunpack.c.l.b16 %v100
    %v257 = vunpack.c.l.b16 %v101
    %v258 = vunpack.c.l.b16 %v102
    %v259 = vunpack.c.l.b16 %v103
    %v260 = vunpack.c.l.b16 %v104
    %v261 = vunpack.c.l.b16 %v105
    %v262 = vunpack.c.l.b16 %v106
    %v263 = vunpack.c.l.b16 %v107
    %v264 = vunpack.c.l.b16 %v108
    %v265 = vunpack.c.l.b16 %v109
    %v266 = vpack.c.b16 %v203, %v202
    %v267 = vpack.c.b16 %v205, %v204
    %v268 = vpack.c.b16 %v207, %v206
    %v269 = vpack.c.b16 %v209, %v208
    %v270 = vpack.c.b16 %v211, %v210
    %v271 = vpack.c.b16 %v213, %v212
    %v272 = vpack.c.b16 %v215, %v214
    %v273 = vpack.c.b16 %v217, %v216
    %v274 = vpack.c.b16 %v219, %v218
    %v275 = vpack.c.b16 %v221, %v220
    %v276 = vpack.c.b16 %v223, %v222
    %v277 = vpack.c.b16 %v225, %v224
    %v278 = vpack.c.b16 %v227, %v226
    %v279 = vpack.c.b16 %v229, %v228
    %v280 = vpack.c.b16 %v231, %v230
    %v281 = vpack.c.b16 %v233, %v232
    %v282 = vpack.c.b16 %v235, %v234
    %v283 = vpack.c.b16 %v237, %v236
    %v284 = vpack.c.b16 %v239, %v238
    %v285 = vpack.c.b16 %v241, %v240
    %v286 = vpack.c.b16 %v243, %v242
    %v287 = vpack.c.b16 %v245, %v244
    %v288 = vpack.c.b16 %v247, %v246
    %v289 = vpack.c.b16 %v249, %v248
    %v290 = vpack.c.b16 %v251, %v250
    %v291 = vpack.c.b16 %v253, %v252
    %v292 = vpack.c.b16 %v255, %v254
    %v293 = vpack.c.b16 %v257, %v256
    %v294 = vpack.c.b16 %v259, %v258
    %v295 = vpack.c.b16 %v261, %v260
    %v296 = vpack.c.b16 %v263, %v262
    %v297 = vpack.c.b16 %v265, %v264
    %v346 = vunpack.c.l.b16 %v110
    %v347 = vunpack.c.h.b16 %v110
    %v348 = vunpack.c.l.b16 %v111
    %v349 = vunpack.c.h.b16 %v111
    %v350 = vunpack.c.l.b16 %v112
    %v351 = vunpack.c.h.b16 %v112
    %v352 = vunpack.c.l.b16 %v113
    %v353 = vunpack.c.h.b16 %v113
    %v354 = vunpack.c.l.b16 %v114
    %v355 = vunpack.c.h.b16 %v114
    %v356 = vunpack.c.l.b16 %v115
    %v357 = vunpack.c.h.b16 %v115
    %v358 = vunpack.c.l.b16 %v116
    %v359 = vunpack.c.h.b16 %v116
    %v360 = vunpack.c.l.b16 %v117
    %v361 = vunpack.c.h.b16 %v117
    %v362 = vunpack.c.l.b16 %v118
    %v363 = vunpack.c.h.b16 %v118
    %v364 = vunpack.c.l.b16 %v119
    %v365 = vunpack.c.h.b16 %v119
    %v366 = vunpack.c.l.b16 %v120
    %v367 = vunpack.c.h.b16 %v120
    %v368 = vunpack.c.l.b16 %v121
    %v369 = vunpack.c.h.b16 %v121
    %v370 = vunpack.c.l.b16 %v122
    %v371 = vunpack.c.h.b16 %v122
    %v372 = vunpack.c.l.b16 %v123
    %v373 = vunpack.c.h.b16 %v123
    %v374 = vunpack.c.l.b16 %v124
    %v375 = vunpack.c.h.b16 %v124
    %v376 = vunpack.c.l.b16 %v125
    %v377 = vunpack.c.h.b16 %v125
    %v378 = vpack.c.b16 %v348, %v346
    %v379 = vpack.c.b16 %v349, %v347
    %v380 = vpack.c.b16 %v352, %v350
    %v381 = vpack.c.b16 %v353, %v351
    %v382 = vpack.c.b16 %v356, %v354
    %v383 = vpack.c.b16 %v357, %v355
    %v384 = vpack.c.b16 %v360, %v358
    %v385 = vpack.c.b16 %v361, %v359
    %v386 = vpack.c.b16 %v364, %v362
    %v387 = vpack.c.b16 %v365, %v363
    %v388 = vpack.c.b16 %v368, %v366
    %v389 = vpack.c.b16 %v369, %v367
    %v390 = vpack.c.b16 %v372, %v370
    %v391 = vpack.c.b16 %v373, %v371
    %v392 = vpack.c.b16 %v376, %v374
    %v393 = vpack.c.b16 %v377, %v375
    %410 = vmatprep.subr.bf16.mxu0 %v379
    %411 = vmatpush1.bf16.msra.mxu0 %v378
    %412 = vmatprep.subr.bf16.mxu0 %v381
    %413 = vmatpush1.bf16.msra.mxu0 %v380
    %414 = vmatprep.subr.bf16.mxu0 %v383
    %415 = vmatpush1.bf16.msra.mxu0 %v382
    %416 = vmatprep.subr.bf16.mxu0 %v385
    %417 = vmatpush1.bf16.msra.mxu0 %v384
    %418 = vmatprep.subr.bf16.mxu0 %v387
    %419 = vmatpush1.bf16.msra.mxu0 %v386
    %420 = vmatprep.subr.bf16.mxu0 %v389
    %421 = vmatpush1.bf16.msra.mxu0 %v388
    %422 = vmatprep.subr.bf16.mxu0 %v391
    %423 = vmatpush1.bf16.msra.mxu0 %v390
    %424 = vmatprep.subr.bf16.mxu0 %v393
    %425 = vmatpush1.bf16.msra.mxu0 %v392
    %426 = vmatprep.subr.bf16.mxu0 0
    %427 = vmatpush1.bf16.msra.mxu0 0
    %428 = vmatprep.subr.bf16.mxu0 0
    %429 = vmatpush1.bf16.msra.mxu0 0
    %430 = vmatprep.subr.bf16.mxu0 0
    %431 = vmatpush1.bf16.msra.mxu0 0
    %432 = vmatprep.subr.bf16.mxu0 0
    %433 = vmatpush1.bf16.msra.mxu0 0
    %434 = vmatprep.subr.bf16.mxu0 0
    %435 = vmatpush1.bf16.msra.mxu0 0
    %436 = vmatprep.subr.bf16.mxu0 0
    %437 = vmatpush1.bf16.msra.mxu0 0
    %438 = vmatprep.subr.bf16.mxu0 0
    %439 = vmatpush1.bf16.msra.mxu0 0
    %440 = vmatprep.subr.bf16.mxu0 0
    %441 = vmatpush1.bf16.msra.mxu0 0
    %442 = vmatprep.mubr.bf16.mxu0 0
    %443 = vmatmul.mubr.bf16.gmra.mrb[0].mxu0 %v266
    %v444 = vpop.f32.mrb[0].mxu0
    %v445 = vadd.f32 %v131, %v444
    %v446 = vpop.f32.mrb[0].mxu0
    %v447 = vadd.f32 %v135, %v446
    %v448 = vpop.f32.mrb[0].mxu0
    %v449 = vadd.f32 %v131, %v448
    %v450 = vpop.f32.mrb[0].mxu0
    %v451 = vadd.f32 %v135, %v450
    %452 = vmatprep.mubr.bf16.mxu0 0
    %453 = vmatmul.mubr.bf16.gmra.mrb[0].mxu0 %v267
    %v454 = vpop.f32.mrb[0].mxu0
    %v455 = vadd.f32 %v131, %v454
    %v456 = vpop.f32.mrb[0].mxu0
    %v457 = vadd.f32 %v135, %v456
    %v458 = vpop.f32.mrb[0].mxu0
    %v459 = vadd.f32 %v131, %v458
    %v460 = vpop.f32.mrb[0].mxu0
    %v461 = vadd.f32 %v135, %v460
    %462 = vmatprep.mubr.bf16.mxu0 0
    %463 = vmatmul.mubr.bf16.gmra.mrb[0].mxu0 %v268
    %v464 = vpop.f32.mrb[0].mxu0
    %v465 = vadd.f32 %v131, %v464
    %v466 = vpop.f32.mrb[0].mxu0
    %v467 = vadd.f32 %v135, %v466
    %v468 = vpop.f32.mrb[0].mxu0
    %v469 = vadd.f32 %v131, %v468
    %v470 = vpop.f32.mrb[0].mxu0
    %v471 = vadd.f32 %v135, %v470
    %472 = vmatprep.mubr.bf16.mxu0 0
    %473 = vmatmul.mubr.bf16.gmra.mrb[0].mxu0 %v269
    %v474 = vpop.f32.mrb[0].mxu0
    %v475 = vadd.f32 %v131, %v474
    %v476 = vpop.f32.mrb[0].mxu0
    %v477 = vadd.f32 %v135, %v476
    %v478 = vpop.f32.mrb[0].mxu0
    %v479 = vadd.f32 %v131, %v478
    %v480 = vpop.f32.mrb[0].mxu0
    %v481 = vadd.f32 %v135, %v480
    %482 = vmatprep.mubr.bf16.mxu0 0
    %483 = vmatmul.mubr.bf16.gmra.mrb[0].mxu0 %v270
    %v484 = vpop.f32.mrb[0].mxu0
    %v485 = vadd.f32 %v131, %v484
    %v486 = vpop.f32.mrb[0].mxu0
    %v487 = vadd.f32 %v135, %v486
    %v488 = vpop.f32.mrb[0].mxu0
    %v489 = vadd.f32 %v131, %v488
    %v490 = vpop.f32.mrb[0].mxu0
    %v491 = vadd.f32 %v135, %v490
    %492 = vmatprep.mubr.bf16.mxu0 0
    %493 = vmatmul.mubr.bf16.gmra.mrb[0].mxu0 %v271
    %v494 = vpop.f32.mrb[0].mxu0
    %v495 = vadd.f32 %v131, %v494
    %v496 = vpop.f32.mrb[0].mxu0
    %v497 = vadd.f32 %v135, %v496
    %v498 = vpop.f32.mrb[0].mxu0
    %v499 = vadd.f32 %v131, %v498
    %v500 = vpop.f32.mrb[0].mxu0
    %v501 = vadd.f32 %v135, %v500
    %502 = vmatprep.mubr.bf16.mxu0 0
    %503 = vmatmul.mubr.bf16.gmra.mrb[0].mxu0 %v272
    %v504 = vpop.f32.mrb[0].mxu0
    %v505 = vadd.f32 %v131, %v504
    %v506 = vpop.f32.mrb[0].mxu0
    %v507 = vadd.f32 %v135, %v506
    %v508 = vpop.f32.mrb[0].mxu0
    %v509 = vadd.f32 %v131, %v508
    %v510 = vpop.f32.mrb[0].mxu0
    %v511 = vadd.f32 %v135, %v510
    %512 = vmatprep.mubr.bf16.mxu0 0
    %513 = vmatmul.mubr.bf16.gmra.mrb[0].mxu0 %v273
    %v514 = vpop.f32.mrb[0].mxu0
    %v515 = vadd.f32 %v131, %v514
    %v516 = vpop.f32.mrb[0].mxu0
    %v517 = vadd.f32 %v135, %v516
    %v518 = vpop.f32.mrb[0].mxu0
    %v519 = vadd.f32 %v131, %v518
    %v520 = vpop.f32.mrb[0].mxu0
    %v521 = vadd.f32 %v135, %v520
    %522 = vmatprep.mubr.bf16.mxu0 0
    %523 = vmatmul.mubr.bf16.gmra.mrb[0].mxu0 %v274
    %v524 = vpop.f32.mrb[0].mxu0
    %v525 = vadd.f32 %v131, %v524
    %v526 = vpop.f32.mrb[0].mxu0
    %v527 = vadd.f32 %v135, %v526
    %v528 = vpop.f32.mrb[0].mxu0
    %v529 = vadd.f32 %v131, %v528
    %v530 = vpop.f32.mrb[0].mxu0
    %v531 = vadd.f32 %v135, %v530
    %532 = vmatprep.mubr.bf16.mxu0 0
    %533 = vmatmul.mubr.bf16.gmra.mrb[0].mxu0 %v275
    %v534 = vpop.f32.mrb[0].mxu0
    %v535 = vadd.f32 %v131, %v534
    %v536 = vpop.f32.mrb[0].mxu0
    %v537 = vadd.f32 %v135, %v536
    %v538 = vpop.f32.mrb[0].mxu0
    %v539 = vadd.f32 %v131, %v538
    %v540 = vpop.f32.mrb[0].mxu0
    %v541 = vadd.f32 %v135, %v540
    %542 = vmatprep.mubr.bf16.mxu0 0
    %543 = vmatmul.mubr.bf16.gmra.mrb[0].mxu0 %v276
    %v544 = vpop.f32.mrb[0].mxu0
    %v545 = vadd.f32 %v131, %v544
    %v546 = vpop.f32.mrb[0].mxu0
    %v547 = vadd.f32 %v135, %v546
    %v548 = vpop.f32.mrb[0].mxu0
    %v549 = vadd.f32 %v131, %v548
    %v550 = vpop.f32.mrb[0].mxu0
    %v551 = vadd.f32 %v135, %v550
    %552 = vmatprep.mubr.bf16.mxu0 0
    %553 = vmatmul.mubr.bf16.gmra.mrb[0].mxu0 %v277
    %v554 = vpop.f32.mrb[0].mxu0
    %v555 = vadd.f32 %v131, %v554
    %v556 = vpop.f32.mrb[0].mxu0
    %v557 = vadd.f32 %v135, %v556
    %v558 = vpop.f32.mrb[0].mxu0
    %v559 = vadd.f32 %v131, %v558
    %v560 = vpop.f32.mrb[0].mxu0
    %v561 = vadd.f32 %v135, %v560
    %562 = vmatprep.mubr.bf16.mxu0 0
    %563 = vmatmul.mubr.bf16.gmra.mrb[0].mxu0 %v278
    %v564 = vpop.f32.mrb[0].mxu0
    %v565 = vadd.f32 %v131, %v564
    %v566 = vpop.f32.mrb[0].mxu0
    %v567 = vadd.f32 %v135, %v566
    %v568 = vpop.f32.mrb[0].mxu0
    %v569 = vadd.f32 %v131, %v568
    %v570 = vpop.f32.mrb[0].mxu0
    %v571 = vadd.f32 %v135, %v570
    %572 = vmatprep.mubr.bf16.mxu0 0
    %573 = vmatmul.mubr.bf16.gmra.mrb[0].mxu0 %v279
    %v574 = vpop.f32.mrb[0].mxu0
    %v575 = vadd.f32 %v131, %v574
    %v576 = vpop.f32.mrb[0].mxu0
    %v577 = vadd.f32 %v135, %v576
    %v578 = vpop.f32.mrb[0].mxu0
    %v579 = vadd.f32 %v131, %v578
    %v580 = vpop.f32.mrb[0].mxu0
    %v581 = vadd.f32 %v135, %v580
    %582 = vmatprep.mubr.bf16.mxu0 0
    %583 = vmatmul.mubr.bf16.gmra.mrb[0].mxu0 %v280
    %v584 = vpop.f32.mrb[0].mxu0
    %v585 = vadd.f32 %v131, %v584
    %v586 = vpop.f32.mrb[0].mxu0
    %v587 = vadd.f32 %v135, %v586
    %v588 = vpop.f32.mrb[0].mxu0
    %v589 = vadd.f32 %v131, %v588
    %v590 = vpop.f32.mrb[0].mxu0
    %v591 = vadd.f32 %v135, %v590
    %592 = vmatprep.mubr.bf16.mxu0 0
    %593 = vmatmul.mubr.bf16.gmra.mrb[0].mxu0 %v281
    %v594 = vpop.f32.mrb[0].mxu0
    %v595 = vadd.f32 %v131, %v594
    %v596 = vpop.f32.mrb[0].mxu0
    %v597 = vadd.f32 %v135, %v596
    %v598 = vpop.f32.mrb[0].mxu0
    %v599 = vadd.f32 %v131, %v598
    %v600 = vpop.f32.mrb[0].mxu0
    %v601 = vadd.f32 %v135, %v600
    %602 = vmatprep.mubr.bf16.mxu0 0
    %603 = vmatmul.mubr.bf16.gmra.mrb[0].mxu0 %v282
    %v604 = vpop.f32.mrb[0].mxu0
    %v605 = vadd.f32 %v131, %v604
    %v606 = vpop.f32.mrb[0].mxu0
    %v607 = vadd.f32 %v135, %v606
    %v608 = vpop.f32.mrb[0].mxu0
    %v609 = vadd.f32 %v131, %v608
    %v610 = vpop.f32.mrb[0].mxu0
    %v611 = vadd.f32 %v135, %v610
    %612 = vmatprep.mubr.bf16.mxu0 0
    %613 = vmatmul.mubr.bf16.gmra.mrb[0].mxu0 %v283
    %v614 = vpop.f32.mrb[0].mxu0
    %v615 = vadd.f32 %v131, %v614
    %v616 = vpop.f32.mrb[0].mxu0
    %v617 = vadd.f32 %v135, %v616
    %v618 = vpop.f32.mrb[0].mxu0
    %v619 = vadd.f32 %v131, %v618
    %v620 = vpop.f32.mrb[0].mxu0
    %v621 = vadd.f32 %v135, %v620
    %622 = vmatprep.mubr.bf16.mxu0 0
    %623 = vmatmul.mubr.bf16.gmra.mrb[0].mxu0 %v284
    %v624 = vpop.f32.mrb[0].mxu0
    %v625 = vadd.f32 %v131, %v624
    %v626 = vpop.f32.mrb[0].mxu0
    %v627 = vadd.f32 %v135, %v626
    %v628 = vpop.f32.mrb[0].mxu0
    %v629 = vadd.f32 %v131, %v628
    %v630 = vpop.f32.mrb[0].mxu0
    %v631 = vadd.f32 %v135, %v630
    %632 = vmatprep.mubr.bf16.mxu0 0
    %633 = vmatmul.mubr.bf16.gmra.mrb[0].mxu0 %v285
    %v634 = vpop.f32.mrb[0].mxu0
    %v635 = vadd.f32 %v131, %v634
    %v636 = vpop.f32.mrb[0].mxu0
    %v637 = vadd.f32 %v135, %v636
    %v638 = vpop.f32.mrb[0].mxu0
    %v639 = vadd.f32 %v131, %v638
    %v640 = vpop.f32.mrb[0].mxu0
    %v641 = vadd.f32 %v135, %v640
    %642 = vmatprep.mubr.bf16.mxu0 0
    %643 = vmatmul.mubr.bf16.gmra.mrb[0].mxu0 %v286
    %v644 = vpop.f32.mrb[0].mxu0
    %v645 = vadd.f32 %v131, %v644
    %v646 = vpop.f32.mrb[0].mxu0
    %v647 = vadd.f32 %v135, %v646
    %v648 = vpop.f32.mrb[0].mxu0
    %v649 = vadd.f32 %v131, %v648
    %v650 = vpop.f32.mrb[0].mxu0
    %v651 = vadd.f32 %v135, %v650
    %652 = vmatprep.mubr.bf16.mxu0 0
    %653 = vmatmul.mubr.bf16.gmra.mrb[0].mxu0 %v287
    %v654 = vpop.f32.mrb[0].mxu0
    %v655 = vadd.f32 %v131, %v654
    %v656 = vpop.f32.mrb[0].mxu0
    %v657 = vadd.f32 %v135, %v656
    %v658 = vpop.f32.mrb[0].mxu0
    %v659 = vadd.f32 %v131, %v658
    %v660 = vpop.f32.mrb[0].mxu0
    %v661 = vadd.f32 %v135, %v660
    %662 = vmatprep.mubr.bf16.mxu0 0
    %663 = vmatmul.mubr.bf16.gmra.mrb[0].mxu0 %v288
    %v664 = vpop.f32.mrb[0].mxu0
    %v665 = vadd.f32 %v131, %v664
    %v666 = vpop.f32.mrb[0].mxu0
    %v667 = vadd.f32 %v135, %v666
    %v668 = vpop.f32.mrb[0].mxu0
    %v669 = vadd.f32 %v131, %v668
    %v670 = vpop.f32.mrb[0].mxu0
    %v671 = vadd.f32 %v135, %v670
    %672 = vmatprep.mubr.bf16.mxu0 0
    %673 = vmatmul.mubr.bf16.gmra.mrb[0].mxu0 %v289
    %v674 = vpop.f32.mrb[0].mxu0
    %v675 = vadd.f32 %v131, %v674
    %v676 = vpop.f32.mrb[0].mxu0
    %v677 = vadd.f32 %v135, %v676
    %v678 = vpop.f32.mrb[0].mxu0
    %v679 = vadd.f32 %v131, %v678
    %v680 = vpop.f32.mrb[0].mxu0
    %v681 = vadd.f32 %v135, %v680
    %682 = vmatprep.mubr.bf16.mxu0 0
    %683 = vmatmul.mubr.bf16.gmra.mrb[0].mxu0 %v290
    %v684 = vpop.f32.mrb[0].mxu0
    %v685 = vadd.f32 %v131, %v684
    %v686 = vpop.f32.mrb[0].mxu0
    %v687 = vadd.f32 %v135, %v686
    %v688 = vpop.f32.mrb[0].mxu0
    %v689 = vadd.f32 %v131, %v688
    %v690 = vpop.f32.mrb[0].mxu0
    %v691 = vadd.f32 %v135, %v690
    %692 = vmatprep.mubr.bf16.mxu0 0
    %693 = vmatmul.mubr.bf16.gmra.mrb[0].mxu0 %v291
    %v694 = vpop.f32.mrb[0].mxu0
    %v695 = vadd.f32 %v131, %v694
    %v696 = vpop.f32.mrb[0].mxu0
    %v697 = vadd.f32 %v135, %v696
    %v698 = vpop.f32.mrb[0].mxu0
    %v699 = vadd.f32 %v131, %v698
    %v700 = vpop.f32.mrb[0].mxu0
    %v701 = vadd.f32 %v135, %v700
    %702 = vmatprep.mubr.bf16.mxu0 0
    %703 = vmatmul.mubr.bf16.gmra.mrb[0].mxu0 %v292
    %v704 = vpop.f32.mrb[0].mxu0
    %v705 = vadd.f32 %v131, %v704
    %v706 = vpop.f32.mrb[0].mxu0
    %v707 = vadd.f32 %v135, %v706
    %v708 = vpop.f32.mrb[0].mxu0
    %v709 = vadd.f32 %v131, %v708
    %v710 = vpop.f32.mrb[0].mxu0
    %v711 = vadd.f32 %v135, %v710
    %712 = vmatprep.mubr.bf16.mxu0 0
    %713 = vmatmul.mubr.bf16.gmra.mrb[0].mxu0 %v293
    %v714 = vpop.f32.mrb[0].mxu0
    %v715 = vadd.f32 %v131, %v714
    %v716 = vpop.f32.mrb[0].mxu0
    %v717 = vadd.f32 %v135, %v716
    %v718 = vpop.f32.mrb[0].mxu0
    %v719 = vadd.f32 %v131, %v718
    %v720 = vpop.f32.mrb[0].mxu0
    %v721 = vadd.f32 %v135, %v720
    %722 = vmatprep.mubr.bf16.mxu0 0
    %723 = vmatmul.mubr.bf16.gmra.mrb[0].mxu0 %v294
    %v724 = vpop.f32.mrb[0].mxu0
    %v725 = vadd.f32 %v131, %v724
    %v726 = vpop.f32.mrb[0].mxu0
    %v727 = vadd.f32 %v135, %v726
    %v728 = vpop.f32.mrb[0].mxu0
    %v729 = vadd.f32 %v131, %v728
    %v730 = vpop.f32.mrb[0].mxu0
    %v731 = vadd.f32 %v135, %v730
    %732 = vmatprep.mubr.bf16.mxu0 0
    %733 = vmatmul.mubr.bf16.gmra.mrb[0].mxu0 %v295
    %v734 = vpop.f32.mrb[0].mxu0
    %v735 = vadd.f32 %v131, %v734
    %v736 = vpop.f32.mrb[0].mxu0
    %v737 = vadd.f32 %v135, %v736
    %v738 = vpop.f32.mrb[0].mxu0
    %v739 = vadd.f32 %v131, %v738
    %v740 = vpop.f32.mrb[0].mxu0
    %v741 = vadd.f32 %v135, %v740
    %742 = vmatprep.mubr.bf16.mxu0 0
    %743 = vmatmul.mubr.bf16.gmra.mrb[0].mxu0 %v296
    %v744 = vpop.f32.mrb[0].mxu0
    %v745 = vadd.f32 %v131, %v744
    %v746 = vpop.f32.mrb[0].mxu0
    %v747 = vadd.f32 %v135, %v746
    %v748 = vpop.f32.mrb[0].mxu0
    %v749 = vadd.f32 %v131, %v748
    %v750 = vpop.f32.mrb[0].mxu0
    %v751 = vadd.f32 %v135, %v750
    %752 = vmatprep.mubr.bf16.mxu0 0
    %753 = vmatmul.mubr.bf16.gmra.mrb[0].mxu0 %v297
    %v754 = vpop.f32.mrb[0].mxu0
    %v755 = vadd.f32 %v131, %v754
    %v756 = vpop.f32.mrb[0].mxu0
    %v757 = vadd.f32 %v135, %v756
    %v758 = vpop.f32.mrb[0].mxu0
    %v759 = vadd.f32 %v131, %v758
    %v760 = vpop.f32.mrb[0].mxu0
    %v761 = vadd.f32 %v135, %v760
    %762 = vdwg.mxu0
    %v763 = vmax.f32 %v445, 0.0
    %v764 = vmax.f32 %v447, 0.0
    %v765 = vmax.f32 %v449, 0.0
    %v766 = vmax.f32 %v451, 0.0
    %v767 = vmax.f32 %v455, 0.0
    %v768 = vmax.f32 %v457, 0.0
    %v769 = vmax.f32 %v459, 0.0
    %v770 = vmax.f32 %v461, 0.0
    %v771 = vmax.f32 %v465, 0.0
    %v772 = vmax.f32 %v467, 0.0
    %v773 = vmax.f32 %v469, 0.0
    %v774 = vmax.f32 %v471, 0.0
    %v775 = vmax.f32 %v475, 0.0
    %v776 = vmax.f32 %v477, 0.0
    %v777 = vmax.f32 %v479, 0.0
    %v778 = vmax.f32 %v481, 0.0
    %v779 = vmax.f32 %v485, 0.0
    %v780 = vmax.f32 %v487, 0.0
    %v781 = vmax.f32 %v489, 0.0
    %v782 = vmax.f32 %v491, 0.0
    %v783 = vmax.f32 %v495, 0.0
    %v784 = vmax.f32 %v497, 0.0
    %v785 = vmax.f32 %v499, 0.0
    %v786 = vmax.f32 %v501, 0.0
    %v787 = vmax.f32 %v505, 0.0
    %v788 = vmax.f32 %v507, 0.0
    %v789 = vmax.f32 %v509, 0.0
    %v790 = vmax.f32 %v511, 0.0
    %v791 = vmax.f32 %v515, 0.0
    %v792 = vmax.f32 %v517, 0.0
    %v793 = vmax.f32 %v519, 0.0
    %v794 = vmax.f32 %v521, 0.0
    %v795 = vmax.f32 %v525, 0.0
    %v796 = vmax.f32 %v527, 0.0
    %v797 = vmax.f32 %v529, 0.0
    %v798 = vmax.f32 %v531, 0.0
    %v799 = vmax.f32 %v535, 0.0
    %v800 = vmax.f32 %v537, 0.0
    %v801 = vmax.f32 %v539, 0.0
    %v802 = vmax.f32 %v541, 0.0
    %v803 = vmax.f32 %v545, 0.0
    %v804 = vmax.f32 %v547, 0.0
    %v805 = vmax.f32 %v549, 0.0
    %v806 = vmax.f32 %v551, 0.0
    %v807 = vmax.f32 %v555, 0.0
    %v808 = vmax.f32 %v557, 0.0
    %v809 = vmax.f32 %v559, 0.0
    %v810 = vmax.f32 %v561, 0.0
    %v811 = vmax.f32 %v565, 0.0
    %v812 = vmax.f32 %v567, 0.0
    %v813 = vmax.f32 %v569, 0.0
    %v814 = vmax.f32 %v571, 0.0
    %v815 = vmax.f32 %v575, 0.0
    %v816 = vmax.f32 %v577, 0.0
    %v817 = vmax.f32 %v579, 0.0
    %v818 = vmax.f32 %v581, 0.0
    %v819 = vmax.f32 %v585, 0.0
    %v820 = vmax.f32 %v587, 0.0
    %v821 = vmax.f32 %v589, 0.0
    %v822 = vmax.f32 %v591, 0.0
    %v823 = vmax.f32 %v595, 0.0
    %v824 = vmax.f32 %v597, 0.0
    %v825 = vmax.f32 %v599, 0.0
    %v826 = vmax.f32 %v601, 0.0
    %v827 = vmax.f32 %v605, 0.0
    %v828 = vmax.f32 %v607, 0.0
    %v829 = vmax.f32 %v609, 0.0
    %v830 = vmax.f32 %v611, 0.0
    %v831 = vmax.f32 %v615, 0.0
    %v832 = vmax.f32 %v617, 0.0
    %v833 = vmax.f32 %v619, 0.0
    %v834 = vmax.f32 %v621, 0.0
    %v835 = vmax.f32 %v625, 0.0
    %v836 = vmax.f32 %v627, 0.0
    %v837 = vmax.f32 %v629, 0.0
    %v838 = vmax.f32 %v631, 0.0
    %v839 = vmax.f32 %v635, 0.0
    %v840 = vmax.f32 %v637, 0.0
    %v841 = vmax.f32 %v639, 0.0
    %v842 = vmax.f32 %v641, 0.0
    %v843 = vmax.f32 %v645, 0.0
    %v844 = vmax.f32 %v647, 0.0
    %v845 = vmax.f32 %v649, 0.0
    %v846 = vmax.f32 %v651, 0.0
    %v847 = vmax.f32 %v655, 0.0
    %v848 = vmax.f32 %v657, 0.0
    %v849 = vmax.f32 %v659, 0.0
    %v850 = vmax.f32 %v661, 0.0
    %v851 = vmax.f32 %v665, 0.0
    %v852 = vmax.f32 %v667, 0.0
    %v853 = vmax.f32 %v669, 0.0
    %v854 = vmax.f32 %v671, 0.0
    %v855 = vmax.f32 %v675, 0.0
    %v856 = vmax.f32 %v677, 0.0
    %v857 = vmax.f32 %v679, 0.0
    %v858 = vmax.f32 %v681, 0.0
    %v859 = vmax.f32 %v685, 0.0
    %v860 = vmax.f32 %v687, 0.0
    %v861 = vmax.f32 %v689, 0.0
    %v862 = vmax.f32 %v691, 0.0
    %v863 = vmax.f32 %v695, 0.0
    %v864 = vmax.f32 %v697, 0.0
    %v865 = vmax.f32 %v699, 0.0
    %v866 = vmax.f32 %v701, 0.0
    %v867 = vmax.f32 %v705, 0.0
    %v868 = vmax.f32 %v707, 0.0
    %v869 = vmax.f32 %v709, 0.0
    %v870 = vmax.f32 %v711, 0.0
    %v871 = vmax.f32 %v715, 0.0
    %v872 = vmax.f32 %v717, 0.0
    %v873 = vmax.f32 %v719, 0.0
    %v874 = vmax.f32 %v721, 0.0
    %v875 = vmax.f32 %v725, 0.0
    %v876 = vmax.f32 %v727, 0.0
    %v877 = vmax.f32 %v729, 0.0
    %v878 = vmax.f32 %v731, 0.0
    %v879 = vmax.f32 %v735, 0.0
    %v880 = vmax.f32 %v737, 0.0
    %v881 = vmax.f32 %v739, 0.0
    %v882 = vmax.f32 %v741, 0.0
    %v883 = vmax.f32 %v745, 0.0
    %v884 = vmax.f32 %v747, 0.0
    %v885 = vmax.f32 %v749, 0.0
    %v886 = vmax.f32 %v751, 0.0
    %v887 = vmax.f32 %v755, 0.0
    %v888 = vmax.f32 %v757, 0.0
    %v889 = vmax.f32 %v759, 0.0
    %v890 = vmax.f32 %v761, 0.0
    %v891 = vpack.c.bf16 %v765, %v763
    %v892 = vpack.c.bf16 %v766, %v764
    %v893 = vpack.c.bf16 %v769, %v767
    %v894 = vpack.c.bf16 %v770, %v768
    %v895 = vpack.c.bf16 %v773, %v771
    %v896 = vpack.c.bf16 %v774, %v772
    %v897 = vpack.c.bf16 %v777, %v775
    %v898 = vpack.c.bf16 %v778, %v776
    %v899 = vpack.c.bf16 %v781, %v779
    %v900 = vpack.c.bf16 %v782, %v780
    %v901 = vpack.c.bf16 %v785, %v783
    %v902 = vpack.c.bf16 %v786, %v784
    %v903 = vpack.c.bf16 %v789, %v787
    %v904 = vpack.c.bf16 %v790, %v788
    %v905 = vpack.c.bf16 %v793, %v791
    %v906 = vpack.c.bf16 %v794, %v792
    %v907 = vpack.c.bf16 %v797, %v795
    %v908 = vpack.c.bf16 %v798, %v796
    %v909 = vpack.c.bf16 %v801, %v799
    %v910 = vpack.c.bf16 %v802, %v800
    %v911 = vpack.c.bf16 %v805, %v803
    %v912 = vpack.c.bf16 %v806, %v804
    %v913 = vpack.c.bf16 %v809, %v807
    %v914 = vpack.c.bf16 %v810, %v808
    %v915 = vpack.c.bf16 %v813, %v811
    %v916 = vpack.c.bf16 %v814, %v812
    %v917 = vpack.c.bf16 %v817, %v815
    %v918 = vpack.c.bf16 %v818, %v816
    %v919 = vpack.c.bf16 %v821, %v819
    %v920 = vpack.c.bf16 %v822, %v820
    %v921 = vpack.c.bf16 %v825, %v823
    %v922 = vpack.c.bf16 %v826, %v824
    %v923 = vpack.c.bf16 %v829, %v827
    %v924 = vpack.c.bf16 %v830, %v828
    %v925 = vpack.c.bf16 %v833, %v831
    %v926 = vpack.c.bf16 %v834, %v832
    %v927 = vpack.c.bf16 %v837, %v835
    %v928 = vpack.c.bf16 %v838, %v836
    %v929 = vpack.c.bf16 %v841, %v839
    %v930 = vpack.c.bf16 %v842, %v840
    %v931 = vpack.c.bf16 %v845, %v843
    %v932 = vpack.c.bf16 %v846, %v844
    %v933 = vpack.c.bf16 %v849, %v847
    %v934 = vpack.c.bf16 %v850, %v848
    %v935 = vpack.c.bf16 %v853, %v851
    %v936 = vpack.c.bf16 %v854, %v852
    %v937 = vpack.c.bf16 %v857, %v855
    %v938 = vpack.c.bf16 %v858, %v856
    %v939 = vpack.c.bf16 %v861, %v859
    %v940 = vpack.c.bf16 %v862, %v860
    %v941 = vpack.c.bf16 %v865, %v863
    %v942 = vpack.c.bf16 %v866, %v864
    %v943 = vpack.c.bf16 %v869, %v867
    %v944 = vpack.c.bf16 %v870, %v868
    %v945 = vpack.c.bf16 %v873, %v871
    %v946 = vpack.c.bf16 %v874, %v872
    %v947 = vpack.c.bf16 %v877, %v875
    %v948 = vpack.c.bf16 %v878, %v876
    %v949 = vpack.c.bf16 %v881, %v879
    %v950 = vpack.c.bf16 %v882, %v880
    %v951 = vpack.c.bf16 %v885, %v883
    %v952 = vpack.c.bf16 %v886, %v884
    %v953 = vpack.c.bf16 %v889, %v887
    %v954 = vpack.c.bf16 %v890, %v888
    %v955 = vld [vmem:[%s3] sm:$0xff]
    %v956 = vld [vmem:[%s3 + $0x8] sm:$0xff]
    %v957 = vld [vmem:[%s3 + $0x10] sm:$0xff]
    %v958 = vld [vmem:[%s3 + $0x18] sm:$0xff]
    %v959 = vld [vmem:[%s3 + $0x20] sm:$0xff]
    %v960 = vld [vmem:[%s3 + $0x28] sm:$0xff]
    %v961 = vld [vmem:[%s3 + $0x30] sm:$0xff]
    %v962 = vld [vmem:[%s3 + $0x38] sm:$0xff]
    %v963 = vld [vmem:[%s3 + $0x40] sm:$0xff]
    %v964 = vld [vmem:[%s3 + $0x48] sm:$0xff]
    %v965 = vld [vmem:[%s3 + $0x50] sm:$0xff]
    %v966 = vld [vmem:[%s3 + $0x58] sm:$0xff]
    %v967 = vld [vmem:[%s3 + $0x60] sm:$0xff]
    %v968 = vld [vmem:[%s3 + $0x68] sm:$0xff]
    %v969 = vld [vmem:[%s3 + $0x70] sm:$0xff]
    %v970 = vld [vmem:[%s3 + $0x78] sm:$0xff]
    %v971 = vld [vmem:[%s3 + $0x80] sm:$0xff]
    %v972 = vld [vmem:[%s3 + $0x88] sm:$0xff]
    %v973 = vld [vmem:[%s3 + $0x90] sm:$0xff]
    %v974 = vld [vmem:[%s3 + $0x98] sm:$0xff]
    %v975 = vld [vmem:[%s3 + $0xa0] sm:$0xff]
    %v976 = vld [vmem:[%s3 + $0xa8] sm:$0xff]
    %v977 = vld [vmem:[%s3 + $0xb0] sm:$0xff]
    %v978 = vld [vmem:[%s3 + $0xb8] sm:$0xff]
    %v979 = vld [vmem:[%s3 + $0xc0] sm:$0xff]
    %v980 = vld [vmem:[%s3 + $0xc8] sm:$0xff]
    %v981 = vld [vmem:[%s3 + $0xd0] sm:$0xff]
    %v982 = vld [vmem:[%s3 + $0xd8] sm:$0xff]
    %v983 = vld [vmem:[%s3 + $0xe0] sm:$0xff]
    %v984 = vld [vmem:[%s3 + $0xe8] sm:$0xff]
    %v985 = vld [vmem:[%s3 + $0xf0] sm:$0xff]
    %v986 = vld [vmem:[%s3 + $0xf8] sm:$0xff]
    %v987 = vld [vmem:[%s3 + $0x100] sm:$0xff]
    %v988 = vld [vmem:[%s3 + $0x108] sm:$0xff]
    %v989 = vld [vmem:[%s3 + $0x110] sm:$0xff]
    %v990 = vld [vmem:[%s3 + $0x118] sm:$0xff]
    %v991 = vld [vmem:[%s3 + $0x120] sm:$0xff]
    %v992 = vld [vmem:[%s3 + $0x128] sm:$0xff]
    %v993 = vld [vmem:[%s3 + $0x130] sm:$0xff]
    %v994 = vld [vmem:[%s3 + $0x138] sm:$0xff]
    %v995 = vld [vmem:[%s3 + $0x140] sm:$0xff]
    %v996 = vld [vmem:[%s3 + $0x148] sm:$0xff]
    %v997 = vld [vmem:[%s3 + $0x150] sm:$0xff]
    %v998 = vld [vmem:[%s3 + $0x158] sm:$0xff]
    %v999 = vld [vmem:[%s3 + $0x160] sm:$0xff]
    %v1000 = vld [vmem:[%s3 + $0x168] sm:$0xff]
    %v1001 = vld [vmem:[%s3 + $0x170] sm:$0xff]
    %v1002 = vld [vmem:[%s3 + $0x178] sm:$0xff]
    %v1003 = vld [vmem:[%s3 + $0x180] sm:$0xff]
    %v1004 = vld [vmem:[%s3 + $0x188] sm:$0xff]
    %v1005 = vld [vmem:[%s3 + $0x190] sm:$0xff]
    %v1006 = vld [vmem:[%s3 + $0x198] sm:$0xff]
    %v1007 = vld [vmem:[%s3 + $0x1a0] sm:$0xff]
    %v1008 = vld [vmem:[%s3 + $0x1a8] sm:$0xff]
    %v1009 = vld [vmem:[%s3 + $0x1b0] sm:$0xff]
    %v1010 = vld [vmem:[%s3 + $0x1b8] sm:$0xff]
    %v1011 = vld [vmem:[%s3 + $0x1c0] sm:$0xff]
    %v1012 = vld [vmem:[%s3 + $0x1c8] sm:$0xff]
    %v1013 = vld [vmem:[%s3 + $0x1d0] sm:$0xff]
    %v1014 = vld [vmem:[%s3 + $0x1d8] sm:$0xff]
    %v1015 = vld [vmem:[%s3 + $0x1e0] sm:$0xff]
    %v1016 = vld [vmem:[%s3 + $0x1e8] sm:$0xff]
    %v1017 = vld [vmem:[%s3 + $0x1f0] sm:$0xff]
    %v1018 = vld [vmem:[%s3 + $0x1f8] sm:$0xff]
    %v1019 = vld [vmem:[%s3 + $0x200] sm:$0xff]
    %v1020 = vld [vmem:[%s3 + $0x208] sm:$0xff]
    %v1021 = vld [vmem:[%s3 + $0x210] sm:$0xff]
    %v1022 = vld [vmem:[%s3 + $0x218] sm:$0xff]
    %v1023 = vld [vmem:[%s3 + $0x220] sm:$0xff]
    %v1024 = vld [vmem:[%s3 + $0x228] sm:$0xff]
    %v1025 = vld [vmem:[%s3 + $0x230] sm:$0xff]
    %v1026 = vld [vmem:[%s3 + $0x238] sm:$0xff]
    %v1027 = vld [vmem:[%s3 + $0x240] sm:$0xff]
    %v1028 = vld [vmem:[%s3 + $0x248] sm:$0xff]
    %v1029 = vld [vmem:[%s3 + $0x250] sm:$0xff]
    %v1030 = vld [vmem:[%s3 + $0x258] sm:$0xff]
    %v1031 = vld [vmem:[%s3 + $0x260] sm:$0xff]
    %v1032 = vld [vmem:[%s3 + $0x268] sm:$0xff]
    %v1033 = vld [vmem:[%s3 + $0x270] sm:$0xff]
    %v1034 = vld [vmem:[%s3 + $0x278] sm:$0xff]
    %v1035 = vld [vmem:[%s3 + $0x280] sm:$0xff]
    %v1036 = vld [vmem:[%s3 + $0x288] sm:$0xff]
    %v1037 = vld [vmem:[%s3 + $0x290] sm:$0xff]
    %v1038 = vld [vmem:[%s3 + $0x298] sm:$0xff]
    %v1039 = vld [vmem:[%s3 + $0x2a0] sm:$0xff]
    %v1040 = vld [vmem:[%s3 + $0x2a8] sm:$0xff]
    %v1041 = vld [vmem:[%s3 + $0x2b0] sm:$0xff]
    %v1042 = vld [vmem:[%s3 + $0x2b8] sm:$0xff]
    %v1043 = vld [vmem:[%s3 + $0x2c0] sm:$0xff]
    %v1044 = vld [vmem:[%s3 + $0x2c8] sm:$0xff]
    %v1045 = vld [vmem:[%s3 + $0x2d0] sm:$0xff]
    %v1046 = vld [vmem:[%s3 + $0x2d8] sm:$0xff]
    %v1047 = vld [vmem:[%s3 + $0x2e0] sm:$0xff]
    %v1048 = vld [vmem:[%s3 + $0x2e8] sm:$0xff]
    %v1049 = vld [vmem:[%s3 + $0x2f0] sm:$0xff]
    %v1050 = vld [vmem:[%s3 + $0x2f8] sm:$0xff]
    %v1051 = vld [vmem:[%s3 + $0x300] sm:$0xff]
    %v1052 = vld [vmem:[%s3 + $0x308] sm:$0xff]
    %v1053 = vld [vmem:[%s3 + $0x310] sm:$0xff]
    %v1054 = vld [vmem:[%s3 + $0x318] sm:$0xff]
    %v1055 = vld [vmem:[%s3 + $0x320] sm:$0xff]
    %v1056 = vld [vmem:[%s3 + $0x328] sm:$0xff]
    %v1057 = vld [vmem:[%s3 + $0x330] sm:$0xff]
    %v1058 = vld [vmem:[%s3 + $0x338] sm:$0xff]
    %v1059 = vld [vmem:[%s3 + $0x340] sm:$0xff]
    %v1060 = vld [vmem:[%s3 + $0x348] sm:$0xff]
    %v1061 = vld [vmem:[%s3 + $0x350] sm:$0xff]
    %v1062 = vld [vmem:[%s3 + $0x358] sm:$0xff]
    %v1063 = vld [vmem:[%s3 + $0x360] sm:$0xff]
    %v1064 = vld [vmem:[%s3 + $0x368] sm:$0xff]
    %v1065 = vld [vmem:[%s3 + $0x370] sm:$0xff]
    %v1066 = vld [vmem:[%s3 + $0x378] sm:$0xff]
    %v1067 = vld [vmem:[%s3 + $0x380] sm:$0xff]
    %v1068 = vld [vmem:[%s3 + $0x388] sm:$0xff]
    %v1069 = vld [vmem:[%s3 + $0x390] sm:$0xff]
    %v1070 = vld [vmem:[%s3 + $0x398] sm:$0xff]
    %v1071 = vld [vmem:[%s3 + $0x3a0] sm:$0xff]
    %v1072 = vld [vmem:[%s3 + $0x3a8] sm:$0xff]
    %v1073 = vld [vmem:[%s3 + $0x3b0] sm:$0xff]
    %v1074 = vld [vmem:[%s3 + $0x3b8] sm:$0xff]
    %v1075 = vld [vmem:[%s3 + $0x3c0] sm:$0xff]
    %v1076 = vld [vmem:[%s3 + $0x3c8] sm:$0xff]
    %v1077 = vld [vmem:[%s3 + $0x3d0] sm:$0xff]
    %v1078 = vld [vmem:[%s3 + $0x3d8] sm:$0xff]
    %v1079 = vld [vmem:[%s3 + $0x3e0] sm:$0xff]
    %v1080 = vld [vmem:[%s3 + $0x3e8] sm:$0xff]
    %v1081 = vld [vmem:[%s3 + $0x3f0] sm:$0xff]
    %v1082 = vld [vmem:[%s3 + $0x3f8] sm:$0xff]
    %v1083 = vld [vmem:[%s3 + $0x400] sm:$0xff]
    %v1084 = vld [vmem:[%s3 + $0x408] sm:$0xff]
    %v1085 = vld [vmem:[%s3 + $0x410] sm:$0xff]
    %v1086 = vld [vmem:[%s3 + $0x418] sm:$0xff]
    %v1087 = vld [vmem:[%s3 + $0x420] sm:$0xff]
    %v1088 = vld [vmem:[%s3 + $0x428] sm:$0xff]
    %v1089 = vld [vmem:[%s3 + $0x430] sm:$0xff]
    %v1090 = vld [vmem:[%s3 + $0x438] sm:$0xff]
    %v1091 = vld [vmem:[%s3 + $0x440] sm:$0xff]
    %v1092 = vld [vmem:[%s3 + $0x448] sm:$0xff]
    %v1093 = vld [vmem:[%s3 + $0x450] sm:$0xff]
    %v1094 = vld [vmem:[%s3 + $0x458] sm:$0xff]
    %v1095 = vld [vmem:[%s3 + $0x460] sm:$0xff]
    %v1096 = vld [vmem:[%s3 + $0x468] sm:$0xff]
    %v1097 = vld [vmem:[%s3 + $0x470] sm:$0xff]
    %v1098 = vld [vmem:[%s3 + $0x478] sm:$0xff]
    %v1099 = vld [vmem:[%s3 + $0x480] sm:$0xff]
    %v1100 = vld [vmem:[%s3 + $0x488] sm:$0xff]
    %v1101 = vld [vmem:[%s3 + $0x490] sm:$0xff]
    %v1102 = vld [vmem:[%s3 + $0x498] sm:$0xff]
    %v1103 = vld [vmem:[%s3 + $0x4a0] sm:$0xff]
    %v1104 = vld [vmem:[%s3 + $0x4a8] sm:$0xff]
    %v1105 = vld [vmem:[%s3 + $0x4b0] sm:$0xff]
    %v1106 = vld [vmem:[%s3 + $0x4b8] sm:$0xff]
    %v1107 = vld [vmem:[%s3 + $0x4c0] sm:$0xff]
    %v1108 = vld [vmem:[%s3 + $0x4c8] sm:$0xff]
    %v1109 = vld [vmem:[%s3 + $0x4d0] sm:$0xff]
    %v1110 = vld [vmem:[%s3 + $0x4d8] sm:$0xff]
    %v1111 = vld [vmem:[%s3 + $0x4e0] sm:$0xff]
    %v1112 = vld [vmem:[%s3 + $0x4e8] sm:$0xff]
    %v1113 = vld [vmem:[%s3 + $0x4f0] sm:$0xff]
    %v1114 = vld [vmem:[%s3 + $0x4f8] sm:$0xff]
    %v1115 = vld [vmem:[%s3 + $0x500] sm:$0xff]
    %v1116 = vld [vmem:[%s3 + $0x508] sm:$0xff]
    %v1117 = vld [vmem:[%s3 + $0x510] sm:$0xff]
    %v1118 = vld [vmem:[%s3 + $0x518] sm:$0xff]
    %v1119 = vld [vmem:[%s3 + $0x520] sm:$0xff]
    %v1120 = vld [vmem:[%s3 + $0x528] sm:$0xff]
    %v1121 = vld [vmem:[%s3 + $0x530] sm:$0xff]
    %v1122 = vld [vmem:[%s3 + $0x538] sm:$0xff]
    %v1123 = vld [vmem:[%s3 + $0x540] sm:$0xff]
    %v1124 = vld [vmem:[%s3 + $0x548] sm:$0xff]
    %v1125 = vld [vmem:[%s3 + $0x550] sm:$0xff]
    %v1126 = vld [vmem:[%s3 + $0x558] sm:$0xff]
    %v1127 = vld [vmem:[%s3 + $0x560] sm:$0xff]
    %v1128 = vld [vmem:[%s3 + $0x568] sm:$0xff]
    %v1129 = vld [vmem:[%s3 + $0x570] sm:$0xff]
    %v1130 = vld [vmem:[%s3 + $0x578] sm:$0xff]
    %v1131 = vld [vmem:[%s3 + $0x580] sm:$0xff]
    %v1132 = vld [vmem:[%s3 + $0x588] sm:$0xff]
    %v1133 = vld [vmem:[%s3 + $0x590] sm:$0xff]
    %v1134 = vld [vmem:[%s3 + $0x598] sm:$0xff]
    %v1135 = vld [vmem:[%s3 + $0x5a0] sm:$0xff]
    %v1136 = vld [vmem:[%s3 + $0x5a8] sm:$0xff]
    %v1137 = vld [vmem:[%s3 + $0x5b0] sm:$0xff]
    %v1138 = vld [vmem:[%s3 + $0x5b8] sm:$0xff]
    %v1139 = vld [vmem:[%s3 + $0x5c0] sm:$0xff]
    %v1140 = vld [vmem:[%s3 + $0x5c8] sm:$0xff]
    %v1141 = vld [vmem:[%s3 + $0x5d0] sm:$0xff]
    %v1142 = vld [vmem:[%s3 + $0x5d8] sm:$0xff]
    %v1143 = vld [vmem:[%s3 + $0x5e0] sm:$0xff]
    %v1144 = vld [vmem:[%s3 + $0x5e8] sm:$0xff]
    %v1145 = vld [vmem:[%s3 + $0x5f0] sm:$0xff]
    %v1146 = vld [vmem:[%s3 + $0x5f8] sm:$0xff]
    %v1147 = vld [vmem:[%s3 + $0x600] sm:$0xff]
    %v1148 = vld [vmem:[%s3 + $0x608] sm:$0xff]
    %v1149 = vld [vmem:[%s3 + $0x610] sm:$0xff]
    %v1150 = vld [vmem:[%s3 + $0x618] sm:$0xff]
    %v1151 = vld [vmem:[%s3 + $0x620] sm:$0xff]
    %v1152 = vld [vmem:[%s3 + $0x628] sm:$0xff]
    %v1153 = vld [vmem:[%s3 + $0x630] sm:$0xff]
    %v1154 = vld [vmem:[%s3 + $0x638] sm:$0xff]
    %v1155 = vld [vmem:[%s3 + $0x640] sm:$0xff]
    %v1156 = vld [vmem:[%s3 + $0x648] sm:$0xff]
    %v1157 = vld [vmem:[%s3 + $0x650] sm:$0xff]
    %v1158 = vld [vmem:[%s3 + $0x658] sm:$0xff]
    %v1159 = vld [vmem:[%s3 + $0x660] sm:$0xff]
    %v1160 = vld [vmem:[%s3 + $0x668] sm:$0xff]
    %v1161 = vld [vmem:[%s3 + $0x670] sm:$0xff]
    %v1162 = vld [vmem:[%s3 + $0x678] sm:$0xff]
    %v1163 = vld [vmem:[%s3 + $0x680] sm:$0xff]
    %v1164 = vld [vmem:[%s3 + $0x688] sm:$0xff]
    %v1165 = vld [vmem:[%s3 + $0x690] sm:$0xff]
    %v1166 = vld [vmem:[%s3 + $0x698] sm:$0xff]
    %v1167 = vld [vmem:[%s3 + $0x6a0] sm:$0xff]
    %v1168 = vld [vmem:[%s3 + $0x6a8] sm:$0xff]
    %v1169 = vld [vmem:[%s3 + $0x6b0] sm:$0xff]
    %v1170 = vld [vmem:[%s3 + $0x6b8] sm:$0xff]
    %v1171 = vld [vmem:[%s3 + $0x6c0] sm:$0xff]
    %v1172 = vld [vmem:[%s3 + $0x6c8] sm:$0xff]
    %v1173 = vld [vmem:[%s3 + $0x6d0] sm:$0xff]
    %v1174 = vld [vmem:[%s3 + $0x6d8] sm:$0xff]
    %v1175 = vld [vmem:[%s3 + $0x6e0] sm:$0xff]
    %v1176 = vld [vmem:[%s3 + $0x6e8] sm:$0xff]
    %v1177 = vld [vmem:[%s3 + $0x6f0] sm:$0xff]
    %v1178 = vld [vmem:[%s3 + $0x6f8] sm:$0xff]
    %v1179 = vld [vmem:[%s3 + $0x700] sm:$0xff]
    %v1180 = vld [vmem:[%s3 + $0x708] sm:$0xff]
    %v1181 = vld [vmem:[%s3 + $0x710] sm:$0xff]
    %v1182 = vld [vmem:[%s3 + $0x718] sm:$0xff]
    %v1183 = vld [vmem:[%s3 + $0x720] sm:$0xff]
    %v1184 = vld [vmem:[%s3 + $0x728] sm:$0xff]
    %v1185 = vld [vmem:[%s3 + $0x730] sm:$0xff]
    %v1186 = vld [vmem:[%s3 + $0x738] sm:$0xff]
    %v1187 = vld [vmem:[%s3 + $0x740] sm:$0xff]
    %v1188 = vld [vmem:[%s3 + $0x748] sm:$0xff]
    %v1189 = vld [vmem:[%s3 + $0x750] sm:$0xff]
    %v1190 = vld [vmem:[%s3 + $0x758] sm:$0xff]
    %v1191 = vld [vmem:[%s3 + $0x760] sm:$0xff]
    %v1192 = vld [vmem:[%s3 + $0x768] sm:$0xff]
    %v1193 = vld [vmem:[%s3 + $0x770] sm:$0xff]
    %v1194 = vld [vmem:[%s3 + $0x778] sm:$0xff]
    %v1195 = vld [vmem:[%s3 + $0x780] sm:$0xff]
    %v1196 = vld [vmem:[%s3 + $0x788] sm:$0xff]
    %v1197 = vld [vmem:[%s3 + $0x790] sm:$0xff]
    %v1198 = vld [vmem:[%s3 + $0x798] sm:$0xff]
    %v1199 = vld [vmem:[%s3 + $0x7a0] sm:$0xff]
    %v1200 = vld [vmem:[%s3 + $0x7a8] sm:$0xff]
    %v1201 = vld [vmem:[%s3 + $0x7b0] sm:$0xff]
    %v1202 = vld [vmem:[%s3 + $0x7b8] sm:$0xff]
    %v1203 = vld [vmem:[%s3 + $0x7c0] sm:$0xff]
    %v1204 = vld [vmem:[%s3 + $0x7c8] sm:$0xff]
    %v1205 = vld [vmem:[%s3 + $0x7d0] sm:$0xff]
    %v1206 = vld [vmem:[%s3 + $0x7d8] sm:$0xff]
    %v1207 = vld [vmem:[%s3 + $0x7e0] sm:$0xff]
    %v1208 = vld [vmem:[%s3 + $0x7e8] sm:$0xff]
    %v1209 = vld [vmem:[%s3 + $0x7f0] sm:$0xff]
    %v1210 = vld [vmem:[%s3 + $0x7f8] sm:$0xff]
    %v1211 = vld [vmem:[%s3 + $0x800] sm:$0xff]
    %v1212 = vld [vmem:[%s3 + $0x808] sm:$0xff]
    %v1213 = vld [vmem:[%s3 + $0x810] sm:$0xff]
    %v1214 = vld [vmem:[%s3 + $0x818] sm:$0xff]
    %v1215 = vld [vmem:[%s3 + $0x820] sm:$0xff]
    %v1216 = vld [vmem:[%s3 + $0x828] sm:$0xff]
    %v1217 = vld [vmem:[%s3 + $0x830] sm:$0xff]
    %v1218 = vld [vmem:[%s3 + $0x838] sm:$0xff]
    %v1219 = vld [vmem:[%s3 + $0x840] sm:$0xff]
    %v1220 = vld [vmem:[%s3 + $0x848] sm:$0xff]
    %v1221 = vld [vmem:[%s3 + $0x850] sm:$0xff]
    %v1222 = vld [vmem:[%s3 + $0x858] sm:$0xff]
    %v1223 = vld [vmem:[%s3 + $0x860] sm:$0xff]
    %v1224 = vld [vmem:[%s3 + $0x868] sm:$0xff]
    %v1225 = vld [vmem:[%s3 + $0x870] sm:$0xff]
    %v1226 = vld [vmem:[%s3 + $0x878] sm:$0xff]
    %v1227 = vld [vmem:[%s3 + $0x880] sm:$0xff]
    %v1228 = vld [vmem:[%s3 + $0x888] sm:$0xff]
    %v1229 = vld [vmem:[%s3 + $0x890] sm:$0xff]
    %v1230 = vld [vmem:[%s3 + $0x898] sm:$0xff]
    %v1231 = vld [vmem:[%s3 + $0x8a0] sm:$0xff]
    %v1232 = vld [vmem:[%s3 + $0x8a8] sm:$0xff]
    %v1233 = vld [vmem:[%s3 + $0x8b0] sm:$0xff]
    %v1234 = vld [vmem:[%s3 + $0x8b8] sm:$0xff]
    %v1235 = vld [vmem:[%s3 + $0x8c0] sm:$0xff]
    %v1236 = vld [vmem:[%s3 + $0x8c8] sm:$0xff]
    %v1237 = vld [vmem:[%s3 + $0x8d0] sm:$0xff]
    %v1238 = vld [vmem:[%s3 + $0x8d8] sm:$0xff]
    %v1239 = vld [vmem:[%s3 + $0x8e0] sm:$0xff]
    %v1240 = vld [vmem:[%s3 + $0x8e8] sm:$0xff]
    %v1241 = vld [vmem:[%s3 + $0x8f0] sm:$0xff]
    %v1242 = vld [vmem:[%s3 + $0x8f8] sm:$0xff]
    %v1531 = vunpack.c.l.b16 %v955
    %v1532 = vunpack.c.h.b16 %v955
    %v1533 = vunpack.c.l.b16 %v956
    %v1534 = vunpack.c.h.b16 %v956
    %v1535 = vunpack.c.l.b16 %v957
    %v1536 = vunpack.c.h.b16 %v957
    %v1537 = vunpack.c.l.b16 %v958
    %v1538 = vunpack.c.h.b16 %v958
    %v1539 = vunpack.c.l.b16 %v959
    %v1540 = vunpack.c.h.b16 %v959
    %v1541 = vunpack.c.l.b16 %v960
    %v1542 = vunpack.c.h.b16 %v960
    %v1543 = vunpack.c.l.b16 %v961
    %v1544 = vunpack.c.h.b16 %v961
    %v1545 = vunpack.c.l.b16 %v962
    %v1546 = vunpack.c.h.b16 %v962
    %v1547 = vunpack.c.l.b16 %v963
    %v1548 = vunpack.c.h.b16 %v963
    %v1549 = vunpack.c.l.b16 %v964
    %v1550 = vunpack.c.h.b16 %v964
    %v1551 = vunpack.c.l.b16 %v965
    %v1552 = vunpack.c.h.b16 %v965
    %v1553 = vunpack.c.l.b16 %v966
    %v1554 = vunpack.c.h.b16 %v966
    %v1555 = vunpack.c.l.b16 %v967
    %v1556 = vunpack.c.h.b16 %v967
    %v1557 = vunpack.c.l.b16 %v968
    %v1558 = vunpack.c.h.b16 %v968
    %v1559 = vunpack.c.l.b16 %v969
    %v1560 = vunpack.c.h.b16 %v969
    %v1561 = vunpack.c.l.b16 %v970
    %v1562 = vunpack.c.h.b16 %v970
    %v1563 = vunpack.c.l.b16 %v971
    %v1564 = vunpack.c.h.b16 %v971
    %v1565 = vunpack.c.l.b16 %v972
    %v1566 = vunpack.c.h.b16 %v972
    %v1567 = vunpack.c.l.b16 %v973
    %v1568 = vunpack.c.h.b16 %v973
    %v1569 = vunpack.c.l.b16 %v974
    %v1570 = vunpack.c.h.b16 %v974
    %v1571 = vunpack.c.l.b16 %v975
    %v1572 = vunpack.c.h.b16 %v975
    %v1573 = vunpack.c.l.b16 %v976
    %v1574 = vunpack.c.h.b16 %v976
    %v1575 = vunpack.c.l.b16 %v977
    %v1576 = vunpack.c.h.b16 %v977
    %v1577 = vunpack.c.l.b16 %v978
    %v1578 = vunpack.c.h.b16 %v978
    %v1579 = vunpack.c.l.b16 %v979
    %v1580 = vunpack.c.h.b16 %v979
    %v1581 = vunpack.c.l.b16 %v980
    %v1582 = vunpack.c.h.b16 %v980
    %v1583 = vunpack.c.l.b16 %v981
    %v1584 = vunpack.c.h.b16 %v981
    %v1585 = vunpack.c.l.b16 %v982
    %v1586 = vunpack.c.h.b16 %v982
    %v1587 = vunpack.c.l.b16 %v983
    %v1588 = vunpack.c.h.b16 %v983
    %v1589 = vunpack.c.l.b16 %v984
    %v1590 = vunpack.c.h.b16 %v984
    %v1591 = vunpack.c.l.b16 %v985
    %v1592 = vunpack.c.h.b16 %v985
    %v1593 = vunpack.c.l.b16 %v986
    %v1594 = vunpack.c.h.b16 %v986
    %v1595 = vunpack.c.l.b16 %v987
    %v1596 = vunpack.c.h.b16 %v987
    %v1597 = vunpack.c.l.b16 %v988
    %v1598 = vunpack.c.h.b16 %v988
    %v1599 = vunpack.c.l.b16 %v989
    %v1600 = vunpack.c.h.b16 %v989
    %v1601 = vunpack.c.l.b16 %v990
    %v1602 = vunpack.c.h.b16 %v990
    %v1603 = vunpack.c.l.b16 %v991
    %v1604 = vunpack.c.h.b16 %v991
    %v1605 = vunpack.c.l.b16 %v992
    %v1606 = vunpack.c.h.b16 %v992
    %v1607 = vunpack.c.l.b16 %v993
    %v1608 = vunpack.c.h.b16 %v993
    %v1609 = vunpack.c.l.b16 %v994
    %v1610 = vunpack.c.h.b16 %v994
    %v1611 = vunpack.c.l.b16 %v995
    %v1612 = vunpack.c.h.b16 %v995
    %v1613 = vunpack.c.l.b16 %v996
    %v1614 = vunpack.c.h.b16 %v996
    %v1615 = vunpack.c.l.b16 %v997
    %v1616 = vunpack.c.h.b16 %v997
    %v1617 = vunpack.c.l.b16 %v998
    %v1618 = vunpack.c.h.b16 %v998
    %v1619 = vunpack.c.l.b16 %v999
    %v1620 = vunpack.c.h.b16 %v999
    %v1621 = vunpack.c.l.b16 %v1000
    %v1622 = vunpack.c.h.b16 %v1000
    %v1623 = vunpack.c.l.b16 %v1001
    %v1624 = vunpack.c.h.b16 %v1001
    %v1625 = vunpack.c.l.b16 %v1002
    %v1626 = vunpack.c.h.b16 %v1002
    %v1627 = vunpack.c.l.b16 %v1003
    %v1628 = vunpack.c.h.b16 %v1003
    %v1629 = vunpack.c.l.b16 %v1004
    %v1630 = vunpack.c.h.b16 %v1004
    %v1631 = vunpack.c.l.b16 %v1005
    %v1632 = vunpack.c.h.b16 %v1005
    %v1633 = vunpack.c.l.b16 %v1006
    %v1634 = vunpack.c.h.b16 %v1006
    %v1635 = vunpack.c.l.b16 %v1007
    %v1636 = vunpack.c.h.b16 %v1007
    %v1637 = vunpack.c.l.b16 %v1008
    %v1638 = vunpack.c.h.b16 %v1008
    %v1639 = vunpack.c.l.b16 %v1009
    %v1640 = vunpack.c.h.b16 %v1009
    %v1641 = vunpack.c.l.b16 %v1010
    %v1642 = vunpack.c.h.b16 %v1010
    %v1643 = vunpack.c.l.b16 %v1011
    %v1644 = vunpack.c.h.b16 %v1011
    %v1645 = vunpack.c.l.b16 %v1012
    %v1646 = vunpack.c.h.b16 %v1012
    %v1647 = vunpack.c.l.b16 %v1013
    %v1648 = vunpack.c.h.b16 %v1013
    %v1649 = vunpack.c.l.b16 %v1014
    %v1650 = vunpack.c.h.b16 %v1014
    %v1651 = vunpack.c.l.b16 %v1015
    %v1652 = vunpack.c.h.b16 %v1015
    %v1653 = vunpack.c.l.b16 %v1016
    %v1654 = vunpack.c.h.b16 %v1016
    %v1655 = vunpack.c.l.b16 %v1017
    %v1656 = vunpack.c.h.b16 %v1017
    %v1657 = vunpack.c.l.b16 %v1018
    %v1658 = vunpack.c.h.b16 %v1018
    %v1659 = vunpack.c.l.b16 %v1019
    %v1660 = vunpack.c.h.b16 %v1019
    %v1661 = vunpack.c.l.b16 %v1020
    %v1662 = vunpack.c.h.b16 %v1020
    %v1663 = vunpack.c.l.b16 %v1021
    %v1664 = vunpack.c.h.b16 %v1021
    %v1665 = vunpack.c.l.b16 %v1022
    %v1666 = vunpack.c.h.b16 %v1022
    %v1667 = vunpack.c.l.b16 %v1023
    %v1668 = vunpack.c.h.b16 %v1023
    %v1669 = vunpack.c.l.b16 %v1024
    %v1670 = vunpack.c.h.b16 %v1024
    %v1671 = vunpack.c.l.b16 %v1025
    %v1672 = vunpack.c.h.b16 %v1025
    %v1673 = vunpack.c.l.b16 %v1026
    %v1674 = vunpack.c.h.b16 %v1026
    %v1675 = vunpack.c.l.b16 %v1027
    %v1676 = vunpack.c.h.b16 %v1027
    %v1677 = vunpack.c.l.b16 %v1028
    %v1678 = vunpack.c.h.b16 %v1028
    %v1679 = vunpack.c.l.b16 %v1029
    %v1680 = vunpack.c.h.b16 %v1029
    %v1681 = vunpack.c.l.b16 %v1030
    %v1682 = vunpack.c.h.b16 %v1030
    %v1683 = vunpack.c.l.b16 %v1031
    %v1684 = vunpack.c.h.b16 %v1031
    %v1685 = vunpack.c.l.b16 %v1032
    %v1686 = vunpack.c.h.b16 %v1032
    %v1687 = vunpack.c.l.b16 %v1033
    %v1688 = vunpack.c.h.b16 %v1033
    %v1689 = vunpack.c.l.b16 %v1034
    %v1690 = vunpack.c.h.b16 %v1034
    %v1691 = vunpack.c.l.b16 %v1035
    %v1692 = vunpack.c.h.b16 %v1035
    %v1693 = vunpack.c.l.b16 %v1036
    %v1694 = vunpack.c.h.b16 %v1036
    %v1695 = vunpack.c.l.b16 %v1037
    %v1696 = vunpack.c.h.b16 %v1037
    %v1697 = vunpack.c.l.b16 %v1038
    %v1698 = vunpack.c.h.b16 %v1038
    %v1699 = vunpack.c.l.b16 %v1039
    %v1700 = vunpack.c.h.b16 %v1039
    %v1701 = vunpack.c.l.b16 %v1040
    %v1702 = vunpack.c.h.b16 %v1040
    %v1703 = vunpack.c.l.b16 %v1041
    %v1704 = vunpack.c.h.b16 %v1041
    %v1705 = vunpack.c.l.b16 %v1042
    %v1706 = vunpack.c.h.b16 %v1042
    %v1707 = vunpack.c.l.b16 %v1043
    %v1708 = vunpack.c.h.b16 %v1043
    %v1709 = vunpack.c.l.b16 %v1044
    %v1710 = vunpack.c.h.b16 %v1044
    %v1711 = vunpack.c.l.b16 %v1045
    %v1712 = vunpack.c.h.b16 %v1045
    %v1713 = vunpack.c.l.b16 %v1046
    %v1714 = vunpack.c.h.b16 %v1046
    %v1715 = vunpack.c.l.b16 %v1047
    %v1716 = vunpack.c.h.b16 %v1047
    %v1717 = vunpack.c.l.b16 %v1048
    %v1718 = vunpack.c.h.b16 %v1048
    %v1719 = vunpack.c.l.b16 %v1049
    %v1720 = vunpack.c.h.b16 %v1049
    %v1721 = vunpack.c.l.b16 %v1050
    %v1722 = vunpack.c.h.b16 %v1050
    %v1723 = vunpack.c.l.b16 %v1051
    %v1724 = vunpack.c.h.b16 %v1051
    %v1725 = vunpack.c.l.b16 %v1052
    %v1726 = vunpack.c.h.b16 %v1052
    %v1727 = vunpack.c.l.b16 %v1053
    %v1728 = vunpack.c.h.b16 %v1053
    %v1729 = vunpack.c.l.b16 %v1054
    %v1730 = vunpack.c.h.b16 %v1054
    %v1731 = vunpack.c.l.b16 %v1055
    %v1732 = vunpack.c.h.b16 %v1055
    %v1733 = vunpack.c.l.b16 %v1056
    %v1734 = vunpack.c.h.b16 %v1056
    %v1735 = vunpack.c.l.b16 %v1057
    %v1736 = vunpack.c.h.b16 %v1057
    %v1737 = vunpack.c.l.b16 %v1058
    %v1738 = vunpack.c.h.b16 %v1058
    %v1739 = vunpack.c.l.b16 %v1059
    %v1740 = vunpack.c.h.b16 %v1059
    %v1741 = vunpack.c.l.b16 %v1060
    %v1742 = vunpack.c.h.b16 %v1060
    %v1743 = vunpack.c.l.b16 %v1061
    %v1744 = vunpack.c.h.b16 %v1061
    %v1745 = vunpack.c.l.b16 %v1062
    %v1746 = vunpack.c.h.b16 %v1062
    %v1747 = vunpack.c.l.b16 %v1063
    %v1748 = vunpack.c.h.b16 %v1063
    %v1749 = vunpack.c.l.b16 %v1064
    %v1750 = vunpack.c.h.b16 %v1064
    %v1751 = vunpack.c.l.b16 %v1065
    %v1752 = vunpack.c.h.b16 %v1065
    %v1753 = vunpack.c.l.b16 %v1066
    %v1754 = vunpack.c.h.b16 %v1066
    %v1755 = vunpack.c.l.b16 %v1067
    %v1756 = vunpack.c.h.b16 %v1067
    %v1757 = vunpack.c.l.b16 %v1068
    %v1758 = vunpack.c.h.b16 %v1068
    %v1759 = vunpack.c.l.b16 %v1069
    %v1760 = vunpack.c.h.b16 %v1069
    %v1761 = vunpack.c.l.b16 %v1070
    %v1762 = vunpack.c.h.b16 %v1070
    %v1763 = vunpack.c.l.b16 %v1071
    %v1764 = vunpack.c.h.b16 %v1071
    %v1765 = vunpack.c.l.b16 %v1072
    %v1766 = vunpack.c.h.b16 %v1072
    %v1767 = vunpack.c.l.b16 %v1073
    %v1768 = vunpack.c.h.b16 %v1073
    %v1769 = vunpack.c.l.b16 %v1074
    %v1770 = vunpack.c.h.b16 %v1074
    %v1771 = vunpack.c.l.b16 %v1075
    %v1772 = vunpack.c.h.b16 %v1075
    %v1773 = vunpack.c.l.b16 %v1076
    %v1774 = vunpack.c.h.b16 %v1076
    %v1775 = vunpack.c.l.b16 %v1077
    %v1776 = vunpack.c.h.b16 %v1077
    %v1777 = vunpack.c.l.b16 %v1078
    %v1778 = vunpack.c.h.b16 %v1078
    %v1779 = vunpack.c.l.b16 %v1079
    %v1780 = vunpack.c.h.b16 %v1079
    %v1781 = vunpack.c.l.b16 %v1080
    %v1782 = vunpack.c.h.b16 %v1080
    %v1783 = vunpack.c.l.b16 %v1081
    %v1784 = vunpack.c.h.b16 %v1081
    %v1785 = vunpack.c.l.b16 %v1082
    %v1786 = vunpack.c.h.b16 %v1082
    %v1787 = vunpack.c.l.b16 %v1083
    %v1788 = vunpack.c.h.b16 %v1083
    %v1789 = vunpack.c.l.b16 %v1084
    %v1790 = vunpack.c.h.b16 %v1084
    %v1791 = vunpack.c.l.b16 %v1085
    %v1792 = vunpack.c.h.b16 %v1085
    %v1793 = vunpack.c.l.b16 %v1086
    %v1794 = vunpack.c.h.b16 %v1086
    %v1795 = vunpack.c.l.b16 %v1087
    %v1796 = vunpack.c.h.b16 %v1087
    %v1797 = vunpack.c.l.b16 %v1088
    %v1798 = vunpack.c.h.b16 %v1088
    %v1799 = vunpack.c.l.b16 %v1089
    %v1800 = vunpack.c.h.b16 %v1089
    %v1801 = vunpack.c.l.b16 %v1090
    %v1802 = vunpack.c.h.b16 %v1090
    %v1803 = vunpack.c.l.b16 %v1091
    %v1804 = vunpack.c.h.b16 %v1091
    %v1805 = vunpack.c.l.b16 %v1092
    %v1806 = vunpack.c.h.b16 %v1092
    %v1807 = vunpack.c.l.b16 %v1093
    %v1808 = vunpack.c.h.b16 %v1093
    %v1809 = vunpack.c.l.b16 %v1094
    %v1810 = vunpack.c.h.b16 %v1094
    %v1811 = vunpack.c.l.b16 %v1095
    %v1812 = vunpack.c.h.b16 %v1095
    %v1813 = vunpack.c.l.b16 %v1096
    %v1814 = vunpack.c.h.b16 %v1096
    %v1815 = vunpack.c.l.b16 %v1097
    %v1816 = vunpack.c.h.b16 %v1097
    %v1817 = vunpack.c.l.b16 %v1098
    %v1818 = vunpack.c.h.b16 %v1098
    %v1819 = vunpack.c.l.b16 %v1099
    %v1820 = vunpack.c.h.b16 %v1099
    %v1821 = vunpack.c.l.b16 %v1100
    %v1822 = vunpack.c.h.b16 %v1100
    %v1823 = vunpack.c.l.b16 %v1101
    %v1824 = vunpack.c.h.b16 %v1101
    %v1825 = vunpack.c.l.b16 %v1102
    %v1826 = vunpack.c.h.b16 %v1102
    %v1827 = vunpack.c.l.b16 %v1103
    %v1828 = vunpack.c.h.b16 %v1103
    %v1829 = vunpack.c.l.b16 %v1104
    %v1830 = vunpack.c.h.b16 %v1104
    %v1831 = vunpack.c.l.b16 %v1105
    %v1832 = vunpack.c.h.b16 %v1105
    %v1833 = vunpack.c.l.b16 %v1106
    %v1834 = vunpack.c.h.b16 %v1106
    %v1835 = vunpack.c.l.b16 %v1107
    %v1836 = vunpack.c.h.b16 %v1107
    %v1837 = vunpack.c.l.b16 %v1108
    %v1838 = vunpack.c.h.b16 %v1108
    %v1839 = vunpack.c.l.b16 %v1109
    %v1840 = vunpack.c.h.b16 %v1109
    %v1841 = vunpack.c.l.b16 %v1110
    %v1842 = vunpack.c.h.b16 %v1110
    %v1843 = vunpack.c.l.b16 %v1111
    %v1844 = vunpack.c.h.b16 %v1111
    %v1845 = vunpack.c.l.b16 %v1112
    %v1846 = vunpack.c.h.b16 %v1112
    %v1847 = vunpack.c.l.b16 %v1113
    %v1848 = vunpack.c.h.b16 %v1113
    %v1849 = vunpack.c.l.b16 %v1114
    %v1850 = vunpack.c.h.b16 %v1114
    %v1851 = vunpack.c.l.b16 %v1115
    %v1852 = vunpack.c.h.b16 %v1115
    %v1853 = vunpack.c.l.b16 %v1116
    %v1854 = vunpack.c.h.b16 %v1116
    %v1855 = vunpack.c.l.b16 %v1117
    %v1856 = vunpack.c.h.b16 %v1117
    %v1857 = vunpack.c.l.b16 %v1118
    %v1858 = vunpack.c.h.b16 %v1118
    %v1859 = vunpack.c.l.b16 %v1119
    %v1860 = vunpack.c.h.b16 %v1119
    %v1861 = vunpack.c.l.b16 %v1120
    %v1862 = vunpack.c.h.b16 %v1120
    %v1863 = vunpack.c.l.b16 %v1121
    %v1864 = vunpack.c.h.b16 %v1121
    %v1865 = vunpack.c.l.b16 %v1122
    %v1866 = vunpack.c.h.b16 %v1122
    %v1867 = vunpack.c.l.b16 %v1123
    %v1868 = vunpack.c.h.b16 %v1123
    %v1869 = vunpack.c.l.b16 %v1124
    %v1870 = vunpack.c.h.b16 %v1124
    %v1871 = vunpack.c.l.b16 %v1125
    %v1872 = vunpack.c.h.b16 %v1125
    %v1873 = vunpack.c.l.b16 %v1126
    %v1874 = vunpack.c.h.b16 %v1126
    %v1875 = vunpack.c.l.b16 %v1127
    %v1876 = vunpack.c.h.b16 %v1127
    %v1877 = vunpack.c.l.b16 %v1128
    %v1878 = vunpack.c.h.b16 %v1128
    %v1879 = vunpack.c.l.b16 %v1129
    %v1880 = vunpack.c.h.b16 %v1129
    %v1881 = vunpack.c.l.b16 %v1130
    %v1882 = vunpack.c.h.b16 %v1130
    %v1883 = vunpack.c.l.b16 %v1131
    %v1884 = vunpack.c.h.b16 %v1131
    %v1885 = vunpack.c.l.b16 %v1132
    %v1886 = vunpack.c.h.b16 %v1132
    %v1887 = vunpack.c.l.b16 %v1133
    %v1888 = vunpack.c.h.b16 %v1133
    %v1889 = vunpack.c.l.b16 %v1134
    %v1890 = vunpack.c.h.b16 %v1134
    %v1891 = vunpack.c.l.b16 %v1135
    %v1892 = vunpack.c.h.b16 %v1135
    %v1893 = vunpack.c.l.b16 %v1136
    %v1894 = vunpack.c.h.b16 %v1136
    %v1895 = vunpack.c.l.b16 %v1137
    %v1896 = vunpack.c.h.b16 %v1137
    %v1897 = vunpack.c.l.b16 %v1138
    %v1898 = vunpack.c.h.b16 %v1138
    %v1899 = vunpack.c.l.b16 %v1139
    %v1900 = vunpack.c.h.b16 %v1139
    %v1901 = vunpack.c.l.b16 %v1140
    %v1902 = vunpack.c.h.b16 %v1140
    %v1903 = vunpack.c.l.b16 %v1141
    %v1904 = vunpack.c.h.b16 %v1141
    %v1905 = vunpack.c.l.b16 %v1142
    %v1906 = vunpack.c.h.b16 %v1142
    %v1907 = vunpack.c.l.b16 %v1143
    %v1908 = vunpack.c.h.b16 %v1143
    %v1909 = vunpack.c.l.b16 %v1144
    %v1910 = vunpack.c.h.b16 %v1144
    %v1911 = vunpack.c.l.b16 %v1145
    %v1912 = vunpack.c.h.b16 %v1145
    %v1913 = vunpack.c.l.b16 %v1146
    %v1914 = vunpack.c.h.b16 %v1146
    %v1915 = vunpack.c.l.b16 %v1147
    %v1916 = vunpack.c.h.b16 %v1147
    %v1917 = vunpack.c.l.b16 %v1148
    %v1918 = vunpack.c.h.b16 %v1148
    %v1919 = vunpack.c.l.b16 %v1149
    %v1920 = vunpack.c.h.b16 %v1149
    %v1921 = vunpack.c.l.b16 %v1150
    %v1922 = vunpack.c.h.b16 %v1150
    %v1923 = vunpack.c.l.b16 %v1151
    %v1924 = vunpack.c.h.b16 %v1151
    %v1925 = vunpack.c.l.b16 %v1152
    %v1926 = vunpack.c.h.b16 %v1152
    %v1927 = vunpack.c.l.b16 %v1153
    %v1928 = vunpack.c.h.b16 %v1153
    %v1929 = vunpack.c.l.b16 %v1154
    %v1930 = vunpack.c.h.b16 %v1154
    %v1931 = vunpack.c.l.b16 %v1155
    %v1932 = vunpack.c.h.b16 %v1155
    %v1933 = vunpack.c.l.b16 %v1156
    %v1934 = vunpack.c.h.b16 %v1156
    %v1935 = vunpack.c.l.b16 %v1157
    %v1936 = vunpack.c.h.b16 %v1157
    %v1937 = vunpack.c.l.b16 %v1158
    %v1938 = vunpack.c.h.b16 %v1158
    %v1939 = vunpack.c.l.b16 %v1159
    %v1940 = vunpack.c.h.b16 %v1159
    %v1941 = vunpack.c.l.b16 %v1160
    %v1942 = vunpack.c.h.b16 %v1160
    %v1943 = vunpack.c.l.b16 %v1161
    %v1944 = vunpack.c.h.b16 %v1161
    %v1945 = vunpack.c.l.b16 %v1162
    %v1946 = vunpack.c.h.b16 %v1162
    %v1947 = vunpack.c.l.b16 %v1163
    %v1948 = vunpack.c.h.b16 %v1163
    %v1949 = vunpack.c.l.b16 %v1164
    %v1950 = vunpack.c.h.b16 %v1164
    %v1951 = vunpack.c.l.b16 %v1165
    %v1952 = vunpack.c.h.b16 %v1165
    %v1953 = vunpack.c.l.b16 %v1166
    %v1954 = vunpack.c.h.b16 %v1166
    %v1955 = vunpack.c.l.b16 %v1167
    %v1956 = vunpack.c.h.b16 %v1167
    %v1957 = vunpack.c.l.b16 %v1168
    %v1958 = vunpack.c.h.b16 %v1168
    %v1959 = vunpack.c.l.b16 %v1169
    %v1960 = vunpack.c.h.b16 %v1169
    %v1961 = vunpack.c.l.b16 %v1170
    %v1962 = vunpack.c.h.b16 %v1170
    %v1963 = vunpack.c.l.b16 %v1171
    %v1964 = vunpack.c.h.b16 %v1171
    %v1965 = vunpack.c.l.b16 %v1172
    %v1966 = vunpack.c.h.b16 %v1172
    %v1967 = vunpack.c.l.b16 %v1173
    %v1968 = vunpack.c.h.b16 %v1173
    %v1969 = vunpack.c.l.b16 %v1174
    %v1970 = vunpack.c.h.b16 %v1174
    %v1971 = vunpack.c.l.b16 %v1175
    %v1972 = vunpack.c.h.b16 %v1175
    %v1973 = vunpack.c.l.b16 %v1176
    %v1974 = vunpack.c.h.b16 %v1176
    %v1975 = vunpack.c.l.b16 %v1177
    %v1976 = vunpack.c.h.b16 %v1177
    %v1977 = vunpack.c.l.b16 %v1178
    %v1978 = vunpack.c.h.b16 %v1178
    %v1979 = vunpack.c.l.b16 %v1179
    %v1980 = vunpack.c.h.b16 %v1179
    %v1981 = vunpack.c.l.b16 %v1180
    %v1982 = vunpack.c.h.b16 %v1180
    %v1983 = vunpack.c.l.b16 %v1181
    %v1984 = vunpack.c.h.b16 %v1181
    %v1985 = vunpack.c.l.b16 %v1182
    %v1986 = vunpack.c.h.b16 %v1182
    %v1987 = vunpack.c.l.b16 %v1183
    %v1988 = vunpack.c.h.b16 %v1183
    %v1989 = vunpack.c.l.b16 %v1184
    %v1990 = vunpack.c.h.b16 %v1184
    %v1991 = vunpack.c.l.b16 %v1185
    %v1992 = vunpack.c.h.b16 %v1185
    %v1993 = vunpack.c.l.b16 %v1186
    %v1994 = vunpack.c.h.b16 %v1186
    %v1995 = vunpack.c.l.b16 %v1187
    %v1996 = vunpack.c.h.b16 %v1187
    %v1997 = vunpack.c.l.b16 %v1188
    %v1998 = vunpack.c.h.b16 %v1188
    %v1999 = vunpack.c.l.b16 %v1189
    %v2000 = vunpack.c.h.b16 %v1189
    %v2001 = vunpack.c.l.b16 %v1190
    %v2002 = vunpack.c.h.b16 %v1190
    %v2003 = vunpack.c.l.b16 %v1191
    %v2004 = vunpack.c.h.b16 %v1191
    %v2005 = vunpack.c.l.b16 %v1192
    %v2006 = vunpack.c.h.b16 %v1192
    %v2007 = vunpack.c.l.b16 %v1193
    %v2008 = vunpack.c.h.b16 %v1193
    %v2009 = vunpack.c.l.b16 %v1194
    %v2010 = vunpack.c.h.b16 %v1194
    %v2011 = vunpack.c.l.b16 %v1195
    %v2012 = vunpack.c.h.b16 %v1195
    %v2013 = vunpack.c.l.b16 %v1196
    %v2014 = vunpack.c.h.b16 %v1196
    %v2015 = vunpack.c.l.b16 %v1197
    %v2016 = vunpack.c.h.b16 %v1197
    %v2017 = vunpack.c.l.b16 %v1198
    %v2018 = vunpack.c.h.b16 %v1198
    %v2019 = vunpack.c.l.b16 %v1199
    %v2020 = vunpack.c.h.b16 %v1199
    %v2021 = vunpack.c.l.b16 %v1200
    %v2022 = vunpack.c.h.b16 %v1200
    %v2023 = vunpack.c.l.b16 %v1201
    %v2024 = vunpack.c.h.b16 %v1201
    %v2025 = vunpack.c.l.b16 %v1202
    %v2026 = vunpack.c.h.b16 %v1202
    %v2027 = vunpack.c.l.b16 %v1203
    %v2028 = vunpack.c.h.b16 %v1203
    %v2029 = vunpack.c.l.b16 %v1204
    %v2030 = vunpack.c.h.b16 %v1204
    %v2031 = vunpack.c.l.b16 %v1205
    %v2032 = vunpack.c.h.b16 %v1205
    %v2033 = vunpack.c.l.b16 %v1206
    %v2034 = vunpack.c.h.b16 %v1206
    %v2035 = vunpack.c.l.b16 %v1207
    %v2036 = vunpack.c.h.b16 %v1207
    %v2037 = vunpack.c.l.b16 %v1208
    %v2038 = vunpack.c.h.b16 %v1208
    %v2039 = vunpack.c.l.b16 %v1209
    %v2040 = vunpack.c.h.b16 %v1209
    %v2041 = vunpack.c.l.b16 %v1210
    %v2042 = vunpack.c.h.b16 %v1210
    %v2043 = vunpack.c.l.b16 %v1211
    %v2044 = vunpack.c.h.b16 %v1211
    %v2045 = vunpack.c.l.b16 %v1212
    %v2046 = vunpack.c.h.b16 %v1212
    %v2047 = vunpack.c.l.b16 %v1213
    %v2048 = vunpack.c.h.b16 %v1213
    %v2049 = vunpack.c.l.b16 %v1214
    %v2050 = vunpack.c.h.b16 %v1214
    %v2051 = vunpack.c.l.b16 %v1215
    %v2052 = vunpack.c.h.b16 %v1215
    %v2053 = vunpack.c.l.b16 %v1216
    %v2054 = vunpack.c.h.b16 %v1216
    %v2055 = vunpack.c.l.b16 %v1217
    %v2056 = vunpack.c.h.b16 %v1217
    %v2057 = vunpack.c.l.b16 %v1218
    %v2058 = vunpack.c.h.b16 %v1218
    %v2059 = vunpack.c.l.b16 %v1219
    %v2060 = vunpack.c.h.b16 %v1219
    %v2061 = vunpack.c.l.b16 %v1220
    %v2062 = vunpack.c.h.b16 %v1220
    %v2063 = vunpack.c.l.b16 %v1221
    %v2064 = vunpack.c.h.b16 %v1221
    %v2065 = vunpack.c.l.b16 %v1222
    %v2066 = vunpack.c.h.b16 %v1222
    %v2067 = vunpack.c.l.b16 %v1223
    %v2068 = vunpack.c.h.b16 %v1223
    %v2069 = vunpack.c.l.b16 %v1224
    %v2070 = vunpack.c.h.b16 %v1224
    %v2071 = vunpack.c.l.b16 %v1225
    %v2072 = vunpack.c.h.b16 %v1225
    %v2073 = vunpack.c.l.b16 %v1226
    %v2074 = vunpack.c.h.b16 %v1226
    %v2075 = vunpack.c.l.b16 %v1227
    %v2076 = vunpack.c.h.b16 %v1227
    %v2077 = vunpack.c.l.b16 %v1228
    %v2078 = vunpack.c.h.b16 %v1228
    %v2079 = vunpack.c.l.b16 %v1229
    %v2080 = vunpack.c.h.b16 %v1229
    %v2081 = vunpack.c.l.b16 %v1230
    %v2082 = vunpack.c.h.b16 %v1230
    %v2083 = vunpack.c.l.b16 %v1231
    %v2084 = vunpack.c.h.b16 %v1231
    %v2085 = vunpack.c.l.b16 %v1232
    %v2086 = vunpack.c.h.b16 %v1232
    %v2087 = vunpack.c.l.b16 %v1233
    %v2088 = vunpack.c.h.b16 %v1233
    %v2089 = vunpack.c.l.b16 %v1234
    %v2090 = vunpack.c.h.b16 %v1234
    %v2091 = vunpack.c.l.b16 %v1235
    %v2092 = vunpack.c.h.b16 %v1235
    %v2093 = vunpack.c.l.b16 %v1236
    %v2094 = vunpack.c.h.b16 %v1236
    %v2095 = vunpack.c.l.b16 %v1237
    %v2096 = vunpack.c.h.b16 %v1237
    %v2097 = vunpack.c.l.b16 %v1238
    %v2098 = vunpack.c.h.b16 %v1238
    %v2099 = vunpack.c.l.b16 %v1239
    %v2100 = vunpack.c.h.b16 %v1239
    %v2101 = vunpack.c.l.b16 %v1240
    %v2102 = vunpack.c.h.b16 %v1240
    %v2103 = vunpack.c.l.b16 %v1241
    %v2104 = vunpack.c.h.b16 %v1241
    %v2105 = vunpack.c.l.b16 %v1242
    %v2106 = vunpack.c.h.b16 %v1242
    %v2107 = vpack.c.b16 %v1535, %v1531
    %v2108 = vpack.c.b16 %v1536, %v1532
    %v2109 = vpack.c.b16 %v1537, %v1533
    %v2110 = vpack.c.b16 %v1538, %v1534
    %v2111 = vpack.c.b16 %v1543, %v1539
    %v2112 = vpack.c.b16 %v1544, %v1540
    %v2113 = vpack.c.b16 %v1545, %v1541
    %v2114 = vpack.c.b16 %v1546, %v1542
    %v2115 = vpack.c.b16 %v1551, %v1547
    %v2116 = vpack.c.b16 %v1552, %v1548
    %v2117 = vpack.c.b16 %v1553, %v1549
    %v2118 = vpack.c.b16 %v1554, %v1550
    %v2119 = vpack.c.b16 %v1559, %v1555
    %v2120 = vpack.c.b16 %v1560, %v1556
    %v2121 = vpack.c.b16 %v1561, %v1557
    %v2122 = vpack.c.b16 %v1562, %v1558
    %v2123 = vpack.c.b16 %v1567, %v1563
    %v2124 = vpack.c.b16 %v1568, %v1564
    %v2125 = vpack.c.b16 %v1569, %v1565
    %v2126 = vpack.c.b16 %v1570, %v1566
    %v2127 = vpack.c.b16 %v1575, %v1571
    %v2128 = vpack.c.b16 %v1576, %v1572
    %v2129 = vpack.c.b16 %v1577, %v1573
    %v2130 = vpack.c.b16 %v1578, %v1574
    %v2131 = vpack.c.b16 %v1583, %v1579
    %v2132 = vpack.c.b16 %v1584, %v1580
    %v2133 = vpack.c.b16 %v1585, %v1581
    %v2134 = vpack.c.b16 %v1586, %v1582
    %v2135 = vpack.c.b16 %v1591, %v1587
    %v2136 = vpack.c.b16 %v1592, %v1588
    %v2137 = vpack.c.b16 %v1593, %v1589
    %v2138 = vpack.c.b16 %v1594, %v1590
    %v2139 = vpack.c.b16 %v1599, %v1595
    %v2140 = vpack.c.b16 %v1600, %v1596
    %v2141 = vpack.c.b16 %v1601, %v1597
    %v2142 = vpack.c.b16 %v1602, %v1598
    %v2143 = vpack.c.b16 %v1607, %v1603
    %v2144 = vpack.c.b16 %v1608, %v1604
    %v2145 = vpack.c.b16 %v1609, %v1605
    %v2146 = vpack.c.b16 %v1610, %v1606
    %v2147 = vpack.c.b16 %v1615, %v1611
    %v2148 = vpack.c.b16 %v1616, %v1612
    %v2149 = vpack.c.b16 %v1617, %v1613
    %v2150 = vpack.c.b16 %v1618, %v1614
    %v2151 = vpack.c.b16 %v1623, %v1619
    %v2152 = vpack.c.b16 %v1624, %v1620
    %v2153 = vpack.c.b16 %v1625, %v1621
    %v2154 = vpack.c.b16 %v1626, %v1622
    %v2155 = vpack.c.b16 %v1631, %v1627
    %v2156 = vpack.c.b16 %v1632, %v1628
    %v2157 = vpack.c.b16 %v1633, %v1629
    %v2158 = vpack.c.b16 %v1634, %v1630
    %v2159 = vpack.c.b16 %v1639, %v1635
    %v2160 = vpack.c.b16 %v1640, %v1636
    %v2161 = vpack.c.b16 %v1641, %v1637
    %v2162 = vpack.c.b16 %v1642, %v1638
    %v2163 = vpack.c.b16 %v1647, %v1643
    %v2164 = vpack.c.b16 %v1648, %v1644
    %v2165 = vpack.c.b16 %v1649, %v1645
    %v2166 = vpack.c.b16 %v1650, %v1646
    %v2167 = vpack.c.b16 %v1655, %v1651
    %v2168 = vpack.c.b16 %v1656, %v1652
    %v2169 = vpack.c.b16 %v1657, %v1653
    %v2170 = vpack.c.b16 %v1658, %v1654
    %v2171 = vpack.c.b16 %v1663, %v1659
    %v2172 = vpack.c.b16 %v1664, %v1660
    %v2173 = vpack.c.b16 %v1665, %v1661
    %v2174 = vpack.c.b16 %v1666, %v1662
    %v2175 = vpack.c.b16 %v1671, %v1667
    %v2176 = vpack.c.b16 %v1672, %v1668
    %v2177 = vpack.c.b16 %v1673, %v1669
    %v2178 = vpack.c.b16 %v1674, %v1670
    %v2179 = vpack.c.b16 %v1679, %v1675
    %v2180 = vpack.c.b16 %v1680, %v1676
    %v2181 = vpack.c.b16 %v1681, %v1677
    %v2182 = vpack.c.b16 %v1682, %v1678
    %v2183 = vpack.c.b16 %v1687, %v1683
    %v2184 = vpack.c.b16 %v1688, %v1684
    %v2185 = vpack.c.b16 %v1689, %v1685
    %v2186 = vpack.c.b16 %v1690, %v1686
    %v2187 = vpack.c.b16 %v1695, %v1691
    %v2188 = vpack.c.b16 %v1696, %v1692
    %v2189 = vpack.c.b16 %v1697, %v1693
    %v2190 = vpack.c.b16 %v1698, %v1694
    %v2191 = vpack.c.b16 %v1703, %v1699
    %v2192 = vpack.c.b16 %v1704, %v1700
    %v2193 = vpack.c.b16 %v1705, %v1701
    %v2194 = vpack.c.b16 %v1706, %v1702
    %v2195 = vpack.c.b16 %v1711, %v1707
    %v2196 = vpack.c.b16 %v1712, %v1708
    %v2197 = vpack.c.b16 %v1713, %v1709
    %v2198 = vpack.c.b16 %v1714, %v1710
    %v2199 = vpack.c.b16 %v1719, %v1715
    %v2200 = vpack.c.b16 %v1720, %v1716
    %v2201 = vpack.c.b16 %v1721, %v1717
    %v2202 = vpack.c.b16 %v1722, %v1718
    %v2203 = vpack.c.b16 %v1727, %v1723
    %v2204 = vpack.c.b16 %v1728, %v1724
    %v2205 = vpack.c.b16 %v1729, %v1725
    %v2206 = vpack.c.b16 %v1730, %v1726
    %v2207 = vpack.c.b16 %v1735, %v1731
    %v2208 = vpack.c.b16 %v1736, %v1732
    %v2209 = vpack.c.b16 %v1737, %v1733
    %v2210 = vpack.c.b16 %v1738, %v1734
    %v2211 = vpack.c.b16 %v1743, %v1739
    %v2212 = vpack.c.b16 %v1744, %v1740
    %v2213 = vpack.c.b16 %v1745, %v1741
    %v2214 = vpack.c.b16 %v1746, %v1742
    %v2215 = vpack.c.b16 %v1751, %v1747
    %v2216 = vpack.c.b16 %v1752, %v1748
    %v2217 = vpack.c.b16 %v1753, %v1749
    %v2218 = vpack.c.b16 %v1754, %v1750
    %v2219 = vpack.c.b16 %v1759, %v1755
    %v2220 = vpack.c.b16 %v1760, %v1756
    %v2221 = vpack.c.b16 %v1761, %v1757
    %v2222 = vpack.c.b16 %v1762, %v1758
    %v2223 = vpack.c.b16 %v1767, %v1763
    %v2224 = vpack.c.b16 %v1768, %v1764
    %v2225 = vpack.c.b16 %v1769, %v1765
    %v2226 = vpack.c.b16 %v1770, %v1766
    %v2227 = vpack.c.b16 %v1775, %v1771
    %v2228 = vpack.c.b16 %v1776, %v1772
    %v2229 = vpack.c.b16 %v1777, %v1773
    %v2230 = vpack.c.b16 %v1778, %v1774
    %v2231 = vpack.c.b16 %v1783, %v1779
    %v2232 = vpack.c.b16 %v1784, %v1780
    %v2233 = vpack.c.b16 %v1785, %v1781
    %v2234 = vpack.c.b16 %v1786, %v1782
    %v2235 = vpack.c.b16 %v1791, %v1787
    %v2236 = vpack.c.b16 %v1792, %v1788
    %v2237 = vpack.c.b16 %v1793, %v1789
    %v2238 = vpack.c.b16 %v1794, %v1790
    %v2239 = vpack.c.b16 %v1799, %v1795
    %v2240 = vpack.c.b16 %v1800, %v1796
    %v2241 = vpack.c.b16 %v1801, %v1797
    %v2242 = vpack.c.b16 %v1802, %v1798
    %v2243 = vpack.c.b16 %v1807, %v1803
    %v2244 = vpack.c.b16 %v1808, %v1804
    %v2245 = vpack.c.b16 %v1809, %v1805
    %v2246 = vpack.c.b16 %v1810, %v1806
    %v2247 = vpack.c.b16 %v1815, %v1811
    %v2248 = vpack.c.b16 %v1816, %v1812
    %v2249 = vpack.c.b16 %v1817, %v1813
    %v2250 = vpack.c.b16 %v1818, %v1814
    %v2251 = vpack.c.b16 %v1823, %v1819
    %v2252 = vpack.c.b16 %v1824, %v1820
    %v2253 = vpack.c.b16 %v1825, %v1821
    %v2254 = vpack.c.b16 %v1826, %v1822
    %v2255 = vpack.c.b16 %v1831, %v1827
    %v2256 = vpack.c.b16 %v1832, %v1828
    %v2257 = vpack.c.b16 %v1833, %v1829
    %v2258 = vpack.c.b16 %v1834, %v1830
    %v2259 = vpack.c.b16 %v1839, %v1835
    %v2260 = vpack.c.b16 %v1840, %v1836
    %v2261 = vpack.c.b16 %v1841, %v1837
    %v2262 = vpack.c.b16 %v1842, %v1838
    %v2263 = vpack.c.b16 %v1847, %v1843
    %v2264 = vpack.c.b16 %v1848, %v1844
    %v2265 = vpack.c.b16 %v1849, %v1845
    %v2266 = vpack.c.b16 %v1850, %v1846
    %v2267 = vpack.c.b16 %v1855, %v1851
    %v2268 = vpack.c.b16 %v1856, %v1852
    %v2269 = vpack.c.b16 %v1857, %v1853
    %v2270 = vpack.c.b16 %v1858, %v1854
    %v2271 = vpack.c.b16 %v1863, %v1859
    %v2272 = vpack.c.b16 %v1864, %v1860
    %v2273 = vpack.c.b16 %v1865, %v1861
    %v2274 = vpack.c.b16 %v1866, %v1862
    %v2275 = vpack.c.b16 %v1871, %v1867
    %v2276 = vpack.c.b16 %v1872, %v1868
    %v2277 = vpack.c.b16 %v1873, %v1869
    %v2278 = vpack.c.b16 %v1874, %v1870
    %v2279 = vpack.c.b16 %v1879, %v1875
    %v2280 = vpack.c.b16 %v1880, %v1876
    %v2281 = vpack.c.b16 %v1881, %v1877
    %v2282 = vpack.c.b16 %v1882, %v1878
    %v2283 = vpack.c.b16 %v1887, %v1883
    %v2284 = vpack.c.b16 %v1888, %v1884
    %v2285 = vpack.c.b16 %v1889, %v1885
    %v2286 = vpack.c.b16 %v1890, %v1886
    %v2287 = vpack.c.b16 %v1895, %v1891
    %v2288 = vpack.c.b16 %v1896, %v1892
    %v2289 = vpack.c.b16 %v1897, %v1893
    %v2290 = vpack.c.b16 %v1898, %v1894
    %v2291 = vpack.c.b16 %v1903, %v1899
    %v2292 = vpack.c.b16 %v1904, %v1900
    %v2293 = vpack.c.b16 %v1905, %v1901
    %v2294 = vpack.c.b16 %v1906, %v1902
    %v2295 = vpack.c.b16 %v1911, %v1907
    %v2296 = vpack.c.b16 %v1912, %v1908
    %v2297 = vpack.c.b16 %v1913, %v1909
    %v2298 = vpack.c.b16 %v1914, %v1910
    %v2299 = vpack.c.b16 %v1919, %v1915
    %v2300 = vpack.c.b16 %v1920, %v1916
    %v2301 = vpack.c.b16 %v1921, %v1917
    %v2302 = vpack.c.b16 %v1922, %v1918
    %v2303 = vpack.c.b16 %v1927, %v1923
    %v2304 = vpack.c.b16 %v1928, %v1924
    %v2305 = vpack.c.b16 %v1929, %v1925
    %v2306 = vpack.c.b16 %v1930, %v1926
    %v2307 = vpack.c.b16 %v1935, %v1931
    %v2308 = vpack.c.b16 %v1936, %v1932
    %v2309 = vpack.c.b16 %v1937, %v1933
    %v2310 = vpack.c.b16 %v1938, %v1934
    %v2311 = vpack.c.b16 %v1943, %v1939
    %v2312 = vpack.c.b16 %v1944, %v1940
    %v2313 = vpack.c.b16 %v1945, %v1941
    %v2314 = vpack.c.b16 %v1946, %v1942
    %v2315 = vpack.c.b16 %v1951, %v1947
    %v2316 = vpack.c.b16 %v1952, %v1948
    %v2317 = vpack.c.b16 %v1953, %v1949
    %v2318 = vpack.c.b16 %v1954, %v1950
    %v2319 = vpack.c.b16 %v1959, %v1955
    %v2320 = vpack.c.b16 %v1960, %v1956
    %v2321 = vpack.c.b16 %v1961, %v1957
    %v2322 = vpack.c.b16 %v1962, %v1958
    %v2323 = vpack.c.b16 %v1967, %v1963
    %v2324 = vpack.c.b16 %v1968, %v1964
    %v2325 = vpack.c.b16 %v1969, %v1965
    %v2326 = vpack.c.b16 %v1970, %v1966
    %v2327 = vpack.c.b16 %v1975, %v1971
    %v2328 = vpack.c.b16 %v1976, %v1972
    %v2329 = vpack.c.b16 %v1977, %v1973
    %v2330 = vpack.c.b16 %v1978, %v1974
    %v2331 = vpack.c.b16 %v1983, %v1979
    %v2332 = vpack.c.b16 %v1984, %v1980
    %v2333 = vpack.c.b16 %v1985, %v1981
    %v2334 = vpack.c.b16 %v1986, %v1982
    %v2335 = vpack.c.b16 %v1991, %v1987
    %v2336 = vpack.c.b16 %v1992, %v1988
    %v2337 = vpack.c.b16 %v1993, %v1989
    %v2338 = vpack.c.b16 %v1994, %v1990
    %v2339 = vpack.c.b16 %v1999, %v1995
    %v2340 = vpack.c.b16 %v2000, %v1996
    %v2341 = vpack.c.b16 %v2001, %v1997
    %v2342 = vpack.c.b16 %v2002, %v1998
    %v2343 = vpack.c.b16 %v2007, %v2003
    %v2344 = vpack.c.b16 %v2008, %v2004
    %v2345 = vpack.c.b16 %v2009, %v2005
    %v2346 = vpack.c.b16 %v2010, %v2006
    %v2347 = vpack.c.b16 %v2015, %v2011
    %v2348 = vpack.c.b16 %v2016, %v2012
    %v2349 = vpack.c.b16 %v2017, %v2013
    %v2350 = vpack.c.b16 %v2018, %v2014
    %v2351 = vpack.c.b16 %v2023, %v2019
    %v2352 = vpack.c.b16 %v2024, %v2020
    %v2353 = vpack.c.b16 %v2025, %v2021
    %v2354 = vpack.c.b16 %v2026, %v2022
    %v2355 = vpack.c.b16 %v2031, %v2027
    %v2356 = vpack.c.b16 %v2032, %v2028
    %v2357 = vpack.c.b16 %v2033, %v2029
    %v2358 = vpack.c.b16 %v2034, %v2030
    %v2359 = vpack.c.b16 %v2039, %v2035
    %v2360 = vpack.c.b16 %v2040, %v2036
    %v2361 = vpack.c.b16 %v2041, %v2037
    %v2362 = vpack.c.b16 %v2042, %v2038
    %v2363 = vpack.c.b16 %v2047, %v2043
    %v2364 = vpack.c.b16 %v2048, %v2044
    %v2365 = vpack.c.b16 %v2049, %v2045
    %v2366 = vpack.c.b16 %v2050, %v2046
    %v2367 = vpack.c.b16 %v2055, %v2051
    %v2368 = vpack.c.b16 %v2056, %v2052
    %v2369 = vpack.c.b16 %v2057, %v2053
    %v2370 = vpack.c.b16 %v2058, %v2054
    %v2371 = vpack.c.b16 %v2063, %v2059
    %v2372 = vpack.c.b16 %v2064, %v2060
    %v2373 = vpack.c.b16 %v2065, %v2061
    %v2374 = vpack.c.b16 %v2066, %v2062
    %v2375 = vpack.c.b16 %v2071, %v2067
    %v2376 = vpack.c.b16 %v2072, %v2068
    %v2377 = vpack.c.b16 %v2073, %v2069
    %v2378 = vpack.c.b16 %v2074, %v2070
    %v2379 = vpack.c.b16 %v2079, %v2075
    %v2380 = vpack.c.b16 %v2080, %v2076
    %v2381 = vpack.c.b16 %v2081, %v2077
    %v2382 = vpack.c.b16 %v2082, %v2078
    %v2383 = vpack.c.b16 %v2087, %v2083
    %v2384 = vpack.c.b16 %v2088, %v2084
    %v2385 = vpack.c.b16 %v2089, %v2085
    %v2386 = vpack.c.b16 %v2090, %v2086
    %v2387 = vpack.c.b16 %v2095, %v2091
    %v2388 = vpack.c.b16 %v2096, %v2092
    %v2389 = vpack.c.b16 %v2097, %v2093
    %v2390 = vpack.c.b16 %v2098, %v2094
    %v2391 = vpack.c.b16 %v2103, %v2099
    %v2392 = vpack.c.b16 %v2104, %v2100
    %v2393 = vpack.c.b16 %v2105, %v2101
    %v2394 = vpack.c.b16 %v2106, %v2102
    %2683 = vmatprep.subr.bf16.mxu0 %v892
    %2684 = vmatpush1.bf16.msra.mxu0 %v891
    %2685 = vmatprep.subr.bf16.mxu0 %v894
    %2686 = vmatpush1.bf16.msra.mxu0 %v893
    %2687 = vmatprep.subr.bf16.mxu0 %v896
    %2688 = vmatpush1.bf16.msra.mxu0 %v895
    %2689 = vmatprep.subr.bf16.mxu0 %v898
    %2690 = vmatpush1.bf16.msra.mxu0 %v897
    %2691 = vmatprep.subr.bf16.mxu0 %v900
    %2692 = vmatpush1.bf16.msra.mxu0 %v899
    %2693 = vmatprep.subr.bf16.mxu0 %v902
    %2694 = vmatpush1.bf16.msra.mxu0 %v901
    %2695 = vmatprep.subr.bf16.mxu0 %v904
    %2696 = vmatpush1.bf16.msra.mxu0 %v903
    %2697 = vmatprep.subr.bf16.mxu0 %v906
    %2698 = vmatpush1.bf16.msra.mxu0 %v905
    %2699 = vmatprep.subr.bf16.mxu0 %v908
    %2700 = vmatpush1.bf16.msra.mxu0 %v907
    %2701 = vmatprep.subr.bf16.mxu0 %v910
    %2702 = vmatpush1.bf16.msra.mxu0 %v909
    %2703 = vmatprep.subr.bf16.mxu0 %v912
    %2704 = vmatpush1.bf16.msra.mxu0 %v911
    %2705 = vmatprep.subr.bf16.mxu0 %v914
    %2706 = vmatpush1.bf16.msra.mxu0 %v913
    %2707 = vmatprep.subr.bf16.mxu0 %v916
    %2708 = vmatpush1.bf16.msra.mxu0 %v915
    %2709 = vmatprep.subr.bf16.mxu0 %v918
    %2710 = vmatpush1.bf16.msra.mxu0 %v917
    %2711 = vmatprep.subr.bf16.mxu0 %v920
    %2712 = vmatpush1.bf16.msra.mxu0 %v919
    %2713 = vmatprep.subr.bf16.mxu0 %v922
    %2714 = vmatpush1.bf16.msra.mxu0 %v921
    %2715 = vmatprep.mubr.bf16.mxu0 %v2108
    %2716 = vmatmul.mubr.bf16.gmra.mrb[0].mxu0 %v2107
    %v2717 = vpop.f32.mrb[0].mxu0
    %v2718 = vadd.f32 0.0, %v2717
    %v2719 = vpop.f32.mrb[0].mxu0
    %v2720 = vadd.f32 0.0, %v2719
    %v2721 = vpop.f32.mrb[0].mxu0
    %v2722 = vadd.f32 0.0, %v2721
    %v2723 = vpop.f32.mrb[0].mxu0
    %v2724 = vadd.f32 0.0, %v2723
    %2725 = vmatprep.mubr.bf16.mxu0 %v2112
    %2726 = vmatmul.mubr.bf16.gmra.mrb[0].mxu0 %v2111
    %v2727 = vpop.f32.mrb[0].mxu0
    %v2728 = vadd.f32 0.0, %v2727
    %v2729 = vpop.f32.mrb[0].mxu0
    %v2730 = vadd.f32 0.0, %v2729
    %v2731 = vpop.f32.mrb[0].mxu0
    %v2732 = vadd.f32 0.0, %v2731
    %v2733 = vpop.f32.mrb[0].mxu0
    %v2734 = vadd.f32 0.0, %v2733
    %2735 = vmatprep.mubr.bf16.mxu0 %v2116
    %2736 = vmatmul.mubr.bf16.gmra.mrb[0].mxu0 %v2115
    %v2737 = vpop.f32.mrb[0].mxu0
    %v2738 = vadd.f32 0.0, %v2737
    %v2739 = vpop.f32.mrb[0].mxu0
    %v2740 = vadd.f32 0.0, %v2739
    %v2741 = vpop.f32.mrb[0].mxu0
    %v2742 = vadd.f32 0.0, %v2741
    %v2743 = vpop.f32.mrb[0].mxu0
    %v2744 = vadd.f32 0.0, %v2743
    %2745 = vmatprep.mubr.bf16.mxu0 %v2120
    %2746 = vmatmul.mubr.bf16.gmra.mrb[0].mxu0 %v2119
    %v2747 = vpop.f32.mrb[0].mxu0
    %v2748 = vadd.f32 0.0, %v2747
    %v2749 = vpop.f32.mrb[0].mxu0
    %v2750 = vadd.f32 0.0, %v2749
    %v2751 = vpop.f32.mrb[0].mxu0
    %v2752 = vadd.f32 0.0, %v2751
    %v2753 = vpop.f32.mrb[0].mxu0
    %v2754 = vadd.f32 0.0, %v2753
    %2755 = vmatprep.mubr.bf16.mxu0 %v2124
    %2756 = vmatmul.mubr.bf16.gmra.mrb[0].mxu0 %v2123
    %v2757 = vpop.f32.mrb[0].mxu0
    %v2758 = vadd.f32 0.0, %v2757
    %v2759 = vpop.f32.mrb[0].mxu0
    %v2760 = vadd.f32 0.0, %v2759
    %v2761 = vpop.f32.mrb[0].mxu0
    %v2762 = vadd.f32 0.0, %v2761
    %v2763 = vpop.f32.mrb[0].mxu0
    %v2764 = vadd.f32 0.0, %v2763
    %2765 = vmatprep.mubr.bf16.mxu0 %v2128
    %2766 = vmatmul.mubr.bf16.gmra.mrb[0].mxu0 %v2127
    %v2767 = vpop.f32.mrb[0].mxu0
    %v2768 = vadd.f32 0.0, %v2767
    %v2769 = vpop.f32.mrb[0].mxu0
    %v2770 = vadd.f32 0.0, %v2769
    %v2771 = vpop.f32.mrb[0].mxu0
    %v2772 = vadd.f32 0.0, %v2771
    %v2773 = vpop.f32.mrb[0].mxu0
    %v2774 = vadd.f32 0.0, %v2773
    %2775 = vmatprep.mubr.bf16.mxu0 %v2132
    %2776 = vmatmul.mubr.bf16.gmra.mrb[0].mxu0 %v2131
    %v2777 = vpop.f32.mrb[0].mxu0
    %v2778 = vadd.f32 0.0, %v2777
    %v2779 = vpop.f32.mrb[0].mxu0
    %v2780 = vadd.f32 0.0, %v2779
    %v2781 = vpop.f32.mrb[0].mxu0
    %v2782 = vadd.f32 0.0, %v2781
    %v2783 = vpop.f32.mrb[0].mxu0
    %v2784 = vadd.f32 0.0, %v2783
    %2785 = vmatprep.mubr.bf16.mxu0 %v2136
    %2786 = vmatmul.mubr.bf16.gmra.mrb[0].mxu0 %v2135
    %v2787 = vpop.f32.mrb[0].mxu0
    %v2788 = vadd.f32 0.0, %v2787
    %v2789 = vpop.f32.mrb[0].mxu0
    %v2790 = vadd.f32 0.0, %v2789
    %v2791 = vpop.f32.mrb[0].mxu0
    %v2792 = vadd.f32 0.0, %v2791
    %v2793 = vpop.f32.mrb[0].mxu0
    %v2794 = vadd.f32 0.0, %v2793
    %2795 = vmatprep.mubr.bf16.mxu0 %v2140
    %2796 = vmatmul.mubr.bf16.gmra.mrb[0].mxu0 %v2139
    %v2797 = vpop.f32.mrb[0].mxu0
    %v2798 = vadd.f32 0.0, %v2797
    %v2799 = vpop.f32.mrb[0].mxu0
    %v2800 = vadd.f32 0.0, %v2799
    %v2801 = vpop.f32.mrb[0].mxu0
    %v2802 = vadd.f32 0.0, %v2801
    %v2803 = vpop.f32.mrb[0].mxu0
    %v2804 = vadd.f32 0.0, %v2803
    %2805 = vmatprep.mubr.bf16.mxu0 %v2144
    %2806 = vmatmul.mubr.bf16.gmra.mrb[0].mxu0 %v2143
    %v2807 = vpop.f32.mrb[0].mxu0
    %v2808 = vadd.f32 0.0, %v2807
    %v2809 = vpop.f32.mrb[0].mxu0
    %v2810 = vadd.f32 0.0, %v2809
    %v2811 = vpop.f32.mrb[0].mxu0
    %v2812 = vadd.f32 0.0, %v2811
    %v2813 = vpop.f32.mrb[0].mxu0
    %v2814 = vadd.f32 0.0, %v2813
    %2815 = vmatprep.mubr.bf16.mxu0 %v2148
    %2816 = vmatmul.mubr.bf16.gmra.mrb[0].mxu0 %v2147
    %v2817 = vpop.f32.mrb[0].mxu0
    %v2818 = vadd.f32 0.0, %v2817
    %v2819 = vpop.f32.mrb[0].mxu0
    %v2820 = vadd.f32 0.0, %v2819
    %v2821 = vpop.f32.mrb[0].mxu0
    %v2822 = vadd.f32 0.0, %v2821
    %v2823 = vpop.f32.mrb[0].mxu0
    %v2824 = vadd.f32 0.0, %v2823
    %2825 = vmatprep.mubr.bf16.mxu0 %v2152
    %2826 = vmatmul.mubr.bf16.gmra.mrb[0].mxu0 %v2151
    %v2827 = vpop.f32.mrb[0].mxu0
    %v2828 = vadd.f32 0.0, %v2827
    %v2829 = vpop.f32.mrb[0].mxu0
    %v2830 = vadd.f32 0.0, %v2829
    %v2831 = vpop.f32.mrb[0].mxu0
    %v2832 = vadd.f32 0.0, %v2831
    %v2833 = vpop.f32.mrb[0].mxu0
    %v2834 = vadd.f32 0.0, %v2833
    %2835 = vmatprep.mubr.bf16.mxu0 %v2156
    %2836 = vmatmul.mubr.bf16.gmra.mrb[0].mxu0 %v2155
    %v2837 = vpop.f32.mrb[0].mxu0
    %v2838 = vadd.f32 0.0, %v2837
    %v2839 = vpop.f32.mrb[0].mxu0
    %v2840 = vadd.f32 0.0, %v2839
    %v2841 = vpop.f32.mrb[0].mxu0
    %v2842 = vadd.f32 0.0, %v2841
    %v2843 = vpop.f32.mrb[0].mxu0
    %v2844 = vadd.f32 0.0, %v2843
    %2845 = vmatprep.mubr.bf16.mxu0 %v2160
    %2846 = vmatmul.mubr.bf16.gmra.mrb[0].mxu0 %v2159
    %v2847 = vpop.f32.mrb[0].mxu0
    %v2848 = vadd.f32 0.0, %v2847
    %v2849 = vpop.f32.mrb[0].mxu0
    %v2850 = vadd.f32 0.0, %v2849
    %v2851 = vpop.f32.mrb[0].mxu0
    %v2852 = vadd.f32 0.0, %v2851
    %v2853 = vpop.f32.mrb[0].mxu0
    %v2854 = vadd.f32 0.0, %v2853
    %2855 = vmatprep.mubr.bf16.mxu0 %v2164
    %2856 = vmatmul.mubr.bf16.gmra.mrb[0].mxu0 %v2163
    %v2857 = vpop.f32.mrb[0].mxu0
    %v2858 = vadd.f32 0.0, %v2857
    %v2859 = vpop.f32.mrb[0].mxu0
    %v2860 = vadd.f32 0.0, %v2859
    %v2861 = vpop.f32.mrb[0].mxu0
    %v2862 = vadd.f32 0.0, %v2861
    %v2863 = vpop.f32.mrb[0].mxu0
    %v2864 = vadd.f32 0.0, %v2863
    %2865 = vmatprep.mubr.bf16.mxu0 %v2168
    %2866 = vmatmul.mubr.bf16.gmra.mrb[0].mxu0 %v2167
    %v2867 = vpop.f32.mrb[0].mxu0
    %v2868 = vadd.f32 0.0, %v2867
    %v2869 = vpop.f32.mrb[0].mxu0
    %v2870 = vadd.f32 0.0, %v2869
    %v2871 = vpop.f32.mrb[0].mxu0
    %v2872 = vadd.f32 0.0, %v2871
    %v2873 = vpop.f32.mrb[0].mxu0
    %v2874 = vadd.f32 0.0, %v2873
    %2875 = vmatprep.mubr.bf16.mxu0 %v2172
    %2876 = vmatmul.mubr.bf16.gmra.mrb[0].mxu0 %v2171
    %v2877 = vpop.f32.mrb[0].mxu0
    %v2878 = vadd.f32 0.0, %v2877
    %v2879 = vpop.f32.mrb[0].mxu0
    %v2880 = vadd.f32 0.0, %v2879
    %v2881 = vpop.f32.mrb[0].mxu0
    %v2882 = vadd.f32 0.0, %v2881
    %v2883 = vpop.f32.mrb[0].mxu0
    %v2884 = vadd.f32 0.0, %v2883
    %2885 = vmatprep.mubr.bf16.mxu0 %v2176
    %2886 = vmatmul.mubr.bf16.gmra.mrb[0].mxu0 %v2175
    %v2887 = vpop.f32.mrb[0].mxu0
    %v2888 = vadd.f32 0.0, %v2887
    %v2889 = vpop.f32.mrb[0].mxu0
    %v2890 = vadd.f32 0.0, %v2889
    %v2891 = vpop.f32.mrb[0].mxu0
    %v2892 = vadd.f32 0.0, %v2891
    %v2893 = vpop.f32.mrb[0].mxu0
    %v2894 = vadd.f32 0.0, %v2893
    %2895 = vmatprep.mubr.bf16.mxu0 %v2180
    %2896 = vmatmul.mubr.bf16.gmra.mrb[0].mxu0 %v2179
    %v2897 = vpop.f32.mrb[0].mxu0
    %v2898 = vadd.f32 0.0, %v2897
    %v2899 = vpop.f32.mrb[0].mxu0
    %v2900 = vadd.f32 0.0, %v2899
    %v2901 = vpop.f32.mrb[0].mxu0
    %v2902 = vadd.f32 0.0, %v2901
    %v2903 = vpop.f32.mrb[0].mxu0
    %v2904 = vadd.f32 0.0, %v2903
    %2905 = vmatprep.mubr.bf16.mxu0 %v2184
    %2906 = vmatmul.mubr.bf16.gmra.mrb[0].mxu0 %v2183
    %v2907 = vpop.f32.mrb[0].mxu0
    %v2908 = vadd.f32 0.0, %v2907
    %v2909 = vpop.f32.mrb[0].mxu0
    %v2910 = vadd.f32 0.0, %v2909
    %v2911 = vpop.f32.mrb[0].mxu0
    %v2912 = vadd.f32 0.0, %v2911
    %v2913 = vpop.f32.mrb[0].mxu0
    %v2914 = vadd.f32 0.0, %v2913
    %2915 = vmatprep.mubr.bf16.mxu0 %v2188
    %2916 = vmatmul.mubr.bf16.gmra.mrb[0].mxu0 %v2187
    %v2917 = vpop.f32.mrb[0].mxu0
    %v2918 = vadd.f32 0.0, %v2917
    %v2919 = vpop.f32.mrb[0].mxu0
    %v2920 = vadd.f32 0.0, %v2919
    %v2921 = vpop.f32.mrb[0].mxu0
    %v2922 = vadd.f32 0.0, %v2921
    %v2923 = vpop.f32.mrb[0].mxu0
    %v2924 = vadd.f32 0.0, %v2923
    %2925 = vmatprep.mubr.bf16.mxu0 %v2192
    %2926 = vmatmul.mubr.bf16.gmra.mrb[0].mxu0 %v2191
    %v2927 = vpop.f32.mrb[0].mxu0
    %v2928 = vadd.f32 0.0, %v2927
    %v2929 = vpop.f32.mrb[0].mxu0
    %v2930 = vadd.f32 0.0, %v2929
    %v2931 = vpop.f32.mrb[0].mxu0
    %v2932 = vadd.f32 0.0, %v2931
    %v2933 = vpop.f32.mrb[0].mxu0
    %v2934 = vadd.f32 0.0, %v2933
    %2935 = vmatprep.mubr.bf16.mxu0 %v2196
    %2936 = vmatmul.mubr.bf16.gmra.mrb[0].mxu0 %v2195
    %v2937 = vpop.f32.mrb[0].mxu0
    %v2938 = vadd.f32 0.0, %v2937
    %v2939 = vpop.f32.mrb[0].mxu0
    %v2940 = vadd.f32 0.0, %v2939
    %v2941 = vpop.f32.mrb[0].mxu0
    %v2942 = vadd.f32 0.0, %v2941
    %v2943 = vpop.f32.mrb[0].mxu0
    %v2944 = vadd.f32 0.0, %v2943
    %2945 = vmatprep.mubr.bf16.mxu0 %v2200
    %2946 = vmatmul.mubr.bf16.gmra.mrb[0].mxu0 %v2199
    %v2947 = vpop.f32.mrb[0].mxu0
    %v2948 = vadd.f32 0.0, %v2947
    %v2949 = vpop.f32.mrb[0].mxu0
    %v2950 = vadd.f32 0.0, %v2949
    %v2951 = vpop.f32.mrb[0].mxu0
    %v2952 = vadd.f32 0.0, %v2951
    %v2953 = vpop.f32.mrb[0].mxu0
    %v2954 = vadd.f32 0.0, %v2953
    %2955 = vmatprep.mubr.bf16.mxu0 %v2204
    %2956 = vmatmul.mubr.bf16.gmra.mrb[0].mxu0 %v2203
    %v2957 = vpop.f32.mrb[0].mxu0
    %v2958 = vadd.f32 0.0, %v2957
    %v2959 = vpop.f32.mrb[0].mxu0
    %v2960 = vadd.f32 0.0, %v2959
    %v2961 = vpop.f32.mrb[0].mxu0
    %v2962 = vadd.f32 0.0, %v2961
    %v2963 = vpop.f32.mrb[0].mxu0
    %v2964 = vadd.f32 0.0, %v2963
    %2965 = vmatprep.mubr.bf16.mxu0 %v2208
    %2966 = vmatmul.mubr.bf16.gmra.mrb[0].mxu0 %v2207
    %v2967 = vpop.f32.mrb[0].mxu0
    %v2968 = vadd.f32 0.0, %v2967
    %v2969 = vpop.f32.mrb[0].mxu0
    %v2970 = vadd.f32 0.0, %v2969
    %v2971 = vpop.f32.mrb[0].mxu0
    %v2972 = vadd.f32 0.0, %v2971
    %v2973 = vpop.f32.mrb[0].mxu0
    %v2974 = vadd.f32 0.0, %v2973
    %2975 = vmatprep.mubr.bf16.mxu0 %v2212
    %2976 = vmatmul.mubr.bf16.gmra.mrb[0].mxu0 %v2211
    %v2977 = vpop.f32.mrb[0].mxu0
    %v2978 = vadd.f32 0.0, %v2977
    %v2979 = vpop.f32.mrb[0].mxu0
    %v2980 = vadd.f32 0.0, %v2979
    %v2981 = vpop.f32.mrb[0].mxu0
    %v2982 = vadd.f32 0.0, %v2981
    %v2983 = vpop.f32.mrb[0].mxu0
    %v2984 = vadd.f32 0.0, %v2983
    %2985 = vmatprep.mubr.bf16.mxu0 %v2216
    %2986 = vmatmul.mubr.bf16.gmra.mrb[0].mxu0 %v2215
    %v2987 = vpop.f32.mrb[0].mxu0
    %v2988 = vadd.f32 0.0, %v2987
    %v2989 = vpop.f32.mrb[0].mxu0
    %v2990 = vadd.f32 0.0, %v2989
    %v2991 = vpop.f32.mrb[0].mxu0
    %v2992 = vadd.f32 0.0, %v2991
    %v2993 = vpop.f32.mrb[0].mxu0
    %v2994 = vadd.f32 0.0, %v2993
    %2995 = vmatprep.mubr.bf16.mxu0 %v2220
    %2996 = vmatmul.mubr.bf16.gmra.mrb[0].mxu0 %v2219
    %v2997 = vpop.f32.mrb[0].mxu0
    %v2998 = vadd.f32 0.0, %v2997
    %v2999 = vpop.f32.mrb[0].mxu0
    %v3000 = vadd.f32 0.0, %v2999
    %v3001 = vpop.f32.mrb[0].mxu0
    %v3002 = vadd.f32 0.0, %v3001
    %v3003 = vpop.f32.mrb[0].mxu0
    %v3004 = vadd.f32 0.0, %v3003
    %3005 = vmatprep.mubr.bf16.mxu0 %v2224
    %3006 = vmatmul.mubr.bf16.gmra.mrb[0].mxu0 %v2223
    %v3007 = vpop.f32.mrb[0].mxu0
    %v3008 = vadd.f32 0.0, %v3007
    %v3009 = vpop.f32.mrb[0].mxu0
    %v3010 = vadd.f32 0.0, %v3009
    %v3011 = vpop.f32.mrb[0].mxu0
    %v3012 = vadd.f32 0.0, %v3011
    %v3013 = vpop.f32.mrb[0].mxu0
    %v3014 = vadd.f32 0.0, %v3013
    %3015 = vmatprep.mubr.bf16.mxu0 %v2228
    %3016 = vmatmul.mubr.bf16.gmra.mrb[0].mxu0 %v2227
    %v3017 = vpop.f32.mrb[0].mxu0
    %v3018 = vadd.f32 0.0, %v3017
    %v3019 = vpop.f32.mrb[0].mxu0
    %v3020 = vadd.f32 0.0, %v3019
    %v3021 = vpop.f32.mrb[0].mxu0
    %v3022 = vadd.f32 0.0, %v3021
    %v3023 = vpop.f32.mrb[0].mxu0
    %v3024 = vadd.f32 0.0, %v3023
    %3025 = vmatprep.mubr.bf16.mxu0 %v2232
    %3026 = vmatmul.mubr.bf16.gmra.mrb[0].mxu0 %v2231
    %v3027 = vpop.f32.mrb[0].mxu0
    %v3028 = vadd.f32 0.0, %v3027
    %v3029 = vpop.f32.mrb[0].mxu0
    %v3030 = vadd.f32 0.0, %v3029
    %v3031 = vpop.f32.mrb[0].mxu0
    %v3032 = vadd.f32 0.0, %v3031
    %v3033 = vpop.f32.mrb[0].mxu0
    %v3034 = vadd.f32 0.0, %v3033
    %3035 = vmatprep.mubr.bf16.mxu0 %v2236
    %3036 = vmatmul.mubr.bf16.gmra.mrb[0].mxu0 %v2235
    %v3037 = vpop.f32.mrb[0].mxu0
    %v3038 = vadd.f32 0.0, %v3037
    %v3039 = vpop.f32.mrb[0].mxu0
    %v3040 = vadd.f32 0.0, %v3039
    %v3041 = vpop.f32.mrb[0].mxu0
    %v3042 = vadd.f32 0.0, %v3041
    %v3043 = vpop.f32.mrb[0].mxu0
    %v3044 = vadd.f32 0.0, %v3043
    %3045 = vmatprep.mubr.bf16.mxu0 %v2240
    %3046 = vmatmul.mubr.bf16.gmra.mrb[0].mxu0 %v2239
    %v3047 = vpop.f32.mrb[0].mxu0
    %v3048 = vadd.f32 0.0, %v3047
    %v3049 = vpop.f32.mrb[0].mxu0
    %v3050 = vadd.f32 0.0, %v3049
    %v3051 = vpop.f32.mrb[0].mxu0
    %v3052 = vadd.f32 0.0, %v3051
    %v3053 = vpop.f32.mrb[0].mxu0
    %v3054 = vadd.f32 0.0, %v3053
    %3055 = vmatprep.mubr.bf16.mxu0 %v2244
    %3056 = vmatmul.mubr.bf16.gmra.mrb[0].mxu0 %v2243
    %v3057 = vpop.f32.mrb[0].mxu0
    %v3058 = vadd.f32 0.0, %v3057
    %v3059 = vpop.f32.mrb[0].mxu0
    %v3060 = vadd.f32 0.0, %v3059
    %v3061 = vpop.f32.mrb[0].mxu0
    %v3062 = vadd.f32 0.0, %v3061
    %v3063 = vpop.f32.mrb[0].mxu0
    %v3064 = vadd.f32 0.0, %v3063
    %3065 = vmatprep.mubr.bf16.mxu0 %v2248
    %3066 = vmatmul.mubr.bf16.gmra.mrb[0].mxu0 %v2247
    %v3067 = vpop.f32.mrb[0].mxu0
    %v3068 = vadd.f32 0.0, %v3067
    %v3069 = vpop.f32.mrb[0].mxu0
    %v3070 = vadd.f32 0.0, %v3069
    %v3071 = vpop.f32.mrb[0].mxu0
    %v3072 = vadd.f32 0.0, %v3071
    %v3073 = vpop.f32.mrb[0].mxu0
    %v3074 = vadd.f32 0.0, %v3073
    %3075 = vmatprep.mubr.bf16.mxu0 %v2252
    %3076 = vmatmul.mubr.bf16.gmra.mrb[0].mxu0 %v2251
    %v3077 = vpop.f32.mrb[0].mxu0
    %v3078 = vadd.f32 0.0, %v3077
    %v3079 = vpop.f32.mrb[0].mxu0
    %v3080 = vadd.f32 0.0, %v3079
    %v3081 = vpop.f32.mrb[0].mxu0
    %v3082 = vadd.f32 0.0, %v3081
    %v3083 = vpop.f32.mrb[0].mxu0
    %v3084 = vadd.f32 0.0, %v3083
    %3085 = vmatprep.mubr.bf16.mxu0 %v2256
    %3086 = vmatmul.mubr.bf16.gmra.mrb[0].mxu0 %v2255
    %v3087 = vpop.f32.mrb[0].mxu0
    %v3088 = vadd.f32 0.0, %v3087
    %v3089 = vpop.f32.mrb[0].mxu0
    %v3090 = vadd.f32 0.0, %v3089
    %v3091 = vpop.f32.mrb[0].mxu0
    %v3092 = vadd.f32 0.0, %v3091
    %v3093 = vpop.f32.mrb[0].mxu0
    %v3094 = vadd.f32 0.0, %v3093
    %3095 = vmatprep.mubr.bf16.mxu0 %v2260
    %3096 = vmatmul.mubr.bf16.gmra.mrb[0].mxu0 %v2259
    %v3097 = vpop.f32.mrb[0].mxu0
    %v3098 = vadd.f32 0.0, %v3097
    %v3099 = vpop.f32.mrb[0].mxu0
    %v3100 = vadd.f32 0.0, %v3099
    %v3101 = vpop.f32.mrb[0].mxu0
    %v3102 = vadd.f32 0.0, %v3101
    %v3103 = vpop.f32.mrb[0].mxu0
    %v3104 = vadd.f32 0.0, %v3103
    %3105 = vmatprep.mubr.bf16.mxu0 %v2264
    %3106 = vmatmul.mubr.bf16.gmra.mrb[0].mxu0 %v2263
    %v3107 = vpop.f32.mrb[0].mxu0
    %v3108 = vadd.f32 0.0, %v3107
    %v3109 = vpop.f32.mrb[0].mxu0
    %v3110 = vadd.f32 0.0, %v3109
    %v3111 = vpop.f32.mrb[0].mxu0
    %v3112 = vadd.f32 0.0, %v3111
    %v3113 = vpop.f32.mrb[0].mxu0
    %v3114 = vadd.f32 0.0, %v3113
    %3115 = vmatprep.mubr.bf16.mxu0 %v2268
    %3116 = vmatmul.mubr.bf16.gmra.mrb[0].mxu0 %v2267
    %v3117 = vpop.f32.mrb[0].mxu0
    %v3118 = vadd.f32 0.0, %v3117
    %v3119 = vpop.f32.mrb[0].mxu0
    %v3120 = vadd.f32 0.0, %v3119
    %v3121 = vpop.f32.mrb[0].mxu0
    %v3122 = vadd.f32 0.0, %v3121
    %v3123 = vpop.f32.mrb[0].mxu0
    %v3124 = vadd.f32 0.0, %v3123
    %3125 = vmatprep.mubr.bf16.mxu0 %v2272
    %3126 = vmatmul.mubr.bf16.gmra.mrb[0].mxu0 %v2271
    %v3127 = vpop.f32.mrb[0].mxu0
    %v3128 = vadd.f32 0.0, %v3127
    %v3129 = vpop.f32.mrb[0].mxu0
    %v3130 = vadd.f32 0.0, %v3129
    %v3131 = vpop.f32.mrb[0].mxu0
    %v3132 = vadd.f32 0.0, %v3131
    %v3133 = vpop.f32.mrb[0].mxu0
    %v3134 = vadd.f32 0.0, %v3133
    %3135 = vmatprep.mubr.bf16.mxu0 %v2276
    %3136 = vmatmul.mubr.bf16.gmra.mrb[0].mxu0 %v2275
    %v3137 = vpop.f32.mrb[0].mxu0
    %v3138 = vadd.f32 0.0, %v3137
    %v3139 = vpop.f32.mrb[0].mxu0
    %v3140 = vadd.f32 0.0, %v3139
    %v3141 = vpop.f32.mrb[0].mxu0
    %v3142 = vadd.f32 0.0, %v3141
    %v3143 = vpop.f32.mrb[0].mxu0
    %v3144 = vadd.f32 0.0, %v3143
    %3145 = vmatprep.mubr.bf16.mxu0 %v2280
    %3146 = vmatmul.mubr.bf16.gmra.mrb[0].mxu0 %v2279
    %v3147 = vpop.f32.mrb[0].mxu0
    %v3148 = vadd.f32 0.0, %v3147
    %v3149 = vpop.f32.mrb[0].mxu0
    %v3150 = vadd.f32 0.0, %v3149
    %v3151 = vpop.f32.mrb[0].mxu0
    %v3152 = vadd.f32 0.0, %v3151
    %v3153 = vpop.f32.mrb[0].mxu0
    %v3154 = vadd.f32 0.0, %v3153
    %3155 = vmatprep.mubr.bf16.mxu0 %v2284
    %3156 = vmatmul.mubr.bf16.gmra.mrb[0].mxu0 %v2283
    %v3157 = vpop.f32.mrb[0].mxu0
    %v3158 = vadd.f32 0.0, %v3157
    %v3159 = vpop.f32.mrb[0].mxu0
    %v3160 = vadd.f32 0.0, %v3159
    %v3161 = vpop.f32.mrb[0].mxu0
    %v3162 = vadd.f32 0.0, %v3161
    %v3163 = vpop.f32.mrb[0].mxu0
    %v3164 = vadd.f32 0.0, %v3163
    %3165 = vmatprep.mubr.bf16.mxu0 %v2288
    %3166 = vmatmul.mubr.bf16.gmra.mrb[0].mxu0 %v2287
    %v3167 = vpop.f32.mrb[0].mxu0
    %v3168 = vadd.f32 0.0, %v3167
    %v3169 = vpop.f32.mrb[0].mxu0
    %v3170 = vadd.f32 0.0, %v3169
    %v3171 = vpop.f32.mrb[0].mxu0
    %v3172 = vadd.f32 0.0, %v3171
    %v3173 = vpop.f32.mrb[0].mxu0
    %v3174 = vadd.f32 0.0, %v3173
    %3175 = vmatprep.mubr.bf16.mxu0 %v2292
    %3176 = vmatmul.mubr.bf16.gmra.mrb[0].mxu0 %v2291
    %v3177 = vpop.f32.mrb[0].mxu0
    %v3178 = vadd.f32 0.0, %v3177
    %v3179 = vpop.f32.mrb[0].mxu0
    %v3180 = vadd.f32 0.0, %v3179
    %v3181 = vpop.f32.mrb[0].mxu0
    %v3182 = vadd.f32 0.0, %v3181
    %v3183 = vpop.f32.mrb[0].mxu0
    %v3184 = vadd.f32 0.0, %v3183
    %3185 = vmatprep.mubr.bf16.mxu0 %v2296
    %3186 = vmatmul.mubr.bf16.gmra.mrb[0].mxu0 %v2295
    %v3187 = vpop.f32.mrb[0].mxu0
    %v3188 = vadd.f32 0.0, %v3187
    %v3189 = vpop.f32.mrb[0].mxu0
    %v3190 = vadd.f32 0.0, %v3189
    %v3191 = vpop.f32.mrb[0].mxu0
    %v3192 = vadd.f32 0.0, %v3191
    %v3193 = vpop.f32.mrb[0].mxu0
    %v3194 = vadd.f32 0.0, %v3193
    %3195 = vmatprep.mubr.bf16.mxu0 %v2300
    %3196 = vmatmul.mubr.bf16.gmra.mrb[0].mxu0 %v2299
    %v3197 = vpop.f32.mrb[0].mxu0
    %v3198 = vadd.f32 0.0, %v3197
    %v3199 = vpop.f32.mrb[0].mxu0
    %v3200 = vadd.f32 0.0, %v3199
    %v3201 = vpop.f32.mrb[0].mxu0
    %v3202 = vadd.f32 0.0, %v3201
    %v3203 = vpop.f32.mrb[0].mxu0
    %v3204 = vadd.f32 0.0, %v3203
    %3205 = vmatprep.mubr.bf16.mxu0 %v2304
    %3206 = vmatmul.mubr.bf16.gmra.mrb[0].mxu0 %v2303
    %v3207 = vpop.f32.mrb[0].mxu0
    %v3208 = vadd.f32 0.0, %v3207
    %v3209 = vpop.f32.mrb[0].mxu0
    %v3210 = vadd.f32 0.0, %v3209
    %v3211 = vpop.f32.mrb[0].mxu0
    %v3212 = vadd.f32 0.0, %v3211
    %v3213 = vpop.f32.mrb[0].mxu0
    %v3214 = vadd.f32 0.0, %v3213
    %3215 = vmatprep.mubr.bf16.mxu0 %v2308
    %3216 = vmatmul.mubr.bf16.gmra.mrb[0].mxu0 %v2307
    %v3217 = vpop.f32.mrb[0].mxu0
    %v3218 = vadd.f32 0.0, %v3217
    %v3219 = vpop.f32.mrb[0].mxu0
    %v3220 = vadd.f32 0.0, %v3219
    %v3221 = vpop.f32.mrb[0].mxu0
    %v3222 = vadd.f32 0.0, %v3221
    %v3223 = vpop.f32.mrb[0].mxu0
    %v3224 = vadd.f32 0.0, %v3223
    %3225 = vmatprep.mubr.bf16.mxu0 %v2312
    %3226 = vmatmul.mubr.bf16.gmra.mrb[0].mxu0 %v2311
    %v3227 = vpop.f32.mrb[0].mxu0
    %v3228 = vadd.f32 0.0, %v3227
    %v3229 = vpop.f32.mrb[0].mxu0
    %v3230 = vadd.f32 0.0, %v3229
    %v3231 = vpop.f32.mrb[0].mxu0
    %v3232 = vadd.f32 0.0, %v3231
    %v3233 = vpop.f32.mrb[0].mxu0
    %v3234 = vadd.f32 0.0, %v3233
    %3235 = vmatprep.mubr.bf16.mxu0 %v2316
    %3236 = vmatmul.mubr.bf16.gmra.mrb[0].mxu0 %v2315
    %v3237 = vpop.f32.mrb[0].mxu0
    %v3238 = vadd.f32 0.0, %v3237
    %v3239 = vpop.f32.mrb[0].mxu0
    %v3240 = vadd.f32 0.0, %v3239
    %v3241 = vpop.f32.mrb[0].mxu0
    %v3242 = vadd.f32 0.0, %v3241
    %v3243 = vpop.f32.mrb[0].mxu0
    %v3244 = vadd.f32 0.0, %v3243
    %3245 = vmatprep.mubr.bf16.mxu0 %v2320
    %3246 = vmatmul.mubr.bf16.gmra.mrb[0].mxu0 %v2319
    %v3247 = vpop.f32.mrb[0].mxu0
    %v3248 = vadd.f32 0.0, %v3247
    %v3249 = vpop.f32.mrb[0].mxu0
    %v3250 = vadd.f32 0.0, %v3249
    %v3251 = vpop.f32.mrb[0].mxu0
    %v3252 = vadd.f32 0.0, %v3251
    %v3253 = vpop.f32.mrb[0].mxu0
    %v3254 = vadd.f32 0.0, %v3253
    %3255 = vmatprep.mubr.bf16.mxu0 %v2324
    %3256 = vmatmul.mubr.bf16.gmra.mrb[0].mxu0 %v2323
    %v3257 = vpop.f32.mrb[0].mxu0
    %v3258 = vadd.f32 0.0, %v3257
    %v3259 = vpop.f32.mrb[0].mxu0
    %v3260 = vadd.f32 0.0, %v3259
    %v3261 = vpop.f32.mrb[0].mxu0
    %v3262 = vadd.f32 0.0, %v3261
    %v3263 = vpop.f32.mrb[0].mxu0
    %v3264 = vadd.f32 0.0, %v3263
    %3265 = vmatprep.mubr.bf16.mxu0 %v2328
    %3266 = vmatmul.mubr.bf16.gmra.mrb[0].mxu0 %v2327
    %v3267 = vpop.f32.mrb[0].mxu0
    %v3268 = vadd.f32 0.0, %v3267
    %v3269 = vpop.f32.mrb[0].mxu0
    %v3270 = vadd.f32 0.0, %v3269
    %v3271 = vpop.f32.mrb[0].mxu0
    %v3272 = vadd.f32 0.0, %v3271
    %v3273 = vpop.f32.mrb[0].mxu0
    %v3274 = vadd.f32 0.0, %v3273
    %3275 = vmatprep.mubr.bf16.mxu0 %v2332
    %3276 = vmatmul.mubr.bf16.gmra.mrb[0].mxu0 %v2331
    %v3277 = vpop.f32.mrb[0].mxu0
    %v3278 = vadd.f32 0.0, %v3277
    %v3279 = vpop.f32.mrb[0].mxu0
    %v3280 = vadd.f32 0.0, %v3279
    %v3281 = vpop.f32.mrb[0].mxu0
    %v3282 = vadd.f32 0.0, %v3281
    %v3283 = vpop.f32.mrb[0].mxu0
    %v3284 = vadd.f32 0.0, %v3283
    %3285 = vmatprep.mubr.bf16.mxu0 %v2336
    %3286 = vmatmul.mubr.bf16.gmra.mrb[0].mxu0 %v2335
    %v3287 = vpop.f32.mrb[0].mxu0
    %v3288 = vadd.f32 0.0, %v3287
    %v3289 = vpop.f32.mrb[0].mxu0
    %v3290 = vadd.f32 0.0, %v3289
    %v3291 = vpop.f32.mrb[0].mxu0
    %v3292 = vadd.f32 0.0, %v3291
    %v3293 = vpop.f32.mrb[0].mxu0
    %v3294 = vadd.f32 0.0, %v3293
    %3295 = vmatprep.mubr.bf16.mxu0 %v2340
    %3296 = vmatmul.mubr.bf16.gmra.mrb[0].mxu0 %v2339
    %v3297 = vpop.f32.mrb[0].mxu0
    %v3298 = vadd.f32 0.0, %v3297
    %v3299 = vpop.f32.mrb[0].mxu0
    %v3300 = vadd.f32 0.0, %v3299
    %v3301 = vpop.f32.mrb[0].mxu0
    %v3302 = vadd.f32 0.0, %v3301
    %v3303 = vpop.f32.mrb[0].mxu0
    %v3304 = vadd.f32 0.0, %v3303
    %3305 = vmatprep.mubr.bf16.mxu0 %v2344
    %3306 = vmatmul.mubr.bf16.gmra.mrb[0].mxu0 %v2343
    %v3307 = vpop.f32.mrb[0].mxu0
    %v3308 = vadd.f32 0.0, %v3307
    %v3309 = vpop.f32.mrb[0].mxu0
    %v3310 = vadd.f32 0.0, %v3309
    %v3311 = vpop.f32.mrb[0].mxu0
    %v3312 = vadd.f32 0.0, %v3311
    %v3313 = vpop.f32.mrb[0].mxu0
    %v3314 = vadd.f32 0.0, %v3313
    %3315 = vmatprep.mubr.bf16.mxu0 %v2348
    %3316 = vmatmul.mubr.bf16.gmra.mrb[0].mxu0 %v2347
    %v3317 = vpop.f32.mrb[0].mxu0
    %v3318 = vadd.f32 0.0, %v3317
    %v3319 = vpop.f32.mrb[0].mxu0
    %v3320 = vadd.f32 0.0, %v3319
    %v3321 = vpop.f32.mrb[0].mxu0
    %v3322 = vadd.f32 0.0, %v3321
    %v3323 = vpop.f32.mrb[0].mxu0
    %v3324 = vadd.f32 0.0, %v3323
    %3325 = vmatprep.mubr.bf16.mxu0 %v2352
    %3326 = vmatmul.mubr.bf16.gmra.mrb[0].mxu0 %v2351
    %v3327 = vpop.f32.mrb[0].mxu0
    %v3328 = vadd.f32 0.0, %v3327
    %v3329 = vpop.f32.mrb[0].mxu0
    %v3330 = vadd.f32 0.0, %v3329
    %v3331 = vpop.f32.mrb[0].mxu0
    %v3332 = vadd.f32 0.0, %v3331
    %v3333 = vpop.f32.mrb[0].mxu0
    %v3334 = vadd.f32 0.0, %v3333
    %3335 = vmatprep.mubr.bf16.mxu0 %v2356
    %3336 = vmatmul.mubr.bf16.gmra.mrb[0].mxu0 %v2355
    %v3337 = vpop.f32.mrb[0].mxu0
    %v3338 = vadd.f32 0.0, %v3337
    %v3339 = vpop.f32.mrb[0].mxu0
    %v3340 = vadd.f32 0.0, %v3339
    %v3341 = vpop.f32.mrb[0].mxu0
    %v3342 = vadd.f32 0.0, %v3341
    %v3343 = vpop.f32.mrb[0].mxu0
    %v3344 = vadd.f32 0.0, %v3343
    %3345 = vmatprep.mubr.bf16.mxu0 %v2360
    %3346 = vmatmul.mubr.bf16.gmra.mrb[0].mxu0 %v2359
    %v3347 = vpop.f32.mrb[0].mxu0
    %v3348 = vadd.f32 0.0, %v3347
    %v3349 = vpop.f32.mrb[0].mxu0
    %v3350 = vadd.f32 0.0, %v3349
    %v3351 = vpop.f32.mrb[0].mxu0
    %v3352 = vadd.f32 0.0, %v3351
    %v3353 = vpop.f32.mrb[0].mxu0
    %v3354 = vadd.f32 0.0, %v3353
    %3355 = vmatprep.mubr.bf16.mxu0 %v2364
    %3356 = vmatmul.mubr.bf16.gmra.mrb[0].mxu0 %v2363
    %v3357 = vpop.f32.mrb[0].mxu0
    %v3358 = vadd.f32 0.0, %v3357
    %v3359 = vpop.f32.mrb[0].mxu0
    %v3360 = vadd.f32 0.0, %v3359
    %v3361 = vpop.f32.mrb[0].mxu0
    %v3362 = vadd.f32 0.0, %v3361
    %v3363 = vpop.f32.mrb[0].mxu0
    %v3364 = vadd.f32 0.0, %v3363
    %3365 = vmatprep.mubr.bf16.mxu0 %v2368
    %3366 = vmatmul.mubr.bf16.gmra.mrb[0].mxu0 %v2367
    %v3367 = vpop.f32.mrb[0].mxu0
    %v3368 = vadd.f32 0.0, %v3367
    %v3369 = vpop.f32.mrb[0].mxu0
    %v3370 = vadd.f32 0.0, %v3369
    %v3371 = vpop.f32.mrb[0].mxu0
    %v3372 = vadd.f32 0.0, %v3371
    %v3373 = vpop.f32.mrb[0].mxu0
    %v3374 = vadd.f32 0.0, %v3373
    %3375 = vmatprep.mubr.bf16.mxu0 %v2372
    %3376 = vmatmul.mubr.bf16.gmra.mrb[0].mxu0 %v2371
    %v3377 = vpop.f32.mrb[0].mxu0
    %v3378 = vadd.f32 0.0, %v3377
    %v3379 = vpop.f32.mrb[0].mxu0
    %v3380 = vadd.f32 0.0, %v3379
    %v3381 = vpop.f32.mrb[0].mxu0
    %v3382 = vadd.f32 0.0, %v3381
    %v3383 = vpop.f32.mrb[0].mxu0
    %v3384 = vadd.f32 0.0, %v3383
    %3385 = vmatprep.mubr.bf16.mxu0 %v2376
    %3386 = vmatmul.mubr.bf16.gmra.mrb[0].mxu0 %v2375
    %v3387 = vpop.f32.mrb[0].mxu0
    %v3388 = vadd.f32 0.0, %v3387
    %v3389 = vpop.f32.mrb[0].mxu0
    %v3390 = vadd.f32 0.0, %v3389
    %v3391 = vpop.f32.mrb[0].mxu0
    %v3392 = vadd.f32 0.0, %v3391
    %v3393 = vpop.f32.mrb[0].mxu0
    %v3394 = vadd.f32 0.0, %v3393
    %3395 = vmatprep.mubr.bf16.mxu0 %v2380
    %3396 = vmatmul.mubr.bf16.gmra.mrb[0].mxu0 %v2379
    %v3397 = vpop.f32.mrb[0].mxu0
    %v3398 = vadd.f32 0.0, %v3397
    %v3399 = vpop.f32.mrb[0].mxu0
    %v3400 = vadd.f32 0.0, %v3399
    %v3401 = vpop.f32.mrb[0].mxu0
    %v3402 = vadd.f32 0.0, %v3401
    %v3403 = vpop.f32.mrb[0].mxu0
    %v3404 = vadd.f32 0.0, %v3403
    %3405 = vmatprep.mubr.bf16.mxu0 %v2384
    %3406 = vmatmul.mubr.bf16.gmra.mrb[0].mxu0 %v2383
    %v3407 = vpop.f32.mrb[0].mxu0
    %v3408 = vadd.f32 0.0, %v3407
    %v3409 = vpop.f32.mrb[0].mxu0
    %v3410 = vadd.f32 0.0, %v3409
    %v3411 = vpop.f32.mrb[0].mxu0
    %v3412 = vadd.f32 0.0, %v3411
    %v3413 = vpop.f32.mrb[0].mxu0
    %v3414 = vadd.f32 0.0, %v3413
    %3415 = vmatprep.mubr.bf16.mxu0 %v2388
    %3416 = vmatmul.mubr.bf16.gmra.mrb[0].mxu0 %v2387
    %v3417 = vpop.f32.mrb[0].mxu0
    %v3418 = vadd.f32 0.0, %v3417
    %v3419 = vpop.f32.mrb[0].mxu0
    %v3420 = vadd.f32 0.0, %v3419
    %v3421 = vpop.f32.mrb[0].mxu0
    %v3422 = vadd.f32 0.0, %v3421
    %v3423 = vpop.f32.mrb[0].mxu0
    %v3424 = vadd.f32 0.0, %v3423
    %3425 = vmatprep.mubr.bf16.mxu0 %v2392
    %3426 = vmatmul.mubr.bf16.gmra.mrb[0].mxu0 %v2391
    %v3427 = vpop.f32.mrb[0].mxu0
    %v3428 = vadd.f32 0.0, %v3427
    %v3429 = vpop.f32.mrb[0].mxu0
    %v3430 = vadd.f32 0.0, %v3429
    %v3431 = vpop.f32.mrb[0].mxu0
    %v3432 = vadd.f32 0.0, %v3431
    %v3433 = vpop.f32.mrb[0].mxu0
    %v3434 = vadd.f32 0.0, %v3433
    %3435 = vdwg.mxu0
    %3436 = vmatprep.subr.bf16.mxu0 %v924
    %3437 = vmatpush1.bf16.msra.mxu0 %v923
    %3438 = vmatprep.subr.bf16.mxu0 %v926
    %3439 = vmatpush1.bf16.msra.mxu0 %v925
    %3440 = vmatprep.subr.bf16.mxu0 %v928
    %3441 = vmatpush1.bf16.msra.mxu0 %v927
    %3442 = vmatprep.subr.bf16.mxu0 %v930
    %3443 = vmatpush1.bf16.msra.mxu0 %v929
    %3444 = vmatprep.subr.bf16.mxu0 %v932
    %3445 = vmatpush1.bf16.msra.mxu0 %v931
    %3446 = vmatprep.subr.bf16.mxu0 %v934
    %3447 = vmatpush1.bf16.msra.mxu0 %v933
    %3448 = vmatprep.subr.bf16.mxu0 %v936
    %3449 = vmatpush1.bf16.msra.mxu0 %v935
    %3450 = vmatprep.subr.bf16.mxu0 %v938
    %3451 = vmatpush1.bf16.msra.mxu0 %v937
    %3452 = vmatprep.subr.bf16.mxu0 %v940
    %3453 = vmatpush1.bf16.msra.mxu0 %v939
    %3454 = vmatprep.subr.bf16.mxu0 %v942
    %3455 = vmatpush1.bf16.msra.mxu0 %v941
    %3456 = vmatprep.subr.bf16.mxu0 %v944
    %3457 = vmatpush1.bf16.msra.mxu0 %v943
    %3458 = vmatprep.subr.bf16.mxu0 %v946
    %3459 = vmatpush1.bf16.msra.mxu0 %v945
    %3460 = vmatprep.subr.bf16.mxu0 %v948
    %3461 = vmatpush1.bf16.msra.mxu0 %v947
    %3462 = vmatprep.subr.bf16.mxu0 %v950
    %3463 = vmatpush1.bf16.msra.mxu0 %v949
    %3464 = vmatprep.subr.bf16.mxu0 %v952
    %3465 = vmatpush1.bf16.msra.mxu0 %v951
    %3466 = vmatprep.subr.bf16.mxu0 %v954
    %3467 = vmatpush1.bf16.msra.mxu0 %v953
    %3468 = vmatprep.mubr.bf16.mxu0 %v2110
    %3469 = vmatmul.mubr.bf16.gmra.mrb[0].mxu0 %v2109
    %v3470 = vpop.f32.mrb[0].mxu0
    %v3471 = vadd.f32 %v2718, %v3470
    %v3472 = vpop.f32.mrb[0].mxu0
    %v3473 = vadd.f32 %v2720, %v3472
    %v3474 = vpop.f32.mrb[0].mxu0
    %v3475 = vadd.f32 %v2722, %v3474
    %v3476 = vpop.f32.mrb[0].mxu0
    %v3477 = vadd.f32 %v2724, %v3476
    %3478 = vmatprep.mubr.bf16.mxu0 %v2114
    %3479 = vmatmul.mubr.bf16.gmra.mrb[0].mxu0 %v2113
    %v3480 = vpop.f32.mrb[0].mxu0
    %v3481 = vadd.f32 %v2728, %v3480
    %v3482 = vpop.f32.mrb[0].mxu0
    %v3483 = vadd.f32 %v2730, %v3482
    %v3484 = vpop.f32.mrb[0].mxu0
    %v3485 = vadd.f32 %v2732, %v3484
    %v3486 = vpop.f32.mrb[0].mxu0
    %v3487 = vadd.f32 %v2734, %v3486
    %3488 = vmatprep.mubr.bf16.mxu0 %v2118
    %3489 = vmatmul.mubr.bf16.gmra.mrb[0].mxu0 %v2117
    %v3490 = vpop.f32.mrb[0].mxu0
    %v3491 = vadd.f32 %v2738, %v3490
    %v3492 = vpop.f32.mrb[0].mxu0
    %v3493 = vadd.f32 %v2740, %v3492
    %v3494 = vpop.f32.mrb[0].mxu0
    %v3495 = vadd.f32 %v2742, %v3494
    %v3496 = vpop.f32.mrb[0].mxu0
    %v3497 = vadd.f32 %v2744, %v3496
    %3498 = vmatprep.mubr.bf16.mxu0 %v2122
    %3499 = vmatmul.mubr.bf16.gmra.mrb[0].mxu0 %v2121
    %v3500 = vpop.f32.mrb[0].mxu0
    %v3501 = vadd.f32 %v2748, %v3500
    %v3502 = vpop.f32.mrb[0].mxu0
    %v3503 = vadd.f32 %v2750, %v3502
    %v3504 = vpop.f32.mrb[0].mxu0
    %v3505 = vadd.f32 %v2752, %v3504
    %v3506 = vpop.f32.mrb[0].mxu0
    %v3507 = vadd.f32 %v2754, %v3506
    %3508 = vmatprep.mubr.bf16.mxu0 %v2126
    %3509 = vmatmul.mubr.bf16.gmra.mrb[0].mxu0 %v2125
    %v3510 = vpop.f32.mrb[0].mxu0
    %v3511 = vadd.f32 %v2758, %v3510
    %v3512 = vpop.f32.mrb[0].mxu0
    %v3513 = vadd.f32 %v2760, %v3512
    %v3514 = vpop.f32.mrb[0].mxu0
    %v3515 = vadd.f32 %v2762, %v3514
    %v3516 = vpop.f32.mrb[0].mxu0
    %v3517 = vadd.f32 %v2764, %v3516
    %3518 = vmatprep.mubr.bf16.mxu0 %v2130
    %3519 = vmatmul.mubr.bf16.gmra.mrb[0].mxu0 %v2129
    %v3520 = vpop.f32.mrb[0].mxu0
    %v3521 = vadd.f32 %v2768, %v3520
    %v3522 = vpop.f32.mrb[0].mxu0
    %v3523 = vadd.f32 %v2770, %v3522
    %v3524 = vpop.f32.mrb[0].mxu0
    %v3525 = vadd.f32 %v2772, %v3524
    %v3526 = vpop.f32.mrb[0].mxu0
    %v3527 = vadd.f32 %v2774, %v3526
    %3528 = vmatprep.mubr.bf16.mxu0 %v2134
    %3529 = vmatmul.mubr.bf16.gmra.mrb[0].mxu0 %v2133
    %v3530 = vpop.f32.mrb[0].mxu0
    %v3531 = vadd.f32 %v2778, %v3530
    %v3532 = vpop.f32.mrb[0].mxu0
    %v3533 = vadd.f32 %v2780, %v3532
    %v3534 = vpop.f32.mrb[0].mxu0
    %v3535 = vadd.f32 %v2782, %v3534
    %v3536 = vpop.f32.mrb[0].mxu0
    %v3537 = vadd.f32 %v2784, %v3536
    %3538 = vmatprep.mubr.bf16.mxu0 %v2138
    %3539 = vmatmul.mubr.bf16.gmra.mrb[0].mxu0 %v2137
    %v3540 = vpop.f32.mrb[0].mxu0
    %v3541 = vadd.f32 %v2788, %v3540
    %v3542 = vpop.f32.mrb[0].mxu0
    %v3543 = vadd.f32 %v2790, %v3542
    %v3544 = vpop.f32.mrb[0].mxu0
    %v3545 = vadd.f32 %v2792, %v3544
    %v3546 = vpop.f32.mrb[0].mxu0
    %v3547 = vadd.f32 %v2794, %v3546
    %3548 = vmatprep.mubr.bf16.mxu0 %v2142
    %3549 = vmatmul.mubr.bf16.gmra.mrb[0].mxu0 %v2141
    %v3550 = vpop.f32.mrb[0].mxu0
    %v3551 = vadd.f32 %v2798, %v3550
    %v3552 = vpop.f32.mrb[0].mxu0
    %v3553 = vadd.f32 %v2800, %v3552
    %v3554 = vpop.f32.mrb[0].mxu0
    %v3555 = vadd.f32 %v2802, %v3554
    %v3556 = vpop.f32.mrb[0].mxu0
    %v3557 = vadd.f32 %v2804, %v3556
    %3558 = vmatprep.mubr.bf16.mxu0 %v2146
    %3559 = vmatmul.mubr.bf16.gmra.mrb[0].mxu0 %v2145
    %v3560 = vpop.f32.mrb[0].mxu0
    %v3561 = vadd.f32 %v2808, %v3560
    %v3562 = vpop.f32.mrb[0].mxu0
    %v3563 = vadd.f32 %v2810, %v3562
    %v3564 = vpop.f32.mrb[0].mxu0
    %v3565 = vadd.f32 %v2812, %v3564
    %v3566 = vpop.f32.mrb[0].mxu0
    %v3567 = vadd.f32 %v2814, %v3566
    %3568 = vmatprep.mubr.bf16.mxu0 %v2150
    %3569 = vmatmul.mubr.bf16.gmra.mrb[0].mxu0 %v2149
    %v3570 = vpop.f32.mrb[0].mxu0
    %v3571 = vadd.f32 %v2818, %v3570
    %v3572 = vpop.f32.mrb[0].mxu0
    %v3573 = vadd.f32 %v2820, %v3572
    %v3574 = vpop.f32.mrb[0].mxu0
    %v3575 = vadd.f32 %v2822, %v3574
    %v3576 = vpop.f32.mrb[0].mxu0
    %v3577 = vadd.f32 %v2824, %v3576
    %3578 = vmatprep.mubr.bf16.mxu0 %v2154
    %3579 = vmatmul.mubr.bf16.gmra.mrb[0].mxu0 %v2153
    %v3580 = vpop.f32.mrb[0].mxu0
    %v3581 = vadd.f32 %v2828, %v3580
    %v3582 = vpop.f32.mrb[0].mxu0
    %v3583 = vadd.f32 %v2830, %v3582
    %v3584 = vpop.f32.mrb[0].mxu0
    %v3585 = vadd.f32 %v2832, %v3584
    %v3586 = vpop.f32.mrb[0].mxu0
    %v3587 = vadd.f32 %v2834, %v3586
    %3588 = vmatprep.mubr.bf16.mxu0 %v2158
    %3589 = vmatmul.mubr.bf16.gmra.mrb[0].mxu0 %v2157
    %v3590 = vpop.f32.mrb[0].mxu0
    %v3591 = vadd.f32 %v2838, %v3590
    %v3592 = vpop.f32.mrb[0].mxu0
    %v3593 = vadd.f32 %v2840, %v3592
    %v3594 = vpop.f32.mrb[0].mxu0
    %v3595 = vadd.f32 %v2842, %v3594
    %v3596 = vpop.f32.mrb[0].mxu0
    %v3597 = vadd.f32 %v2844, %v3596
    %3598 = vmatprep.mubr.bf16.mxu0 %v2162
    %3599 = vmatmul.mubr.bf16.gmra.mrb[0].mxu0 %v2161
    %v3600 = vpop.f32.mrb[0].mxu0
    %v3601 = vadd.f32 %v2848, %v3600
    %v3602 = vpop.f32.mrb[0].mxu0
    %v3603 = vadd.f32 %v2850, %v3602
    %v3604 = vpop.f32.mrb[0].mxu0
    %v3605 = vadd.f32 %v2852, %v3604
    %v3606 = vpop.f32.mrb[0].mxu0
    %v3607 = vadd.f32 %v2854, %v3606
    %3608 = vmatprep.mubr.bf16.mxu0 %v2166
    %3609 = vmatmul.mubr.bf16.gmra.mrb[0].mxu0 %v2165
    %v3610 = vpop.f32.mrb[0].mxu0
    %v3611 = vadd.f32 %v2858, %v3610
    %v3612 = vpop.f32.mrb[0].mxu0
    %v3613 = vadd.f32 %v2860, %v3612
    %v3614 = vpop.f32.mrb[0].mxu0
    %v3615 = vadd.f32 %v2862, %v3614
    %v3616 = vpop.f32.mrb[0].mxu0
    %v3617 = vadd.f32 %v2864, %v3616
    %3618 = vmatprep.mubr.bf16.mxu0 %v2170
    %3619 = vmatmul.mubr.bf16.gmra.mrb[0].mxu0 %v2169
    %v3620 = vpop.f32.mrb[0].mxu0
    %v3621 = vadd.f32 %v2868, %v3620
    %v3622 = vpop.f32.mrb[0].mxu0
    %v3623 = vadd.f32 %v2870, %v3622
    %v3624 = vpop.f32.mrb[0].mxu0
    %v3625 = vadd.f32 %v2872, %v3624
    %v3626 = vpop.f32.mrb[0].mxu0
    %v3627 = vadd.f32 %v2874, %v3626
    %3628 = vmatprep.mubr.bf16.mxu0 %v2174
    %3629 = vmatmul.mubr.bf16.gmra.mrb[0].mxu0 %v2173
    %v3630 = vpop.f32.mrb[0].mxu0
    %v3631 = vadd.f32 %v2878, %v3630
    %v3632 = vpop.f32.mrb[0].mxu0
    %v3633 = vadd.f32 %v2880, %v3632
    %v3634 = vpop.f32.mrb[0].mxu0
    %v3635 = vadd.f32 %v2882, %v3634
    %v3636 = vpop.f32.mrb[0].mxu0
    %v3637 = vadd.f32 %v2884, %v3636
    %3638 = vmatprep.mubr.bf16.mxu0 %v2178
    %3639 = vmatmul.mubr.bf16.gmra.mrb[0].mxu0 %v2177
    %v3640 = vpop.f32.mrb[0].mxu0
    %v3641 = vadd.f32 %v2888, %v3640
    %v3642 = vpop.f32.mrb[0].mxu0
    %v3643 = vadd.f32 %v2890, %v3642
    %v3644 = vpop.f32.mrb[0].mxu0
    %v3645 = vadd.f32 %v2892, %v3644
    %v3646 = vpop.f32.mrb[0].mxu0
    %v3647 = vadd.f32 %v2894, %v3646
    %3648 = vmatprep.mubr.bf16.mxu0 %v2182
    %3649 = vmatmul.mubr.bf16.gmra.mrb[0].mxu0 %v2181
    %v3650 = vpop.f32.mrb[0].mxu0
    %v3651 = vadd.f32 %v2898, %v3650
    %v3652 = vpop.f32.mrb[0].mxu0
    %v3653 = vadd.f32 %v2900, %v3652
    %v3654 = vpop.f32.mrb[0].mxu0
    %v3655 = vadd.f32 %v2902, %v3654
    %v3656 = vpop.f32.mrb[0].mxu0
    %v3657 = vadd.f32 %v2904, %v3656
    %3658 = vmatprep.mubr.bf16.mxu0 %v2186
    %3659 = vmatmul.mubr.bf16.gmra.mrb[0].mxu0 %v2185
    %v3660 = vpop.f32.mrb[0].mxu0
    %v3661 = vadd.f32 %v2908, %v3660
    %v3662 = vpop.f32.mrb[0].mxu0
    %v3663 = vadd.f32 %v2910, %v3662
    %v3664 = vpop.f32.mrb[0].mxu0
    %v3665 = vadd.f32 %v2912, %v3664
    %v3666 = vpop.f32.mrb[0].mxu0
    %v3667 = vadd.f32 %v2914, %v3666
    %3668 = vmatprep.mubr.bf16.mxu0 %v2190
    %3669 = vmatmul.mubr.bf16.gmra.mrb[0].mxu0 %v2189
    %v3670 = vpop.f32.mrb[0].mxu0
    %v3671 = vadd.f32 %v2918, %v3670
    %v3672 = vpop.f32.mrb[0].mxu0
    %v3673 = vadd.f32 %v2920, %v3672
    %v3674 = vpop.f32.mrb[0].mxu0
    %v3675 = vadd.f32 %v2922, %v3674
    %v3676 = vpop.f32.mrb[0].mxu0
    %v3677 = vadd.f32 %v2924, %v3676
    %3678 = vmatprep.mubr.bf16.mxu0 %v2194
    %3679 = vmatmul.mubr.bf16.gmra.mrb[0].mxu0 %v2193
    %v3680 = vpop.f32.mrb[0].mxu0
    %v3681 = vadd.f32 %v2928, %v3680
    %v3682 = vpop.f32.mrb[0].mxu0
    %v3683 = vadd.f32 %v2930, %v3682
    %v3684 = vpop.f32.mrb[0].mxu0
    %v3685 = vadd.f32 %v2932, %v3684
    %v3686 = vpop.f32.mrb[0].mxu0
    %v3687 = vadd.f32 %v2934, %v3686
    %3688 = vmatprep.mubr.bf16.mxu0 %v2198
    %3689 = vmatmul.mubr.bf16.gmra.mrb[0].mxu0 %v2197
    %v3690 = vpop.f32.mrb[0].mxu0
    %v3691 = vadd.f32 %v2938, %v3690
    %v3692 = vpop.f32.mrb[0].mxu0
    %v3693 = vadd.f32 %v2940, %v3692
    %v3694 = vpop.f32.mrb[0].mxu0
    %v3695 = vadd.f32 %v2942, %v3694
    %v3696 = vpop.f32.mrb[0].mxu0
    %v3697 = vadd.f32 %v2944, %v3696
    %3698 = vmatprep.mubr.bf16.mxu0 %v2202
    %3699 = vmatmul.mubr.bf16.gmra.mrb[0].mxu0 %v2201
    %v3700 = vpop.f32.mrb[0].mxu0
    %v3701 = vadd.f32 %v2948, %v3700
    %v3702 = vpop.f32.mrb[0].mxu0
    %v3703 = vadd.f32 %v2950, %v3702
    %v3704 = vpop.f32.mrb[0].mxu0
    %v3705 = vadd.f32 %v2952, %v3704
    %v3706 = vpop.f32.mrb[0].mxu0
    %v3707 = vadd.f32 %v2954, %v3706
    %3708 = vmatprep.mubr.bf16.mxu0 %v2206
    %3709 = vmatmul.mubr.bf16.gmra.mrb[0].mxu0 %v2205
    %v3710 = vpop.f32.mrb[0].mxu0
    %v3711 = vadd.f32 %v2958, %v3710
    %v3712 = vpop.f32.mrb[0].mxu0
    %v3713 = vadd.f32 %v2960, %v3712
    %v3714 = vpop.f32.mrb[0].mxu0
    %v3715 = vadd.f32 %v2962, %v3714
    %v3716 = vpop.f32.mrb[0].mxu0
    %v3717 = vadd.f32 %v2964, %v3716
    %3718 = vmatprep.mubr.bf16.mxu0 %v2210
    %3719 = vmatmul.mubr.bf16.gmra.mrb[0].mxu0 %v2209
    %v3720 = vpop.f32.mrb[0].mxu0
    %v3721 = vadd.f32 %v2968, %v3720
    %v3722 = vpop.f32.mrb[0].mxu0
    %v3723 = vadd.f32 %v2970, %v3722
    %v3724 = vpop.f32.mrb[0].mxu0
    %v3725 = vadd.f32 %v2972, %v3724
    %v3726 = vpop.f32.mrb[0].mxu0
    %v3727 = vadd.f32 %v2974, %v3726
    %3728 = vmatprep.mubr.bf16.mxu0 %v2214
    %3729 = vmatmul.mubr.bf16.gmra.mrb[0].mxu0 %v2213
    %v3730 = vpop.f32.mrb[0].mxu0
    %v3731 = vadd.f32 %v2978, %v3730
    %v3732 = vpop.f32.mrb[0].mxu0
    %v3733 = vadd.f32 %v2980, %v3732
    %v3734 = vpop.f32.mrb[0].mxu0
    %v3735 = vadd.f32 %v2982, %v3734
    %v3736 = vpop.f32.mrb[0].mxu0
    %v3737 = vadd.f32 %v2984, %v3736
    %3738 = vmatprep.mubr.bf16.mxu0 %v2218
    %3739 = vmatmul.mubr.bf16.gmra.mrb[0].mxu0 %v2217
    %v3740 = vpop.f32.mrb[0].mxu0
    %v3741 = vadd.f32 %v2988, %v3740
    %v3742 = vpop.f32.mrb[0].mxu0
    %v3743 = vadd.f32 %v2990, %v3742
    %v3744 = vpop.f32.mrb[0].mxu0
    %v3745 = vadd.f32 %v2992, %v3744
    %v3746 = vpop.f32.mrb[0].mxu0
    %v3747 = vadd.f32 %v2994, %v3746
    %3748 = vmatprep.mubr.bf16.mxu0 %v2222
    %3749 = vmatmul.mubr.bf16.gmra.mrb[0].mxu0 %v2221
    %v3750 = vpop.f32.mrb[0].mxu0
    %v3751 = vadd.f32 %v2998, %v3750
    %v3752 = vpop.f32.mrb[0].mxu0
    %v3753 = vadd.f32 %v3000, %v3752
    %v3754 = vpop.f32.mrb[0].mxu0
    %v3755 = vadd.f32 %v3002, %v3754
    %v3756 = vpop.f32.mrb[0].mxu0
    %v3757 = vadd.f32 %v3004, %v3756
    %3758 = vmatprep.mubr.bf16.mxu0 %v2226
    %3759 = vmatmul.mubr.bf16.gmra.mrb[0].mxu0 %v2225
    %v3760 = vpop.f32.mrb[0].mxu0
    %v3761 = vadd.f32 %v3008, %v3760
    %v3762 = vpop.f32.mrb[0].mxu0
    %v3763 = vadd.f32 %v3010, %v3762
    %v3764 = vpop.f32.mrb[0].mxu0
    %v3765 = vadd.f32 %v3012, %v3764
    %v3766 = vpop.f32.mrb[0].mxu0
    %v3767 = vadd.f32 %v3014, %v3766
    %3768 = vmatprep.mubr.bf16.mxu0 %v2230
    %3769 = vmatmul.mubr.bf16.gmra.mrb[0].mxu0 %v2229
    %v3770 = vpop.f32.mrb[0].mxu0
    %v3771 = vadd.f32 %v3018, %v3770
    %v3772 = vpop.f32.mrb[0].mxu0
    %v3773 = vadd.f32 %v3020, %v3772
    %v3774 = vpop.f32.mrb[0].mxu0
    %v3775 = vadd.f32 %v3022, %v3774
    %v3776 = vpop.f32.mrb[0].mxu0
    %v3777 = vadd.f32 %v3024, %v3776
    %3778 = vmatprep.mubr.bf16.mxu0 %v2234
    %3779 = vmatmul.mubr.bf16.gmra.mrb[0].mxu0 %v2233
    %v3780 = vpop.f32.mrb[0].mxu0
    %v3781 = vadd.f32 %v3028, %v3780
    %v3782 = vpop.f32.mrb[0].mxu0
    %v3783 = vadd.f32 %v3030, %v3782
    %v3784 = vpop.f32.mrb[0].mxu0
    %v3785 = vadd.f32 %v3032, %v3784
    %v3786 = vpop.f32.mrb[0].mxu0
    %v3787 = vadd.f32 %v3034, %v3786
    %3788 = vmatprep.mubr.bf16.mxu0 %v2238
    %3789 = vmatmul.mubr.bf16.gmra.mrb[0].mxu0 %v2237
    %v3790 = vpop.f32.mrb[0].mxu0
    %v3791 = vadd.f32 %v3038, %v3790
    %v3792 = vpop.f32.mrb[0].mxu0
    %v3793 = vadd.f32 %v3040, %v3792
    %v3794 = vpop.f32.mrb[0].mxu0
    %v3795 = vadd.f32 %v3042, %v3794
    %v3796 = vpop.f32.mrb[0].mxu0
    %v3797 = vadd.f32 %v3044, %v3796
    %3798 = vmatprep.mubr.bf16.mxu0 %v2242
    %3799 = vmatmul.mubr.bf16.gmra.mrb[0].mxu0 %v2241
    %v3800 = vpop.f32.mrb[0].mxu0
    %v3801 = vadd.f32 %v3048, %v3800
    %v3802 = vpop.f32.mrb[0].mxu0
    %v3803 = vadd.f32 %v3050, %v3802
    %v3804 = vpop.f32.mrb[0].mxu0
    %v3805 = vadd.f32 %v3052, %v3804
    %v3806 = vpop.f32.mrb[0].mxu0
    %v3807 = vadd.f32 %v3054, %v3806
    %3808 = vmatprep.mubr.bf16.mxu0 %v2246
    %3809 = vmatmul.mubr.bf16.gmra.mrb[0].mxu0 %v2245
    %v3810 = vpop.f32.mrb[0].mxu0
    %v3811 = vadd.f32 %v3058, %v3810
    %v3812 = vpop.f32.mrb[0].mxu0
    %v3813 = vadd.f32 %v3060, %v3812
    %v3814 = vpop.f32.mrb[0].mxu0
    %v3815 = vadd.f32 %v3062, %v3814
    %v3816 = vpop.f32.mrb[0].mxu0
    %v3817 = vadd.f32 %v3064, %v3816
    %3818 = vmatprep.mubr.bf16.mxu0 %v2250
    %3819 = vmatmul.mubr.bf16.gmra.mrb[0].mxu0 %v2249
    %v3820 = vpop.f32.mrb[0].mxu0
    %v3821 = vadd.f32 %v3068, %v3820
    %v3822 = vpop.f32.mrb[0].mxu0
    %v3823 = vadd.f32 %v3070, %v3822
    %v3824 = vpop.f32.mrb[0].mxu0
    %v3825 = vadd.f32 %v3072, %v3824
    %v3826 = vpop.f32.mrb[0].mxu0
    %v3827 = vadd.f32 %v3074, %v3826
    %3828 = vmatprep.mubr.bf16.mxu0 %v2254
    %3829 = vmatmul.mubr.bf16.gmra.mrb[0].mxu0 %v2253
    %v3830 = vpop.f32.mrb[0].mxu0
    %v3831 = vadd.f32 %v3078, %v3830
    %v3832 = vpop.f32.mrb[0].mxu0
    %v3833 = vadd.f32 %v3080, %v3832
    %v3834 = vpop.f32.mrb[0].mxu0
    %v3835 = vadd.f32 %v3082, %v3834
    %v3836 = vpop.f32.mrb[0].mxu0
    %v3837 = vadd.f32 %v3084, %v3836
    %3838 = vmatprep.mubr.bf16.mxu0 %v2258
    %3839 = vmatmul.mubr.bf16.gmra.mrb[0].mxu0 %v2257
    %v3840 = vpop.f32.mrb[0].mxu0
    %v3841 = vadd.f32 %v3088, %v3840
    %v3842 = vpop.f32.mrb[0].mxu0
    %v3843 = vadd.f32 %v3090, %v3842
    %v3844 = vpop.f32.mrb[0].mxu0
    %v3845 = vadd.f32 %v3092, %v3844
    %v3846 = vpop.f32.mrb[0].mxu0
    %v3847 = vadd.f32 %v3094, %v3846
    %3848 = vmatprep.mubr.bf16.mxu0 %v2262
    %3849 = vmatmul.mubr.bf16.gmra.mrb[0].mxu0 %v2261
    %v3850 = vpop.f32.mrb[0].mxu0
    %v3851 = vadd.f32 %v3098, %v3850
    %v3852 = vpop.f32.mrb[0].mxu0
    %v3853 = vadd.f32 %v3100, %v3852
    %v3854 = vpop.f32.mrb[0].mxu0
    %v3855 = vadd.f32 %v3102, %v3854
    %v3856 = vpop.f32.mrb[0].mxu0
    %v3857 = vadd.f32 %v3104, %v3856
    %3858 = vmatprep.mubr.bf16.mxu0 %v2266
    %3859 = vmatmul.mubr.bf16.gmra.mrb[0].mxu0 %v2265
    %v3860 = vpop.f32.mrb[0].mxu0
    %v3861 = vadd.f32 %v3108, %v3860
    %v3862 = vpop.f32.mrb[0].mxu0
    %v3863 = vadd.f32 %v3110, %v3862
    %v3864 = vpop.f32.mrb[0].mxu0
    %v3865 = vadd.f32 %v3112, %v3864
    %v3866 = vpop.f32.mrb[0].mxu0
    %v3867 = vadd.f32 %v3114, %v3866
    %3868 = vmatprep.mubr.bf16.mxu0 %v2270
    %3869 = vmatmul.mubr.bf16.gmra.mrb[0].mxu0 %v2269
    %v3870 = vpop.f32.mrb[0].mxu0
    %v3871 = vadd.f32 %v3118, %v3870
    %v3872 = vpop.f32.mrb[0].mxu0
    %v3873 = vadd.f32 %v3120, %v3872
    %v3874 = vpop.f32.mrb[0].mxu0
    %v3875 = vadd.f32 %v3122, %v3874
    %v3876 = vpop.f32.mrb[0].mxu0
    %v3877 = vadd.f32 %v3124, %v3876
    %3878 = vmatprep.mubr.bf16.mxu0 %v2274
    %3879 = vmatmul.mubr.bf16.gmra.mrb[0].mxu0 %v2273
    %v3880 = vpop.f32.mrb[0].mxu0
    %v3881 = vadd.f32 %v3128, %v3880
    %v3882 = vpop.f32.mrb[0].mxu0
    %v3883 = vadd.f32 %v3130, %v3882
    %v3884 = vpop.f32.mrb[0].mxu0
    %v3885 = vadd.f32 %v3132, %v3884
    %v3886 = vpop.f32.mrb[0].mxu0
    %v3887 = vadd.f32 %v3134, %v3886
    %3888 = vmatprep.mubr.bf16.mxu0 %v2278
    %3889 = vmatmul.mubr.bf16.gmra.mrb[0].mxu0 %v2277
    %v3890 = vpop.f32.mrb[0].mxu0
    %v3891 = vadd.f32 %v3138, %v3890
    %v3892 = vpop.f32.mrb[0].mxu0
    %v3893 = vadd.f32 %v3140, %v3892
    %v3894 = vpop.f32.mrb[0].mxu0
    %v3895 = vadd.f32 %v3142, %v3894
    %v3896 = vpop.f32.mrb[0].mxu0
    %v3897 = vadd.f32 %v3144, %v3896
    %3898 = vmatprep.mubr.bf16.mxu0 %v2282
    %3899 = vmatmul.mubr.bf16.gmra.mrb[0].mxu0 %v2281
    %v3900 = vpop.f32.mrb[0].mxu0
    %v3901 = vadd.f32 %v3148, %v3900
    %v3902 = vpop.f32.mrb[0].mxu0
    %v3903 = vadd.f32 %v3150, %v3902
    %v3904 = vpop.f32.mrb[0].mxu0
    %v3905 = vadd.f32 %v3152, %v3904
    %v3906 = vpop.f32.mrb[0].mxu0
    %v3907 = vadd.f32 %v3154, %v3906
    %3908 = vmatprep.mubr.bf16.mxu0 %v2286
    %3909 = vmatmul.mubr.bf16.gmra.mrb[0].mxu0 %v2285
    %v3910 = vpop.f32.mrb[0].mxu0
    %v3911 = vadd.f32 %v3158, %v3910
    %v3912 = vpop.f32.mrb[0].mxu0
    %v3913 = vadd.f32 %v3160, %v3912
    %v3914 = vpop.f32.mrb[0].mxu0
    %v3915 = vadd.f32 %v3162, %v3914
    %v3916 = vpop.f32.mrb[0].mxu0
    %v3917 = vadd.f32 %v3164, %v3916
    %3918 = vmatprep.mubr.bf16.mxu0 %v2290
    %3919 = vmatmul.mubr.bf16.gmra.mrb[0].mxu0 %v2289
    %v3920 = vpop.f32.mrb[0].mxu0
    %v3921 = vadd.f32 %v3168, %v3920
    %v3922 = vpop.f32.mrb[0].mxu0
    %v3923 = vadd.f32 %v3170, %v3922
    %v3924 = vpop.f32.mrb[0].mxu0
    %v3925 = vadd.f32 %v3172, %v3924
    %v3926 = vpop.f32.mrb[0].mxu0
    %v3927 = vadd.f32 %v3174, %v3926
    %3928 = vmatprep.mubr.bf16.mxu0 %v2294
    %3929 = vmatmul.mubr.bf16.gmra.mrb[0].mxu0 %v2293
    %v3930 = vpop.f32.mrb[0].mxu0
    %v3931 = vadd.f32 %v3178, %v3930
    %v3932 = vpop.f32.mrb[0].mxu0
    %v3933 = vadd.f32 %v3180, %v3932
    %v3934 = vpop.f32.mrb[0].mxu0
    %v3935 = vadd.f32 %v3182, %v3934
    %v3936 = vpop.f32.mrb[0].mxu0
    %v3937 = vadd.f32 %v3184, %v3936
    %3938 = vmatprep.mubr.bf16.mxu0 %v2298
    %3939 = vmatmul.mubr.bf16.gmra.mrb[0].mxu0 %v2297
    %v3940 = vpop.f32.mrb[0].mxu0
    %v3941 = vadd.f32 %v3188, %v3940
    %v3942 = vpop.f32.mrb[0].mxu0
    %v3943 = vadd.f32 %v3190, %v3942
    %v3944 = vpop.f32.mrb[0].mxu0
    %v3945 = vadd.f32 %v3192, %v3944
    %v3946 = vpop.f32.mrb[0].mxu0
    %v3947 = vadd.f32 %v3194, %v3946
    %3948 = vmatprep.mubr.bf16.mxu0 %v2302
    %3949 = vmatmul.mubr.bf16.gmra.mrb[0].mxu0 %v2301
    %v3950 = vpop.f32.mrb[0].mxu0
    %v3951 = vadd.f32 %v3198, %v3950
    %v3952 = vpop.f32.mrb[0].mxu0
    %v3953 = vadd.f32 %v3200, %v3952
    %v3954 = vpop.f32.mrb[0].mxu0
    %v3955 = vadd.f32 %v3202, %v3954
    %v3956 = vpop.f32.mrb[0].mxu0
    %v3957 = vadd.f32 %v3204, %v3956
    %3958 = vmatprep.mubr.bf16.mxu0 %v2306
    %3959 = vmatmul.mubr.bf16.gmra.mrb[0].mxu0 %v2305
    %v3960 = vpop.f32.mrb[0].mxu0
    %v3961 = vadd.f32 %v3208, %v3960
    %v3962 = vpop.f32.mrb[0].mxu0
    %v3963 = vadd.f32 %v3210, %v3962
    %v3964 = vpop.f32.mrb[0].mxu0
    %v3965 = vadd.f32 %v3212, %v3964
    %v3966 = vpop.f32.mrb[0].mxu0
    %v3967 = vadd.f32 %v3214, %v3966
    %3968 = vmatprep.mubr.bf16.mxu0 %v2310
    %3969 = vmatmul.mubr.bf16.gmra.mrb[0].mxu0 %v2309
    %v3970 = vpop.f32.mrb[0].mxu0
    %v3971 = vadd.f32 %v3218, %v3970
    %v3972 = vpop.f32.mrb[0].mxu0
    %v3973 = vadd.f32 %v3220, %v3972
    %v3974 = vpop.f32.mrb[0].mxu0
    %v3975 = vadd.f32 %v3222, %v3974
    %v3976 = vpop.f32.mrb[0].mxu0
    %v3977 = vadd.f32 %v3224, %v3976
    %3978 = vmatprep.mubr.bf16.mxu0 %v2314
    %3979 = vmatmul.mubr.bf16.gmra.mrb[0].mxu0 %v2313
    %v3980 = vpop.f32.mrb[0].mxu0
    %v3981 = vadd.f32 %v3228, %v3980
    %v3982 = vpop.f32.mrb[0].mxu0
    %v3983 = vadd.f32 %v3230, %v3982
    %v3984 = vpop.f32.mrb[0].mxu0
    %v3985 = vadd.f32 %v3232, %v3984
    %v3986 = vpop.f32.mrb[0].mxu0
    %v3987 = vadd.f32 %v3234, %v3986
    %3988 = vmatprep.mubr.bf16.mxu0 %v2318
    %3989 = vmatmul.mubr.bf16.gmra.mrb[0].mxu0 %v2317
    %v3990 = vpop.f32.mrb[0].mxu0
    %v3991 = vadd.f32 %v3238, %v3990
    %v3992 = vpop.f32.mrb[0].mxu0
    %v3993 = vadd.f32 %v3240, %v3992
    %v3994 = vpop.f32.mrb[0].mxu0
    %v3995 = vadd.f32 %v3242, %v3994
    %v3996 = vpop.f32.mrb[0].mxu0
    %v3997 = vadd.f32 %v3244, %v3996
    %3998 = vmatprep.mubr.bf16.mxu0 %v2322
    %3999 = vmatmul.mubr.bf16.gmra.mrb[0].mxu0 %v2321
    %v4000 = vpop.f32.mrb[0].mxu0
    %v4001 = vadd.f32 %v3248, %v4000
    %v4002 = vpop.f32.mrb[0].mxu0
    %v4003 = vadd.f32 %v3250, %v4002
    %v4004 = vpop.f32.mrb[0].mxu0
    %v4005 = vadd.f32 %v3252, %v4004
    %v4006 = vpop.f32.mrb[0].mxu0
    %v4007 = vadd.f32 %v3254, %v4006
    %4008 = vmatprep.mubr.bf16.mxu0 %v2326
    %4009 = vmatmul.mubr.bf16.gmra.mrb[0].mxu0 %v2325
    %v4010 = vpop.f32.mrb[0].mxu0
    %v4011 = vadd.f32 %v3258, %v4010
    %v4012 = vpop.f32.mrb[0].mxu0
    %v4013 = vadd.f32 %v3260, %v4012
    %v4014 = vpop.f32.mrb[0].mxu0
    %v4015 = vadd.f32 %v3262, %v4014
    %v4016 = vpop.f32.mrb[0].mxu0
    %v4017 = vadd.f32 %v3264, %v4016
    %4018 = vmatprep.mubr.bf16.mxu0 %v2330
    %4019 = vmatmul.mubr.bf16.gmra.mrb[0].mxu0 %v2329
    %v4020 = vpop.f32.mrb[0].mxu0
    %v4021 = vadd.f32 %v3268, %v4020
    %v4022 = vpop.f32.mrb[0].mxu0
    %v4023 = vadd.f32 %v3270, %v4022
    %v4024 = vpop.f32.mrb[0].mxu0
    %v4025 = vadd.f32 %v3272, %v4024
    %v4026 = vpop.f32.mrb[0].mxu0
    %v4027 = vadd.f32 %v3274, %v4026
    %4028 = vmatprep.mubr.bf16.mxu0 %v2334
    %4029 = vmatmul.mubr.bf16.gmra.mrb[0].mxu0 %v2333
    %v4030 = vpop.f32.mrb[0].mxu0
    %v4031 = vadd.f32 %v3278, %v4030
    %v4032 = vpop.f32.mrb[0].mxu0
    %v4033 = vadd.f32 %v3280, %v4032
    %v4034 = vpop.f32.mrb[0].mxu0
    %v4035 = vadd.f32 %v3282, %v4034
    %v4036 = vpop.f32.mrb[0].mxu0
    %v4037 = vadd.f32 %v3284, %v4036
    %4038 = vmatprep.mubr.bf16.mxu0 %v2338
    %4039 = vmatmul.mubr.bf16.gmra.mrb[0].mxu0 %v2337
    %v4040 = vpop.f32.mrb[0].mxu0
    %v4041 = vadd.f32 %v3288, %v4040
    %v4042 = vpop.f32.mrb[0].mxu0
    %v4043 = vadd.f32 %v3290, %v4042
    %v4044 = vpop.f32.mrb[0].mxu0
    %v4045 = vadd.f32 %v3292, %v4044
    %v4046 = vpop.f32.mrb[0].mxu0
    %v4047 = vadd.f32 %v3294, %v4046
    %4048 = vmatprep.mubr.bf16.mxu0 %v2342
    %4049 = vmatmul.mubr.bf16.gmra.mrb[0].mxu0 %v2341
    %v4050 = vpop.f32.mrb[0].mxu0
    %v4051 = vadd.f32 %v3298, %v4050
    %v4052 = vpop.f32.mrb[0].mxu0
    %v4053 = vadd.f32 %v3300, %v4052
    %v4054 = vpop.f32.mrb[0].mxu0
    %v4055 = vadd.f32 %v3302, %v4054
    %v4056 = vpop.f32.mrb[0].mxu0
    %v4057 = vadd.f32 %v3304, %v4056
    %4058 = vmatprep.mubr.bf16.mxu0 %v2346
    %4059 = vmatmul.mubr.bf16.gmra.mrb[0].mxu0 %v2345
    %v4060 = vpop.f32.mrb[0].mxu0
    %v4061 = vadd.f32 %v3308, %v4060
    %v4062 = vpop.f32.mrb[0].mxu0
    %v4063 = vadd.f32 %v3310, %v4062
    %v4064 = vpop.f32.mrb[0].mxu0
    %v4065 = vadd.f32 %v3312, %v4064
    %v4066 = vpop.f32.mrb[0].mxu0
    %v4067 = vadd.f32 %v3314, %v4066
    %4068 = vmatprep.mubr.bf16.mxu0 %v2350
    %4069 = vmatmul.mubr.bf16.gmra.mrb[0].mxu0 %v2349
    %v4070 = vpop.f32.mrb[0].mxu0
    %v4071 = vadd.f32 %v3318, %v4070
    %v4072 = vpop.f32.mrb[0].mxu0
    %v4073 = vadd.f32 %v3320, %v4072
    %v4074 = vpop.f32.mrb[0].mxu0
    %v4075 = vadd.f32 %v3322, %v4074
    %v4076 = vpop.f32.mrb[0].mxu0
    %v4077 = vadd.f32 %v3324, %v4076
    %4078 = vmatprep.mubr.bf16.mxu0 %v2354
    %4079 = vmatmul.mubr.bf16.gmra.mrb[0].mxu0 %v2353
    %v4080 = vpop.f32.mrb[0].mxu0
    %v4081 = vadd.f32 %v3328, %v4080
    %v4082 = vpop.f32.mrb[0].mxu0
    %v4083 = vadd.f32 %v3330, %v4082
    %v4084 = vpop.f32.mrb[0].mxu0
    %v4085 = vadd.f32 %v3332, %v4084
    %v4086 = vpop.f32.mrb[0].mxu0
    %v4087 = vadd.f32 %v3334, %v4086
    %4088 = vmatprep.mubr.bf16.mxu0 %v2358
    %4089 = vmatmul.mubr.bf16.gmra.mrb[0].mxu0 %v2357
    %v4090 = vpop.f32.mrb[0].mxu0
    %v4091 = vadd.f32 %v3338, %v4090
    %v4092 = vpop.f32.mrb[0].mxu0
    %v4093 = vadd.f32 %v3340, %v4092
    %v4094 = vpop.f32.mrb[0].mxu0
    %v4095 = vadd.f32 %v3342, %v4094
    %v4096 = vpop.f32.mrb[0].mxu0
    %v4097 = vadd.f32 %v3344, %v4096
    %4098 = vmatprep.mubr.bf16.mxu0 %v2362
    %4099 = vmatmul.mubr.bf16.gmra.mrb[0].mxu0 %v2361
    %v4100 = vpop.f32.mrb[0].mxu0
    %v4101 = vadd.f32 %v3348, %v4100
    %v4102 = vpop.f32.mrb[0].mxu0
    %v4103 = vadd.f32 %v3350, %v4102
    %v4104 = vpop.f32.mrb[0].mxu0
    %v4105 = vadd.f32 %v3352, %v4104
    %v4106 = vpop.f32.mrb[0].mxu0
    %v4107 = vadd.f32 %v3354, %v4106
    %4108 = vmatprep.mubr.bf16.mxu0 %v2366
    %4109 = vmatmul.mubr.bf16.gmra.mrb[0].mxu0 %v2365
    %v4110 = vpop.f32.mrb[0].mxu0
    %v4111 = vadd.f32 %v3358, %v4110
    %v4112 = vpop.f32.mrb[0].mxu0
    %v4113 = vadd.f32 %v3360, %v4112
    %v4114 = vpop.f32.mrb[0].mxu0
    %v4115 = vadd.f32 %v3362, %v4114
    %v4116 = vpop.f32.mrb[0].mxu0
    %v4117 = vadd.f32 %v3364, %v4116
    %4118 = vmatprep.mubr.bf16.mxu0 %v2370
    %4119 = vmatmul.mubr.bf16.gmra.mrb[0].mxu0 %v2369
    %v4120 = vpop.f32.mrb[0].mxu0
    %v4121 = vadd.f32 %v3368, %v4120
    %v4122 = vpop.f32.mrb[0].mxu0
    %v4123 = vadd.f32 %v3370, %v4122
    %v4124 = vpop.f32.mrb[0].mxu0
    %v4125 = vadd.f32 %v3372, %v4124
    %v4126 = vpop.f32.mrb[0].mxu0
    %v4127 = vadd.f32 %v3374, %v4126
    %4128 = vmatprep.mubr.bf16.mxu0 %v2374
    %4129 = vmatmul.mubr.bf16.gmra.mrb[0].mxu0 %v2373
    %v4130 = vpop.f32.mrb[0].mxu0
    %v4131 = vadd.f32 %v3378, %v4130
    %v4132 = vpop.f32.mrb[0].mxu0
    %v4133 = vadd.f32 %v3380, %v4132
    %v4134 = vpop.f32.mrb[0].mxu0
    %v4135 = vadd.f32 %v3382, %v4134
    %v4136 = vpop.f32.mrb[0].mxu0
    %v4137 = vadd.f32 %v3384, %v4136
    %4138 = vmatprep.mubr.bf16.mxu0 %v2378
    %4139 = vmatmul.mubr.bf16.gmra.mrb[0].mxu0 %v2377
    %v4140 = vpop.f32.mrb[0].mxu0
    %v4141 = vadd.f32 %v3388, %v4140
    %v4142 = vpop.f32.mrb[0].mxu0
    %v4143 = vadd.f32 %v3390, %v4142
    %v4144 = vpop.f32.mrb[0].mxu0
    %v4145 = vadd.f32 %v3392, %v4144
    %v4146 = vpop.f32.mrb[0].mxu0
    %v4147 = vadd.f32 %v3394, %v4146
    %4148 = vmatprep.mubr.bf16.mxu0 %v2382
    %4149 = vmatmul.mubr.bf16.gmra.mrb[0].mxu0 %v2381
    %v4150 = vpop.f32.mrb[0].mxu0
    %v4151 = vadd.f32 %v3398, %v4150
    %v4152 = vpop.f32.mrb[0].mxu0
    %v4153 = vadd.f32 %v3400, %v4152
    %v4154 = vpop.f32.mrb[0].mxu0
    %v4155 = vadd.f32 %v3402, %v4154
    %v4156 = vpop.f32.mrb[0].mxu0
    %v4157 = vadd.f32 %v3404, %v4156
    %4158 = vmatprep.mubr.bf16.mxu0 %v2386
    %4159 = vmatmul.mubr.bf16.gmra.mrb[0].mxu0 %v2385
    %v4160 = vpop.f32.mrb[0].mxu0
    %v4161 = vadd.f32 %v3408, %v4160
    %v4162 = vpop.f32.mrb[0].mxu0
    %v4163 = vadd.f32 %v3410, %v4162
    %v4164 = vpop.f32.mrb[0].mxu0
    %v4165 = vadd.f32 %v3412, %v4164
    %v4166 = vpop.f32.mrb[0].mxu0
    %v4167 = vadd.f32 %v3414, %v4166
    %4168 = vmatprep.mubr.bf16.mxu0 %v2390
    %4169 = vmatmul.mubr.bf16.gmra.mrb[0].mxu0 %v2389
    %v4170 = vpop.f32.mrb[0].mxu0
    %v4171 = vadd.f32 %v3418, %v4170
    %v4172 = vpop.f32.mrb[0].mxu0
    %v4173 = vadd.f32 %v3420, %v4172
    %v4174 = vpop.f32.mrb[0].mxu0
    %v4175 = vadd.f32 %v3422, %v4174
    %v4176 = vpop.f32.mrb[0].mxu0
    %v4177 = vadd.f32 %v3424, %v4176
    %4178 = vmatprep.mubr.bf16.mxu0 %v2394
    %4179 = vmatmul.mubr.bf16.gmra.mrb[0].mxu0 %v2393
    %v4180 = vpop.f32.mrb[0].mxu0
    %v4181 = vadd.f32 %v3428, %v4180
    %v4182 = vpop.f32.mrb[0].mxu0
    %v4183 = vadd.f32 %v3430, %v4182
    %v4184 = vpop.f32.mrb[0].mxu0
    %v4185 = vadd.f32 %v3432, %v4184
    %v4186 = vpop.f32.mrb[0].mxu0
    %v4187 = vadd.f32 %v3434, %v4186
    %4188 = vdwg.mxu0
    %v4189 = vpack.c.bf16 %v3475, %v3471
    %v4190 = vpack.c.bf16 %v3477, %v3473
    %v4191 = vpack.c.bf16 %v3485, %v3481
    %v4192 = vpack.c.bf16 %v3487, %v3483
    %v4193 = vpack.c.bf16 %v3495, %v3491
    %v4194 = vpack.c.bf16 %v3497, %v3493
    %v4195 = vpack.c.bf16 %v3505, %v3501
    %v4196 = vpack.c.bf16 %v3507, %v3503
    %v4197 = vpack.c.bf16 %v3515, %v3511
    %v4198 = vpack.c.bf16 %v3517, %v3513
    %v4199 = vpack.c.bf16 %v3525, %v3521
    %v4200 = vpack.c.bf16 %v3527, %v3523
    %v4201 = vpack.c.bf16 %v3535, %v3531
    %v4202 = vpack.c.bf16 %v3537, %v3533
    %v4203 = vpack.c.bf16 %v3545, %v3541
    %v4204 = vpack.c.bf16 %v3547, %v3543
    %v4205 = vpack.c.bf16 %v3555, %v3551
    %v4206 = vpack.c.bf16 %v3557, %v3553
    %v4207 = vpack.c.bf16 %v3565, %v3561
    %v4208 = vpack.c.bf16 %v3567, %v3563
    %v4209 = vpack.c.bf16 %v3575, %v3571
    %v4210 = vpack.c.bf16 %v3577, %v3573
    %v4211 = vpack.c.bf16 %v3585, %v3581
    %v4212 = vpack.c.bf16 %v3587, %v3583
    %v4213 = vpack.c.bf16 %v3595, %v3591
    %v4214 = vpack.c.bf16 %v3597, %v3593
    %v4215 = vpack.c.bf16 %v3605, %v3601
    %v4216 = vpack.c.bf16 %v3607, %v3603
    %v4217 = vpack.c.bf16 %v3615, %v3611
    %v4218 = vpack.c.bf16 %v3617, %v3613
    %v4219 = vpack.c.bf16 %v3625, %v3621
    %v4220 = vpack.c.bf16 %v3627, %v3623
    %v4221 = vpack.c.bf16 %v3635, %v3631
    %v4222 = vpack.c.bf16 %v3637, %v3633
    %v4223 = vpack.c.bf16 %v3645, %v3641
    %v4224 = vpack.c.bf16 %v3647, %v3643
    %v4225 = vpack.c.bf16 %v3655, %v3651
    %v4226 = vpack.c.bf16 %v3657, %v3653
    %v4227 = vpack.c.bf16 %v3665, %v3661
    %v4228 = vpack.c.bf16 %v3667, %v3663
    %v4229 = vpack.c.bf16 %v3675, %v3671
    %v4230 = vpack.c.bf16 %v3677, %v3673
    %v4231 = vpack.c.bf16 %v3685, %v3681
    %v4232 = vpack.c.bf16 %v3687, %v3683
    %v4233 = vpack.c.bf16 %v3695, %v3691
    %v4234 = vpack.c.bf16 %v3697, %v3693
    %v4235 = vpack.c.bf16 %v3705, %v3701
    %v4236 = vpack.c.bf16 %v3707, %v3703
    %v4237 = vpack.c.bf16 %v3715, %v3711
    %v4238 = vpack.c.bf16 %v3717, %v3713
    %v4239 = vpack.c.bf16 %v3725, %v3721
    %v4240 = vpack.c.bf16 %v3727, %v3723
    %v4241 = vpack.c.bf16 %v3735, %v3731
    %v4242 = vpack.c.bf16 %v3737, %v3733
    %v4243 = vpack.c.bf16 %v3745, %v3741
    %v4244 = vpack.c.bf16 %v3747, %v3743
    %v4245 = vpack.c.bf16 %v3755, %v3751
    %v4246 = vpack.c.bf16 %v3757, %v3753
    %v4247 = vpack.c.bf16 %v3765, %v3761
    %v4248 = vpack.c.bf16 %v3767, %v3763
    %v4249 = vpack.c.bf16 %v3775, %v3771
    %v4250 = vpack.c.bf16 %v3777, %v3773
    %v4251 = vpack.c.bf16 %v3785, %v3781
    %v4252 = vpack.c.bf16 %v3787, %v3783
    %v4253 = vpack.c.bf16 %v3795, %v3791
    %v4254 = vpack.c.bf16 %v3797, %v3793
    %v4255 = vpack.c.bf16 %v3805, %v3801
    %v4256 = vpack.c.bf16 %v3807, %v3803
    %v4257 = vpack.c.bf16 %v3815, %v3811
    %v4258 = vpack.c.bf16 %v3817, %v3813
    %v4259 = vpack.c.bf16 %v3825, %v3821
    %v4260 = vpack.c.bf16 %v3827, %v3823
    %v4261 = vpack.c.bf16 %v3835, %v3831
    %v4262 = vpack.c.bf16 %v3837, %v3833
    %v4263 = vpack.c.bf16 %v3845, %v3841
    %v4264 = vpack.c.bf16 %v3847, %v3843
    %v4265 = vpack.c.bf16 %v3855, %v3851
    %v4266 = vpack.c.bf16 %v3857, %v3853
    %v4267 = vpack.c.bf16 %v3865, %v3861
    %v4268 = vpack.c.bf16 %v3867, %v3863
    %v4269 = vpack.c.bf16 %v3875, %v3871
    %v4270 = vpack.c.bf16 %v3877, %v3873
    %v4271 = vpack.c.bf16 %v3885, %v3881
    %v4272 = vpack.c.bf16 %v3887, %v3883
    %v4273 = vpack.c.bf16 %v3895, %v3891
    %v4274 = vpack.c.bf16 %v3897, %v3893
    %v4275 = vpack.c.bf16 %v3905, %v3901
    %v4276 = vpack.c.bf16 %v3907, %v3903
    %v4277 = vpack.c.bf16 %v3915, %v3911
    %v4278 = vpack.c.bf16 %v3917, %v3913
    %v4279 = vpack.c.bf16 %v3925, %v3921
    %v4280 = vpack.c.bf16 %v3927, %v3923
    %v4281 = vpack.c.bf16 %v3935, %v3931
    %v4282 = vpack.c.bf16 %v3937, %v3933
    %v4283 = vpack.c.bf16 %v3945, %v3941
    %v4284 = vpack.c.bf16 %v3947, %v3943
    %v4285 = vpack.c.bf16 %v3955, %v3951
    %v4286 = vpack.c.bf16 %v3957, %v3953
    %v4287 = vpack.c.bf16 %v3965, %v3961
    %v4288 = vpack.c.bf16 %v3967, %v3963
    %v4289 = vpack.c.bf16 %v3975, %v3971
    %v4290 = vpack.c.bf16 %v3977, %v3973
    %v4291 = vpack.c.bf16 %v3985, %v3981
    %v4292 = vpack.c.bf16 %v3987, %v3983
    %v4293 = vpack.c.bf16 %v3995, %v3991
    %v4294 = vpack.c.bf16 %v3997, %v3993
    %v4295 = vpack.c.bf16 %v4005, %v4001
    %v4296 = vpack.c.bf16 %v4007, %v4003
    %v4297 = vpack.c.bf16 %v4015, %v4011
    %v4298 = vpack.c.bf16 %v4017, %v4013
    %v4299 = vpack.c.bf16 %v4025, %v4021
    %v4300 = vpack.c.bf16 %v4027, %v4023
    %v4301 = vpack.c.bf16 %v4035, %v4031
    %v4302 = vpack.c.bf16 %v4037, %v4033
    %v4303 = vpack.c.bf16 %v4045, %v4041
    %v4304 = vpack.c.bf16 %v4047, %v4043
    %v4305 = vpack.c.bf16 %v4055, %v4051
    %v4306 = vpack.c.bf16 %v4057, %v4053
    %v4307 = vpack.c.bf16 %v4065, %v4061
    %v4308 = vpack.c.bf16 %v4067, %v4063
    %v4309 = vpack.c.bf16 %v4075, %v4071
    %v4310 = vpack.c.bf16 %v4077, %v4073
    %v4311 = vpack.c.bf16 %v4085, %v4081
    %v4312 = vpack.c.bf16 %v4087, %v4083
    %v4313 = vpack.c.bf16 %v4095, %v4091
    %v4314 = vpack.c.bf16 %v4097, %v4093
    %v4315 = vpack.c.bf16 %v4105, %v4101
    %v4316 = vpack.c.bf16 %v4107, %v4103
    %v4317 = vpack.c.bf16 %v4115, %v4111
    %v4318 = vpack.c.bf16 %v4117, %v4113
    %v4319 = vpack.c.bf16 %v4125, %v4121
    %v4320 = vpack.c.bf16 %v4127, %v4123
    %v4321 = vpack.c.bf16 %v4135, %v4131
    %v4322 = vpack.c.bf16 %v4137, %v4133
    %v4323 = vpack.c.bf16 %v4145, %v4141
    %v4324 = vpack.c.bf16 %v4147, %v4143
    %v4325 = vpack.c.bf16 %v4155, %v4151
    %v4326 = vpack.c.bf16 %v4157, %v4153
    %v4327 = vpack.c.bf16 %v4165, %v4161
    %v4328 = vpack.c.bf16 %v4167, %v4163
    %v4329 = vpack.c.bf16 %v4175, %v4171
    %v4330 = vpack.c.bf16 %v4177, %v4173
    %v4331 = vpack.c.bf16 %v4185, %v4181
    %v4332 = vpack.c.bf16 %v4187, %v4183
    %v4333 = vld [vmem:[#allocation3] sm:$0xff]
    %v4334 = vld [vmem:[#allocation3 + $0x8] sm:$0xff]
    %v4335 = vld [vmem:[#allocation3 + $0x10] sm:$0xff]
    %v4336 = vld [vmem:[#allocation3 + $0x18] sm:$0xff]
    %v4337 = vld [vmem:[#allocation3 + $0x20] sm:$0xff]
    %v4338 = vld [vmem:[#allocation3 + $0x28] sm:$0xff]
    %v4339 = vld [vmem:[#allocation3 + $0x30] sm:$0xff]
    %v4340 = vld [vmem:[#allocation3 + $0x38] sm:$0xff]
    %v4341 = vld [vmem:[#allocation3 + $0x40] sm:$0xff]
    %v4342 = vld [vmem:[#allocation3 + $0x48] sm:$0xff]
    %v4343 = vld [vmem:[#allocation3 + $0x50] sm:$0xff]
    %v4344 = vld [vmem:[#allocation3 + $0x58] sm:$0xff]
    %v4345 = vld [vmem:[#allocation3 + $0x60] sm:$0xff]
    %v4346 = vld [vmem:[#allocation3 + $0x68] sm:$0xff]
    %v4347 = vld [vmem:[#allocation3 + $0x70] sm:$0xff]
    %v4348 = vld [vmem:[#allocation3 + $0x78] sm:$0xff]
    %v4349 = vld [vmem:[#allocation3 + $0x80] sm:$0xff]
    %v4350 = vld [vmem:[#allocation3 + $0x88] sm:$0xff]
    %v4351 = vld [vmem:[#allocation3 + $0x90] sm:$0xff]
    %v4352 = vld [vmem:[#allocation3 + $0x98] sm:$0xff]
    %v4353 = vld [vmem:[#allocation3 + $0xa0] sm:$0xff]
    %v4354 = vld [vmem:[#allocation3 + $0xa8] sm:$0xff]
    %v4355 = vld [vmem:[#allocation3 + $0xb0] sm:$0xff]
    %v4356 = vld [vmem:[#allocation3 + $0xb8] sm:$0xff]
    %v4357 = vld [vmem:[#allocation3 + $0xc0] sm:$0xff]
    %v4358 = vld [vmem:[#allocation3 + $0xc8] sm:$0xff]
    %v4359 = vld [vmem:[#allocation3 + $0xd0] sm:$0xff]
    %v4360 = vld [vmem:[#allocation3 + $0xd8] sm:$0xff]
    %v4361 = vld [vmem:[#allocation3 + $0xe0] sm:$0xff]
    %v4362 = vld [vmem:[#allocation3 + $0xe8] sm:$0xff]
    %v4363 = vld [vmem:[#allocation3 + $0xf0] sm:$0xff]
    %v4364 = vld [vmem:[#allocation3 + $0xf8] sm:$0xff]
    %s4365 = scalar_lea.vmem [#allocation3], 256
    %v4366 = vld [vmem:[%s4365] sm:$0xff]
    %v4367 = vld [vmem:[%s4365 + $0x8] sm:$0xff]
    %v4368 = vld [vmem:[%s4365 + $0x10] sm:$0xff]
    %v4369 = vld [vmem:[%s4365 + $0x18] sm:$0xff]
    %v4370 = vld [vmem:[%s4365 + $0x20] sm:$0xff]
    %v4371 = vld [vmem:[%s4365 + $0x28] sm:$0xff]
    %v4372 = vld [vmem:[%s4365 + $0x30] sm:$0xff]
    %v4373 = vld [vmem:[%s4365 + $0x38] sm:$0xff]
    %v4374 = vld [vmem:[%s4365 + $0x40] sm:$0xff]
    %v4375 = vld [vmem:[%s4365 + $0x48] sm:$0xff]
    %v4376 = vld [vmem:[%s4365 + $0x50] sm:$0xff]
    %v4377 = vld [vmem:[%s4365 + $0x58] sm:$0xff]
    %v4378 = vld [vmem:[%s4365 + $0x60] sm:$0xff]
    %v4379 = vld [vmem:[%s4365 + $0x68] sm:$0xff]
    %v4380 = vld [vmem:[%s4365 + $0x70] sm:$0xff]
    %v4381 = vld [vmem:[%s4365 + $0x78] sm:$0xff]
    %v4382 = vld [vmem:[%s4365 + $0x80] sm:$0xff]
    %v4383 = vld [vmem:[%s4365 + $0x88] sm:$0xff]
    %v4384 = vld [vmem:[%s4365 + $0x90] sm:$0xff]
    %v4385 = vld [vmem:[%s4365 + $0x98] sm:$0xff]
    %v4386 = vld [vmem:[%s4365 + $0xa0] sm:$0xff]
    %v4387 = vld [vmem:[%s4365 + $0xa8] sm:$0xff]
    %v4388 = vld [vmem:[%s4365 + $0xb0] sm:$0xff]
    %v4389 = vld [vmem:[%s4365 + $0xb8] sm:$0xff]
    %v4390 = vld [vmem:[%s4365 + $0xc0] sm:$0xff]
    %v4391 = vld [vmem:[%s4365 + $0xc8] sm:$0xff]
    %v4392 = vld [vmem:[%s4365 + $0xd0] sm:$0xff]
    %v4393 = vld [vmem:[%s4365 + $0xd8] sm:$0xff]
    %v4394 = vld [vmem:[%s4365 + $0xe0] sm:$0xff]
    %v4395 = vld [vmem:[%s4365 + $0xe8] sm:$0xff]
    %v4396 = vld [vmem:[%s4365 + $0xf0] sm:$0xff]
    %v4397 = vld [vmem:[%s4365 + $0xf8] sm:$0xff]
    %v4430 = vunpack.c.l.b16 %v4366
    %v4431 = vunpack.c.h.b16 %v4366
    %v4432 = vunpack.c.l.b16 %v4367
    %v4433 = vunpack.c.h.b16 %v4367
    %v4434 = vunpack.c.l.b16 %v4368
    %v4435 = vunpack.c.h.b16 %v4368
    %v4436 = vunpack.c.l.b16 %v4369
    %v4437 = vunpack.c.h.b16 %v4369
    %v4438 = vunpack.c.l.b16 %v4370
    %v4439 = vunpack.c.h.b16 %v4370
    %v4440 = vunpack.c.l.b16 %v4371
    %v4441 = vunpack.c.h.b16 %v4371
    %v4442 = vunpack.c.l.b16 %v4372
    %v4443 = vunpack.c.h.b16 %v4372
    %v4444 = vunpack.c.l.b16 %v4373
    %v4445 = vunpack.c.h.b16 %v4373
    %v4446 = vunpack.c.l.b16 %v4374
    %v4447 = vunpack.c.h.b16 %v4374
    %v4448 = vunpack.c.l.b16 %v4375
    %v4449 = vunpack.c.h.b16 %v4375
    %v4450 = vunpack.c.l.b16 %v4376
    %v4451 = vunpack.c.h.b16 %v4376
    %v4452 = vunpack.c.l.b16 %v4377
    %v4453 = vunpack.c.h.b16 %v4377
    %v4454 = vunpack.c.l.b16 %v4378
    %v4455 = vunpack.c.h.b16 %v4378
    %v4456 = vunpack.c.l.b16 %v4379
    %v4457 = vunpack.c.h.b16 %v4379
    %v4458 = vunpack.c.l.b16 %v4380
    %v4459 = vunpack.c.h.b16 %v4380
    %v4460 = vunpack.c.l.b16 %v4381
    %v4461 = vunpack.c.h.b16 %v4381
    %v4462 = vunpack.c.l.b16 %v4382
    %v4463 = vunpack.c.h.b16 %v4382
    %v4464 = vunpack.c.l.b16 %v4383
    %v4465 = vunpack.c.h.b16 %v4383
    %v4466 = vunpack.c.l.b16 %v4384
    %v4467 = vunpack.c.h.b16 %v4384
    %v4468 = vunpack.c.l.b16 %v4385
    %v4469 = vunpack.c.h.b16 %v4385
    %v4470 = vunpack.c.l.b16 %v4386
    %v4471 = vunpack.c.h.b16 %v4386
    %v4472 = vunpack.c.l.b16 %v4387
    %v4473 = vunpack.c.h.b16 %v4387
    %v4474 = vunpack.c.l.b16 %v4388
    %v4475 = vunpack.c.h.b16 %v4388
    %v4476 = vunpack.c.l.b16 %v4389
    %v4477 = vunpack.c.h.b16 %v4389
    %v4478 = vunpack.c.l.b16 %v4390
    %v4479 = vunpack.c.h.b16 %v4390
    %v4480 = vunpack.c.l.b16 %v4391
    %v4481 = vunpack.c.h.b16 %v4391
    %v4482 = vunpack.c.l.b16 %v4392
    %v4483 = vunpack.c.h.b16 %v4392
    %v4484 = vunpack.c.l.b16 %v4393
    %v4485 = vunpack.c.h.b16 %v4393
    %v4486 = vunpack.c.l.b16 %v4394
    %v4487 = vunpack.c.h.b16 %v4394
    %v4488 = vunpack.c.l.b16 %v4395
    %v4489 = vunpack.c.h.b16 %v4395
    %v4490 = vunpack.c.l.b16 %v4396
    %v4491 = vunpack.c.h.b16 %v4396
    %v4492 = vunpack.c.l.b16 %v4397
    %v4493 = vunpack.c.h.b16 %v4397
    %v4494 = vpack.c.b16 %v4432, %v4430
    %v4495 = vpack.c.b16 %v4433, %v4431
    %v4496 = vpack.c.b16 %v4436, %v4434
    %v4497 = vpack.c.b16 %v4437, %v4435
    %v4498 = vpack.c.b16 %v4440, %v4438
    %v4499 = vpack.c.b16 %v4441, %v4439
    %v4500 = vpack.c.b16 %v4444, %v4442
    %v4501 = vpack.c.b16 %v4445, %v4443
    %v4502 = vpack.c.b16 %v4448, %v4446
    %v4503 = vpack.c.b16 %v4449, %v4447
    %v4504 = vpack.c.b16 %v4452, %v4450
    %v4505 = vpack.c.b16 %v4453, %v4451
    %v4506 = vpack.c.b16 %v4456, %v4454
    %v4507 = vpack.c.b16 %v4457, %v4455
    %v4508 = vpack.c.b16 %v4460, %v4458
    %v4509 = vpack.c.b16 %v4461, %v4459
    %v4510 = vpack.c.b16 %v4464, %v4462
    %v4511 = vpack.c.b16 %v4465, %v4463
    %v4512 = vpack.c.b16 %v4468, %v4466
    %v4513 = vpack.c.b16 %v4469, %v4467
    %v4514 = vpack.c.b16 %v4472, %v4470
    %v4515 = vpack.c.b16 %v4473, %v4471
    %v4516 = vpack.c.b16 %v4476, %v4474
    %v4517 = vpack.c.b16 %v4477, %v4475
    %v4518 = vpack.c.b16 %v4480, %v4478
    %v4519 = vpack.c.b16 %v4481, %v4479
    %v4520 = vpack.c.b16 %v4484, %v4482
    %v4521 = vpack.c.b16 %v4485, %v4483
    %v4522 = vpack.c.b16 %v4488, %v4486
    %v4523 = vpack.c.b16 %v4489, %v4487
    %v4524 = vpack.c.b16 %v4492, %v4490
    %v4525 = vpack.c.b16 %v4493, %v4491
    %4558 = vmatprep.subr.bf16.mxu0 %v4495
    %4559 = vmatpush1.bf16.msra.mxu0 %v4494
    %4560 = vmatprep.subr.bf16.mxu0 %v4497
    %4561 = vmatpush1.bf16.msra.mxu0 %v4496
    %4562 = vmatprep.subr.bf16.mxu0 %v4499
    %4563 = vmatpush1.bf16.msra.mxu0 %v4498
    %4564 = vmatprep.subr.bf16.mxu0 %v4501
    %4565 = vmatpush1.bf16.msra.mxu0 %v4500
    %4566 = vmatprep.subr.bf16.mxu0 %v4503
    %4567 = vmatpush1.bf16.msra.mxu0 %v4502
    %4568 = vmatprep.subr.bf16.mxu0 %v4505
    %4569 = vmatpush1.bf16.msra.mxu0 %v4504
    %4570 = vmatprep.subr.bf16.mxu0 %v4507
    %4571 = vmatpush1.bf16.msra.mxu0 %v4506
    %4572 = vmatprep.subr.bf16.mxu0 %v4509
    %4573 = vmatpush1.bf16.msra.mxu0 %v4508
    %4574 = vmatprep.subr.bf16.mxu0 %v4511
    %4575 = vmatpush1.bf16.msra.mxu0 %v4510
    %4576 = vmatprep.subr.bf16.mxu0 %v4513
    %4577 = vmatpush1.bf16.msra.mxu0 %v4512
    %4578 = vmatprep.subr.bf16.mxu0 %v4515
    %4579 = vmatpush1.bf16.msra.mxu0 %v4514
    %4580 = vmatprep.subr.bf16.mxu0 %v4517
    %4581 = vmatpush1.bf16.msra.mxu0 %v4516
    %4582 = vmatprep.subr.bf16.mxu0 %v4519
    %4583 = vmatpush1.bf16.msra.mxu0 %v4518
    %4584 = vmatprep.subr.bf16.mxu0 %v4521
    %4585 = vmatpush1.bf16.msra.mxu0 %v4520
    %4586 = vmatprep.subr.bf16.mxu0 %v4523
    %4587 = vmatpush1.bf16.msra.mxu0 %v4522
    %4588 = vmatprep.subr.bf16.mxu0 %v4525
    %4589 = vmatpush1.bf16.msra.mxu0 %v4524
    %4590 = vmatprep.mubr.bf16.mxu0 %v4206
    %4591 = vmatmul.mubr.bf16.gmra.mrb[0].mxu0 %v4205
    %v4592 = vpop.f32.mrb[0].mxu0
    %v4593 = vadd.f32 0.0, %v4592
    %v4594 = vpop.f32.mrb[0].mxu0
    %v4595 = vadd.f32 0.0, %v4594
    %v4596 = vpop.f32.mrb[0].mxu0
    %v4597 = vadd.f32 0.0, %v4596
    %v4598 = vpop.f32.mrb[0].mxu0
    %v4599 = vadd.f32 0.0, %v4598
    %4600 = vmatprep.mubr.bf16.mxu0 %v4208
    %4601 = vmatmul.mubr.bf16.gmra.mrb[0].mxu0 %v4207
    %v4602 = vpop.f32.mrb[0].mxu0
    %v4603 = vadd.f32 0.0, %v4602
    %v4604 = vpop.f32.mrb[0].mxu0
    %v4605 = vadd.f32 0.0, %v4604
    %v4606 = vpop.f32.mrb[0].mxu0
    %v4607 = vadd.f32 0.0, %v4606
    %v4608 = vpop.f32.mrb[0].mxu0
    %v4609 = vadd.f32 0.0, %v4608
    %4610 = vmatprep.mubr.bf16.mxu0 %v4210
    %4611 = vmatmul.mubr.bf16.gmra.mrb[0].mxu0 %v4209
    %v4612 = vpop.f32.mrb[0].mxu0
    %v4613 = vadd.f32 0.0, %v4612
    %v4614 = vpop.f32.mrb[0].mxu0
    %v4615 = vadd.f32 0.0, %v4614
    %v4616 = vpop.f32.mrb[0].mxu0
    %v4617 = vadd.f32 0.0, %v4616
    %v4618 = vpop.f32.mrb[0].mxu0
    %v4619 = vadd.f32 0.0, %v4618
    %4620 = vmatprep.mubr.bf16.mxu0 %v4212
    %4621 = vmatmul.mubr.bf16.gmra.mrb[0].mxu0 %v4211
    %v4622 = vpop.f32.mrb[0].mxu0
    %v4623 = vadd.f32 0.0, %v4622
    %v4624 = vpop.f32.mrb[0].mxu0
    %v4625 = vadd.f32 0.0, %v4624
    %v4626 = vpop.f32.mrb[0].mxu0
    %v4627 = vadd.f32 0.0, %v4626
    %v4628 = vpop.f32.mrb[0].mxu0
    %v4629 = vadd.f32 0.0, %v4628
    %4630 = vmatprep.mubr.bf16.mxu0 %v4214
    %4631 = vmatmul.mubr.bf16.gmra.mrb[0].mxu0 %v4213
    %v4632 = vpop.f32.mrb[0].mxu0
    %v4633 = vadd.f32 0.0, %v4632
    %v4634 = vpop.f32.mrb[0].mxu0
    %v4635 = vadd.f32 0.0, %v4634
    %v4636 = vpop.f32.mrb[0].mxu0
    %v4637 = vadd.f32 0.0, %v4636
    %v4638 = vpop.f32.mrb[0].mxu0
    %v4639 = vadd.f32 0.0, %v4638
    %4640 = vmatprep.mubr.bf16.mxu0 %v4216
    %4641 = vmatmul.mubr.bf16.gmra.mrb[0].mxu0 %v4215
    %v4642 = vpop.f32.mrb[0].mxu0
    %v4643 = vadd.f32 0.0, %v4642
    %v4644 = vpop.f32.mrb[0].mxu0
    %v4645 = vadd.f32 0.0, %v4644
    %v4646 = vpop.f32.mrb[0].mxu0
    %v4647 = vadd.f32 0.0, %v4646
    %v4648 = vpop.f32.mrb[0].mxu0
    %v4649 = vadd.f32 0.0, %v4648
    %4650 = vmatprep.mubr.bf16.mxu0 %v4218
    %4651 = vmatmul.mubr.bf16.gmra.mrb[0].mxu0 %v4217
    %v4652 = vpop.f32.mrb[0].mxu0
    %v4653 = vadd.f32 0.0, %v4652
    %v4654 = vpop.f32.mrb[0].mxu0
    %v4655 = vadd.f32 0.0, %v4654
    %v4656 = vpop.f32.mrb[0].mxu0
    %v4657 = vadd.f32 0.0, %v4656
    %v4658 = vpop.f32.mrb[0].mxu0
    %v4659 = vadd.f32 0.0, %v4658
    %4660 = vmatprep.mubr.bf16.mxu0 %v4220
    %4661 = vmatmul.mubr.bf16.gmra.mrb[0].mxu0 %v4219
    %v4662 = vpop.f32.mrb[0].mxu0
    %v4663 = vadd.f32 0.0, %v4662
    %v4664 = vpop.f32.mrb[0].mxu0
    %v4665 = vadd.f32 0.0, %v4664
    %v4666 = vpop.f32.mrb[0].mxu0
    %v4667 = vadd.f32 0.0, %v4666
    %v4668 = vpop.f32.mrb[0].mxu0
    %v4669 = vadd.f32 0.0, %v4668
    %4670 = vdwg.mxu0
    %v4703 = vunpack.c.l.b16 %v4333
    %v4704 = vunpack.c.h.b16 %v4333
    %v4705 = vunpack.c.l.b16 %v4334
    %v4706 = vunpack.c.h.b16 %v4334
    %v4707 = vunpack.c.l.b16 %v4335
    %v4708 = vunpack.c.h.b16 %v4335
    %v4709 = vunpack.c.l.b16 %v4336
    %v4710 = vunpack.c.h.b16 %v4336
    %v4711 = vunpack.c.l.b16 %v4337
    %v4712 = vunpack.c.h.b16 %v4337
    %v4713 = vunpack.c.l.b16 %v4338
    %v4714 = vunpack.c.h.b16 %v4338
    %v4715 = vunpack.c.l.b16 %v4339
    %v4716 = vunpack.c.h.b16 %v4339
    %v4717 = vunpack.c.l.b16 %v4340
    %v4718 = vunpack.c.h.b16 %v4340
    %v4719 = vunpack.c.l.b16 %v4341
    %v4720 = vunpack.c.h.b16 %v4341
    %v4721 = vunpack.c.l.b16 %v4342
    %v4722 = vunpack.c.h.b16 %v4342
    %v4723 = vunpack.c.l.b16 %v4343
    %v4724 = vunpack.c.h.b16 %v4343
    %v4725 = vunpack.c.l.b16 %v4344
    %v4726 = vunpack.c.h.b16 %v4344
    %v4727 = vunpack.c.l.b16 %v4345
    %v4728 = vunpack.c.h.b16 %v4345
    %v4729 = vunpack.c.l.b16 %v4346
    %v4730 = vunpack.c.h.b16 %v4346
    %v4731 = vunpack.c.l.b16 %v4347
    %v4732 = vunpack.c.h.b16 %v4347
    %v4733 = vunpack.c.l.b16 %v4348
    %v4734 = vunpack.c.h.b16 %v4348
    %v4735 = vunpack.c.l.b16 %v4349
    %v4736 = vunpack.c.h.b16 %v4349
    %v4737 = vunpack.c.l.b16 %v4350
    %v4738 = vunpack.c.h.b16 %v4350
    %v4739 = vunpack.c.l.b16 %v4351
    %v4740 = vunpack.c.h.b16 %v4351
    %v4741 = vunpack.c.l.b16 %v4352
    %v4742 = vunpack.c.h.b16 %v4352
    %v4743 = vunpack.c.l.b16 %v4353
    %v4744 = vunpack.c.h.b16 %v4353
    %v4745 = vunpack.c.l.b16 %v4354
    %v4746 = vunpack.c.h.b16 %v4354
    %v4747 = vunpack.c.l.b16 %v4355
    %v4748 = vunpack.c.h.b16 %v4355
    %v4749 = vunpack.c.l.b16 %v4356
    %v4750 = vunpack.c.h.b16 %v4356
    %v4751 = vunpack.c.l.b16 %v4357
    %v4752 = vunpack.c.h.b16 %v4357
    %v4753 = vunpack.c.l.b16 %v4358
    %v4754 = vunpack.c.h.b16 %v4358
    %v4755 = vunpack.c.l.b16 %v4359
    %v4756 = vunpack.c.h.b16 %v4359
    %v4757 = vunpack.c.l.b16 %v4360
    %v4758 = vunpack.c.h.b16 %v4360
    %v4759 = vunpack.c.l.b16 %v4361
    %v4760 = vunpack.c.h.b16 %v4361
    %v4761 = vunpack.c.l.b16 %v4362
    %v4762 = vunpack.c.h.b16 %v4362
    %v4763 = vunpack.c.l.b16 %v4363
    %v4764 = vunpack.c.h.b16 %v4363
    %v4765 = vunpack.c.l.b16 %v4364
    %v4766 = vunpack.c.h.b16 %v4364
    %v4767 = vpack.c.b16 %v4705, %v4703
    %v4768 = vpack.c.b16 %v4706, %v4704
    %v4769 = vpack.c.b16 %v4709, %v4707
    %v4770 = vpack.c.b16 %v4710, %v4708
    %v4771 = vpack.c.b16 %v4713, %v4711
    %v4772 = vpack.c.b16 %v4714, %v4712
    %v4773 = vpack.c.b16 %v4717, %v4715
    %v4774 = vpack.c.b16 %v4718, %v4716
    %v4775 = vpack.c.b16 %v4721, %v4719
    %v4776 = vpack.c.b16 %v4722, %v4720
    %v4777 = vpack.c.b16 %v4725, %v4723
    %v4778 = vpack.c.b16 %v4726, %v4724
    %v4779 = vpack.c.b16 %v4729, %v4727
    %v4780 = vpack.c.b16 %v4730, %v4728
    %v4781 = vpack.c.b16 %v4733, %v4731
    %v4782 = vpack.c.b16 %v4734, %v4732
    %v4783 = vpack.c.b16 %v4737, %v4735
    %v4784 = vpack.c.b16 %v4738, %v4736
    %v4785 = vpack.c.b16 %v4741, %v4739
    %v4786 = vpack.c.b16 %v4742, %v4740
    %v4787 = vpack.c.b16 %v4745, %v4743
    %v4788 = vpack.c.b16 %v4746, %v4744
    %v4789 = vpack.c.b16 %v4749, %v4747
    %v4790 = vpack.c.b16 %v4750, %v4748
    %v4791 = vpack.c.b16 %v4753, %v4751
    %v4792 = vpack.c.b16 %v4754, %v4752
    %v4793 = vpack.c.b16 %v4757, %v4755
    %v4794 = vpack.c.b16 %v4758, %v4756
    %v4795 = vpack.c.b16 %v4761, %v4759
    %v4796 = vpack.c.b16 %v4762, %v4760
    %v4797 = vpack.c.b16 %v4765, %v4763
    %v4798 = vpack.c.b16 %v4766, %v4764
    %4831 = vmatprep.subr.bf16.mxu0 %v4768
    %4832 = vmatpush1.bf16.msra.mxu0 %v4767
    %4833 = vmatprep.subr.bf16.mxu0 %v4770
    %4834 = vmatpush1.bf16.msra.mxu0 %v4769
    %4835 = vmatprep.subr.bf16.mxu0 %v4772
    %4836 = vmatpush1.bf16.msra.mxu0 %v4771
    %4837 = vmatprep.subr.bf16.mxu0 %v4774
    %4838 = vmatpush1.bf16.msra.mxu0 %v4773
    %4839 = vmatprep.subr.bf16.mxu0 %v4776
    %4840 = vmatpush1.bf16.msra.mxu0 %v4775
    %4841 = vmatprep.subr.bf16.mxu0 %v4778
    %4842 = vmatpush1.bf16.msra.mxu0 %v4777
    %4843 = vmatprep.subr.bf16.mxu0 %v4780
    %4844 = vmatpush1.bf16.msra.mxu0 %v4779
    %4845 = vmatprep.subr.bf16.mxu0 %v4782
    %4846 = vmatpush1.bf16.msra.mxu0 %v4781
    %4847 = vmatprep.subr.bf16.mxu0 %v4784
    %4848 = vmatpush1.bf16.msra.mxu0 %v4783
    %4849 = vmatprep.subr.bf16.mxu0 %v4786
    %4850 = vmatpush1.bf16.msra.mxu0 %v4785
    %4851 = vmatprep.subr.bf16.mxu0 %v4788
    %4852 = vmatpush1.bf16.msra.mxu0 %v4787
    %4853 = vmatprep.subr.bf16.mxu0 %v4790
    %4854 = vmatpush1.bf16.msra.mxu0 %v4789
    %4855 = vmatprep.subr.bf16.mxu0 %v4792
    %4856 = vmatpush1.bf16.msra.mxu0 %v4791
    %4857 = vmatprep.subr.bf16.mxu0 %v4794
    %4858 = vmatpush1.bf16.msra.mxu0 %v4793
    %4859 = vmatprep.subr.bf16.mxu0 %v4796
    %4860 = vmatpush1.bf16.msra.mxu0 %v4795
    %4861 = vmatprep.subr.bf16.mxu0 %v4798
    %4862 = vmatpush1.bf16.msra.mxu0 %v4797
    %4863 = vmatprep.mubr.bf16.mxu0 %v4190
    %4864 = vmatmul.mubr.bf16.gmra.mrb[0].mxu0 %v4189
    %v4865 = vpop.f32.mrb[0].mxu0
    %v4866 = vadd.f32 %v4593, %v4865
    %v4867 = vpop.f32.mrb[0].mxu0
    %v4868 = vadd.f32 %v4595, %v4867
    %v4869 = vpop.f32.mrb[0].mxu0
    %v4870 = vadd.f32 %v4597, %v4869
    %v4871 = vpop.f32.mrb[0].mxu0
    %v4872 = vadd.f32 %v4599, %v4871
    %4873 = vmatprep.mubr.bf16.mxu0 %v4192
    %4874 = vmatmul.mubr.bf16.gmra.mrb[0].mxu0 %v4191
    %v4875 = vpop.f32.mrb[0].mxu0
    %v4876 = vadd.f32 %v4603, %v4875
    %v4877 = vpop.f32.mrb[0].mxu0
    %v4878 = vadd.f32 %v4605, %v4877
    %v4879 = vpop.f32.mrb[0].mxu0
    %v4880 = vadd.f32 %v4607, %v4879
    %v4881 = vpop.f32.mrb[0].mxu0
    %v4882 = vadd.f32 %v4609, %v4881
    %4883 = vmatprep.mubr.bf16.mxu0 %v4194
    %4884 = vmatmul.mubr.bf16.gmra.mrb[0].mxu0 %v4193
    %v4885 = vpop.f32.mrb[0].mxu0
    %v4886 = vadd.f32 %v4613, %v4885
    %v4887 = vpop.f32.mrb[0].mxu0
    %v4888 = vadd.f32 %v4615, %v4887
    %v4889 = vpop.f32.mrb[0].mxu0
    %v4890 = vadd.f32 %v4617, %v4889
    %v4891 = vpop.f32.mrb[0].mxu0
    %v4892 = vadd.f32 %v4619, %v4891
    %4893 = vmatprep.mubr.bf16.mxu0 %v4196
    %4894 = vmatmul.mubr.bf16.gmra.mrb[0].mxu0 %v4195
    %v4895 = vpop.f32.mrb[0].mxu0
    %v4896 = vadd.f32 %v4623, %v4895
    %v4897 = vpop.f32.mrb[0].mxu0
    %v4898 = vadd.f32 %v4625, %v4897
    %v4899 = vpop.f32.mrb[0].mxu0
    %v4900 = vadd.f32 %v4627, %v4899
    %v4901 = vpop.f32.mrb[0].mxu0
    %v4902 = vadd.f32 %v4629, %v4901
    %4903 = vmatprep.mubr.bf16.mxu0 %v4198
    %4904 = vmatmul.mubr.bf16.gmra.mrb[0].mxu0 %v4197
    %v4905 = vpop.f32.mrb[0].mxu0
    %v4906 = vadd.f32 %v4633, %v4905
    %v4907 = vpop.f32.mrb[0].mxu0
    %v4908 = vadd.f32 %v4635, %v4907
    %v4909 = vpop.f32.mrb[0].mxu0
    %v4910 = vadd.f32 %v4637, %v4909
    %v4911 = vpop.f32.mrb[0].mxu0
    %v4912 = vadd.f32 %v4639, %v4911
    %4913 = vmatprep.mubr.bf16.mxu0 %v4200
    %4914 = vmatmul.mubr.bf16.gmra.mrb[0].mxu0 %v4199
    %v4915 = vpop.f32.mrb[0].mxu0
    %v4916 = vadd.f32 %v4643, %v4915
    %v4917 = vpop.f32.mrb[0].mxu0
    %v4918 = vadd.f32 %v4645, %v4917
    %v4919 = vpop.f32.mrb[0].mxu0
    %v4920 = vadd.f32 %v4647, %v4919
    %v4921 = vpop.f32.mrb[0].mxu0
    %v4922 = vadd.f32 %v4649, %v4921
    %4923 = vmatprep.mubr.bf16.mxu0 %v4202
    %4924 = vmatmul.mubr.bf16.gmra.mrb[0].mxu0 %v4201
    %v4925 = vpop.f32.mrb[0].mxu0
    %v4926 = vadd.f32 %v4653, %v4925
    %v4927 = vpop.f32.mrb[0].mxu0
    %v4928 = vadd.f32 %v4655, %v4927
    %v4929 = vpop.f32.mrb[0].mxu0
    %v4930 = vadd.f32 %v4657, %v4929
    %v4931 = vpop.f32.mrb[0].mxu0
    %v4932 = vadd.f32 %v4659, %v4931
    %4933 = vmatprep.mubr.bf16.mxu0 %v4204
    %4934 = vmatmul.mubr.bf16.gmra.mrb[0].mxu0 %v4203
    %v4935 = vpop.f32.mrb[0].mxu0
    %v4936 = vadd.f32 %v4663, %v4935
    %v4937 = vpop.f32.mrb[0].mxu0
    %v4938 = vadd.f32 %v4665, %v4937
    %v4939 = vpop.f32.mrb[0].mxu0
    %v4940 = vadd.f32 %v4667, %v4939
    %v4941 = vpop.f32.mrb[0].mxu0
    %v4942 = vadd.f32 %v4669, %v4941
    %4943 = vdwg.mxu0
    %s4944 = scalar_lea.vmem [#allocation3], 512
    %v4945 = vld [vmem:[%s4944] sm:$0xff]
    %v4946 = vld [vmem:[%s4944 + $0x8] sm:$0xff]
    %v4947 = vld [vmem:[%s4944 + $0x10] sm:$0xff]
    %v4948 = vld [vmem:[%s4944 + $0x18] sm:$0xff]
    %v4949 = vld [vmem:[%s4944 + $0x20] sm:$0xff]
    %v4950 = vld [vmem:[%s4944 + $0x28] sm:$0xff]
    %v4951 = vld [vmem:[%s4944 + $0x30] sm:$0xff]
    %v4952 = vld [vmem:[%s4944 + $0x38] sm:$0xff]
    %v4953 = vld [vmem:[%s4944 + $0x40] sm:$0xff]
    %v4954 = vld [vmem:[%s4944 + $0x48] sm:$0xff]
    %v4955 = vld [vmem:[%s4944 + $0x50] sm:$0xff]
    %v4956 = vld [vmem:[%s4944 + $0x58] sm:$0xff]
    %v4957 = vld [vmem:[%s4944 + $0x60] sm:$0xff]
    %v4958 = vld [vmem:[%s4944 + $0x68] sm:$0xff]
    %v4959 = vld [vmem:[%s4944 + $0x70] sm:$0xff]
    %v4960 = vld [vmem:[%s4944 + $0x78] sm:$0xff]
    %v4961 = vld [vmem:[%s4944 + $0x80] sm:$0xff]
    %v4962 = vld [vmem:[%s4944 + $0x88] sm:$0xff]
    %v4963 = vld [vmem:[%s4944 + $0x90] sm:$0xff]
    %v4964 = vld [vmem:[%s4944 + $0x98] sm:$0xff]
    %v4965 = vld [vmem:[%s4944 + $0xa0] sm:$0xff]
    %v4966 = vld [vmem:[%s4944 + $0xa8] sm:$0xff]
    %v4967 = vld [vmem:[%s4944 + $0xb0] sm:$0xff]
    %v4968 = vld [vmem:[%s4944 + $0xb8] sm:$0xff]
    %v4969 = vld [vmem:[%s4944 + $0xc0] sm:$0xff]
    %v4970 = vld [vmem:[%s4944 + $0xc8] sm:$0xff]
    %v4971 = vld [vmem:[%s4944 + $0xd0] sm:$0xff]
    %v4972 = vld [vmem:[%s4944 + $0xd8] sm:$0xff]
    %v4973 = vld [vmem:[%s4944 + $0xe0] sm:$0xff]
    %v4974 = vld [vmem:[%s4944 + $0xe8] sm:$0xff]
    %v4975 = vld [vmem:[%s4944 + $0xf0] sm:$0xff]
    %v4976 = vld [vmem:[%s4944 + $0xf8] sm:$0xff]
    %v5009 = vunpack.c.l.b16 %v4945
    %v5010 = vunpack.c.h.b16 %v4945
    %v5011 = vunpack.c.l.b16 %v4946
    %v5012 = vunpack.c.h.b16 %v4946
    %v5013 = vunpack.c.l.b16 %v4947
    %v5014 = vunpack.c.h.b16 %v4947
    %v5015 = vunpack.c.l.b16 %v4948
    %v5016 = vunpack.c.h.b16 %v4948
    %v5017 = vunpack.c.l.b16 %v4949
    %v5018 = vunpack.c.h.b16 %v4949
    %v5019 = vunpack.c.l.b16 %v4950
    %v5020 = vunpack.c.h.b16 %v4950
    %v5021 = vunpack.c.l.b16 %v4951
    %v5022 = vunpack.c.h.b16 %v4951
    %v5023 = vunpack.c.l.b16 %v4952
    %v5024 = vunpack.c.h.b16 %v4952
    %v5025 = vunpack.c.l.b16 %v4953
    %v5026 = vunpack.c.h.b16 %v4953
    %v5027 = vunpack.c.l.b16 %v4954
    %v5028 = vunpack.c.h.b16 %v4954
    %v5029 = vunpack.c.l.b16 %v4955
    %v5030 = vunpack.c.h.b16 %v4955
    %v5031 = vunpack.c.l.b16 %v4956
    %v5032 = vunpack.c.h.b16 %v4956
    %v5033 = vunpack.c.l.b16 %v4957
    %v5034 = vunpack.c.h.b16 %v4957
    %v5035 = vunpack.c.l.b16 %v4958
    %v5036 = vunpack.c.h.b16 %v4958
    %v5037 = vunpack.c.l.b16 %v4959
    %v5038 = vunpack.c.h.b16 %v4959
    %v5039 = vunpack.c.l.b16 %v4960
    %v5040 = vunpack.c.h.b16 %v4960
    %v5041 = vunpack.c.l.b16 %v4961
    %v5042 = vunpack.c.h.b16 %v4961
    %v5043 = vunpack.c.l.b16 %v4962
    %v5044 = vunpack.c.h.b16 %v4962
    %v5045 = vunpack.c.l.b16 %v4963
    %v5046 = vunpack.c.h.b16 %v4963
    %v5047 = vunpack.c.l.b16 %v4964
    %v5048 = vunpack.c.h.b16 %v4964
    %v5049 = vunpack.c.l.b16 %v4965
    %v5050 = vunpack.c.h.b16 %v4965
    %v5051 = vunpack.c.l.b16 %v4966
    %v5052 = vunpack.c.h.b16 %v4966
    %v5053 = vunpack.c.l.b16 %v4967
    %v5054 = vunpack.c.h.b16 %v4967
    %v5055 = vunpack.c.l.b16 %v4968
    %v5056 = vunpack.c.h.b16 %v4968
    %v5057 = vunpack.c.l.b16 %v4969
    %v5058 = vunpack.c.h.b16 %v4969
    %v5059 = vunpack.c.l.b16 %v4970
    %v5060 = vunpack.c.h.b16 %v4970
    %v5061 = vunpack.c.l.b16 %v4971
    %v5062 = vunpack.c.h.b16 %v4971
    %v5063 = vunpack.c.l.b16 %v4972
    %v5064 = vunpack.c.h.b16 %v4972
    %v5065 = vunpack.c.l.b16 %v4973
    %v5066 = vunpack.c.h.b16 %v4973
    %v5067 = vunpack.c.l.b16 %v4974
    %v5068 = vunpack.c.h.b16 %v4974
    %v5069 = vunpack.c.l.b16 %v4975
    %v5070 = vunpack.c.h.b16 %v4975
    %v5071 = vunpack.c.l.b16 %v4976
    %v5072 = vunpack.c.h.b16 %v4976
    %v5073 = vpack.c.b16 %v5011, %v5009
    %v5074 = vpack.c.b16 %v5012, %v5010
    %v5075 = vpack.c.b16 %v5015, %v5013
    %v5076 = vpack.c.b16 %v5016, %v5014
    %v5077 = vpack.c.b16 %v5019, %v5017
    %v5078 = vpack.c.b16 %v5020, %v5018
    %v5079 = vpack.c.b16 %v5023, %v5021
    %v5080 = vpack.c.b16 %v5024, %v5022
    %v5081 = vpack.c.b16 %v5027, %v5025
    %v5082 = vpack.c.b16 %v5028, %v5026
    %v5083 = vpack.c.b16 %v5031, %v5029
    %v5084 = vpack.c.b16 %v5032, %v5030
    %v5085 = vpack.c.b16 %v5035, %v5033
    %v5086 = vpack.c.b16 %v5036, %v5034
    %v5087 = vpack.c.b16 %v5039, %v5037
    %v5088 = vpack.c.b16 %v5040, %v5038
    %v5089 = vpack.c.b16 %v5043, %v5041
    %v5090 = vpack.c.b16 %v5044, %v5042
    %v5091 = vpack.c.b16 %v5047, %v5045
    %v5092 = vpack.c.b16 %v5048, %v5046
    %v5093 = vpack.c.b16 %v5051, %v5049
    %v5094 = vpack.c.b16 %v5052, %v5050
    %v5095 = vpack.c.b16 %v5055, %v5053
    %v5096 = vpack.c.b16 %v5056, %v5054
    %v5097 = vpack.c.b16 %v5059, %v5057
    %v5098 = vpack.c.b16 %v5060, %v5058
    %v5099 = vpack.c.b16 %v5063, %v5061
    %v5100 = vpack.c.b16 %v5064, %v5062
    %v5101 = vpack.c.b16 %v5067, %v5065
    %v5102 = vpack.c.b16 %v5068, %v5066
    %v5103 = vpack.c.b16 %v5071, %v5069
    %v5104 = vpack.c.b16 %v5072, %v5070
    %5137 = vmatprep.subr.bf16.mxu0 %v5074
    %5138 = vmatpush1.bf16.msra.mxu0 %v5073
    %5139 = vmatprep.subr.bf16.mxu0 %v5076
    %5140 = vmatpush1.bf16.msra.mxu0 %v5075
    %5141 = vmatprep.subr.bf16.mxu0 %v5078
    %5142 = vmatpush1.bf16.msra.mxu0 %v5077
    %5143 = vmatprep.subr.bf16.mxu0 %v5080
    %5144 = vmatpush1.bf16.msra.mxu0 %v5079
    %5145 = vmatprep.subr.bf16.mxu0 %v5082
    %5146 = vmatpush1.bf16.msra.mxu0 %v5081
    %5147 = vmatprep.subr.bf16.mxu0 %v5084
    %5148 = vmatpush1.bf16.msra.mxu0 %v5083
    %5149 = vmatprep.subr.bf16.mxu0 %v5086
    %5150 = vmatpush1.bf16.msra.mxu0 %v5085
    %5151 = vmatprep.subr.bf16.mxu0 %v5088
    %5152 = vmatpush1.bf16.msra.mxu0 %v5087
    %5153 = vmatprep.subr.bf16.mxu0 %v5090
    %5154 = vmatpush1.bf16.msra.mxu0 %v5089
    %5155 = vmatprep.subr.bf16.mxu0 %v5092
    %5156 = vmatpush1.bf16.msra.mxu0 %v5091
    %5157 = vmatprep.subr.bf16.mxu0 %v5094
    %5158 = vmatpush1.bf16.msra.mxu0 %v5093
    %5159 = vmatprep.subr.bf16.mxu0 %v5096
    %5160 = vmatpush1.bf16.msra.mxu0 %v5095
    %5161 = vmatprep.subr.bf16.mxu0 %v5098
    %5162 = vmatpush1.bf16.msra.mxu0 %v5097
    %5163 = vmatprep.subr.bf16.mxu0 %v5100
    %5164 = vmatpush1.bf16.msra.mxu0 %v5099
    %5165 = vmatprep.subr.bf16.mxu0 %v5102
    %5166 = vmatpush1.bf16.msra.mxu0 %v5101
    %5167 = vmatprep.subr.bf16.mxu0 %v5104
    %5168 = vmatpush1.bf16.msra.mxu0 %v5103
    %5169 = vmatprep.mubr.bf16.mxu0 %v4222
    %5170 = vmatmul.mubr.bf16.gmra.mrb[0].mxu0 %v4221
    %v5171 = vpop.f32.mrb[0].mxu0
    %v5172 = vadd.f32 0.0, %v5171
    %v5173 = vpop.f32.mrb[0].mxu0
    %v5174 = vadd.f32 0.0, %v5173
    %v5175 = vpop.f32.mrb[0].mxu0
    %v5176 = vadd.f32 0.0, %v5175
    %v5177 = vpop.f32.mrb[0].mxu0
    %v5178 = vadd.f32 0.0, %v5177
    %5179 = vmatprep.mubr.bf16.mxu0 %v4224
    %5180 = vmatmul.mubr.bf16.gmra.mrb[0].mxu0 %v4223
    %v5181 = vpop.f32.mrb[0].mxu0
    %v5182 = vadd.f32 0.0, %v5181
    %v5183 = vpop.f32.mrb[0].mxu0
    %v5184 = vadd.f32 0.0, %v5183
    %v5185 = vpop.f32.mrb[0].mxu0
    %v5186 = vadd.f32 0.0, %v5185
    %v5187 = vpop.f32.mrb[0].mxu0
    %v5188 = vadd.f32 0.0, %v5187
    %5189 = vmatprep.mubr.bf16.mxu0 %v4226
    %5190 = vmatmul.mubr.bf16.gmra.mrb[0].mxu0 %v4225
    %v5191 = vpop.f32.mrb[0].mxu0
    %v5192 = vadd.f32 0.0, %v5191
    %v5193 = vpop.f32.mrb[0].mxu0
    %v5194 = vadd.f32 0.0, %v5193
    %v5195 = vpop.f32.mrb[0].mxu0
    %v5196 = vadd.f32 0.0, %v5195
    %v5197 = vpop.f32.mrb[0].mxu0
    %v5198 = vadd.f32 0.0, %v5197
    %5199 = vmatprep.mubr.bf16.mxu0 %v4228
    %5200 = vmatmul.mubr.bf16.gmra.mrb[0].mxu0 %v4227
    %v5201 = vpop.f32.mrb[0].mxu0
    %v5202 = vadd.f32 0.0, %v5201
    %v5203 = vpop.f32.mrb[0].mxu0
    %v5204 = vadd.f32 0.0, %v5203
    %v5205 = vpop.f32.mrb[0].mxu0
    %v5206 = vadd.f32 0.0, %v5205
    %v5207 = vpop.f32.mrb[0].mxu0
    %v5208 = vadd.f32 0.0, %v5207
    %5209 = vmatprep.mubr.bf16.mxu0 %v4230
    %5210 = vmatmul.mubr.bf16.gmra.mrb[0].mxu0 %v4229
    %v5211 = vpop.f32.mrb[0].mxu0
    %v5212 = vadd.f32 0.0, %v5211
    %v5213 = vpop.f32.mrb[0].mxu0
    %v5214 = vadd.f32 0.0, %v5213
    %v5215 = vpop.f32.mrb[0].mxu0
    %v5216 = vadd.f32 0.0, %v5215
    %v5217 = vpop.f32.mrb[0].mxu0
    %v5218 = vadd.f32 0.0, %v5217
    %5219 = vmatprep.mubr.bf16.mxu0 %v4232
    %5220 = vmatmul.mubr.bf16.gmra.mrb[0].mxu0 %v4231
    %v5221 = vpop.f32.mrb[0].mxu0
    %v5222 = vadd.f32 0.0, %v5221
    %v5223 = vpop.f32.mrb[0].mxu0
    %v5224 = vadd.f32 0.0, %v5223
    %v5225 = vpop.f32.mrb[0].mxu0
    %v5226 = vadd.f32 0.0, %v5225
    %v5227 = vpop.f32.mrb[0].mxu0
    %v5228 = vadd.f32 0.0, %v5227
    %5229 = vmatprep.mubr.bf16.mxu0 %v4234
    %5230 = vmatmul.mubr.bf16.gmra.mrb[0].mxu0 %v4233
    %v5231 = vpop.f32.mrb[0].mxu0
    %v5232 = vadd.f32 0.0, %v5231
    %v5233 = vpop.f32.mrb[0].mxu0
    %v5234 = vadd.f32 0.0, %v5233
    %v5235 = vpop.f32.mrb[0].mxu0
    %v5236 = vadd.f32 0.0, %v5235
    %v5237 = vpop.f32.mrb[0].mxu0
    %v5238 = vadd.f32 0.0, %v5237
    %5239 = vmatprep.mubr.bf16.mxu0 %v4236
    %5240 = vmatmul.mubr.bf16.gmra.mrb[0].mxu0 %v4235
    %v5241 = vpop.f32.mrb[0].mxu0
    %v5242 = vadd.f32 0.0, %v5241
    %v5243 = vpop.f32.mrb[0].mxu0
    %v5244 = vadd.f32 0.0, %v5243
    %v5245 = vpop.f32.mrb[0].mxu0
    %v5246 = vadd.f32 0.0, %v5245
    %v5247 = vpop.f32.mrb[0].mxu0
    %v5248 = vadd.f32 0.0, %v5247
    %5249 = vdwg.mxu0
    %v5250 = vadd.f32 %v4866, %v5172
    %v5251 = vadd.f32 %v4868, %v5174
    %v5252 = vadd.f32 %v4870, %v5176
    %v5253 = vadd.f32 %v4872, %v5178
    %v5254 = vadd.f32 %v4876, %v5182
    %v5255 = vadd.f32 %v4878, %v5184
    %v5256 = vadd.f32 %v4880, %v5186
    %v5257 = vadd.f32 %v4882, %v5188
    %v5258 = vadd.f32 %v4886, %v5192
    %v5259 = vadd.f32 %v4888, %v5194
    %v5260 = vadd.f32 %v4890, %v5196
    %v5261 = vadd.f32 %v4892, %v5198
    %v5262 = vadd.f32 %v4896, %v5202
    %v5263 = vadd.f32 %v4898, %v5204
    %v5264 = vadd.f32 %v4900, %v5206
    %v5265 = vadd.f32 %v4902, %v5208
    %v5266 = vadd.f32 %v4906, %v5212
    %v5267 = vadd.f32 %v4908, %v5214
    %v5268 = vadd.f32 %v4910, %v5216
    %v5269 = vadd.f32 %v4912, %v5218
    %v5270 = vadd.f32 %v4916, %v5222
    %v5271 = vadd.f32 %v4918, %v5224
    %v5272 = vadd.f32 %v4920, %v5226
    %v5273 = vadd.f32 %v4922, %v5228
    %v5274 = vadd.f32 %v4926, %v5232
    %v5275 = vadd.f32 %v4928, %v5234
    %v5276 = vadd.f32 %v4930, %v5236
    %v5277 = vadd.f32 %v4932, %v5238
    %v5278 = vadd.f32 %v4936, %v5242
    %v5279 = vadd.f32 %v4938, %v5244
    %v5280 = vadd.f32 %v4940, %v5246
    %v5281 = vadd.f32 %v4942, %v5248
    %s5282 = scalar_lea.vmem [#allocation3], 768
    %v5283 = vld [vmem:[%s5282] sm:$0xff]
    %v5284 = vld [vmem:[%s5282 + $0x8] sm:$0xff]
    %v5285 = vld [vmem:[%s5282 + $0x10] sm:$0xff]
    %v5286 = vld [vmem:[%s5282 + $0x18] sm:$0xff]
    %v5287 = vld [vmem:[%s5282 + $0x20] sm:$0xff]
    %v5288 = vld [vmem:[%s5282 + $0x28] sm:$0xff]
    %v5289 = vld [vmem:[%s5282 + $0x30] sm:$0xff]
    %v5290 = vld [vmem:[%s5282 + $0x38] sm:$0xff]
    %v5291 = vld [vmem:[%s5282 + $0x40] sm:$0xff]
    %v5292 = vld [vmem:[%s5282 + $0x48] sm:$0xff]
    %v5293 = vld [vmem:[%s5282 + $0x50] sm:$0xff]
    %v5294 = vld [vmem:[%s5282 + $0x58] sm:$0xff]
    %v5295 = vld [vmem:[%s5282 + $0x60] sm:$0xff]
    %v5296 = vld [vmem:[%s5282 + $0x68] sm:$0xff]
    %v5297 = vld [vmem:[%s5282 + $0x70] sm:$0xff]
    %v5298 = vld [vmem:[%s5282 + $0x78] sm:$0xff]
    %v5299 = vld [vmem:[%s5282 + $0x80] sm:$0xff]
    %v5300 = vld [vmem:[%s5282 + $0x88] sm:$0xff]
    %v5301 = vld [vmem:[%s5282 + $0x90] sm:$0xff]
    %v5302 = vld [vmem:[%s5282 + $0x98] sm:$0xff]
    %v5303 = vld [vmem:[%s5282 + $0xa0] sm:$0xff]
    %v5304 = vld [vmem:[%s5282 + $0xa8] sm:$0xff]
    %v5305 = vld [vmem:[%s5282 + $0xb0] sm:$0xff]
    %v5306 = vld [vmem:[%s5282 + $0xb8] sm:$0xff]
    %v5307 = vld [vmem:[%s5282 + $0xc0] sm:$0xff]
    %v5308 = vld [vmem:[%s5282 + $0xc8] sm:$0xff]
    %v5309 = vld [vmem:[%s5282 + $0xd0] sm:$0xff]
    %v5310 = vld [vmem:[%s5282 + $0xd8] sm:$0xff]
    %v5311 = vld [vmem:[%s5282 + $0xe0] sm:$0xff]
    %v5312 = vld [vmem:[%s5282 + $0xe8] sm:$0xff]
    %v5313 = vld [vmem:[%s5282 + $0xf0] sm:$0xff]
    %v5314 = vld [vmem:[%s5282 + $0xf8] sm:$0xff]
    %v5347 = vunpack.c.l.b16 %v5283
    %v5348 = vunpack.c.h.b16 %v5283
    %v5349 = vunpack.c.l.b16 %v5284
    %v5350 = vunpack.c.h.b16 %v5284
    %v5351 = vunpack.c.l.b16 %v5285
    %v5352 = vunpack.c.h.b16 %v5285
    %v5353 = vunpack.c.l.b16 %v5286
    %v5354 = vunpack.c.h.b16 %v5286
    %v5355 = vunpack.c.l.b16 %v5287
    %v5356 = vunpack.c.h.b16 %v5287
    %v5357 = vunpack.c.l.b16 %v5288
    %v5358 = vunpack.c.h.b16 %v5288
    %v5359 = vunpack.c.l.b16 %v5289
    %v5360 = vunpack.c.h.b16 %v5289
    %v5361 = vunpack.c.l.b16 %v5290
    %v5362 = vunpack.c.h.b16 %v5290
    %v5363 = vunpack.c.l.b16 %v5291
    %v5364 = vunpack.c.h.b16 %v5291
    %v5365 = vunpack.c.l.b16 %v5292
    %v5366 = vunpack.c.h.b16 %v5292
    %v5367 = vunpack.c.l.b16 %v5293
    %v5368 = vunpack.c.h.b16 %v5293
    %v5369 = vunpack.c.l.b16 %v5294
    %v5370 = vunpack.c.h.b16 %v5294
    %v5371 = vunpack.c.l.b16 %v5295
    %v5372 = vunpack.c.h.b16 %v5295
    %v5373 = vunpack.c.l.b16 %v5296
    %v5374 = vunpack.c.h.b16 %v5296
    %v5375 = vunpack.c.l.b16 %v5297
    %v5376 = vunpack.c.h.b16 %v5297
    %v5377 = vunpack.c.l.b16 %v5298
    %v5378 = vunpack.c.h.b16 %v5298
    %v5379 = vunpack.c.l.b16 %v5299
    %v5380 = vunpack.c.h.b16 %v5299
    %v5381 = vunpack.c.l.b16 %v5300
    %v5382 = vunpack.c.h.b16 %v5300
    %v5383 = vunpack.c.l.b16 %v5301
    %v5384 = vunpack.c.h.b16 %v5301
    %v5385 = vunpack.c.l.b16 %v5302
    %v5386 = vunpack.c.h.b16 %v5302
    %v5387 = vunpack.c.l.b16 %v5303
    %v5388 = vunpack.c.h.b16 %v5303
    %v5389 = vunpack.c.l.b16 %v5304
    %v5390 = vunpack.c.h.b16 %v5304
    %v5391 = vunpack.c.l.b16 %v5305
    %v5392 = vunpack.c.h.b16 %v5305
    %v5393 = vunpack.c.l.b16 %v5306
    %v5394 = vunpack.c.h.b16 %v5306
    %v5395 = vunpack.c.l.b16 %v5307
    %v5396 = vunpack.c.h.b16 %v5307
    %v5397 = vunpack.c.l.b16 %v5308
    %v5398 = vunpack.c.h.b16 %v5308
    %v5399 = vunpack.c.l.b16 %v5309
    %v5400 = vunpack.c.h.b16 %v5309
    %v5401 = vunpack.c.l.b16 %v5310
    %v5402 = vunpack.c.h.b16 %v5310
    %v5403 = vunpack.c.l.b16 %v5311
    %v5404 = vunpack.c.h.b16 %v5311
    %v5405 = vunpack.c.l.b16 %v5312
    %v5406 = vunpack.c.h.b16 %v5312
    %v5407 = vunpack.c.l.b16 %v5313
    %v5408 = vunpack.c.h.b16 %v5313
    %v5409 = vunpack.c.l.b16 %v5314
    %v5410 = vunpack.c.h.b16 %v5314
    %v5411 = vpack.c.b16 %v5349, %v5347
    %v5412 = vpack.c.b16 %v5350, %v5348
    %v5413 = vpack.c.b16 %v5353, %v5351
    %v5414 = vpack.c.b16 %v5354, %v5352
    %v5415 = vpack.c.b16 %v5357, %v5355
    %v5416 = vpack.c.b16 %v5358, %v5356
    %v5417 = vpack.c.b16 %v5361, %v5359
    %v5418 = vpack.c.b16 %v5362, %v5360
    %v5419 = vpack.c.b16 %v5365, %v5363
    %v5420 = vpack.c.b16 %v5366, %v5364
    %v5421 = vpack.c.b16 %v5369, %v5367
    %v5422 = vpack.c.b16 %v5370, %v5368
    %v5423 = vpack.c.b16 %v5373, %v5371
    %v5424 = vpack.c.b16 %v5374, %v5372
    %v5425 = vpack.c.b16 %v5377, %v5375
    %v5426 = vpack.c.b16 %v5378, %v5376
    %v5427 = vpack.c.b16 %v5381, %v5379
    %v5428 = vpack.c.b16 %v5382, %v5380
    %v5429 = vpack.c.b16 %v5385, %v5383
    %v5430 = vpack.c.b16 %v5386, %v5384
    %v5431 = vpack.c.b16 %v5389, %v5387
    %v5432 = vpack.c.b16 %v5390, %v5388
    %v5433 = vpack.c.b16 %v5393, %v5391
    %v5434 = vpack.c.b16 %v5394, %v5392
    %v5435 = vpack.c.b16 %v5397, %v5395
    %v5436 = vpack.c.b16 %v5398, %v5396
    %v5437 = vpack.c.b16 %v5401, %v5399
    %v5438 = vpack.c.b16 %v5402, %v5400
    %v5439 = vpack.c.b16 %v5405, %v5403
    %v5440 = vpack.c.b16 %v5406, %v5404
    %v5441 = vpack.c.b16 %v5409, %v5407
    %v5442 = vpack.c.b16 %v5410, %v5408
    %5475 = vmatprep.subr.bf16.mxu0 %v5412
    %5476 = vmatpush1.bf16.msra.mxu0 %v5411
    %5477 = vmatprep.subr.bf16.mxu0 %v5414
    %5478 = vmatpush1.bf16.msra.mxu0 %v5413
    %5479 = vmatprep.subr.bf16.mxu0 %v5416
    %5480 = vmatpush1.bf16.msra.mxu0 %v5415
    %5481 = vmatprep.subr.bf16.mxu0 %v5418
    %5482 = vmatpush1.bf16.msra.mxu0 %v5417
    %5483 = vmatprep.subr.bf16.mxu0 %v5420
    %5484 = vmatpush1.bf16.msra.mxu0 %v5419
    %5485 = vmatprep.subr.bf16.mxu0 %v5422
    %5486 = vmatpush1.bf16.msra.mxu0 %v5421
    %5487 = vmatprep.subr.bf16.mxu0 %v5424
    %5488 = vmatpush1.bf16.msra.mxu0 %v5423
    %5489 = vmatprep.subr.bf16.mxu0 %v5426
    %5490 = vmatpush1.bf16.msra.mxu0 %v5425
    %5491 = vmatprep.subr.bf16.mxu0 %v5428
    %5492 = vmatpush1.bf16.msra.mxu0 %v5427
    %5493 = vmatprep.subr.bf16.mxu0 %v5430
    %5494 = vmatpush1.bf16.msra.mxu0 %v5429
    %5495 = vmatprep.subr.bf16.mxu0 %v5432
    %5496 = vmatpush1.bf16.msra.mxu0 %v5431
    %5497 = vmatprep.subr.bf16.mxu0 %v5434
    %5498 = vmatpush1.bf16.msra.mxu0 %v5433
    %5499 = vmatprep.subr.bf16.mxu0 %v5436
    %5500 = vmatpush1.bf16.msra.mxu0 %v5435
    %5501 = vmatprep.subr.bf16.mxu0 %v5438
    %5502 = vmatpush1.bf16.msra.mxu0 %v5437
    %5503 = vmatprep.subr.bf16.mxu0 %v5440
    %5504 = vmatpush1.bf16.msra.mxu0 %v5439
    %5505 = vmatprep.subr.bf16.mxu0 %v5442
    %5506 = vmatpush1.bf16.msra.mxu0 %v5441
    %5507 = vmatprep.mubr.bf16.mxu0 %v4238
    %5508 = vmatmul.mubr.bf16.gmra.mrb[0].mxu0 %v4237
    %v5509 = vpop.f32.mrb[0].mxu0
    %v5510 = vadd.f32 0.0, %v5509
    %v5511 = vpop.f32.mrb[0].mxu0
    %v5512 = vadd.f32 0.0, %v5511
    %v5513 = vpop.f32.mrb[0].mxu0
    %v5514 = vadd.f32 0.0, %v5513
    %v5515 = vpop.f32.mrb[0].mxu0
    %v5516 = vadd.f32 0.0, %v5515
    %5517 = vmatprep.mubr.bf16.mxu0 %v4240
    %5518 = vmatmul.mubr.bf16.gmra.mrb[0].mxu0 %v4239
    %v5519 = vpop.f32.mrb[0].mxu0
    %v5520 = vadd.f32 0.0, %v5519
    %v5521 = vpop.f32.mrb[0].mxu0
    %v5522 = vadd.f32 0.0, %v5521
    %v5523 = vpop.f32.mrb[0].mxu0
    %v5524 = vadd.f32 0.0, %v5523
    %v5525 = vpop.f32.mrb[0].mxu0
    %v5526 = vadd.f32 0.0, %v5525
    %5527 = vmatprep.mubr.bf16.mxu0 %v4242
    %5528 = vmatmul.mubr.bf16.gmra.mrb[0].mxu0 %v4241
    %v5529 = vpop.f32.mrb[0].mxu0
    %v5530 = vadd.f32 0.0, %v5529
    %v5531 = vpop.f32.mrb[0].mxu0
    %v5532 = vadd.f32 0.0, %v5531
    %v5533 = vpop.f32.mrb[0].mxu0
    %v5534 = vadd.f32 0.0, %v5533
    %v5535 = vpop.f32.mrb[0].mxu0
    %v5536 = vadd.f32 0.0, %v5535
    %5537 = vmatprep.mubr.bf16.mxu0 %v4244
    %5538 = vmatmul.mubr.bf16.gmra.mrb[0].mxu0 %v4243
    %v5539 = vpop.f32.mrb[0].mxu0
    %v5540 = vadd.f32 0.0, %v5539
    %v5541 = vpop.f32.mrb[0].mxu0
    %v5542 = vadd.f32 0.0, %v5541
    %v5543 = vpop.f32.mrb[0].mxu0
    %v5544 = vadd.f32 0.0, %v5543
    %v5545 = vpop.f32.mrb[0].mxu0
    %v5546 = vadd.f32 0.0, %v5545
    %5547 = vmatprep.mubr.bf16.mxu0 %v4246
    %5548 = vmatmul.mubr.bf16.gmra.mrb[0].mxu0 %v4245
    %v5549 = vpop.f32.mrb[0].mxu0
    %v5550 = vadd.f32 0.0, %v5549
    %v5551 = vpop.f32.mrb[0].mxu0
    %v5552 = vadd.f32 0.0, %v5551
    %v5553 = vpop.f32.mrb[0].mxu0
    %v5554 = vadd.f32 0.0, %v5553
    %v5555 = vpop.f32.mrb[0].mxu0
    %v5556 = vadd.f32 0.0, %v5555
    %5557 = vmatprep.mubr.bf16.mxu0 %v4248
    %5558 = vmatmul.mubr.bf16.gmra.mrb[0].mxu0 %v4247
    %v5559 = vpop.f32.mrb[0].mxu0
    %v5560 = vadd.f32 0.0, %v5559
    %v5561 = vpop.f32.mrb[0].mxu0
    %v5562 = vadd.f32 0.0, %v5561
    %v5563 = vpop.f32.mrb[0].mxu0
    %v5564 = vadd.f32 0.0, %v5563
    %v5565 = vpop.f32.mrb[0].mxu0
    %v5566 = vadd.f32 0.0, %v5565
    %5567 = vmatprep.mubr.bf16.mxu0 %v4250
    %5568 = vmatmul.mubr.bf16.gmra.mrb[0].mxu0 %v4249
    %v5569 = vpop.f32.mrb[0].mxu0
    %v5570 = vadd.f32 0.0, %v5569
    %v5571 = vpop.f32.mrb[0].mxu0
    %v5572 = vadd.f32 0.0, %v5571
    %v5573 = vpop.f32.mrb[0].mxu0
    %v5574 = vadd.f32 0.0, %v5573
    %v5575 = vpop.f32.mrb[0].mxu0
    %v5576 = vadd.f32 0.0, %v5575
    %5577 = vmatprep.mubr.bf16.mxu0 %v4252
    %5578 = vmatmul.mubr.bf16.gmra.mrb[0].mxu0 %v4251
    %v5579 = vpop.f32.mrb[0].mxu0
    %v5580 = vadd.f32 0.0, %v5579
    %v5581 = vpop.f32.mrb[0].mxu0
    %v5582 = vadd.f32 0.0, %v5581
    %v5583 = vpop.f32.mrb[0].mxu0
    %v5584 = vadd.f32 0.0, %v5583
    %v5585 = vpop.f32.mrb[0].mxu0
    %v5586 = vadd.f32 0.0, %v5585
    %5587 = vdwg.mxu0
    %v5588 = vadd.f32 %v5250, %v5510
    %v5589 = vadd.f32 %v5251, %v5512
    %v5590 = vadd.f32 %v5252, %v5514
    %v5591 = vadd.f32 %v5253, %v5516
    %v5592 = vadd.f32 %v5254, %v5520
    %v5593 = vadd.f32 %v5255, %v5522
    %v5594 = vadd.f32 %v5256, %v5524
    %v5595 = vadd.f32 %v5257, %v5526
    %v5596 = vadd.f32 %v5258, %v5530
    %v5597 = vadd.f32 %v5259, %v5532
    %v5598 = vadd.f32 %v5260, %v5534
    %v5599 = vadd.f32 %v5261, %v5536
    %v5600 = vadd.f32 %v5262, %v5540
    %v5601 = vadd.f32 %v5263, %v5542
    %v5602 = vadd.f32 %v5264, %v5544
    %v5603 = vadd.f32 %v5265, %v5546
    %v5604 = vadd.f32 %v5266, %v5550
    %v5605 = vadd.f32 %v5267, %v5552
    %v5606 = vadd.f32 %v5268, %v5554
    %v5607 = vadd.f32 %v5269, %v5556
    %v5608 = vadd.f32 %v5270, %v5560
    %v5609 = vadd.f32 %v5271, %v5562
    %v5610 = vadd.f32 %v5272, %v5564
    %v5611 = vadd.f32 %v5273, %v5566
    %v5612 = vadd.f32 %v5274, %v5570
    %v5613 = vadd.f32 %v5275, %v5572
    %v5614 = vadd.f32 %v5276, %v5574
    %v5615 = vadd.f32 %v5277, %v5576
    %v5616 = vadd.f32 %v5278, %v5580
    %v5617 = vadd.f32 %v5279, %v5582
    %v5618 = vadd.f32 %v5280, %v5584
    %v5619 = vadd.f32 %v5281, %v5586
    %s5620 = scalar_lea.vmem [#allocation3], 1024
    %v5621 = vld [vmem:[%s5620] sm:$0xff]
    %v5622 = vld [vmem:[%s5620 + $0x8] sm:$0xff]
    %v5623 = vld [vmem:[%s5620 + $0x10] sm:$0xff]
    %v5624 = vld [vmem:[%s5620 + $0x18] sm:$0xff]
    %v5625 = vld [vmem:[%s5620 + $0x20] sm:$0xff]
    %v5626 = vld [vmem:[%s5620 + $0x28] sm:$0xff]
    %v5627 = vld [vmem:[%s5620 + $0x30] sm:$0xff]
    %v5628 = vld [vmem:[%s5620 + $0x38] sm:$0xff]
    %v5629 = vld [vmem:[%s5620 + $0x40] sm:$0xff]
    %v5630 = vld [vmem:[%s5620 + $0x48] sm:$0xff]
    %v5631 = vld [vmem:[%s5620 + $0x50] sm:$0xff]
    %v5632 = vld [vmem:[%s5620 + $0x58] sm:$0xff]
    %v5633 = vld [vmem:[%s5620 + $0x60] sm:$0xff]
    %v5634 = vld [vmem:[%s5620 + $0x68] sm:$0xff]
    %v5635 = vld [vmem:[%s5620 + $0x70] sm:$0xff]
    %v5636 = vld [vmem:[%s5620 + $0x78] sm:$0xff]
    %v5637 = vld [vmem:[%s5620 + $0x80] sm:$0xff]
    %v5638 = vld [vmem:[%s5620 + $0x88] sm:$0xff]
    %v5639 = vld [vmem:[%s5620 + $0x90] sm:$0xff]
    %v5640 = vld [vmem:[%s5620 + $0x98] sm:$0xff]
    %v5641 = vld [vmem:[%s5620 + $0xa0] sm:$0xff]
    %v5642 = vld [vmem:[%s5620 + $0xa8] sm:$0xff]
    %v5643 = vld [vmem:[%s5620 + $0xb0] sm:$0xff]
    %v5644 = vld [vmem:[%s5620 + $0xb8] sm:$0xff]
    %v5645 = vld [vmem:[%s5620 + $0xc0] sm:$0xff]
    %v5646 = vld [vmem:[%s5620 + $0xc8] sm:$0xff]
    %v5647 = vld [vmem:[%s5620 + $0xd0] sm:$0xff]
    %v5648 = vld [vmem:[%s5620 + $0xd8] sm:$0xff]
    %v5649 = vld [vmem:[%s5620 + $0xe0] sm:$0xff]
    %v5650 = vld [vmem:[%s5620 + $0xe8] sm:$0xff]
    %v5651 = vld [vmem:[%s5620 + $0xf0] sm:$0xff]
    %v5652 = vld [vmem:[%s5620 + $0xf8] sm:$0xff]
    %v5685 = vunpack.c.l.b16 %v5621
    %v5686 = vunpack.c.h.b16 %v5621
    %v5687 = vunpack.c.l.b16 %v5622
    %v5688 = vunpack.c.h.b16 %v5622
    %v5689 = vunpack.c.l.b16 %v5623
    %v5690 = vunpack.c.h.b16 %v5623
    %v5691 = vunpack.c.l.b16 %v5624
    %v5692 = vunpack.c.h.b16 %v5624
    %v5693 = vunpack.c.l.b16 %v5625
    %v5694 = vunpack.c.h.b16 %v5625
    %v5695 = vunpack.c.l.b16 %v5626
    %v5696 = vunpack.c.h.b16 %v5626
    %v5697 = vunpack.c.l.b16 %v5627
    %v5698 = vunpack.c.h.b16 %v5627
    %v5699 = vunpack.c.l.b16 %v5628
    %v5700 = vunpack.c.h.b16 %v5628
    %v5701 = vunpack.c.l.b16 %v5629
    %v5702 = vunpack.c.h.b16 %v5629
    %v5703 = vunpack.c.l.b16 %v5630
    %v5704 = vunpack.c.h.b16 %v5630
    %v5705 = vunpack.c.l.b16 %v5631
    %v5706 = vunpack.c.h.b16 %v5631
    %v5707 = vunpack.c.l.b16 %v5632
    %v5708 = vunpack.c.h.b16 %v5632
    %v5709 = vunpack.c.l.b16 %v5633
    %v5710 = vunpack.c.h.b16 %v5633
    %v5711 = vunpack.c.l.b16 %v5634
    %v5712 = vunpack.c.h.b16 %v5634
    %v5713 = vunpack.c.l.b16 %v5635
    %v5714 = vunpack.c.h.b16 %v5635
    %v5715 = vunpack.c.l.b16 %v5636
    %v5716 = vunpack.c.h.b16 %v5636
    %v5717 = vunpack.c.l.b16 %v5637
    %v5718 = vunpack.c.h.b16 %v5637
    %v5719 = vunpack.c.l.b16 %v5638
    %v5720 = vunpack.c.h.b16 %v5638
    %v5721 = vunpack.c.l.b16 %v5639
    %v5722 = vunpack.c.h.b16 %v5639
    %v5723 = vunpack.c.l.b16 %v5640
    %v5724 = vunpack.c.h.b16 %v5640
    %v5725 = vunpack.c.l.b16 %v5641
    %v5726 = vunpack.c.h.b16 %v5641
    %v5727 = vunpack.c.l.b16 %v5642
    %v5728 = vunpack.c.h.b16 %v5642
    %v5729 = vunpack.c.l.b16 %v5643
    %v5730 = vunpack.c.h.b16 %v5643
    %v5731 = vunpack.c.l.b16 %v5644
    %v5732 = vunpack.c.h.b16 %v5644
    %v5733 = vunpack.c.l.b16 %v5645
    %v5734 = vunpack.c.h.b16 %v5645
    %v5735 = vunpack.c.l.b16 %v5646
    %v5736 = vunpack.c.h.b16 %v5646
    %v5737 = vunpack.c.l.b16 %v5647
    %v5738 = vunpack.c.h.b16 %v5647
    %v5739 = vunpack.c.l.b16 %v5648
    %v5740 = vunpack.c.h.b16 %v5648
    %v5741 = vunpack.c.l.b16 %v5649
    %v5742 = vunpack.c.h.b16 %v5649
    %v5743 = vunpack.c.l.b16 %v5650
    %v5744 = vunpack.c.h.b16 %v5650
    %v5745 = vunpack.c.l.b16 %v5651
    %v5746 = vunpack.c.h.b16 %v5651
    %v5747 = vunpack.c.l.b16 %v5652
    %v5748 = vunpack.c.h.b16 %v5652
    %v5749 = vpack.c.b16 %v5687, %v5685
    %v5750 = vpack.c.b16 %v5688, %v5686
    %v5751 = vpack.c.b16 %v5691, %v5689
    %v5752 = vpack.c.b16 %v5692, %v5690
    %v5753 = vpack.c.b16 %v5695, %v5693
    %v5754 = vpack.c.b16 %v5696, %v5694
    %v5755 = vpack.c.b16 %v5699, %v5697
    %v5756 = vpack.c.b16 %v5700, %v5698
    %v5757 = vpack.c.b16 %v5703, %v5701
    %v5758 = vpack.c.b16 %v5704, %v5702
    %v5759 = vpack.c.b16 %v5707, %v5705
    %v5760 = vpack.c.b16 %v5708, %v5706
    %v5761 = vpack.c.b16 %v5711, %v5709
    %v5762 = vpack.c.b16 %v5712, %v5710
    %v5763 = vpack.c.b16 %v5715, %v5713
    %v5764 = vpack.c.b16 %v5716, %v5714
    %v5765 = vpack.c.b16 %v5719, %v5717
    %v5766 = vpack.c.b16 %v5720, %v5718
    %v5767 = vpack.c.b16 %v5723, %v5721
    %v5768 = vpack.c.b16 %v5724, %v5722
    %v5769 = vpack.c.b16 %v5727, %v5725
    %v5770 = vpack.c.b16 %v5728, %v5726
    %v5771 = vpack.c.b16 %v5731, %v5729
    %v5772 = vpack.c.b16 %v5732, %v5730
    %v5773 = vpack.c.b16 %v5735, %v5733
    %v5774 = vpack.c.b16 %v5736, %v5734
    %v5775 = vpack.c.b16 %v5739, %v5737
    %v5776 = vpack.c.b16 %v5740, %v5738
    %v5777 = vpack.c.b16 %v5743, %v5741
    %v5778 = vpack.c.b16 %v5744, %v5742
    %v5779 = vpack.c.b16 %v5747, %v5745
    %v5780 = vpack.c.b16 %v5748, %v5746
    %5813 = vmatprep.subr.bf16.mxu0 %v5750
    %5814 = vmatpush1.bf16.msra.mxu0 %v5749
    %5815 = vmatprep.subr.bf16.mxu0 %v5752
    %5816 = vmatpush1.bf16.msra.mxu0 %v5751
    %5817 = vmatprep.subr.bf16.mxu0 %v5754
    %5818 = vmatpush1.bf16.msra.mxu0 %v5753
    %5819 = vmatprep.subr.bf16.mxu0 %v5756
    %5820 = vmatpush1.bf16.msra.mxu0 %v5755
    %5821 = vmatprep.subr.bf16.mxu0 %v5758
    %5822 = vmatpush1.bf16.msra.mxu0 %v5757
    %5823 = vmatprep.subr.bf16.mxu0 %v5760
    %5824 = vmatpush1.bf16.msra.mxu0 %v5759
    %5825 = vmatprep.subr.bf16.mxu0 %v5762
    %5826 = vmatpush1.bf16.msra.mxu0 %v5761
    %5827 = vmatprep.subr.bf16.mxu0 %v5764
    %5828 = vmatpush1.bf16.msra.mxu0 %v5763
    %5829 = vmatprep.subr.bf16.mxu0 %v5766
    %5830 = vmatpush1.bf16.msra.mxu0 %v5765
    %5831 = vmatprep.subr.bf16.mxu0 %v5768
    %5832 = vmatpush1.bf16.msra.mxu0 %v5767
    %5833 = vmatprep.subr.bf16.mxu0 %v5770
    %5834 = vmatpush1.bf16.msra.mxu0 %v5769
    %5835 = vmatprep.subr.bf16.mxu0 %v5772
    %5836 = vmatpush1.bf16.msra.mxu0 %v5771
    %5837 = vmatprep.subr.bf16.mxu0 %v5774
    %5838 = vmatpush1.bf16.msra.mxu0 %v5773
    %5839 = vmatprep.subr.bf16.mxu0 %v5776
    %5840 = vmatpush1.bf16.msra.mxu0 %v5775
    %5841 = vmatprep.subr.bf16.mxu0 %v5778
    %5842 = vmatpush1.bf16.msra.mxu0 %v5777
    %5843 = vmatprep.subr.bf16.mxu0 %v5780
    %5844 = vmatpush1.bf16.msra.mxu0 %v5779
    %5845 = vmatprep.mubr.bf16.mxu0 %v4254
    %5846 = vmatmul.mubr.bf16.gmra.mrb[0].mxu0 %v4253
    %v5847 = vpop.f32.mrb[0].mxu0
    %v5848 = vadd.f32 0.0, %v5847
    %v5849 = vpop.f32.mrb[0].mxu0
    %v5850 = vadd.f32 0.0, %v5849
    %v5851 = vpop.f32.mrb[0].mxu0
    %v5852 = vadd.f32 0.0, %v5851
    %v5853 = vpop.f32.mrb[0].mxu0
    %v5854 = vadd.f32 0.0, %v5853
    %5855 = vmatprep.mubr.bf16.mxu0 %v4256
    %5856 = vmatmul.mubr.bf16.gmra.mrb[0].mxu0 %v4255
    %v5857 = vpop.f32.mrb[0].mxu0
    %v5858 = vadd.f32 0.0, %v5857
    %v5859 = vpop.f32.mrb[0].mxu0
    %v5860 = vadd.f32 0.0, %v5859
    %v5861 = vpop.f32.mrb[0].mxu0
    %v5862 = vadd.f32 0.0, %v5861
    %v5863 = vpop.f32.mrb[0].mxu0
    %v5864 = vadd.f32 0.0, %v5863
    %5865 = vmatprep.mubr.bf16.mxu0 %v4258
    %5866 = vmatmul.mubr.bf16.gmra.mrb[0].mxu0 %v4257
    %v5867 = vpop.f32.mrb[0].mxu0
    %v5868 = vadd.f32 0.0, %v5867
    %v5869 = vpop.f32.mrb[0].mxu0
    %v5870 = vadd.f32 0.0, %v5869
    %v5871 = vpop.f32.mrb[0].mxu0
    %v5872 = vadd.f32 0.0, %v5871
    %v5873 = vpop.f32.mrb[0].mxu0
    %v5874 = vadd.f32 0.0, %v5873
    %5875 = vmatprep.mubr.bf16.mxu0 %v4260
    %5876 = vmatmul.mubr.bf16.gmra.mrb[0].mxu0 %v4259
    %v5877 = vpop.f32.mrb[0].mxu0
    %v5878 = vadd.f32 0.0, %v5877
    %v5879 = vpop.f32.mrb[0].mxu0
    %v5880 = vadd.f32 0.0, %v5879
    %v5881 = vpop.f32.mrb[0].mxu0
    %v5882 = vadd.f32 0.0, %v5881
    %v5883 = vpop.f32.mrb[0].mxu0
    %v5884 = vadd.f32 0.0, %v5883
    %5885 = vmatprep.mubr.bf16.mxu0 %v4262
    %5886 = vmatmul.mubr.bf16.gmra.mrb[0].mxu0 %v4261
    %v5887 = vpop.f32.mrb[0].mxu0
    %v5888 = vadd.f32 0.0, %v5887
    %v5889 = vpop.f32.mrb[0].mxu0
    %v5890 = vadd.f32 0.0, %v5889
    %v5891 = vpop.f32.mrb[0].mxu0
    %v5892 = vadd.f32 0.0, %v5891
    %v5893 = vpop.f32.mrb[0].mxu0
    %v5894 = vadd.f32 0.0, %v5893
    %5895 = vmatprep.mubr.bf16.mxu0 %v4264
    %5896 = vmatmul.mubr.bf16.gmra.mrb[0].mxu0 %v4263
    %v5897 = vpop.f32.mrb[0].mxu0
    %v5898 = vadd.f32 0.0, %v5897
    %v5899 = vpop.f32.mrb[0].mxu0
    %v5900 = vadd.f32 0.0, %v5899
    %v5901 = vpop.f32.mrb[0].mxu0
    %v5902 = vadd.f32 0.0, %v5901
    %v5903 = vpop.f32.mrb[0].mxu0
    %v5904 = vadd.f32 0.0, %v5903
    %5905 = vmatprep.mubr.bf16.mxu0 %v4266
    %5906 = vmatmul.mubr.bf16.gmra.mrb[0].mxu0 %v4265
    %v5907 = vpop.f32.mrb[0].mxu0
    %v5908 = vadd.f32 0.0, %v5907
    %v5909 = vpop.f32.mrb[0].mxu0
    %v5910 = vadd.f32 0.0, %v5909
    %v5911 = vpop.f32.mrb[0].mxu0
    %v5912 = vadd.f32 0.0, %v5911
    %v5913 = vpop.f32.mrb[0].mxu0
    %v5914 = vadd.f32 0.0, %v5913
    %5915 = vmatprep.mubr.bf16.mxu0 %v4268
    %5916 = vmatmul.mubr.bf16.gmra.mrb[0].mxu0 %v4267
    %v5917 = vpop.f32.mrb[0].mxu0
    %v5918 = vadd.f32 0.0, %v5917
    %v5919 = vpop.f32.mrb[0].mxu0
    %v5920 = vadd.f32 0.0, %v5919
    %v5921 = vpop.f32.mrb[0].mxu0
    %v5922 = vadd.f32 0.0, %v5921
    %v5923 = vpop.f32.mrb[0].mxu0
    %v5924 = vadd.f32 0.0, %v5923
    %5925 = vdwg.mxu0
    %v5926 = vadd.f32 %v5588, %v5848
    %v5927 = vadd.f32 %v5589, %v5850
    %v5928 = vadd.f32 %v5590, %v5852
    %v5929 = vadd.f32 %v5591, %v5854
    %v5930 = vadd.f32 %v5592, %v5858
    %v5931 = vadd.f32 %v5593, %v5860
    %v5932 = vadd.f32 %v5594, %v5862
    %v5933 = vadd.f32 %v5595, %v5864
    %v5934 = vadd.f32 %v5596, %v5868
    %v5935 = vadd.f32 %v5597, %v5870
    %v5936 = vadd.f32 %v5598, %v5872
    %v5937 = vadd.f32 %v5599, %v5874
    %v5938 = vadd.f32 %v5600, %v5878
    %v5939 = vadd.f32 %v5601, %v5880
    %v5940 = vadd.f32 %v5602, %v5882
    %v5941 = vadd.f32 %v5603, %v5884
    %v5942 = vadd.f32 %v5604, %v5888
    %v5943 = vadd.f32 %v5605, %v5890
    %v5944 = vadd.f32 %v5606, %v5892
    %v5945 = vadd.f32 %v5607, %v5894
    %v5946 = vadd.f32 %v5608, %v5898
    %v5947 = vadd.f32 %v5609, %v5900
    %v5948 = vadd.f32 %v5610, %v5902
    %v5949 = vadd.f32 %v5611, %v5904
    %v5950 = vadd.f32 %v5612, %v5908
    %v5951 = vadd.f32 %v5613, %v5910
    %v5952 = vadd.f32 %v5614, %v5912
    %v5953 = vadd.f32 %v5615, %v5914
    %v5954 = vadd.f32 %v5616, %v5918
    %v5955 = vadd.f32 %v5617, %v5920
    %v5956 = vadd.f32 %v5618, %v5922
    %v5957 = vadd.f32 %v5619, %v5924
    %s5958 = scalar_lea.vmem [#allocation3], 1280
    %v5959 = vld [vmem:[%s5958] sm:$0xff]
    %v5960 = vld [vmem:[%s5958 + $0x8] sm:$0xff]
    %v5961 = vld [vmem:[%s5958 + $0x10] sm:$0xff]
    %v5962 = vld [vmem:[%s5958 + $0x18] sm:$0xff]
    %v5963 = vld [vmem:[%s5958 + $0x20] sm:$0xff]
    %v5964 = vld [vmem:[%s5958 + $0x28] sm:$0xff]
    %v5965 = vld [vmem:[%s5958 + $0x30] sm:$0xff]
    %v5966 = vld [vmem:[%s5958 + $0x38] sm:$0xff]
    %v5967 = vld [vmem:[%s5958 + $0x40] sm:$0xff]
    %v5968 = vld [vmem:[%s5958 + $0x48] sm:$0xff]
    %v5969 = vld [vmem:[%s5958 + $0x50] sm:$0xff]
    %v5970 = vld [vmem:[%s5958 + $0x58] sm:$0xff]
    %v5971 = vld [vmem:[%s5958 + $0x60] sm:$0xff]
    %v5972 = vld [vmem:[%s5958 + $0x68] sm:$0xff]
    %v5973 = vld [vmem:[%s5958 + $0x70] sm:$0xff]
    %v5974 = vld [vmem:[%s5958 + $0x78] sm:$0xff]
    %v5975 = vld [vmem:[%s5958 + $0x80] sm:$0xff]
    %v5976 = vld [vmem:[%s5958 + $0x88] sm:$0xff]
    %v5977 = vld [vmem:[%s5958 + $0x90] sm:$0xff]
    %v5978 = vld [vmem:[%s5958 + $0x98] sm:$0xff]
    %v5979 = vld [vmem:[%s5958 + $0xa0] sm:$0xff]
    %v5980 = vld [vmem:[%s5958 + $0xa8] sm:$0xff]
    %v5981 = vld [vmem:[%s5958 + $0xb0] sm:$0xff]
    %v5982 = vld [vmem:[%s5958 + $0xb8] sm:$0xff]
    %v5983 = vld [vmem:[%s5958 + $0xc0] sm:$0xff]
    %v5984 = vld [vmem:[%s5958 + $0xc8] sm:$0xff]
    %v5985 = vld [vmem:[%s5958 + $0xd0] sm:$0xff]
    %v5986 = vld [vmem:[%s5958 + $0xd8] sm:$0xff]
    %v5987 = vld [vmem:[%s5958 + $0xe0] sm:$0xff]
    %v5988 = vld [vmem:[%s5958 + $0xe8] sm:$0xff]
    %v5989 = vld [vmem:[%s5958 + $0xf0] sm:$0xff]
    %v5990 = vld [vmem:[%s5958 + $0xf8] sm:$0xff]
    %v6023 = vunpack.c.l.b16 %v5959
    %v6024 = vunpack.c.h.b16 %v5959
    %v6025 = vunpack.c.l.b16 %v5960
    %v6026 = vunpack.c.h.b16 %v5960
    %v6027 = vunpack.c.l.b16 %v5961
    %v6028 = vunpack.c.h.b16 %v5961
    %v6029 = vunpack.c.l.b16 %v5962
    %v6030 = vunpack.c.h.b16 %v5962
    %v6031 = vunpack.c.l.b16 %v5963
    %v6032 = vunpack.c.h.b16 %v5963
    %v6033 = vunpack.c.l.b16 %v5964
    %v6034 = vunpack.c.h.b16 %v5964
    %v6035 = vunpack.c.l.b16 %v5965
    %v6036 = vunpack.c.h.b16 %v5965
    %v6037 = vunpack.c.l.b16 %v5966
    %v6038 = vunpack.c.h.b16 %v5966
    %v6039 = vunpack.c.l.b16 %v5967
    %v6040 = vunpack.c.h.b16 %v5967
    %v6041 = vunpack.c.l.b16 %v5968
    %v6042 = vunpack.c.h.b16 %v5968
    %v6043 = vunpack.c.l.b16 %v5969
    %v6044 = vunpack.c.h.b16 %v5969
    %v6045 = vunpack.c.l.b16 %v5970
    %v6046 = vunpack.c.h.b16 %v5970
    %v6047 = vunpack.c.l.b16 %v5971
    %v6048 = vunpack.c.h.b16 %v5971
    %v6049 = vunpack.c.l.b16 %v5972
    %v6050 = vunpack.c.h.b16 %v5972
    %v6051 = vunpack.c.l.b16 %v5973
    %v6052 = vunpack.c.h.b16 %v5973
    %v6053 = vunpack.c.l.b16 %v5974
    %v6054 = vunpack.c.h.b16 %v5974
    %v6055 = vunpack.c.l.b16 %v5975
    %v6056 = vunpack.c.h.b16 %v5975
    %v6057 = vunpack.c.l.b16 %v5976
    %v6058 = vunpack.c.h.b16 %v5976
    %v6059 = vunpack.c.l.b16 %v5977
    %v6060 = vunpack.c.h.b16 %v5977
    %v6061 = vunpack.c.l.b16 %v5978
    %v6062 = vunpack.c.h.b16 %v5978
    %v6063 = vunpack.c.l.b16 %v5979
    %v6064 = vunpack.c.h.b16 %v5979
    %v6065 = vunpack.c.l.b16 %v5980
    %v6066 = vunpack.c.h.b16 %v5980
    %v6067 = vunpack.c.l.b16 %v5981
    %v6068 = vunpack.c.h.b16 %v5981
    %v6069 = vunpack.c.l.b16 %v5982
    %v6070 = vunpack.c.h.b16 %v5982
    %v6071 = vunpack.c.l.b16 %v5983
    %v6072 = vunpack.c.h.b16 %v5983
    %v6073 = vunpack.c.l.b16 %v5984
    %v6074 = vunpack.c.h.b16 %v5984
    %v6075 = vunpack.c.l.b16 %v5985
    %v6076 = vunpack.c.h.b16 %v5985
    %v6077 = vunpack.c.l.b16 %v5986
    %v6078 = vunpack.c.h.b16 %v5986
    %v6079 = vunpack.c.l.b16 %v5987
    %v6080 = vunpack.c.h.b16 %v5987
    %v6081 = vunpack.c.l.b16 %v5988
    %v6082 = vunpack.c.h.b16 %v5988
    %v6083 = vunpack.c.l.b16 %v5989
    %v6084 = vunpack.c.h.b16 %v5989
    %v6085 = vunpack.c.l.b16 %v5990
    %v6086 = vunpack.c.h.b16 %v5990
    %v6087 = vpack.c.b16 %v6025, %v6023
    %v6088 = vpack.c.b16 %v6026, %v6024
    %v6089 = vpack.c.b16 %v6029, %v6027
    %v6090 = vpack.c.b16 %v6030, %v6028
    %v6091 = vpack.c.b16 %v6033, %v6031
    %v6092 = vpack.c.b16 %v6034, %v6032
    %v6093 = vpack.c.b16 %v6037, %v6035
    %v6094 = vpack.c.b16 %v6038, %v6036
    %v6095 = vpack.c.b16 %v6041, %v6039
    %v6096 = vpack.c.b16 %v6042, %v6040
    %v6097 = vpack.c.b16 %v6045, %v6043
    %v6098 = vpack.c.b16 %v6046, %v6044
    %v6099 = vpack.c.b16 %v6049, %v6047
    %v6100 = vpack.c.b16 %v6050, %v6048
    %v6101 = vpack.c.b16 %v6053, %v6051
    %v6102 = vpack.c.b16 %v6054, %v6052
    %v6103 = vpack.c.b16 %v6057, %v6055
    %v6104 = vpack.c.b16 %v6058, %v6056
    %v6105 = vpack.c.b16 %v6061, %v6059
    %v6106 = vpack.c.b16 %v6062, %v6060
    %v6107 = vpack.c.b16 %v6065, %v6063
    %v6108 = vpack.c.b16 %v6066, %v6064
    %v6109 = vpack.c.b16 %v6069, %v6067
    %v6110 = vpack.c.b16 %v6070, %v6068
    %v6111 = vpack.c.b16 %v6073, %v6071
    %v6112 = vpack.c.b16 %v6074, %v6072
    %v6113 = vpack.c.b16 %v6077, %v6075
    %v6114 = vpack.c.b16 %v6078, %v6076
    %v6115 = vpack.c.b16 %v6081, %v6079
    %v6116 = vpack.c.b16 %v6082, %v6080
    %v6117 = vpack.c.b16 %v6085, %v6083
    %v6118 = vpack.c.b16 %v6086, %v6084
    %6151 = vmatprep.subr.bf16.mxu0 %v6088
    %6152 = vmatpush1.bf16.msra.mxu0 %v6087
    %6153 = vmatprep.subr.bf16.mxu0 %v6090
    %6154 = vmatpush1.bf16.msra.mxu0 %v6089
    %6155 = vmatprep.subr.bf16.mxu0 %v6092
    %6156 = vmatpush1.bf16.msra.mxu0 %v6091
    %6157 = vmatprep.subr.bf16.mxu0 %v6094
    %6158 = vmatpush1.bf16.msra.mxu0 %v6093
    %6159 = vmatprep.subr.bf16.mxu0 %v6096
    %6160 = vmatpush1.bf16.msra.mxu0 %v6095
    %6161 = vmatprep.subr.bf16.mxu0 %v6098
    %6162 = vmatpush1.bf16.msra.mxu0 %v6097
    %6163 = vmatprep.subr.bf16.mxu0 %v6100
    %6164 = vmatpush1.bf16.msra.mxu0 %v6099
    %6165 = vmatprep.subr.bf16.mxu0 %v6102
    %6166 = vmatpush1.bf16.msra.mxu0 %v6101
    %6167 = vmatprep.subr.bf16.mxu0 %v6104
    %6168 = vmatpush1.bf16.msra.mxu0 %v6103
    %6169 = vmatprep.subr.bf16.mxu0 %v6106
    %6170 = vmatpush1.bf16.msra.mxu0 %v6105
    %6171 = vmatprep.subr.bf16.mxu0 %v6108
    %6172 = vmatpush1.bf16.msra.mxu0 %v6107
    %6173 = vmatprep.subr.bf16.mxu0 %v6110
    %6174 = vmatpush1.bf16.msra.mxu0 %v6109
    %6175 = vmatprep.subr.bf16.mxu0 %v6112
    %6176 = vmatpush1.bf16.msra.mxu0 %v6111
    %6177 = vmatprep.subr.bf16.mxu0 %v6114
    %6178 = vmatpush1.bf16.msra.mxu0 %v6113
    %6179 = vmatprep.subr.bf16.mxu0 %v6116
    %6180 = vmatpush1.bf16.msra.mxu0 %v6115
    %6181 = vmatprep.subr.bf16.mxu0 %v6118
    %6182 = vmatpush1.bf16.msra.mxu0 %v6117
    %6183 = vmatprep.mubr.bf16.mxu0 %v4270
    %6184 = vmatmul.mubr.bf16.gmra.mrb[0].mxu0 %v4269
    %v6185 = vpop.f32.mrb[0].mxu0
    %v6186 = vadd.f32 0.0, %v6185
    %v6187 = vpop.f32.mrb[0].mxu0
    %v6188 = vadd.f32 0.0, %v6187
    %v6189 = vpop.f32.mrb[0].mxu0
    %v6190 = vadd.f32 0.0, %v6189
    %v6191 = vpop.f32.mrb[0].mxu0
    %v6192 = vadd.f32 0.0, %v6191
    %6193 = vmatprep.mubr.bf16.mxu0 %v4272
    %6194 = vmatmul.mubr.bf16.gmra.mrb[0].mxu0 %v4271
    %v6195 = vpop.f32.mrb[0].mxu0
    %v6196 = vadd.f32 0.0, %v6195
    %v6197 = vpop.f32.mrb[0].mxu0
    %v6198 = vadd.f32 0.0, %v6197
    %v6199 = vpop.f32.mrb[0].mxu0
    %v6200 = vadd.f32 0.0, %v6199
    %v6201 = vpop.f32.mrb[0].mxu0
    %v6202 = vadd.f32 0.0, %v6201
    %6203 = vmatprep.mubr.bf16.mxu0 %v4274
    %6204 = vmatmul.mubr.bf16.gmra.mrb[0].mxu0 %v4273
    %v6205 = vpop.f32.mrb[0].mxu0
    %v6206 = vadd.f32 0.0, %v6205
    %v6207 = vpop.f32.mrb[0].mxu0
    %v6208 = vadd.f32 0.0, %v6207
    %v6209 = vpop.f32.mrb[0].mxu0
    %v6210 = vadd.f32 0.0, %v6209
    %v6211 = vpop.f32.mrb[0].mxu0
    %v6212 = vadd.f32 0.0, %v6211
    %6213 = vmatprep.mubr.bf16.mxu0 %v4276
    %6214 = vmatmul.mubr.bf16.gmra.mrb[0].mxu0 %v4275
    %v6215 = vpop.f32.mrb[0].mxu0
    %v6216 = vadd.f32 0.0, %v6215
    %v6217 = vpop.f32.mrb[0].mxu0
    %v6218 = vadd.f32 0.0, %v6217
    %v6219 = vpop.f32.mrb[0].mxu0
    %v6220 = vadd.f32 0.0, %v6219
    %v6221 = vpop.f32.mrb[0].mxu0
    %v6222 = vadd.f32 0.0, %v6221
    %6223 = vmatprep.mubr.bf16.mxu0 %v4278
    %6224 = vmatmul.mubr.bf16.gmra.mrb[0].mxu0 %v4277
    %v6225 = vpop.f32.mrb[0].mxu0
    %v6226 = vadd.f32 0.0, %v6225
    %v6227 = vpop.f32.mrb[0].mxu0
    %v6228 = vadd.f32 0.0, %v6227
    %v6229 = vpop.f32.mrb[0].mxu0
    %v6230 = vadd.f32 0.0, %v6229
    %v6231 = vpop.f32.mrb[0].mxu0
    %v6232 = vadd.f32 0.0, %v6231
    %6233 = vmatprep.mubr.bf16.mxu0 %v4280
    %6234 = vmatmul.mubr.bf16.gmra.mrb[0].mxu0 %v4279
    %v6235 = vpop.f32.mrb[0].mxu0
    %v6236 = vadd.f32 0.0, %v6235
    %v6237 = vpop.f32.mrb[0].mxu0
    %v6238 = vadd.f32 0.0, %v6237
    %v6239 = vpop.f32.mrb[0].mxu0
    %v6240 = vadd.f32 0.0, %v6239
    %v6241 = vpop.f32.mrb[0].mxu0
    %v6242 = vadd.f32 0.0, %v6241
    %6243 = vmatprep.mubr.bf16.mxu0 %v4282
    %6244 = vmatmul.mubr.bf16.gmra.mrb[0].mxu0 %v4281
    %v6245 = vpop.f32.mrb[0].mxu0
    %v6246 = vadd.f32 0.0, %v6245
    %v6247 = vpop.f32.mrb[0].mxu0
    %v6248 = vadd.f32 0.0, %v6247
    %v6249 = vpop.f32.mrb[0].mxu0
    %v6250 = vadd.f32 0.0, %v6249
    %v6251 = vpop.f32.mrb[0].mxu0
    %v6252 = vadd.f32 0.0, %v6251
    %6253 = vmatprep.mubr.bf16.mxu0 %v4284
    %6254 = vmatmul.mubr.bf16.gmra.mrb[0].mxu0 %v4283
    %v6255 = vpop.f32.mrb[0].mxu0
    %v6256 = vadd.f32 0.0, %v6255
    %v6257 = vpop.f32.mrb[0].mxu0
    %v6258 = vadd.f32 0.0, %v6257
    %v6259 = vpop.f32.mrb[0].mxu0
    %v6260 = vadd.f32 0.0, %v6259
    %v6261 = vpop.f32.mrb[0].mxu0
    %v6262 = vadd.f32 0.0, %v6261
    %6263 = vdwg.mxu0
    %v6264 = vadd.f32 %v5926, %v6186
    %v6265 = vadd.f32 %v5927, %v6188
    %v6266 = vadd.f32 %v5928, %v6190
    %v6267 = vadd.f32 %v5929, %v6192
    %v6268 = vadd.f32 %v5930, %v6196
    %v6269 = vadd.f32 %v5931, %v6198
    %v6270 = vadd.f32 %v5932, %v6200
    %v6271 = vadd.f32 %v5933, %v6202
    %v6272 = vadd.f32 %v5934, %v6206
    %v6273 = vadd.f32 %v5935, %v6208
    %v6274 = vadd.f32 %v5936, %v6210
    %v6275 = vadd.f32 %v5937, %v6212
    %v6276 = vadd.f32 %v5938, %v6216
    %v6277 = vadd.f32 %v5939, %v6218
    %v6278 = vadd.f32 %v5940, %v6220
    %v6279 = vadd.f32 %v5941, %v6222
    %v6280 = vadd.f32 %v5942, %v6226
    %v6281 = vadd.f32 %v5943, %v6228
    %v6282 = vadd.f32 %v5944, %v6230
    %v6283 = vadd.f32 %v5945, %v6232
    %v6284 = vadd.f32 %v5946, %v6236
    %v6285 = vadd.f32 %v5947, %v6238
    %v6286 = vadd.f32 %v5948, %v6240
    %v6287 = vadd.f32 %v5949, %v6242
    %v6288 = vadd.f32 %v5950, %v6246
    %v6289 = vadd.f32 %v5951, %v6248
    %v6290 = vadd.f32 %v5952, %v6250
    %v6291 = vadd.f32 %v5953, %v6252
    %v6292 = vadd.f32 %v5954, %v6256
    %v6293 = vadd.f32 %v5955, %v6258
    %v6294 = vadd.f32 %v5956, %v6260
    %v6295 = vadd.f32 %v5957, %v6262
    %s6296 = scalar_lea.vmem [#allocation3], 1536
    %v6297 = vld [vmem:[%s6296] sm:$0xff]
    %v6298 = vld [vmem:[%s6296 + $0x8] sm:$0xff]
    %v6299 = vld [vmem:[%s6296 + $0x10] sm:$0xff]
    %v6300 = vld [vmem:[%s6296 + $0x18] sm:$0xff]
    %v6301 = vld [vmem:[%s6296 + $0x20] sm:$0xff]
    %v6302 = vld [vmem:[%s6296 + $0x28] sm:$0xff]
    %v6303 = vld [vmem:[%s6296 + $0x30] sm:$0xff]
    %v6304 = vld [vmem:[%s6296 + $0x38] sm:$0xff]
    %v6305 = vld [vmem:[%s6296 + $0x40] sm:$0xff]
    %v6306 = vld [vmem:[%s6296 + $0x48] sm:$0xff]
    %v6307 = vld [vmem:[%s6296 + $0x50] sm:$0xff]
    %v6308 = vld [vmem:[%s6296 + $0x58] sm:$0xff]
    %v6309 = vld [vmem:[%s6296 + $0x60] sm:$0xff]
    %v6310 = vld [vmem:[%s6296 + $0x68] sm:$0xff]
    %v6311 = vld [vmem:[%s6296 + $0x70] sm:$0xff]
    %v6312 = vld [vmem:[%s6296 + $0x78] sm:$0xff]
    %v6313 = vld [vmem:[%s6296 + $0x80] sm:$0xff]
    %v6314 = vld [vmem:[%s6296 + $0x88] sm:$0xff]
    %v6315 = vld [vmem:[%s6296 + $0x90] sm:$0xff]
    %v6316 = vld [vmem:[%s6296 + $0x98] sm:$0xff]
    %v6317 = vld [vmem:[%s6296 + $0xa0] sm:$0xff]
    %v6318 = vld [vmem:[%s6296 + $0xa8] sm:$0xff]
    %v6319 = vld [vmem:[%s6296 + $0xb0] sm:$0xff]
    %v6320 = vld [vmem:[%s6296 + $0xb8] sm:$0xff]
    %v6321 = vld [vmem:[%s6296 + $0xc0] sm:$0xff]
    %v6322 = vld [vmem:[%s6296 + $0xc8] sm:$0xff]
    %v6323 = vld [vmem:[%s6296 + $0xd0] sm:$0xff]
    %v6324 = vld [vmem:[%s6296 + $0xd8] sm:$0xff]
    %v6325 = vld [vmem:[%s6296 + $0xe0] sm:$0xff]
    %v6326 = vld [vmem:[%s6296 + $0xe8] sm:$0xff]
    %v6327 = vld [vmem:[%s6296 + $0xf0] sm:$0xff]
    %v6328 = vld [vmem:[%s6296 + $0xf8] sm:$0xff]
    %v6361 = vunpack.c.l.b16 %v6297
    %v6362 = vunpack.c.h.b16 %v6297
    %v6363 = vunpack.c.l.b16 %v6298
    %v6364 = vunpack.c.h.b16 %v6298
    %v6365 = vunpack.c.l.b16 %v6299
    %v6366 = vunpack.c.h.b16 %v6299
    %v6367 = vunpack.c.l.b16 %v6300
    %v6368 = vunpack.c.h.b16 %v6300
    %v6369 = vunpack.c.l.b16 %v6301
    %v6370 = vunpack.c.h.b16 %v6301
    %v6371 = vunpack.c.l.b16 %v6302
    %v6372 = vunpack.c.h.b16 %v6302
    %v6373 = vunpack.c.l.b16 %v6303
    %v6374 = vunpack.c.h.b16 %v6303
    %v6375 = vunpack.c.l.b16 %v6304
    %v6376 = vunpack.c.h.b16 %v6304
    %v6377 = vunpack.c.l.b16 %v6305
    %v6378 = vunpack.c.h.b16 %v6305
    %v6379 = vunpack.c.l.b16 %v6306
    %v6380 = vunpack.c.h.b16 %v6306
    %v6381 = vunpack.c.l.b16 %v6307
    %v6382 = vunpack.c.h.b16 %v6307
    %v6383 = vunpack.c.l.b16 %v6308
    %v6384 = vunpack.c.h.b16 %v6308
    %v6385 = vunpack.c.l.b16 %v6309
    %v6386 = vunpack.c.h.b16 %v6309
    %v6387 = vunpack.c.l.b16 %v6310
    %v6388 = vunpack.c.h.b16 %v6310
    %v6389 = vunpack.c.l.b16 %v6311
    %v6390 = vunpack.c.h.b16 %v6311
    %v6391 = vunpack.c.l.b16 %v6312
    %v6392 = vunpack.c.h.b16 %v6312
    %v6393 = vunpack.c.l.b16 %v6313
    %v6394 = vunpack.c.h.b16 %v6313
    %v6395 = vunpack.c.l.b16 %v6314
    %v6396 = vunpack.c.h.b16 %v6314
    %v6397 = vunpack.c.l.b16 %v6315
    %v6398 = vunpack.c.h.b16 %v6315
    %v6399 = vunpack.c.l.b16 %v6316
    %v6400 = vunpack.c.h.b16 %v6316
    %v6401 = vunpack.c.l.b16 %v6317
    %v6402 = vunpack.c.h.b16 %v6317
    %v6403 = vunpack.c.l.b16 %v6318
    %v6404 = vunpack.c.h.b16 %v6318
    %v6405 = vunpack.c.l.b16 %v6319
    %v6406 = vunpack.c.h.b16 %v6319
    %v6407 = vunpack.c.l.b16 %v6320
    %v6408 = vunpack.c.h.b16 %v6320
    %v6409 = vunpack.c.l.b16 %v6321
    %v6410 = vunpack.c.h.b16 %v6321
    %v6411 = vunpack.c.l.b16 %v6322
    %v6412 = vunpack.c.h.b16 %v6322
    %v6413 = vunpack.c.l.b16 %v6323
    %v6414 = vunpack.c.h.b16 %v6323
    %v6415 = vunpack.c.l.b16 %v6324
    %v6416 = vunpack.c.h.b16 %v6324
    %v6417 = vunpack.c.l.b16 %v6325
    %v6418 = vunpack.c.h.b16 %v6325
    %v6419 = vunpack.c.l.b16 %v6326
    %v6420 = vunpack.c.h.b16 %v6326
    %v6421 = vunpack.c.l.b16 %v6327
    %v6422 = vunpack.c.h.b16 %v6327
    %v6423 = vunpack.c.l.b16 %v6328
    %v6424 = vunpack.c.h.b16 %v6328
    %v6425 = vpack.c.b16 %v6363, %v6361
    %v6426 = vpack.c.b16 %v6364, %v6362
    %v6427 = vpack.c.b16 %v6367, %v6365
    %v6428 = vpack.c.b16 %v6368, %v6366
    %v6429 = vpack.c.b16 %v6371, %v6369
    %v6430 = vpack.c.b16 %v6372, %v6370
    %v6431 = vpack.c.b16 %v6375, %v6373
    %v6432 = vpack.c.b16 %v6376, %v6374
    %v6433 = vpack.c.b16 %v6379, %v6377
    %v6434 = vpack.c.b16 %v6380, %v6378
    %v6435 = vpack.c.b16 %v6383, %v6381
    %v6436 = vpack.c.b16 %v6384, %v6382
    %v6437 = vpack.c.b16 %v6387, %v6385
    %v6438 = vpack.c.b16 %v6388, %v6386
    %v6439 = vpack.c.b16 %v6391, %v6389
    %v6440 = vpack.c.b16 %v6392, %v6390
    %v6441 = vpack.c.b16 %v6395, %v6393
    %v6442 = vpack.c.b16 %v6396, %v6394
    %v6443 = vpack.c.b16 %v6399, %v6397
    %v6444 = vpack.c.b16 %v6400, %v6398
    %v6445 = vpack.c.b16 %v6403, %v6401
    %v6446 = vpack.c.b16 %v6404, %v6402
    %v6447 = vpack.c.b16 %v6407, %v6405
    %v6448 = vpack.c.b16 %v6408, %v6406
    %v6449 = vpack.c.b16 %v6411, %v6409
    %v6450 = vpack.c.b16 %v6412, %v6410
    %v6451 = vpack.c.b16 %v6415, %v6413
    %v6452 = vpack.c.b16 %v6416, %v6414
    %v6453 = vpack.c.b16 %v6419, %v6417
    %v6454 = vpack.c.b16 %v6420, %v6418
    %v6455 = vpack.c.b16 %v6423, %v6421
    %v6456 = vpack.c.b16 %v6424, %v6422
    %6489 = vmatprep.subr.bf16.mxu0 %v6426
    %6490 = vmatpush1.bf16.msra.mxu0 %v6425
    %6491 = vmatprep.subr.bf16.mxu0 %v6428
    %6492 = vmatpush1.bf16.msra.mxu0 %v6427
    %6493 = vmatprep.subr.bf16.mxu0 %v6430
    %6494 = vmatpush1.bf16.msra.mxu0 %v6429
    %6495 = vmatprep.subr.bf16.mxu0 %v6432
    %6496 = vmatpush1.bf16.msra.mxu0 %v6431
    %6497 = vmatprep.subr.bf16.mxu0 %v6434
    %6498 = vmatpush1.bf16.msra.mxu0 %v6433
    %6499 = vmatprep.subr.bf16.mxu0 %v6436
    %6500 = vmatpush1.bf16.msra.mxu0 %v6435
    %6501 = vmatprep.subr.bf16.mxu0 %v6438
    %6502 = vmatpush1.bf16.msra.mxu0 %v6437
    %6503 = vmatprep.subr.bf16.mxu0 %v6440
    %6504 = vmatpush1.bf16.msra.mxu0 %v6439
    %6505 = vmatprep.subr.bf16.mxu0 %v6442
    %6506 = vmatpush1.bf16.msra.mxu0 %v6441
    %6507 = vmatprep.subr.bf16.mxu0 %v6444
    %6508 = vmatpush1.bf16.msra.mxu0 %v6443
    %6509 = vmatprep.subr.bf16.mxu0 %v6446
    %6510 = vmatpush1.bf16.msra.mxu0 %v6445
    %6511 = vmatprep.subr.bf16.mxu0 %v6448
    %6512 = vmatpush1.bf16.msra.mxu0 %v6447
    %6513 = vmatprep.subr.bf16.mxu0 %v6450
    %6514 = vmatpush1.bf16.msra.mxu0 %v6449
    %6515 = vmatprep.subr.bf16.mxu0 %v6452
    %6516 = vmatpush1.bf16.msra.mxu0 %v6451
    %6517 = vmatprep.subr.bf16.mxu0 %v6454
    %6518 = vmatpush1.bf16.msra.mxu0 %v6453
    %6519 = vmatprep.subr.bf16.mxu0 %v6456
    %6520 = vmatpush1.bf16.msra.mxu0 %v6455
    %6521 = vmatprep.mubr.bf16.mxu0 %v4286
    %6522 = vmatmul.mubr.bf16.gmra.mrb[0].mxu0 %v4285
    %v6523 = vpop.f32.mrb[0].mxu0
    %v6524 = vadd.f32 0.0, %v6523
    %v6525 = vpop.f32.mrb[0].mxu0
    %v6526 = vadd.f32 0.0, %v6525
    %v6527 = vpop.f32.mrb[0].mxu0
    %v6528 = vadd.f32 0.0, %v6527
    %v6529 = vpop.f32.mrb[0].mxu0
    %v6530 = vadd.f32 0.0, %v6529
    %6531 = vmatprep.mubr.bf16.mxu0 %v4288
    %6532 = vmatmul.mubr.bf16.gmra.mrb[0].mxu0 %v4287
    %v6533 = vpop.f32.mrb[0].mxu0
    %v6534 = vadd.f32 0.0, %v6533
    %v6535 = vpop.f32.mrb[0].mxu0
    %v6536 = vadd.f32 0.0, %v6535
    %v6537 = vpop.f32.mrb[0].mxu0
    %v6538 = vadd.f32 0.0, %v6537
    %v6539 = vpop.f32.mrb[0].mxu0
    %v6540 = vadd.f32 0.0, %v6539
    %6541 = vmatprep.mubr.bf16.mxu0 %v4290
    %6542 = vmatmul.mubr.bf16.gmra.mrb[0].mxu0 %v4289
    %v6543 = vpop.f32.mrb[0].mxu0
    %v6544 = vadd.f32 0.0, %v6543
    %v6545 = vpop.f32.mrb[0].mxu0
    %v6546 = vadd.f32 0.0, %v6545
    %v6547 = vpop.f32.mrb[0].mxu0
    %v6548 = vadd.f32 0.0, %v6547
    %v6549 = vpop.f32.mrb[0].mxu0
    %v6550 = vadd.f32 0.0, %v6549
    %6551 = vmatprep.mubr.bf16.mxu0 %v4292
    %6552 = vmatmul.mubr.bf16.gmra.mrb[0].mxu0 %v4291
    %v6553 = vpop.f32.mrb[0].mxu0
    %v6554 = vadd.f32 0.0, %v6553
    %v6555 = vpop.f32.mrb[0].mxu0
    %v6556 = vadd.f32 0.0, %v6555
    %v6557 = vpop.f32.mrb[0].mxu0
    %v6558 = vadd.f32 0.0, %v6557
    %v6559 = vpop.f32.mrb[0].mxu0
    %v6560 = vadd.f32 0.0, %v6559
    %6561 = vmatprep.mubr.bf16.mxu0 %v4294
    %6562 = vmatmul.mubr.bf16.gmra.mrb[0].mxu0 %v4293
    %v6563 = vpop.f32.mrb[0].mxu0
    %v6564 = vadd.f32 0.0, %v6563
    %v6565 = vpop.f32.mrb[0].mxu0
    %v6566 = vadd.f32 0.0, %v6565
    %v6567 = vpop.f32.mrb[0].mxu0
    %v6568 = vadd.f32 0.0, %v6567
    %v6569 = vpop.f32.mrb[0].mxu0
    %v6570 = vadd.f32 0.0, %v6569
    %6571 = vmatprep.mubr.bf16.mxu0 %v4296
    %6572 = vmatmul.mubr.bf16.gmra.mrb[0].mxu0 %v4295
    %v6573 = vpop.f32.mrb[0].mxu0
    %v6574 = vadd.f32 0.0, %v6573
    %v6575 = vpop.f32.mrb[0].mxu0
    %v6576 = vadd.f32 0.0, %v6575
    %v6577 = vpop.f32.mrb[0].mxu0
    %v6578 = vadd.f32 0.0, %v6577
    %v6579 = vpop.f32.mrb[0].mxu0
    %v6580 = vadd.f32 0.0, %v6579
    %6581 = vmatprep.mubr.bf16.mxu0 %v4298
    %6582 = vmatmul.mubr.bf16.gmra.mrb[0].mxu0 %v4297
    %v6583 = vpop.f32.mrb[0].mxu0
    %v6584 = vadd.f32 0.0, %v6583
    %v6585 = vpop.f32.mrb[0].mxu0
    %v6586 = vadd.f32 0.0, %v6585
    %v6587 = vpop.f32.mrb[0].mxu0
    %v6588 = vadd.f32 0.0, %v6587
    %v6589 = vpop.f32.mrb[0].mxu0
    %v6590 = vadd.f32 0.0, %v6589
    %6591 = vmatprep.mubr.bf16.mxu0 %v4300
    %6592 = vmatmul.mubr.bf16.gmra.mrb[0].mxu0 %v4299
    %v6593 = vpop.f32.mrb[0].mxu0
    %v6594 = vadd.f32 0.0, %v6593
    %v6595 = vpop.f32.mrb[0].mxu0
    %v6596 = vadd.f32 0.0, %v6595
    %v6597 = vpop.f32.mrb[0].mxu0
    %v6598 = vadd.f32 0.0, %v6597
    %v6599 = vpop.f32.mrb[0].mxu0
    %v6600 = vadd.f32 0.0, %v6599
    %6601 = vdwg.mxu0
    %v6602 = vadd.f32 %v6264, %v6524
    %v6603 = vadd.f32 %v6265, %v6526
    %v6604 = vadd.f32 %v6266, %v6528
    %v6605 = vadd.f32 %v6267, %v6530
    %v6606 = vadd.f32 %v6268, %v6534
    %v6607 = vadd.f32 %v6269, %v6536
    %v6608 = vadd.f32 %v6270, %v6538
    %v6609 = vadd.f32 %v6271, %v6540
    %v6610 = vadd.f32 %v6272, %v6544
    %v6611 = vadd.f32 %v6273, %v6546
    %v6612 = vadd.f32 %v6274, %v6548
    %v6613 = vadd.f32 %v6275, %v6550
    %v6614 = vadd.f32 %v6276, %v6554
    %v6615 = vadd.f32 %v6277, %v6556
    %v6616 = vadd.f32 %v6278, %v6558
    %v6617 = vadd.f32 %v6279, %v6560
    %v6618 = vadd.f32 %v6280, %v6564
    %v6619 = vadd.f32 %v6281, %v6566
    %v6620 = vadd.f32 %v6282, %v6568
    %v6621 = vadd.f32 %v6283, %v6570
    %v6622 = vadd.f32 %v6284, %v6574
    %v6623 = vadd.f32 %v6285, %v6576
    %v6624 = vadd.f32 %v6286, %v6578
    %v6625 = vadd.f32 %v6287, %v6580
    %v6626 = vadd.f32 %v6288, %v6584
    %v6627 = vadd.f32 %v6289, %v6586
    %v6628 = vadd.f32 %v6290, %v6588
    %v6629 = vadd.f32 %v6291, %v6590
    %v6630 = vadd.f32 %v6292, %v6594
    %v6631 = vadd.f32 %v6293, %v6596
    %v6632 = vadd.f32 %v6294, %v6598
    %v6633 = vadd.f32 %v6295, %v6600
    %s6634 = scalar_lea.vmem [#allocation3], 1792
    %v6635 = vld [vmem:[%s6634] sm:$0xff]
    %v6636 = vld [vmem:[%s6634 + $0x8] sm:$0xff]
    %v6637 = vld [vmem:[%s6634 + $0x10] sm:$0xff]
    %v6638 = vld [vmem:[%s6634 + $0x18] sm:$0xff]
    %v6639 = vld [vmem:[%s6634 + $0x20] sm:$0xff]
    %v6640 = vld [vmem:[%s6634 + $0x28] sm:$0xff]
    %v6641 = vld [vmem:[%s6634 + $0x30] sm:$0xff]
    %v6642 = vld [vmem:[%s6634 + $0x38] sm:$0xff]
    %v6643 = vld [vmem:[%s6634 + $0x40] sm:$0xff]
    %v6644 = vld [vmem:[%s6634 + $0x48] sm:$0xff]
    %v6645 = vld [vmem:[%s6634 + $0x50] sm:$0xff]
    %v6646 = vld [vmem:[%s6634 + $0x58] sm:$0xff]
    %v6647 = vld [vmem:[%s6634 + $0x60] sm:$0xff]
    %v6648 = vld [vmem:[%s6634 + $0x68] sm:$0xff]
    %v6649 = vld [vmem:[%s6634 + $0x70] sm:$0xff]
    %v6650 = vld [vmem:[%s6634 + $0x78] sm:$0xff]
    %v6651 = vld [vmem:[%s6634 + $0x80] sm:$0xff]
    %v6652 = vld [vmem:[%s6634 + $0x88] sm:$0xff]
    %v6653 = vld [vmem:[%s6634 + $0x90] sm:$0xff]
    %v6654 = vld [vmem:[%s6634 + $0x98] sm:$0xff]
    %v6655 = vld [vmem:[%s6634 + $0xa0] sm:$0xff]
    %v6656 = vld [vmem:[%s6634 + $0xa8] sm:$0xff]
    %v6657 = vld [vmem:[%s6634 + $0xb0] sm:$0xff]
    %v6658 = vld [vmem:[%s6634 + $0xb8] sm:$0xff]
    %v6659 = vld [vmem:[%s6634 + $0xc0] sm:$0xff]
    %v6660 = vld [vmem:[%s6634 + $0xc8] sm:$0xff]
    %v6661 = vld [vmem:[%s6634 + $0xd0] sm:$0xff]
    %v6662 = vld [vmem:[%s6634 + $0xd8] sm:$0xff]
    %v6663 = vld [vmem:[%s6634 + $0xe0] sm:$0xff]
    %v6664 = vld [vmem:[%s6634 + $0xe8] sm:$0xff]
    %v6665 = vld [vmem:[%s6634 + $0xf0] sm:$0xff]
    %v6666 = vld [vmem:[%s6634 + $0xf8] sm:$0xff]
    %v6699 = vunpack.c.l.b16 %v6635
    %v6700 = vunpack.c.h.b16 %v6635
    %v6701 = vunpack.c.l.b16 %v6636
    %v6702 = vunpack.c.h.b16 %v6636
    %v6703 = vunpack.c.l.b16 %v6637
    %v6704 = vunpack.c.h.b16 %v6637
    %v6705 = vunpack.c.l.b16 %v6638
    %v6706 = vunpack.c.h.b16 %v6638
    %v6707 = vunpack.c.l.b16 %v6639
    %v6708 = vunpack.c.h.b16 %v6639
    %v6709 = vunpack.c.l.b16 %v6640
    %v6710 = vunpack.c.h.b16 %v6640
    %v6711 = vunpack.c.l.b16 %v6641
    %v6712 = vunpack.c.h.b16 %v6641
    %v6713 = vunpack.c.l.b16 %v6642
    %v6714 = vunpack.c.h.b16 %v6642
    %v6715 = vunpack.c.l.b16 %v6643
    %v6716 = vunpack.c.h.b16 %v6643
    %v6717 = vunpack.c.l.b16 %v6644
    %v6718 = vunpack.c.h.b16 %v6644
    %v6719 = vunpack.c.l.b16 %v6645
    %v6720 = vunpack.c.h.b16 %v6645
    %v6721 = vunpack.c.l.b16 %v6646
    %v6722 = vunpack.c.h.b16 %v6646
    %v6723 = vunpack.c.l.b16 %v6647
    %v6724 = vunpack.c.h.b16 %v6647
    %v6725 = vunpack.c.l.b16 %v6648
    %v6726 = vunpack.c.h.b16 %v6648
    %v6727 = vunpack.c.l.b16 %v6649
    %v6728 = vunpack.c.h.b16 %v6649
    %v6729 = vunpack.c.l.b16 %v6650
    %v6730 = vunpack.c.h.b16 %v6650
    %v6731 = vunpack.c.l.b16 %v6651
    %v6732 = vunpack.c.h.b16 %v6651
    %v6733 = vunpack.c.l.b16 %v6652
    %v6734 = vunpack.c.h.b16 %v6652
    %v6735 = vunpack.c.l.b16 %v6653
    %v6736 = vunpack.c.h.b16 %v6653
    %v6737 = vunpack.c.l.b16 %v6654
    %v6738 = vunpack.c.h.b16 %v6654
    %v6739 = vunpack.c.l.b16 %v6655
    %v6740 = vunpack.c.h.b16 %v6655
    %v6741 = vunpack.c.l.b16 %v6656
    %v6742 = vunpack.c.h.b16 %v6656
    %v6743 = vunpack.c.l.b16 %v6657
    %v6744 = vunpack.c.h.b16 %v6657
    %v6745 = vunpack.c.l.b16 %v6658
    %v6746 = vunpack.c.h.b16 %v6658
    %v6747 = vunpack.c.l.b16 %v6659
    %v6748 = vunpack.c.h.b16 %v6659
    %v6749 = vunpack.c.l.b16 %v6660
    %v6750 = vunpack.c.h.b16 %v6660
    %v6751 = vunpack.c.l.b16 %v6661
    %v6752 = vunpack.c.h.b16 %v6661
    %v6753 = vunpack.c.l.b16 %v6662
    %v6754 = vunpack.c.h.b16 %v6662
    %v6755 = vunpack.c.l.b16 %v6663
    %v6756 = vunpack.c.h.b16 %v6663
    %v6757 = vunpack.c.l.b16 %v6664
    %v6758 = vunpack.c.h.b16 %v6664
    %v6759 = vunpack.c.l.b16 %v6665
    %v6760 = vunpack.c.h.b16 %v6665
    %v6761 = vunpack.c.l.b16 %v6666
    %v6762 = vunpack.c.h.b16 %v6666
    %v6763 = vpack.c.b16 %v6701, %v6699
    %v6764 = vpack.c.b16 %v6702, %v6700
    %v6765 = vpack.c.b16 %v6705, %v6703
    %v6766 = vpack.c.b16 %v6706, %v6704
    %v6767 = vpack.c.b16 %v6709, %v6707
    %v6768 = vpack.c.b16 %v6710, %v6708
    %v6769 = vpack.c.b16 %v6713, %v6711
    %v6770 = vpack.c.b16 %v6714, %v6712
    %v6771 = vpack.c.b16 %v6717, %v6715
    %v6772 = vpack.c.b16 %v6718, %v6716
    %v6773 = vpack.c.b16 %v6721, %v6719
    %v6774 = vpack.c.b16 %v6722, %v6720
    %v6775 = vpack.c.b16 %v6725, %v6723
    %v6776 = vpack.c.b16 %v6726, %v6724
    %v6777 = vpack.c.b16 %v6729, %v6727
    %v6778 = vpack.c.b16 %v6730, %v6728
    %v6779 = vpack.c.b16 %v6733, %v6731
    %v6780 = vpack.c.b16 %v6734, %v6732
    %v6781 = vpack.c.b16 %v6737, %v6735
    %v6782 = vpack.c.b16 %v6738, %v6736
    %v6783 = vpack.c.b16 %v6741, %v6739
    %v6784 = vpack.c.b16 %v6742, %v6740
    %v6785 = vpack.c.b16 %v6745, %v6743
    %v6786 = vpack.c.b16 %v6746, %v6744
    %v6787 = vpack.c.b16 %v6749, %v6747
    %v6788 = vpack.c.b16 %v6750, %v6748
    %v6789 = vpack.c.b16 %v6753, %v6751
    %v6790 = vpack.c.b16 %v6754, %v6752
    %v6791 = vpack.c.b16 %v6757, %v6755
    %v6792 = vpack.c.b16 %v6758, %v6756
    %v6793 = vpack.c.b16 %v6761, %v6759
    %v6794 = vpack.c.b16 %v6762, %v6760
    %6827 = vmatprep.subr.bf16.mxu0 %v6764
    %6828 = vmatpush1.bf16.msra.mxu0 %v6763
    %6829 = vmatprep.subr.bf16.mxu0 %v6766
    %6830 = vmatpush1.bf16.msra.mxu0 %v6765
    %6831 = vmatprep.subr.bf16.mxu0 %v6768
    %6832 = vmatpush1.bf16.msra.mxu0 %v6767
    %6833 = vmatprep.subr.bf16.mxu0 %v6770
    %6834 = vmatpush1.bf16.msra.mxu0 %v6769
    %6835 = vmatprep.subr.bf16.mxu0 %v6772
    %6836 = vmatpush1.bf16.msra.mxu0 %v6771
    %6837 = vmatprep.subr.bf16.mxu0 %v6774
    %6838 = vmatpush1.bf16.msra.mxu0 %v6773
    %6839 = vmatprep.subr.bf16.mxu0 %v6776
    %6840 = vmatpush1.bf16.msra.mxu0 %v6775
    %6841 = vmatprep.subr.bf16.mxu0 %v6778
    %6842 = vmatpush1.bf16.msra.mxu0 %v6777
    %6843 = vmatprep.subr.bf16.mxu0 %v6780
    %6844 = vmatpush1.bf16.msra.mxu0 %v6779
    %6845 = vmatprep.subr.bf16.mxu0 %v6782
    %6846 = vmatpush1.bf16.msra.mxu0 %v6781
    %6847 = vmatprep.subr.bf16.mxu0 %v6784
    %6848 = vmatpush1.bf16.msra.mxu0 %v6783
    %6849 = vmatprep.subr.bf16.mxu0 %v6786
    %6850 = vmatpush1.bf16.msra.mxu0 %v6785
    %6851 = vmatprep.subr.bf16.mxu0 %v6788
    %6852 = vmatpush1.bf16.msra.mxu0 %v6787
    %6853 = vmatprep.subr.bf16.mxu0 %v6790
    %6854 = vmatpush1.bf16.msra.mxu0 %v6789
    %6855 = vmatprep.subr.bf16.mxu0 %v6792
    %6856 = vmatpush1.bf16.msra.mxu0 %v6791
    %6857 = vmatprep.subr.bf16.mxu0 %v6794
    %6858 = vmatpush1.bf16.msra.mxu0 %v6793
    %6859 = vmatprep.mubr.bf16.mxu0 %v4302
    %6860 = vmatmul.mubr.bf16.gmra.mrb[0].mxu0 %v4301
    %v6861 = vpop.f32.mrb[0].mxu0
    %v6862 = vadd.f32 0.0, %v6861
    %v6863 = vpop.f32.mrb[0].mxu0
    %v6864 = vadd.f32 0.0, %v6863
    %v6865 = vpop.f32.mrb[0].mxu0
    %v6866 = vadd.f32 0.0, %v6865
    %v6867 = vpop.f32.mrb[0].mxu0
    %v6868 = vadd.f32 0.0, %v6867
    %6869 = vmatprep.mubr.bf16.mxu0 %v4304
    %6870 = vmatmul.mubr.bf16.gmra.mrb[0].mxu0 %v4303
    %v6871 = vpop.f32.mrb[0].mxu0
    %v6872 = vadd.f32 0.0, %v6871
    %v6873 = vpop.f32.mrb[0].mxu0
    %v6874 = vadd.f32 0.0, %v6873
    %v6875 = vpop.f32.mrb[0].mxu0
    %v6876 = vadd.f32 0.0, %v6875
    %v6877 = vpop.f32.mrb[0].mxu0
    %v6878 = vadd.f32 0.0, %v6877
    %6879 = vmatprep.mubr.bf16.mxu0 %v4306
    %6880 = vmatmul.mubr.bf16.gmra.mrb[0].mxu0 %v4305
    %v6881 = vpop.f32.mrb[0].mxu0
    %v6882 = vadd.f32 0.0, %v6881
    %v6883 = vpop.f32.mrb[0].mxu0
    %v6884 = vadd.f32 0.0, %v6883
    %v6885 = vpop.f32.mrb[0].mxu0
    %v6886 = vadd.f32 0.0, %v6885
    %v6887 = vpop.f32.mrb[0].mxu0
    %v6888 = vadd.f32 0.0, %v6887
    %6889 = vmatprep.mubr.bf16.mxu0 %v4308
    %6890 = vmatmul.mubr.bf16.gmra.mrb[0].mxu0 %v4307
    %v6891 = vpop.f32.mrb[0].mxu0
    %v6892 = vadd.f32 0.0, %v6891
    %v6893 = vpop.f32.mrb[0].mxu0
    %v6894 = vadd.f32 0.0, %v6893
    %v6895 = vpop.f32.mrb[0].mxu0
    %v6896 = vadd.f32 0.0, %v6895
    %v6897 = vpop.f32.mrb[0].mxu0
    %v6898 = vadd.f32 0.0, %v6897
    %6899 = vmatprep.mubr.bf16.mxu0 %v4310
    %6900 = vmatmul.mubr.bf16.gmra.mrb[0].mxu0 %v4309
    %v6901 = vpop.f32.mrb[0].mxu0
    %v6902 = vadd.f32 0.0, %v6901
    %v6903 = vpop.f32.mrb[0].mxu0
    %v6904 = vadd.f32 0.0, %v6903
    %v6905 = vpop.f32.mrb[0].mxu0
    %v6906 = vadd.f32 0.0, %v6905
    %v6907 = vpop.f32.mrb[0].mxu0
    %v6908 = vadd.f32 0.0, %v6907
    %6909 = vmatprep.mubr.bf16.mxu0 %v4312
    %6910 = vmatmul.mubr.bf16.gmra.mrb[0].mxu0 %v4311
    %v6911 = vpop.f32.mrb[0].mxu0
    %v6912 = vadd.f32 0.0, %v6911
    %v6913 = vpop.f32.mrb[0].mxu0
    %v6914 = vadd.f32 0.0, %v6913
    %v6915 = vpop.f32.mrb[0].mxu0
    %v6916 = vadd.f32 0.0, %v6915
    %v6917 = vpop.f32.mrb[0].mxu0
    %v6918 = vadd.f32 0.0, %v6917
    %6919 = vmatprep.mubr.bf16.mxu0 %v4314
    %6920 = vmatmul.mubr.bf16.gmra.mrb[0].mxu0 %v4313
    %v6921 = vpop.f32.mrb[0].mxu0
    %v6922 = vadd.f32 0.0, %v6921
    %v6923 = vpop.f32.mrb[0].mxu0
    %v6924 = vadd.f32 0.0, %v6923
    %v6925 = vpop.f32.mrb[0].mxu0
    %v6926 = vadd.f32 0.0, %v6925
    %v6927 = vpop.f32.mrb[0].mxu0
    %v6928 = vadd.f32 0.0, %v6927
    %6929 = vmatprep.mubr.bf16.mxu0 %v4316
    %6930 = vmatmul.mubr.bf16.gmra.mrb[0].mxu0 %v4315
    %v6931 = vpop.f32.mrb[0].mxu0
    %v6932 = vadd.f32 0.0, %v6931
    %v6933 = vpop.f32.mrb[0].mxu0
    %v6934 = vadd.f32 0.0, %v6933
    %v6935 = vpop.f32.mrb[0].mxu0
    %v6936 = vadd.f32 0.0, %v6935
    %v6937 = vpop.f32.mrb[0].mxu0
    %v6938 = vadd.f32 0.0, %v6937
    %6939 = vdwg.mxu0
    %v6940 = vadd.f32 %v6602, %v6862
    %v6941 = vadd.f32 %v6603, %v6864
    %v6942 = vadd.f32 %v6604, %v6866
    %v6943 = vadd.f32 %v6605, %v6868
    %v6944 = vadd.f32 %v6606, %v6872
    %v6945 = vadd.f32 %v6607, %v6874
    %v6946 = vadd.f32 %v6608, %v6876
    %v6947 = vadd.f32 %v6609, %v6878
    %v6948 = vadd.f32 %v6610, %v6882
    %v6949 = vadd.f32 %v6611, %v6884
    %v6950 = vadd.f32 %v6612, %v6886
    %v6951 = vadd.f32 %v6613, %v6888
    %v6952 = vadd.f32 %v6614, %v6892
    %v6953 = vadd.f32 %v6615, %v6894
    %v6954 = vadd.f32 %v6616, %v6896
    %v6955 = vadd.f32 %v6617, %v6898
    %v6956 = vadd.f32 %v6618, %v6902
    %v6957 = vadd.f32 %v6619, %v6904
    %v6958 = vadd.f32 %v6620, %v6906
    %v6959 = vadd.f32 %v6621, %v6908
    %v6960 = vadd.f32 %v6622, %v6912
    %v6961 = vadd.f32 %v6623, %v6914
    %v6962 = vadd.f32 %v6624, %v6916
    %v6963 = vadd.f32 %v6625, %v6918
    %v6964 = vadd.f32 %v6626, %v6922
    %v6965 = vadd.f32 %v6627, %v6924
    %v6966 = vadd.f32 %v6628, %v6926
    %v6967 = vadd.f32 %v6629, %v6928
    %v6968 = vadd.f32 %v6630, %v6932
    %v6969 = vadd.f32 %v6631, %v6934
    %v6970 = vadd.f32 %v6632, %v6936
    %v6971 = vadd.f32 %v6633, %v6938
    %s6972 = scalar_lea.vmem [#allocation3], 2048
    %v6973 = vld [vmem:[%s6972] sm:$0xff]
    %v6974 = vld [vmem:[%s6972 + $0x8] sm:$0xff]
    %v6975 = vld [vmem:[%s6972 + $0x10] sm:$0xff]
    %v6976 = vld [vmem:[%s6972 + $0x18] sm:$0xff]
    %v6977 = vld [vmem:[%s6972 + $0x20] sm:$0xff]
    %v6978 = vld [vmem:[%s6972 + $0x28] sm:$0xff]
    %v6979 = vld [vmem:[%s6972 + $0x30] sm:$0xff]
    %v6980 = vld [vmem:[%s6972 + $0x38] sm:$0xff]
    %v6981 = vld [vmem:[%s6972 + $0x40] sm:$0xff]
    %v6982 = vld [vmem:[%s6972 + $0x48] sm:$0xff]
    %v6983 = vld [vmem:[%s6972 + $0x50] sm:$0xff]
    %v6984 = vld [vmem:[%s6972 + $0x58] sm:$0xff]
    %v6985 = vld [vmem:[%s6972 + $0x60] sm:$0xff]
    %v6986 = vld [vmem:[%s6972 + $0x68] sm:$0xff]
    %v6987 = vld [vmem:[%s6972 + $0x70] sm:$0xff]
    %v6988 = vld [vmem:[%s6972 + $0x78] sm:$0xff]
    %v6989 = vld [vmem:[%s6972 + $0x80] sm:$0xff]
    %v6990 = vld [vmem:[%s6972 + $0x88] sm:$0xff]
    %v6991 = vld [vmem:[%s6972 + $0x90] sm:$0xff]
    %v6992 = vld [vmem:[%s6972 + $0x98] sm:$0xff]
    %v6993 = vld [vmem:[%s6972 + $0xa0] sm:$0xff]
    %v6994 = vld [vmem:[%s6972 + $0xa8] sm:$0xff]
    %v6995 = vld [vmem:[%s6972 + $0xb0] sm:$0xff]
    %v6996 = vld [vmem:[%s6972 + $0xb8] sm:$0xff]
    %v6997 = vld [vmem:[%s6972 + $0xc0] sm:$0xff]
    %v6998 = vld [vmem:[%s6972 + $0xc8] sm:$0xff]
    %v6999 = vld [vmem:[%s6972 + $0xd0] sm:$0xff]
    %v7000 = vld [vmem:[%s6972 + $0xd8] sm:$0xff]
    %v7001 = vld [vmem:[%s6972 + $0xe0] sm:$0xff]
    %v7002 = vld [vmem:[%s6972 + $0xe8] sm:$0xff]
    %v7003 = vld [vmem:[%s6972 + $0xf0] sm:$0xff]
    %v7004 = vld [vmem:[%s6972 + $0xf8] sm:$0xff]
    %v7037 = vunpack.c.l.b16 %v6973
    %v7038 = vunpack.c.h.b16 %v6973
    %v7039 = vunpack.c.l.b16 %v6974
    %v7040 = vunpack.c.h.b16 %v6974
    %v7041 = vunpack.c.l.b16 %v6975
    %v7042 = vunpack.c.h.b16 %v6975
    %v7043 = vunpack.c.l.b16 %v6976
    %v7044 = vunpack.c.h.b16 %v6976
    %v7045 = vunpack.c.l.b16 %v6977
    %v7046 = vunpack.c.h.b16 %v6977
    %v7047 = vunpack.c.l.b16 %v6978
    %v7048 = vunpack.c.h.b16 %v6978
    %v7049 = vunpack.c.l.b16 %v6979
    %v7050 = vunpack.c.h.b16 %v6979
    %v7051 = vunpack.c.l.b16 %v6980
    %v7052 = vunpack.c.h.b16 %v6980
    %v7053 = vunpack.c.l.b16 %v6981
    %v7054 = vunpack.c.h.b16 %v6981
    %v7055 = vunpack.c.l.b16 %v6982
    %v7056 = vunpack.c.h.b16 %v6982
    %v7057 = vunpack.c.l.b16 %v6983
    %v7058 = vunpack.c.h.b16 %v6983
    %v7059 = vunpack.c.l.b16 %v6984
    %v7060 = vunpack.c.h.b16 %v6984
    %v7061 = vunpack.c.l.b16 %v6985
    %v7062 = vunpack.c.h.b16 %v6985
    %v7063 = vunpack.c.l.b16 %v6986
    %v7064 = vunpack.c.h.b16 %v6986
    %v7065 = vunpack.c.l.b16 %v6987
    %v7066 = vunpack.c.h.b16 %v6987
    %v7067 = vunpack.c.l.b16 %v6988
    %v7068 = vunpack.c.h.b16 %v6988
    %v7069 = vunpack.c.l.b16 %v6989
    %v7070 = vunpack.c.h.b16 %v6989
    %v7071 = vunpack.c.l.b16 %v6990
    %v7072 = vunpack.c.h.b16 %v6990
    %v7073 = vunpack.c.l.b16 %v6991
    %v7074 = vunpack.c.h.b16 %v6991
    %v7075 = vunpack.c.l.b16 %v6992
    %v7076 = vunpack.c.h.b16 %v6992
    %v7077 = vunpack.c.l.b16 %v6993
    %v7078 = vunpack.c.h.b16 %v6993
    %v7079 = vunpack.c.l.b16 %v6994
    %v7080 = vunpack.c.h.b16 %v6994
    %v7081 = vunpack.c.l.b16 %v6995
    %v7082 = vunpack.c.h.b16 %v6995
    %v7083 = vunpack.c.l.b16 %v6996
    %v7084 = vunpack.c.h.b16 %v6996
    %v7085 = vunpack.c.l.b16 %v6997
    %v7086 = vunpack.c.h.b16 %v6997
    %v7087 = vunpack.c.l.b16 %v6998
    %v7088 = vunpack.c.h.b16 %v6998
    %v7089 = vunpack.c.l.b16 %v6999
    %v7090 = vunpack.c.h.b16 %v6999
    %v7091 = vunpack.c.l.b16 %v7000
    %v7092 = vunpack.c.h.b16 %v7000
    %v7093 = vunpack.c.l.b16 %v7001
    %v7094 = vunpack.c.h.b16 %v7001
    %v7095 = vunpack.c.l.b16 %v7002
    %v7096 = vunpack.c.h.b16 %v7002
    %v7097 = vunpack.c.l.b16 %v7003
    %v7098 = vunpack.c.h.b16 %v7003
    %v7099 = vunpack.c.l.b16 %v7004
    %v7100 = vunpack.c.h.b16 %v7004
    %v7101 = vpack.c.b16 %v7039, %v7037
    %v7102 = vpack.c.b16 %v7040, %v7038
    %v7103 = vpack.c.b16 %v7043, %v7041
    %v7104 = vpack.c.b16 %v7044, %v7042
    %v7105 = vpack.c.b16 %v7047, %v7045
    %v7106 = vpack.c.b16 %v7048, %v7046
    %v7107 = vpack.c.b16 %v7051, %v7049
    %v7108 = vpack.c.b16 %v7052, %v7050
    %v7109 = vpack.c.b16 %v7055, %v7053
    %v7110 = vpack.c.b16 %v7056, %v7054
    %v7111 = vpack.c.b16 %v7059, %v7057
    %v7112 = vpack.c.b16 %v7060, %v7058
    %v7113 = vpack.c.b16 %v7063, %v7061
    %v7114 = vpack.c.b16 %v7064, %v7062
    %v7115 = vpack.c.b16 %v7067, %v7065
    %v7116 = vpack.c.b16 %v7068, %v7066
    %v7117 = vpack.c.b16 %v7071, %v7069
    %v7118 = vpack.c.b16 %v7072, %v7070
    %v7119 = vpack.c.b16 %v7075, %v7073
    %v7120 = vpack.c.b16 %v7076, %v7074
    %v7121 = vpack.c.b16 %v7079, %v7077
    %v7122 = vpack.c.b16 %v7080, %v7078
    %v7123 = vpack.c.b16 %v7083, %v7081
    %v7124 = vpack.c.b16 %v7084, %v7082
    %v7125 = vpack.c.b16 %v7087, %v7085
    %v7126 = vpack.c.b16 %v7088, %v7086
    %v7127 = vpack.c.b16 %v7091, %v7089
    %v7128 = vpack.c.b16 %v7092, %v7090
    %v7129 = vpack.c.b16 %v7095, %v7093
    %v7130 = vpack.c.b16 %v7096, %v7094
    %v7131 = vpack.c.b16 %v7099, %v7097
    %v7132 = vpack.c.b16 %v7100, %v7098
    %7165 = vmatprep.subr.bf16.mxu0 %v7102
    %7166 = vmatpush1.bf16.msra.mxu0 %v7101
    %7167 = vmatprep.subr.bf16.mxu0 %v7104
    %7168 = vmatpush1.bf16.msra.mxu0 %v7103
    %7169 = vmatprep.subr.bf16.mxu0 %v7106
    %7170 = vmatpush1.bf16.msra.mxu0 %v7105
    %7171 = vmatprep.subr.bf16.mxu0 %v7108
    %7172 = vmatpush1.bf16.msra.mxu0 %v7107
    %7173 = vmatprep.subr.bf16.mxu0 %v7110
    %7174 = vmatpush1.bf16.msra.mxu0 %v7109
    %7175 = vmatprep.subr.bf16.mxu0 %v7112
    %7176 = vmatpush1.bf16.msra.mxu0 %v7111
    %7177 = vmatprep.subr.bf16.mxu0 %v7114
    %7178 = vmatpush1.bf16.msra.mxu0 %v7113
    %7179 = vmatprep.subr.bf16.mxu0 %v7116
    %7180 = vmatpush1.bf16.msra.mxu0 %v7115
    %7181 = vmatprep.subr.bf16.mxu0 %v7118
    %7182 = vmatpush1.bf16.msra.mxu0 %v7117
    %7183 = vmatprep.subr.bf16.mxu0 %v7120
    %7184 = vmatpush1.bf16.msra.mxu0 %v7119
    %7185 = vmatprep.subr.bf16.mxu0 %v7122
    %7186 = vmatpush1.bf16.msra.mxu0 %v7121
    %7187 = vmatprep.subr.bf16.mxu0 %v7124
    %7188 = vmatpush1.bf16.msra.mxu0 %v7123
    %7189 = vmatprep.subr.bf16.mxu0 %v7126
    %7190 = vmatpush1.bf16.msra.mxu0 %v7125
    %7191 = vmatprep.subr.bf16.mxu0 %v7128
    %7192 = vmatpush1.bf16.msra.mxu0 %v7127
    %7193 = vmatprep.subr.bf16.mxu0 %v7130
    %7194 = vmatpush1.bf16.msra.mxu0 %v7129
    %7195 = vmatprep.subr.bf16.mxu0 %v7132
    %7196 = vmatpush1.bf16.msra.mxu0 %v7131
    %7197 = vmatprep.mubr.bf16.mxu0 %v4318
    %7198 = vmatmul.mubr.bf16.gmra.mrb[0].mxu0 %v4317
    %v7199 = vpop.f32.mrb[0].mxu0
    %v7200 = vadd.f32 0.0, %v7199
    %v7201 = vpop.f32.mrb[0].mxu0
    %v7202 = vadd.f32 0.0, %v7201
    %v7203 = vpop.f32.mrb[0].mxu0
    %v7204 = vadd.f32 0.0, %v7203
    %v7205 = vpop.f32.mrb[0].mxu0
    %v7206 = vadd.f32 0.0, %v7205
    %7207 = vmatprep.mubr.bf16.mxu0 %v4320
    %7208 = vmatmul.mubr.bf16.gmra.mrb[0].mxu0 %v4319
    %v7209 = vpop.f32.mrb[0].mxu0
    %v7210 = vadd.f32 0.0, %v7209
    %v7211 = vpop.f32.mrb[0].mxu0
    %v7212 = vadd.f32 0.0, %v7211
    %v7213 = vpop.f32.mrb[0].mxu0
    %v7214 = vadd.f32 0.0, %v7213
    %v7215 = vpop.f32.mrb[0].mxu0
    %v7216 = vadd.f32 0.0, %v7215
    %7217 = vmatprep.mubr.bf16.mxu0 %v4322
    %7218 = vmatmul.mubr.bf16.gmra.mrb[0].mxu0 %v4321
    %v7219 = vpop.f32.mrb[0].mxu0
    %v7220 = vadd.f32 0.0, %v7219
    %v7221 = vpop.f32.mrb[0].mxu0
    %v7222 = vadd.f32 0.0, %v7221
    %v7223 = vpop.f32.mrb[0].mxu0
    %v7224 = vadd.f32 0.0, %v7223
    %v7225 = vpop.f32.mrb[0].mxu0
    %v7226 = vadd.f32 0.0, %v7225
    %7227 = vmatprep.mubr.bf16.mxu0 %v4324
    %7228 = vmatmul.mubr.bf16.gmra.mrb[0].mxu0 %v4323
    %v7229 = vpop.f32.mrb[0].mxu0
    %v7230 = vadd.f32 0.0, %v7229
    %v7231 = vpop.f32.mrb[0].mxu0
    %v7232 = vadd.f32 0.0, %v7231
    %v7233 = vpop.f32.mrb[0].mxu0
    %v7234 = vadd.f32 0.0, %v7233
    %v7235 = vpop.f32.mrb[0].mxu0
    %v7236 = vadd.f32 0.0, %v7235
    %7237 = vmatprep.mubr.bf16.mxu0 %v4326
    %7238 = vmatmul.mubr.bf16.gmra.mrb[0].mxu0 %v4325
    %v7239 = vpop.f32.mrb[0].mxu0
    %v7240 = vadd.f32 0.0, %v7239
    %v7241 = vpop.f32.mrb[0].mxu0
    %v7242 = vadd.f32 0.0, %v7241
    %v7243 = vpop.f32.mrb[0].mxu0
    %v7244 = vadd.f32 0.0, %v7243
    %v7245 = vpop.f32.mrb[0].mxu0
    %v7246 = vadd.f32 0.0, %v7245
    %7247 = vmatprep.mubr.bf16.mxu0 %v4328
    %7248 = vmatmul.mubr.bf16.gmra.mrb[0].mxu0 %v4327
    %v7249 = vpop.f32.mrb[0].mxu0
    %v7250 = vadd.f32 0.0, %v7249
    %v7251 = vpop.f32.mrb[0].mxu0
    %v7252 = vadd.f32 0.0, %v7251
    %v7253 = vpop.f32.mrb[0].mxu0
    %v7254 = vadd.f32 0.0, %v7253
    %v7255 = vpop.f32.mrb[0].mxu0
    %v7256 = vadd.f32 0.0, %v7255
    %7257 = vmatprep.mubr.bf16.mxu0 %v4330
    %7258 = vmatmul.mubr.bf16.gmra.mrb[0].mxu0 %v4329
    %v7259 = vpop.f32.mrb[0].mxu0
    %v7260 = vadd.f32 0.0, %v7259
    %v7261 = vpop.f32.mrb[0].mxu0
    %v7262 = vadd.f32 0.0, %v7261
    %v7263 = vpop.f32.mrb[0].mxu0
    %v7264 = vadd.f32 0.0, %v7263
    %v7265 = vpop.f32.mrb[0].mxu0
    %v7266 = vadd.f32 0.0, %v7265
    %7267 = vmatprep.mubr.bf16.mxu0 %v4332
    %7268 = vmatmul.mubr.bf16.gmra.mrb[0].mxu0 %v4331
    %v7269 = vpop.f32.mrb[0].mxu0
    %v7270 = vadd.f32 0.0, %v7269
    %v7271 = vpop.f32.mrb[0].mxu0
    %v7272 = vadd.f32 0.0, %v7271
    %v7273 = vpop.f32.mrb[0].mxu0
    %v7274 = vadd.f32 0.0, %v7273
    %v7275 = vpop.f32.mrb[0].mxu0
    %v7276 = vadd.f32 0.0, %v7275
    %7277 = vdwg.mxu0
    %v7278 = vadd.f32 %v6940, %v7200
    %v7279 = vadd.f32 %v6941, %v7202
    %v7280 = vadd.f32 %v6942, %v7204
    %v7281 = vadd.f32 %v6943, %v7206
    %v7282 = vadd.f32 %v6944, %v7210
    %v7283 = vadd.f32 %v6945, %v7212
    %v7284 = vadd.f32 %v6946, %v7214
    %v7285 = vadd.f32 %v6947, %v7216
    %v7286 = vadd.f32 %v6948, %v7220
    %v7287 = vadd.f32 %v6949, %v7222
    %v7288 = vadd.f32 %v6950, %v7224
    %v7289 = vadd.f32 %v6951, %v7226
    %v7290 = vadd.f32 %v6952, %v7230
    %v7291 = vadd.f32 %v6953, %v7232
    %v7292 = vadd.f32 %v6954, %v7234
    %v7293 = vadd.f32 %v6955, %v7236
    %v7294 = vadd.f32 %v6956, %v7240
    %v7295 = vadd.f32 %v6957, %v7242
    %v7296 = vadd.f32 %v6958, %v7244
    %v7297 = vadd.f32 %v6959, %v7246
    %v7298 = vadd.f32 %v6960, %v7250
    %v7299 = vadd.f32 %v6961, %v7252
    %v7300 = vadd.f32 %v6962, %v7254
    %v7301 = vadd.f32 %v6963, %v7256
    %v7302 = vadd.f32 %v6964, %v7260
    %v7303 = vadd.f32 %v6965, %v7262
    %v7304 = vadd.f32 %v6966, %v7264
    %v7305 = vadd.f32 %v6967, %v7266
    %v7306 = vadd.f32 %v6968, %v7270
    %v7307 = vadd.f32 %v6969, %v7272
    %v7308 = vadd.f32 %v6970, %v7274
    %v7309 = vadd.f32 %v6971, %v7276
    %v7310 = vld [vmem:[%s5] sm:$0x3]
    %v7312 = vlaneseq
    %v7313 = vshrl.u32 %v7312, 7
    %v7314 = vsub.s32 0, %v7313
    %v7315 = vrot.slane %v7310, %v7314
    %v7316 = vlaneseq
    %v7317 = vshrl.u32 %v7316, 7
    %v7318 = vsub.s32 1, %v7317
    %v7319 = vrot.slane %v7310, %v7318
    %v7322 = vadd.f32 %v7278, %v7315
    %v7323 = vadd.f32 %v7279, %v7319
    %v7324 = vadd.f32 %v7280, %v7315
    %v7325 = vadd.f32 %v7281, %v7319
    %v7326 = vadd.f32 %v7282, %v7315
    %v7327 = vadd.f32 %v7283, %v7319
    %v7328 = vadd.f32 %v7284, %v7315
    %v7329 = vadd.f32 %v7285, %v7319
    %v7330 = vadd.f32 %v7286, %v7315
    %v7331 = vadd.f32 %v7287, %v7319
    %v7332 = vadd.f32 %v7288, %v7315
    %v7333 = vadd.f32 %v7289, %v7319
    %v7334 = vadd.f32 %v7290, %v7315
    %v7335 = vadd.f32 %v7291, %v7319
    %v7336 = vadd.f32 %v7292, %v7315
    %v7337 = vadd.f32 %v7293, %v7319
    %v7338 = vadd.f32 %v7294, %v7315
    %v7339 = vadd.f32 %v7295, %v7319
    %v7340 = vadd.f32 %v7296, %v7315
    %v7341 = vadd.f32 %v7297, %v7319
    %v7342 = vadd.f32 %v7298, %v7315
    %v7343 = vadd.f32 %v7299, %v7319
    %v7344 = vadd.f32 %v7300, %v7315
    %v7345 = vadd.f32 %v7301, %v7319
    %v7346 = vadd.f32 %v7302, %v7315
    %v7347 = vadd.f32 %v7303, %v7319
    %v7348 = vadd.f32 %v7304, %v7315
    %v7349 = vadd.f32 %v7305, %v7319
    %v7350 = vadd.f32 %v7306, %v7315
    %v7351 = vadd.f32 %v7307, %v7319
    %v7352 = vadd.f32 %v7308, %v7315
    %v7353 = vadd.f32 %v7309, %v7319
    %v7354 = vmax.f32 %v7322, 0.0
    %v7355 = vmax.f32 %v7323, 0.0
    %v7356 = vmax.f32 %v7324, 0.0
    %v7357 = vmax.f32 %v7325, 0.0
    %v7358 = vmax.f32 %v7326, 0.0
    %v7359 = vmax.f32 %v7327, 0.0
    %v7360 = vmax.f32 %v7328, 0.0
    %v7361 = vmax.f32 %v7329, 0.0
    %v7362 = vmax.f32 %v7330, 0.0
    %v7363 = vmax.f32 %v7331, 0.0
    %v7364 = vmax.f32 %v7332, 0.0
    %v7365 = vmax.f32 %v7333, 0.0
    %v7366 = vmax.f32 %v7334, 0.0
    %v7367 = vmax.f32 %v7335, 0.0
    %v7368 = vmax.f32 %v7336, 0.0
    %v7369 = vmax.f32 %v7337, 0.0
    %v7370 = vmax.f32 %v7338, 0.0
    %v7371 = vmax.f32 %v7339, 0.0
    %v7372 = vmax.f32 %v7340, 0.0
    %v7373 = vmax.f32 %v7341, 0.0
    %v7374 = vmax.f32 %v7342, 0.0
    %v7375 = vmax.f32 %v7343, 0.0
    %v7376 = vmax.f32 %v7344, 0.0
    %v7377 = vmax.f32 %v7345, 0.0
    %v7378 = vmax.f32 %v7346, 0.0
    %v7379 = vmax.f32 %v7347, 0.0
    %v7380 = vmax.f32 %v7348, 0.0
    %v7381 = vmax.f32 %v7349, 0.0
    %v7382 = vmax.f32 %v7350, 0.0
    %v7383 = vmax.f32 %v7351, 0.0
    %v7384 = vmax.f32 %v7352, 0.0
    %v7385 = vmax.f32 %v7353, 0.0
    %v7386 = vmax.f32 %v7354, %v7356
    %v7387 = vrot.slane %v7386, 4
    %v7388 = vmax.f32 %v7386, %v7387
    %v7389 = vrot.slane %v7388, 2
    %v7390 = vmax.f32 %v7388, %v7389
    %v7391 = vrot.slane %v7390, 1
    %v7392 = vmax.f32 %v7390, %v7391
    %v7393 = vmax.f32 %v7355, %v7357
    %v7394 = vrot.slane %v7393, 4
    %v7395 = vmax.f32 %v7393, %v7394
    %v7396 = vrot.slane %v7395, 2
    %v7397 = vmax.f32 %v7395, %v7396
    %v7398 = vrot.slane %v7397, 1
    %v7399 = vmax.f32 %v7397, %v7398
    %v7400 = vmax.f32 %v7358, %v7360
    %v7401 = vrot.slane %v7400, 4
    %v7402 = vmax.f32 %v7400, %v7401
    %v7403 = vrot.slane %v7402, 2
    %v7404 = vmax.f32 %v7402, %v7403
    %v7405 = vrot.slane %v7404, 1
    %v7406 = vmax.f32 %v7404, %v7405
    %v7407 = vmax.f32 %v7359, %v7361
    %v7408 = vrot.slane %v7407, 4
    %v7409 = vmax.f32 %v7407, %v7408
    %v7410 = vrot.slane %v7409, 2
    %v7411 = vmax.f32 %v7409, %v7410
    %v7412 = vrot.slane %v7411, 1
    %v7413 = vmax.f32 %v7411, %v7412
    %v7414 = vmax.f32 %v7362, %v7364
    %v7415 = vrot.slane %v7414, 4
    %v7416 = vmax.f32 %v7414, %v7415
    %v7417 = vrot.slane %v7416, 2
    %v7418 = vmax.f32 %v7416, %v7417
    %v7419 = vrot.slane %v7418, 1
    %v7420 = vmax.f32 %v7418, %v7419
    %v7421 = vmax.f32 %v7363, %v7365
    %v7422 = vrot.slane %v7421, 4
    %v7423 = vmax.f32 %v7421, %v7422
    %v7424 = vrot.slane %v7423, 2
    %v7425 = vmax.f32 %v7423, %v7424
    %v7426 = vrot.slane %v7425, 1
    %v7427 = vmax.f32 %v7425, %v7426
    %v7428 = vmax.f32 %v7366, %v7368
    %v7429 = vrot.slane %v7428, 4
    %v7430 = vmax.f32 %v7428, %v7429
    %v7431 = vrot.slane %v7430, 2
    %v7432 = vmax.f32 %v7430, %v7431
    %v7433 = vrot.slane %v7432, 1
    %v7434 = vmax.f32 %v7432, %v7433
    %v7435 = vmax.f32 %v7367, %v7369
    %v7436 = vrot.slane %v7435, 4
    %v7437 = vmax.f32 %v7435, %v7436
    %v7438 = vrot.slane %v7437, 2
    %v7439 = vmax.f32 %v7437, %v7438
    %v7440 = vrot.slane %v7439, 1
    %v7441 = vmax.f32 %v7439, %v7440
    %v7442 = vmax.f32 %v7370, %v7372
    %v7443 = vrot.slane %v7442, 4
    %v7444 = vmax.f32 %v7442, %v7443
    %v7445 = vrot.slane %v7444, 2
    %v7446 = vmax.f32 %v7444, %v7445
    %v7447 = vrot.slane %v7446, 1
    %v7448 = vmax.f32 %v7446, %v7447
    %v7449 = vmax.f32 %v7371, %v7373
    %v7450 = vrot.slane %v7449, 4
    %v7451 = vmax.f32 %v7449, %v7450
    %v7452 = vrot.slane %v7451, 2
    %v7453 = vmax.f32 %v7451, %v7452
    %v7454 = vrot.slane %v7453, 1
    %v7455 = vmax.f32 %v7453, %v7454
    %v7456 = vmax.f32 %v7374, %v7376
    %v7457 = vrot.slane %v7456, 4
    %v7458 = vmax.f32 %v7456, %v7457
    %v7459 = vrot.slane %v7458, 2
    %v7460 = vmax.f32 %v7458, %v7459
    %v7461 = vrot.slane %v7460, 1
    %v7462 = vmax.f32 %v7460, %v7461
    %v7463 = vmax.f32 %v7375, %v7377
    %v7464 = vrot.slane %v7463, 4
    %v7465 = vmax.f32 %v7463, %v7464
    %v7466 = vrot.slane %v7465, 2
    %v7467 = vmax.f32 %v7465, %v7466
    %v7468 = vrot.slane %v7467, 1
    %v7469 = vmax.f32 %v7467, %v7468
    %v7470 = vmax.f32 %v7378, %v7380
    %v7471 = vrot.slane %v7470, 4
    %v7472 = vmax.f32 %v7470, %v7471
    %v7473 = vrot.slane %v7472, 2
    %v7474 = vmax.f32 %v7472, %v7473
    %v7475 = vrot.slane %v7474, 1
    %v7476 = vmax.f32 %v7474, %v7475
    %v7477 = vmax.f32 %v7379, %v7381
    %v7478 = vrot.slane %v7477, 4
    %v7479 = vmax.f32 %v7477, %v7478
    %v7480 = vrot.slane %v7479, 2
    %v7481 = vmax.f32 %v7479, %v7480
    %v7482 = vrot.slane %v7481, 1
    %v7483 = vmax.f32 %v7481, %v7482
    %v7484 = vmax.f32 %v7382, %v7384
    %v7485 = vrot.slane %v7484, 4
    %v7486 = vmax.f32 %v7484, %v7485
    %v7487 = vrot.slane %v7486, 2
    %v7488 = vmax.f32 %v7486, %v7487
    %v7489 = vrot.slane %v7488, 1
    %v7490 = vmax.f32 %v7488, %v7489
    %v7491 = vmax.f32 %v7383, %v7385
    %v7492 = vrot.slane %v7491, 4
    %v7493 = vmax.f32 %v7491, %v7492
    %v7494 = vrot.slane %v7493, 2
    %v7495 = vmax.f32 %v7493, %v7494
    %v7496 = vrot.slane %v7495, 1
    %v7497 = vmax.f32 %v7495, %v7496
    %v7498 = vld [vmem:[%s6] sm:$0x3]
    %v7500 = vlaneseq
    %v7501 = vshrl.u32 %v7500, 7
    %v7502 = vsub.s32 0, %v7501
    %v7503 = vrot.slane %v7498, %v7502
    %v7504 = vlaneseq
    %v7505 = vshrl.u32 %v7504, 7
    %v7506 = vsub.s32 1, %v7505
    %v7507 = vrot.slane %v7498, %v7506
    %v7510 = vmul.f32 %v7392, %v7503
    %v7511 = vmul.f32 %v7399, %v7507
    %v7512 = vmul.f32 %v7406, %v7503
    %v7513 = vmul.f32 %v7413, %v7507
    %v7514 = vmul.f32 %v7420, %v7503
    %v7515 = vmul.f32 %v7427, %v7507
    %v7516 = vmul.f32 %v7434, %v7503
    %v7517 = vmul.f32 %v7441, %v7507
    %v7518 = vmul.f32 %v7448, %v7503
    %v7519 = vmul.f32 %v7455, %v7507
    %v7520 = vmul.f32 %v7462, %v7503
    %v7521 = vmul.f32 %v7469, %v7507
    %v7522 = vmul.f32 %v7476, %v7503
    %v7523 = vmul.f32 %v7483, %v7507
    %v7524 = vmul.f32 %v7490, %v7503
    %v7525 = vmul.f32 %v7497, %v7507
    %v7542 = vrot.slane %v7512, 7
    %vm7543 = vcmask 1041409
    %v7544 = vsel %vm7543, %v7542, %v7510
    %v7545 = vrot.slane %v7514, 6
    %vm7546 = vcmask 1042434
    %v7547 = vsel %vm7546, %v7545, %v7544
    %v7548 = vrot.slane %v7516, 5
    %vm7549 = vcmask 1043459
    %v7550 = vsel %vm7549, %v7548, %v7547
    %v7551 = vrot.slane %v7518, 4
    %vm7552 = vcmask 1044484
    %v7553 = vsel %vm7552, %v7551, %v7550
    %v7554 = vrot.slane %v7520, 3
    %vm7555 = vcmask 1045509
    %v7556 = vsel %vm7555, %v7554, %v7553
    %v7557 = vrot.slane %v7522, 2
    %vm7558 = vcmask 1046534
    %v7559 = vsel %vm7558, %v7557, %v7556
    %v7560 = vrot.slane %v7524, 1
    %vm7561 = vcmask 1047559
    %v7562 = vsel %vm7561, %v7560, %v7559
    %v7563 = vrot.slane %v7513, 7
    %v7564 = vsel %vm7543, %v7563, %v7511
    %v7565 = vrot.slane %v7515, 6
    %v7566 = vsel %vm7546, %v7565, %v7564
    %v7567 = vrot.slane %v7517, 5
    %v7568 = vsel %vm7549, %v7567, %v7566
    %v7569 = vrot.slane %v7519, 4
    %v7570 = vsel %vm7552, %v7569, %v7568
    %v7571 = vrot.slane %v7521, 3
    %v7572 = vsel %vm7555, %v7571, %v7570
    %v7573 = vrot.slane %v7523, 2
    %v7574 = vsel %vm7558, %v7573, %v7572
    %v7575 = vrot.slane %v7525, 1
    %v7576 = vsel %vm7561, %v7575, %v7574
    %v7579 = vadd.f32 %v7562, %v7576
    %7580 = vadd.xlane.f32.xlu0 %v7579
    %v7581 = vpop.xlane.xlu0 %7580
    %v7582 = vld [vmem:[#allocation2] sm:$0x1]
    %v7584 = vlaneseq
    %v7585 = vshrl.u32 %v7584, 7
    %v7586 = vsub.s32 0, %v7585
    %v7587 = vrot.slane %v7582, %v7586
    %v7589 = vadd.f32 %v7581, %v7587
    %7591 = vset.pattern.permute.xlu0 0
    %7592 = vperm.xlu0 %7591, %v7589
    %v7593 = vpop.permute.xlu0 %7592
    %7595 = vst [vmem:[%s8] sm:$0xff] %v7593
    // Predicated region
    $region38: #{game_state_model.1} parent=1 // pred_check
      _
    $region39: #{game_state_model.1} parent=1 // pred_check_branch
      %7597 = sbr.rel (0) target = $region41
    $region40: #{game_state_model.1} parent=1 // pred_region
      _
    $region41: #{game_state_model.1} parent=1 // pred_fallthru
      _
    // Predicated region
    $region42: #{game_state_model.1} parent=1 // pred_check
      _
    $region43: #{game_state_model.1} parent=1 // pred_check_branch
      %7599 = sbr.rel (0) target = $region45
    $region44: #{game_state_model.1} parent=1 // pred_region
      _
    $region45: #{game_state_model.1} parent=1 // pred_fallthru
      _
    %7600 = vsyncpa [#allocation4], 1

</llo_original>
